<compile_context>
chip_gen: v7x
topology: tpu7x:2x2x1
jax: 0.10.0
libtpu: 0.0.40
codegen_flags: <defaults>
</compile_context>

<pallas_src>
import jax
import jax.numpy as jnp
from jax.experimental import pallas as pl
from jax.experimental.pallas import tpu as pltpu

NEG_SLOPE = 0.01               # nn.LeakyReLU default negative_slope
SEM_IN = 608                   # 256 + 160 + 128 + 64
FUSE_C = 64 + 4 + 6 + 5        # 79 channels into the clip-pooling conv


def _leaky(x):
    # max-form leaky ReLU (identical to the where-form for 0 < slope < 1)
    return jnp.maximum(x, NEG_SLOPE * x)


# ---------------------------------------------------------------------------
# Fused kernel.  One grid step = tm_pool pooled clips = TM = 8*tm_pool clip
# pairs, rows in natural order: row r = 8*pooled_clip_m + conv_tap_k.
# ---------------------------------------------------------------------------
def _make_kernel(act_dtype):
    """act_dtype: elementwise dtype for the wide branches (bf16 on v6e/v7x,
    f32 on v5e).  All matmuls accumulate in f32 on the MXU."""

    def lin_act(x, w_ref, b_ref):
        y = jnp.dot(x.astype(w_ref.dtype), w_ref[...],
                    preferred_element_type=jnp.float32).astype(act_dtype)
        return _leaky(y + b_ref[...].astype(act_dtype))

    def lin_f32(x, w_ref, b_ref):
        return jnp.dot(x.astype(w_ref.dtype), w_ref[...],
                       preferred_element_type=jnp.float32) + b_ref[...]

    def kernel(
        sem_t_ref, sem_s_ref, dis_ref, motion_ref,
        # semantic_temporal 608->512->128->64
        st_w1, st_b1, st_w2, st_b2, st_w3, st_b3,
        # semantic_spatial 608->512->128->6
        ss_w1, ss_b1, ss_w2, ss_b2, ss_w3, ss_b3,
        # distortion temporal+spatial first layers fused block-diagonally
        # (12->10), then distortion_temporal second layer (5->4)
        dd_w1, dd_b1, dt_w2, dt_b2,
        # clip_pooling_t Conv1d(79->79, k=8, s=8) as per-tap [79,79] matmuls
        cv_w, cv_b,
        # motion_fc 512->512->128->64
        m_w1, m_b1, m_w2, m_b2, m_w3, m_b3,
        # spatial_temporal_fc 143->64->16->1 (first-layer weight split 79/64)
        f_w1a, f_w1b, f_b1, f_w2, f_b2, f_w3, f_b3,
        out_ref, fused_scratch,
    ):
        tm_pool = motion_ref.shape[0]

        # ---- per clip-pair branch MLPs (rows r = 8*m + k) -------------------
        h = lin_act(sem_t_ref[...], st_w1, st_b1)
        h = lin_act(h, st_w2, st_b2)
        f_st = lin_act(h, st_w3, st_b3)                       # [TM, 64]

        h = lin_act(sem_s_ref[...], ss_w1, ss_b1)
        h = lin_act(h, ss_w2, ss_b2)
        f_ss = lin_act(h, ss_w3, ss_b3)                       # [TM, 6]

        # distortion temporal + spatial share one MXU pass (block-diag weight)
        h = _leaky(lin_f32(dis_ref[...], dd_w1, dd_b1))       # [TM, 10]
        f_dt = _leaky(lin_f32(h[:, :5], dt_w2, dt_b2))        # [TM, 4]
        f_ds = h[:, 5:]                                       # [TM, 5]

        # torch.cat order: (semantic_t, distortion_t, semantic_s, distortion_s)
        fused_scratch[...] = jnp.concatenate(
            [f_st.astype(jnp.float32), f_dt,
             f_ss.astype(jnp.float32), f_ds], axis=-1)        # [TM, 79] f32

        # ---- clip pooling: non-overlapping Conv1d(k=8, s=8) -----------------
        # tap-k rows of the fused features are rows k, k+8, ... (stride 8)
        conv = jnp.zeros((tm_pool, FUSE_C), jnp.float32)
        for k in range(8):
            fk = fused_scratch[pl.ds(k, tm_pool, stride=8), :]
            conv = conv + jnp.dot(fk.astype(cv_w.dtype), cv_w[k],
                                  preferred_element_type=jnp.float32)
        f_conv = _leaky((conv + cv_b[...]).astype(act_dtype))  # [tm_pool, 79]

        # ---- motion_fc -------------------------------------------------------
        h = lin_act(motion_ref[...], m_w1, m_b1)
        h = lin_act(h, m_w2, m_b2)
        f_m = lin_act(h, m_w3, m_b3)                          # [tm_pool, 64]

        # ---- spatial_temporal_fc (concat folded into split first layer) -----
        h = (jnp.dot(f_conv.astype(f_w1a.dtype), f_w1a[...],
                     preferred_element_type=jnp.float32)
             + jnp.dot(f_m.astype(f_w1b.dtype), f_w1b[...],
                       preferred_element_type=jnp.float32)
             + f_b1[...])
        h = _leaky(h)                                         # [tm_pool, 64]
        h = _leaky(jnp.dot(h.astype(f_w2.dtype), f_w2[...],
                           preferred_element_type=jnp.float32) + f_b2[...])
        out_ref[...] = _leaky(
            jnp.dot(h, f_w3[...], preferred_element_type=jnp.float32)
            + f_b3[...])                                      # [tm_pool, 1]
        # TODO(synk): lane-dense (1, tm_pool) output store skipped; the
        # (tm_pool, 1) masked store costs only ~tm_pool*4 bytes per step.

    return kernel


# ---------------------------------------------------------------------------
# Chip-dependent defaults (elementwise dtype, VMEM budget / tiling class).
# ---------------------------------------------------------------------------
def _chip_config():
    try:
        kind = jax.devices()[0].device_kind.lower()
    except Exception:
        kind = ""
    is_v5e = ("v5 lite" in kind) or ("v5e" in kind) or ("v5lite" in kind)
    act_dtype = jnp.float32 if is_v5e else jnp.bfloat16
    vmem_bytes = None
    try:
        vmem_bytes = int(pltpu.get_tpu_info().vmem_capacity_bytes)
    except Exception:
        vmem_bytes = None
    if vmem_bytes is not None:
        big_vmem = vmem_bytes >= (100 << 20)    # v5e/v6e: 128 MiB, v7x: 64 MiB
    else:
        big_vmem = bool(kind) and ("v7" not in kind)
    return act_dtype, big_vmem


# ---------------------------------------------------------------------------
# Wrapper-side weight preparation.
# ---------------------------------------------------------------------------
def _prep_weights(params):
    def wb(pairs):      # cast linear weights to bf16, keep biases f32
        out = []
        for i in range(0, len(pairs), 2):
            out.append(pairs[i].astype(jnp.bfloat16))
            out.append(pairs[i + 1])
        return out

    st = wb(params["st"])
    ss = wb(params["ss"])

    dt_w1, dt_b1, dt_w2, dt_b2 = params["dt"]
    ds_w1, ds_b1 = params["ds"]
    dd_w1 = (jnp.zeros((12, 10), jnp.float32)
             .at[:6, :5].set(dt_w1).at[6:, 5:].set(ds_w1))
    dd_b1 = jnp.concatenate([dt_b1, ds_b1], axis=-1)            # [1, 10]

    wc, bc = params["conv_raw"]                                 # [O,I,K], [O]
    cv_w = jnp.transpose(wc, (2, 1, 0)).astype(jnp.bfloat16)    # [k, in, out]
    cv_b = bc.reshape(1, FUSE_C)

    motion = wb(params["motion"])

    f_w1, f_b1, f_w2, f_b2, f_w3, f_b3 = params["stfc"]
    stfc = [f_w1[:FUSE_C].astype(jnp.bfloat16),
            f_w1[FUSE_C:].astype(jnp.bfloat16),
            f_b1, f_w2.astype(jnp.bfloat16), f_b2, f_w3, f_b3]

    return st + ss + [dd_w1, dd_b1, dt_w2, dt_b2, cv_w, cv_b] + motion + stfc


def mdvqa_forward(params, semantic_feature, metric_feature, motion_feature,
                  *, tm_pool=None):
    B, T, _ = semantic_feature.shape
    T16 = (T // 2) // 8          # pooled clips per batch element
    R = 8 * T16                  # clip pairs actually consumed per batch elem
    M = B * T16                  # total pooled clips

    act_dtype, big_vmem = _chip_config()

    if tm_pool is None:
        # Bigger tiles on 128 MiB-VMEM v5e/v6e; keep >= 2 grid steps on the
        # dual-core, 64 MiB-VMEM v7x so both TensorCores get work.
        cap = 256 if big_vmem else 128
        min_steps = 1 if big_vmem else 2
        tm_pool = min(cap, 16 * max(1, -(-M // (16 * min_steps))))
    assert tm_pool > 0 and tm_pool % 8 == 0
    G = -(-M // tm_pool)
    Mp = G * tm_pool
    TM = 8 * tm_pool

    # ---- input prep: one fused elementwise pass, reshape-only layout --------
    f32 = jnp.float32
    sem = semantic_feature[:, : 2 * R, 48:].astype(f32)
    met = metric_feature[:, : 2 * R].astype(f32)
    sem_even = sem[:, 0::2].reshape(B * R, SEM_IN)
    sem_odd = sem[:, 1::2].reshape(B * R, SEM_IN)
    met_even = met[:, 0::2].reshape(B * R, 6)
    met_odd = met[:, 1::2].reshape(B * R, 6)

    # temporal diffs in f32 (bf16 cancellation hazard), streams shipped bf16
    sem_t = jnp.abs(sem_even - sem_odd).astype(jnp.bfloat16)    # [8M, 608]
    sem_s = sem_odd.astype(jnp.bfloat16)                        # [8M, 608]
    dis = jnp.concatenate([jnp.abs(met_even - met_odd), met_odd], axis=-1)
    motion = motion_feature.reshape(M, 512).astype(jnp.bfloat16)

    if Mp != M:
        pr = 8 * (Mp - M)
        sem_t = jnp.pad(sem_t, ((0, pr), (0, 0)))
        sem_s = jnp.pad(sem_s, ((0, pr), (0, 0)))
        dis = jnp.pad(dis, ((0, pr), (0, 0)))
        motion = jnp.pad(motion, ((0, Mp - M), (0, 0)))

    weights = _prep_weights(params)

    def _tile(shape):
        return pl.BlockSpec(shape, lambda i: (i, 0))

    def _resident(shape):        # VMEM-resident, single-buffered weights
        idx = (lambda i: (0, 0, 0)) if len(shape) == 3 else (lambda i: (0, 0))
        return pl.BlockSpec(shape, idx, pipeline_mode=pl.Buffered(1))

    in_specs = [
        _tile((TM, SEM_IN)), _tile((TM, SEM_IN)), _tile((TM, 12)),
        _tile((tm_pool, 512)),
    ] + [_resident(tuple(w.shape)) for w in weights]

    rows = 8 * Mp
    wide = SEM_IN * 512 + 512 * 128
    flops = (2 * rows * (2 * wide + 128 * (64 + 6) + 12 * 10 + 5 * 4)
             + 2 * Mp * (8 * FUSE_C * FUSE_C + 512 * 512 + 512 * 128
                         + 128 * 64 + (FUSE_C + 64) * 64 + 64 * 16 + 16))
    bytes_accessed = (2 * 2 * rows * SEM_IN + 4 * rows * 12 + 2 * Mp * 512
                      + 4 * Mp
                      + int(sum(int(w.size) * w.dtype.itemsize
                                for w in weights)))

    per_clip = pl.pallas_call(
        _make_kernel(act_dtype),
        grid=(G,),
        in_specs=in_specs,
        out_specs=_tile((tm_pool, 1)),
        out_shape=jax.ShapeDtypeStruct((Mp, 1), jnp.float32),
        scratch_shapes=[pltpu.VMEM((TM, FUSE_C), jnp.float32)],
        compiler_params=pltpu.CompilerParams(
            dimension_semantics=("parallel",),
            vmem_limit_bytes=(96 << 20) if big_vmem else (48 << 20),
        ),
        cost_estimate=pl.CostEstimate(flops=int(flops), transcendentals=0,
                                      bytes_accessed=int(bytes_accessed)),
    )(sem_t, sem_s, dis, motion, *weights)

    # Padded pooled clips (if any) are excluded; finish the mean in JAX.
    return jnp.sum(per_clip[:M, 0]) / M


# ---------------------------------------------------------------------------
# Deterministic parameter init (kaiming-style normal, zero bias for Linear).
# ---------------------------------------------------------------------------
def init_params(key):
    def linear(k, fan_in, fan_out):
        std = (2.0 / fan_in) ** 0.5           # kaiming_normal_, leaky_relu gain
        w = std * jax.random.normal(k, (fan_in, fan_out), jnp.float32)
        b = jnp.zeros((1, fan_out), jnp.float32)
        return [w, b]

    def mlp(k, dims):
        ks = jax.random.split(k, len(dims) - 1)
        out = []
        for kk, fi, fo in zip(ks, dims[:-1], dims[1:]):
            out.extend(linear(kk, fi, fo))
        return out

    ks = jax.random.split(key, 8)
    params = {
        "st": mlp(ks[0], [SEM_IN, 512, 128, 64]),
        "dt": mlp(ks[1], [6, 5, 4]),
        "ss": mlp(ks[2], [SEM_IN, 512, 128, 6]),
        "ds": mlp(ks[3], [6, 5]),
        "motion": mlp(ks[4], [512, 512, 128, 64]),
        "stfc": mlp(ks[5], [FUSE_C + 64, 64, 16, 1]),
    }
    # Conv1d(79 -> 79, kernel=8): weight [O, I, K], bias [O]
    wc = jax.random.normal(ks[6], (FUSE_C, FUSE_C, 8), jnp.float32) * (
        1.0 / (FUSE_C * 8)) ** 0.5
    bc = 0.01 * jax.random.normal(ks[7], (FUSE_C,), jnp.float32)
    params["conv_raw"] = (wc, bc)
    return params


# ---------------------------------------------------------------------------
# Pure-JAX f32 reference (mirrors the PyTorch forward) for verification.
# ---------------------------------------------------------------------------
def mdvqa_reference(params, semantic_feature, metric_feature, motion_feature):
    def mlp(x, ps):
        for i in range(0, len(ps), 2):
            x = _leaky(x @ ps[i] + ps[i + 1])
        return x

    sem = semantic_feature[:, :, 48:]
    sem_t = jnp.abs(sem[:, 0::2] - sem[:, 1::2])
    dis_t = jnp.abs(metric_feature[:, 0::2] - metric_feature[:, 1::2])
    sem_s = sem[:, 1::2, :]
    dis_s = metric_feature[:, 1::2, :]

    sem_t = mlp(sem_t, params["st"])
    dis_t = mlp(dis_t, params["dt"])
    sem_s = mlp(sem_s, params["ss"])
    dis_s = mlp(dis_s, params["ds"])

    ff = jnp.concatenate([sem_t, dis_t, sem_s, dis_s], axis=2)   # [B, T2, 79]
    ff = jnp.transpose(ff, (0, 2, 1))                            # [B, 79, T2]
    wc, bc = params["conv_raw"]
    conv = jax.lax.conv_general_dilated(
        ff, wc, window_strides=(8,), padding="VALID",
        dimension_numbers=("NCH", "OIH", "NCH"))
    conv = _leaky(conv + bc[None, :, None])
    ff = jnp.transpose(conv, (0, 2, 1))                          # [B, T16, 79]

    fm = mlp(motion_feature, params["motion"])
    ff = jnp.concatenate([ff, fm], axis=2)                       # [B, T16, 143]
    out = mlp(ff, params["stfc"])
    return jnp.mean(out)


if __name__ == "__main__":
    key = jax.random.PRNGKey(0)
    B, T = 2, 144                 # T/2 = 72 clip pairs, T/16 = 9 pooled clips
    T16 = T // 16
    kp, ka, kb, kc = jax.random.split(key, 4)

    params = init_params(kp)
    semantic = jax.random.normal(ka, (B, T, 48 + SEM_IN), jnp.float32)
    metric = jax.random.normal(kb, (B, T, 6), jnp.float32)
    motion_feat = jax.random.normal(kc, (B, T16, 512), jnp.float32)

    # Small tm_pool so the demo exercises several grid steps plus a padded
    # tail (M = 18 pooled clips, tm_pool = 16 -> grid of 2, 14 padded clips).
    score = mdvqa_forward(params, semantic, metric, motion_feat, tm_pool=16)
    score = jax.block_until_ready(score)

    ref = mdvqa_reference(params, semantic, metric, motion_feat)
    # bf16 input streams / weights / elementwise (f32 MXU accumulation)
    # vs. the pure-f32 reference.
    assert jnp.allclose(score, ref, rtol=5e-2, atol=5e-2), (score, ref)
    print("KERNEL_OK")
</pallas_src>

<mosaic_0001>
module attributes {stable_mosaic.version = 11 : i64} {
  func.func @kernel(%arg0: i32, %arg1: memref<128x608xbf16, #tpu.memory_space<vmem>>, %arg2: memref<128x608xbf16, #tpu.memory_space<vmem>>, %arg3: memref<128x12xf32, #tpu.memory_space<vmem>>, %arg4: memref<16x512xbf16, #tpu.memory_space<vmem>>, %arg5: memref<608x512xbf16, #tpu.memory_space<vmem>>, %arg6: memref<1x512xf32, #tpu.memory_space<vmem>>, %arg7: memref<512x128xbf16, #tpu.memory_space<vmem>>, %arg8: memref<1x128xf32, #tpu.memory_space<vmem>>, %arg9: memref<128x64xbf16, #tpu.memory_space<vmem>>, %arg10: memref<1x64xf32, #tpu.memory_space<vmem>>, %arg11: memref<608x512xbf16, #tpu.memory_space<vmem>>, %arg12: memref<1x512xf32, #tpu.memory_space<vmem>>, %arg13: memref<512x128xbf16, #tpu.memory_space<vmem>>, %arg14: memref<1x128xf32, #tpu.memory_space<vmem>>, %arg15: memref<128x6xbf16, #tpu.memory_space<vmem>>, %arg16: memref<1x6xf32, #tpu.memory_space<vmem>>, %arg17: memref<12x10xf32, #tpu.memory_space<vmem>>, %arg18: memref<1x10xf32, #tpu.memory_space<vmem>>, %arg19: memref<5x4xf32, #tpu.memory_space<vmem>>, %arg20: memref<1x4xf32, #tpu.memory_space<vmem>>, %arg21: memref<8x79x79xbf16, #tpu.memory_space<vmem>>, %arg22: memref<1x79xf32, #tpu.memory_space<vmem>>, %arg23: memref<512x512xbf16, #tpu.memory_space<vmem>>, %arg24: memref<1x512xf32, #tpu.memory_space<vmem>>, %arg25: memref<512x128xbf16, #tpu.memory_space<vmem>>, %arg26: memref<1x128xf32, #tpu.memory_space<vmem>>, %arg27: memref<128x64xbf16, #tpu.memory_space<vmem>>, %arg28: memref<1x64xf32, #tpu.memory_space<vmem>>, %arg29: memref<79x64xbf16, #tpu.memory_space<vmem>>, %arg30: memref<64x64xbf16, #tpu.memory_space<vmem>>, %arg31: memref<1x64xf32, #tpu.memory_space<vmem>>, %arg32: memref<64x16xbf16, #tpu.memory_space<vmem>>, %arg33: memref<1x16xf32, #tpu.memory_space<vmem>>, %arg34: memref<16x1xf32, #tpu.memory_space<vmem>>, %arg35: memref<1x1xf32, #tpu.memory_space<vmem>>, %arg36: memref<16x1xf32, #tpu.memory_space<vmem>>, %arg37: memref<128x79xf32, #tpu.memory_space<vmem>>) attributes {dimension_semantics = [#tpu.dimension_semantics<parallel>], iteration_bounds = array<i64: 2>, scalar_prefetch = 0 : i64, scratch_operands = 1 : i64, tpu.core_type = #tpu.core_type<tc>, window_params = [{transform_indices = @transform_0, window_bounds = array<i64: 128, 608>}, {transform_indices = @transform_1, window_bounds = array<i64: 128, 608>}, {transform_indices = @transform_2, window_bounds = array<i64: 128, 12>}, {transform_indices = @transform_3, window_bounds = array<i64: 16, 512>}, {pipeline_mode = #tpu.pipeline_mode<synchronous>, transform_indices = @transform_4, window_bounds = array<i64: 608, 512>}, {pipeline_mode = #tpu.pipeline_mode<synchronous>, transform_indices = @transform_5, window_bounds = array<i64: 1, 512>}, {pipeline_mode = #tpu.pipeline_mode<synchronous>, transform_indices = @transform_6, window_bounds = array<i64: 512, 128>}, {pipeline_mode = #tpu.pipeline_mode<synchronous>, transform_indices = @transform_7, window_bounds = array<i64: 1, 128>}, {pipeline_mode = #tpu.pipeline_mode<synchronous>, transform_indices = @transform_8, window_bounds = array<i64: 128, 64>}, {pipeline_mode = #tpu.pipeline_mode<synchronous>, transform_indices = @transform_9, window_bounds = array<i64: 1, 64>}, {pipeline_mode = #tpu.pipeline_mode<synchronous>, transform_indices = @transform_10, window_bounds = array<i64: 608, 512>}, {pipeline_mode = #tpu.pipeline_mode<synchronous>, transform_indices = @transform_11, window_bounds = array<i64: 1, 512>}, {pipeline_mode = #tpu.pipeline_mode<synchronous>, transform_indices = @transform_12, window_bounds = array<i64: 512, 128>}, {pipeline_mode = #tpu.pipeline_mode<synchronous>, transform_indices = @transform_13, window_bounds = array<i64: 1, 128>}, {pipeline_mode = #tpu.pipeline_mode<synchronous>, transform_indices = @transform_14, window_bounds = array<i64: 128, 6>}, {pipeline_mode = #tpu.pipeline_mode<synchronous>, transform_indices = @transform_15, window_bounds = array<i64: 1, 6>}, {pipeline_mode = #tpu.pipeline_mode<synchronous>, transform_indices = @transform_16, window_bounds = array<i64: 12, 10>}, {pipeline_mode = #tpu.pipeline_mode<synchronous>, transform_indices = @transform_17, window_bounds = array<i64: 1, 10>}, {pipeline_mode = #tpu.pipeline_mode<synchronous>, transform_indices = @transform_18, window_bounds = array<i64: 5, 4>}, {pipeline_mode = #tpu.pipeline_mode<synchronous>, transform_indices = @transform_19, window_bounds = array<i64: 1, 4>}, {pipeline_mode = #tpu.pipeline_mode<synchronous>, transform_indices = @transform_20, window_bounds = array<i64: 8, 79, 79>}, {pipeline_mode = #tpu.pipeline_mode<synchronous>, transform_indices = @transform_21, window_bounds = array<i64: 1, 79>}, {pipeline_mode = #tpu.pipeline_mode<synchronous>, transform_indices = @transform_22, window_bounds = array<i64: 512, 512>}, {pipeline_mode = #tpu.pipeline_mode<synchronous>, transform_indices = @transform_23, window_bounds = array<i64: 1, 512>}, {pipeline_mode = #tpu.pipeline_mode<synchronous>, transform_indices = @transform_24, window_bounds = array<i64: 512, 128>}, {pipeline_mode = #tpu.pipeline_mode<synchronous>, transform_indices = @transform_25, window_bounds = array<i64: 1, 128>}, {pipeline_mode = #tpu.pipeline_mode<synchronous>, transform_indices = @transform_26, window_bounds = array<i64: 128, 64>}, {pipeline_mode = #tpu.pipeline_mode<synchronous>, transform_indices = @transform_27, window_bounds = array<i64: 1, 64>}, {pipeline_mode = #tpu.pipeline_mode<synchronous>, transform_indices = @transform_28, window_bounds = array<i64: 79, 64>}, {pipeline_mode = #tpu.pipeline_mode<synchronous>, transform_indices = @transform_29, window_bounds = array<i64: 64, 64>}, {pipeline_mode = #tpu.pipeline_mode<synchronous>, transform_indices = @transform_30, window_bounds = array<i64: 1, 64>}, {pipeline_mode = #tpu.pipeline_mode<synchronous>, transform_indices = @transform_31, window_bounds = array<i64: 64, 16>}, {pipeline_mode = #tpu.pipeline_mode<synchronous>, transform_indices = @transform_32, window_bounds = array<i64: 1, 16>}, {pipeline_mode = #tpu.pipeline_mode<synchronous>, transform_indices = @transform_33, window_bounds = array<i64: 16, 1>}, {pipeline_mode = #tpu.pipeline_mode<synchronous>, transform_indices = @transform_34, window_bounds = array<i64: 1, 1>}, {transform_indices = @transform_35, window_bounds = array<i64: 16, 1>}]} {
    %c0 = arith.constant 0 : index
    %c0_0 = arith.constant 0 : index
    %0 = vector.load %arg1[%c0, %c0_0] : memref<128x608xbf16, #tpu.memory_space<vmem>>, vector<128x608xbf16>
    %c0_1 = arith.constant 0 : index
    %c0_2 = arith.constant 0 : index
    %1 = vector.load %arg5[%c0_1, %c0_2] : memref<608x512xbf16, #tpu.memory_space<vmem>>, vector<608x512xbf16>
    %cst = arith.constant dense<0.000000e+00> : vector<128x512xf32>
    %2 = tpu.matmul %0, %1, %cst {dimension_numbers = #tpu.dot_dimension_numbers<[1], [0], [0], [1], [0, 0, 1, 1], [], []>} : vector<128x608xbf16>, vector<608x512xbf16>, vector<128x512xf32> -> vector<128x512xf32>
    %3 = arith.truncf %2 : vector<128x512xf32> to vector<128x512xbf16>
    %c0_3 = arith.constant 0 : index
    %c0_4 = arith.constant 0 : index
    %4 = vector.load %arg6[%c0_3, %c0_4] : memref<1x512xf32, #tpu.memory_space<vmem>>, vector<1x512xf32>
    %5 = arith.truncf %4 : vector<1x512xf32> to vector<1x512xbf16>
    %6 = vector.broadcast %5 : vector<1x512xbf16> to vector<128x512xbf16>
    %7 = arith.addf %3, %6 : vector<128x512xbf16>
    %cst_5 = arith.constant 1.000980e-02 : bf16
    %8 = vector.broadcast %cst_5 : bf16 to vector<128x512xbf16>
    %9 = arith.mulf %8, %7 : vector<128x512xbf16>
    %10 = arith.maximumf %7, %9 : vector<128x512xbf16>
    %c0_6 = arith.constant 0 : index
    %c0_7 = arith.constant 0 : index
    %11 = vector.load %arg7[%c0_6, %c0_7] : memref<512x128xbf16, #tpu.memory_space<vmem>>, vector<512x128xbf16>
    %cst_8 = arith.constant dense<0.000000e+00> : vector<128x128xf32>
    %12 = tpu.matmul %10, %11, %cst_8 {dimension_numbers = #tpu.dot_dimension_numbers<[1], [0], [0], [1], [0, 0, 1, 1], [], []>} : vector<128x512xbf16>, vector<512x128xbf16>, vector<128x128xf32> -> vector<128x128xf32>
    %13 = arith.truncf %12 : vector<128x128xf32> to vector<128x128xbf16>
    %c0_9 = arith.constant 0 : index
    %c0_10 = arith.constant 0 : index
    %14 = vector.load %arg8[%c0_9, %c0_10] : memref<1x128xf32, #tpu.memory_space<vmem>>, vector<1x128xf32>
    %15 = arith.truncf %14 : vector<1x128xf32> to vector<1x128xbf16>
    %16 = vector.broadcast %15 : vector<1x128xbf16> to vector<128x128xbf16>
    %17 = arith.addf %13, %16 : vector<128x128xbf16>
    %cst_11 = arith.constant 1.000980e-02 : bf16
    %18 = vector.broadcast %cst_11 : bf16 to vector<128x128xbf16>
    %19 = arith.mulf %18, %17 : vector<128x128xbf16>
    %20 = arith.maximumf %17, %19 : vector<128x128xbf16>
    %c0_12 = arith.constant 0 : index
    %c0_13 = arith.constant 0 : index
    %21 = vector.load %arg9[%c0_12, %c0_13] : memref<128x64xbf16, #tpu.memory_space<vmem>>, vector<128x64xbf16>
    %cst_14 = arith.constant dense<0.000000e+00> : vector<128x64xf32>
    %22 = tpu.matmul %20, %21, %cst_14 {dimension_numbers = #tpu.dot_dimension_numbers<[1], [0], [0], [1], [0, 0, 1, 1], [], []>} : vector<128x128xbf16>, vector<128x64xbf16>, vector<128x64xf32> -> vector<128x64xf32>
    %23 = arith.truncf %22 : vector<128x64xf32> to vector<128x64xbf16>
    %c0_15 = arith.constant 0 : index
    %c0_16 = arith.constant 0 : index
    %24 = vector.load %arg10[%c0_15, %c0_16] : memref<1x64xf32, #tpu.memory_space<vmem>>, vector<1x64xf32>
    %25 = arith.truncf %24 : vector<1x64xf32> to vector<1x64xbf16>
    %26 = vector.broadcast %25 : vector<1x64xbf16> to vector<128x64xbf16>
    %27 = arith.addf %23, %26 : vector<128x64xbf16>
    %cst_17 = arith.constant 1.000980e-02 : bf16
    %28 = vector.broadcast %cst_17 : bf16 to vector<128x64xbf16>
    %29 = arith.mulf %28, %27 : vector<128x64xbf16>
    %30 = arith.maximumf %27, %29 : vector<128x64xbf16>
    %c0_18 = arith.constant 0 : index
    %c0_19 = arith.constant 0 : index
    %31 = vector.load %arg2[%c0_18, %c0_19] : memref<128x608xbf16, #tpu.memory_space<vmem>>, vector<128x608xbf16>
    %c0_20 = arith.constant 0 : index
    %c0_21 = arith.constant 0 : index
    %32 = vector.load %arg11[%c0_20, %c0_21] : memref<608x512xbf16, #tpu.memory_space<vmem>>, vector<608x512xbf16>
    %cst_22 = arith.constant dense<0.000000e+00> : vector<128x512xf32>
    %33 = tpu.matmul %31, %32, %cst_22 {dimension_numbers = #tpu.dot_dimension_numbers<[1], [0], [0], [1], [0, 0, 1, 1], [], []>} : vector<128x608xbf16>, vector<608x512xbf16>, vector<128x512xf32> -> vector<128x512xf32>
    %34 = arith.truncf %33 : vector<128x512xf32> to vector<128x512xbf16>
    %c0_23 = arith.constant 0 : index
    %c0_24 = arith.constant 0 : index
    %35 = vector.load %arg12[%c0_23, %c0_24] : memref<1x512xf32, #tpu.memory_space<vmem>>, vector<1x512xf32>
    %36 = arith.truncf %35 : vector<1x512xf32> to vector<1x512xbf16>
    %37 = vector.broadcast %36 : vector<1x512xbf16> to vector<128x512xbf16>
    %38 = arith.addf %34, %37 : vector<128x512xbf16>
    %cst_25 = arith.constant 1.000980e-02 : bf16
    %39 = vector.broadcast %cst_25 : bf16 to vector<128x512xbf16>
    %40 = arith.mulf %39, %38 : vector<128x512xbf16>
    %41 = arith.maximumf %38, %40 : vector<128x512xbf16>
    %c0_26 = arith.constant 0 : index
    %c0_27 = arith.constant 0 : index
    %42 = vector.load %arg13[%c0_26, %c0_27] : memref<512x128xbf16, #tpu.memory_space<vmem>>, vector<512x128xbf16>
    %cst_28 = arith.constant dense<0.000000e+00> : vector<128x128xf32>
    %43 = tpu.matmul %41, %42, %cst_28 {dimension_numbers = #tpu.dot_dimension_numbers<[1], [0], [0], [1], [0, 0, 1, 1], [], []>} : vector<128x512xbf16>, vector<512x128xbf16>, vector<128x128xf32> -> vector<128x128xf32>
    %44 = arith.truncf %43 : vector<128x128xf32> to vector<128x128xbf16>
    %c0_29 = arith.constant 0 : index
    %c0_30 = arith.constant 0 : index
    %45 = vector.load %arg14[%c0_29, %c0_30] : memref<1x128xf32, #tpu.memory_space<vmem>>, vector<1x128xf32>
    %46 = arith.truncf %45 : vector<1x128xf32> to vector<1x128xbf16>
    %47 = vector.broadcast %46 : vector<1x128xbf16> to vector<128x128xbf16>
    %48 = arith.addf %44, %47 : vector<128x128xbf16>
    %cst_31 = arith.constant 1.000980e-02 : bf16
    %49 = vector.broadcast %cst_31 : bf16 to vector<128x128xbf16>
    %50 = arith.mulf %49, %48 : vector<128x128xbf16>
    %51 = arith.maximumf %48, %50 : vector<128x128xbf16>
    %c0_32 = arith.constant 0 : index
    %c0_33 = arith.constant 0 : index
    %52 = vector.load %arg15[%c0_32, %c0_33] : memref<128x6xbf16, #tpu.memory_space<vmem>>, vector<128x6xbf16>
    %cst_34 = arith.constant dense<0.000000e+00> : vector<128x6xf32>
    %53 = tpu.matmul %51, %52, %cst_34 {dimension_numbers = #tpu.dot_dimension_numbers<[1], [0], [0], [1], [0, 0, 1, 1], [], []>} : vector<128x128xbf16>, vector<128x6xbf16>, vector<128x6xf32> -> vector<128x6xf32>
    %54 = arith.truncf %53 : vector<128x6xf32> to vector<128x6xbf16>
    %c0_35 = arith.constant 0 : index
    %c0_36 = arith.constant 0 : index
    %55 = vector.load %arg16[%c0_35, %c0_36] : memref<1x6xf32, #tpu.memory_space<vmem>>, vector<1x6xf32>
    %56 = arith.truncf %55 : vector<1x6xf32> to vector<1x6xbf16>
    %57 = vector.broadcast %56 : vector<1x6xbf16> to vector<128x6xbf16>
    %58 = arith.addf %54, %57 : vector<128x6xbf16>
    %cst_37 = arith.constant 1.000980e-02 : bf16
    %59 = vector.broadcast %cst_37 : bf16 to vector<128x6xbf16>
    %60 = arith.mulf %59, %58 : vector<128x6xbf16>
    %61 = arith.maximumf %58, %60 : vector<128x6xbf16>
    %c0_38 = arith.constant 0 : index
    %c0_39 = arith.constant 0 : index
    %62 = vector.load %arg3[%c0_38, %c0_39] : memref<128x12xf32, #tpu.memory_space<vmem>>, vector<128x12xf32>
    %c0_40 = arith.constant 0 : index
    %c0_41 = arith.constant 0 : index
    %63 = vector.load %arg17[%c0_40, %c0_41] : memref<12x10xf32, #tpu.memory_space<vmem>>, vector<12x10xf32>
    %cst_42 = arith.constant dense<0.000000e+00> : vector<128x10xf32>
    %64 = tpu.matmul %62, %63, %cst_42 {dimension_numbers = #tpu.dot_dimension_numbers<[1], [0], [0], [1], [0, 0, 1, 1], [], []>} : vector<128x12xf32>, vector<12x10xf32>, vector<128x10xf32> -> vector<128x10xf32>
    %c0_43 = arith.constant 0 : index
    %c0_44 = arith.constant 0 : index
    %65 = vector.load %arg18[%c0_43, %c0_44] : memref<1x10xf32, #tpu.memory_space<vmem>>, vector<1x10xf32>
    %66 = vector.broadcast %65 : vector<1x10xf32> to vector<128x10xf32>
    %67 = arith.addf %64, %66 : vector<128x10xf32>
    %cst_45 = arith.constant 0.00999999977 : f32
    %68 = vector.broadcast %cst_45 : f32 to vector<128x10xf32>
    %69 = arith.mulf %68, %67 : vector<128x10xf32>
    %70 = arith.maximumf %67, %69 : vector<128x10xf32>
    %71 = vector.extract_strided_slice %70 {offsets = [0, 0], sizes = [128, 5], strides = [1, 1]} : vector<128x10xf32> to vector<128x5xf32>
    %c0_46 = arith.constant 0 : index
    %c0_47 = arith.constant 0 : index
    %72 = vector.load %arg19[%c0_46, %c0_47] : memref<5x4xf32, #tpu.memory_space<vmem>>, vector<5x4xf32>
    %cst_48 = arith.constant dense<0.000000e+00> : vector<128x4xf32>
    %73 = tpu.matmul %71, %72, %cst_48 {dimension_numbers = #tpu.dot_dimension_numbers<[1], [0], [0], [1], [0, 0, 1, 1], [], []>} : vector<128x5xf32>, vector<5x4xf32>, vector<128x4xf32> -> vector<128x4xf32>
    %c0_49 = arith.constant 0 : index
    %c0_50 = arith.constant 0 : index
    %74 = vector.load %arg20[%c0_49, %c0_50] : memref<1x4xf32, #tpu.memory_space<vmem>>, vector<1x4xf32>
    %75 = vector.broadcast %74 : vector<1x4xf32> to vector<128x4xf32>
    %76 = arith.addf %73, %75 : vector<128x4xf32>
    %cst_51 = arith.constant 0.00999999977 : f32
    %77 = vector.broadcast %cst_51 : f32 to vector<128x4xf32>
    %78 = arith.mulf %77, %76 : vector<128x4xf32>
    %79 = arith.maximumf %76, %78 : vector<128x4xf32>
    %80 = vector.extract_strided_slice %70 {offsets = [0, 5], sizes = [128, 5], strides = [1, 1]} : vector<128x10xf32> to vector<128x5xf32>
    %81 = arith.extf %30 : vector<128x64xbf16> to vector<128x64xf32>
    %82 = arith.extf %61 : vector<128x6xbf16> to vector<128x6xf32>
    %83 = tpu.concatenate %81, %79, %82, %80 in 1 : vector<128x64xf32>, vector<128x4xf32>, vector<128x6xf32>, vector<128x5xf32> -> vector<128x79xf32>
    %c0_52 = arith.constant 0 : index
    %c0_53 = arith.constant 0 : index
    %84 = vector.load %arg37[%c0_52, %c0_53] : memref<128x79xf32, #tpu.memory_space<vmem>>, vector<128x79xf32>
    tpu.vector_store %arg37[%c0_52, %c0_53], %83 {strides = array<i32>} : memref<128x79xf32, #tpu.memory_space<vmem>>, vector<128x79xf32>,
    %cst_54 = arith.constant 0.000000e+00 : f32
    %85 = vector.broadcast %cst_54 : f32 to vector<16x79xf32>
    %c0_55 = arith.constant 0 : index
    %c0_56 = arith.constant 0 : index
    %86 = tpu.strided_load %arg37[%c0_55, %c0_56] {strides = array<i32: 8, 1>} : memref<128x79xf32, #tpu.memory_space<vmem>>, vector<16x79xf32>
    %87 = arith.truncf %86 : vector<16x79xf32> to vector<16x79xbf16>
    %c0_57 = arith.constant 0 : index
    %c0_58 = arith.constant 0 : index
    %c0_59 = arith.constant 0 : index
    %88 = vector.load %arg21[%c0_57, %c0_58, %c0_59] : memref<8x79x79xbf16, #tpu.memory_space<vmem>>, vector<1x79x79xbf16>
    %89 = vector.shape_cast %88 : vector<1x79x79xbf16> to vector<79x79xbf16>
    %cst_60 = arith.constant dense<0.000000e+00> : vector<16x79xf32>
    %90 = tpu.matmul %87, %89, %cst_60 {dimension_numbers = #tpu.dot_dimension_numbers<[1], [0], [0], [1], [0, 0, 1, 1], [], []>} : vector<16x79xbf16>, vector<79x79xbf16>, vector<16x79xf32> -> vector<16x79xf32>
    %91 = arith.addf %85, %90 : vector<16x79xf32>
    %c1 = arith.constant 1 : index
    %c0_61 = arith.constant 0 : index
    %92 = tpu.strided_load %arg37[%c1, %c0_61] {strides = array<i32: 8, 1>} : memref<128x79xf32, #tpu.memory_space<vmem>>, vector<16x79xf32>
    %93 = arith.truncf %92 : vector<16x79xf32> to vector<16x79xbf16>
    %c1_62 = arith.constant 1 : index
    %c0_63 = arith.constant 0 : index
    %c0_64 = arith.constant 0 : index
    %94 = vector.load %arg21[%c1_62, %c0_63, %c0_64] : memref<8x79x79xbf16, #tpu.memory_space<vmem>>, vector<1x79x79xbf16>
    %95 = vector.shape_cast %94 : vector<1x79x79xbf16> to vector<79x79xbf16>
    %cst_65 = arith.constant dense<0.000000e+00> : vector<16x79xf32>
    %96 = tpu.matmul %93, %95, %cst_65 {dimension_numbers = #tpu.dot_dimension_numbers<[1], [0], [0], [1], [0, 0, 1, 1], [], []>} : vector<16x79xbf16>, vector<79x79xbf16>, vector<16x79xf32> -> vector<16x79xf32>
    %97 = arith.addf %91, %96 : vector<16x79xf32>
    %c2 = arith.constant 2 : index
    %c0_66 = arith.constant 0 : index
    %98 = tpu.strided_load %arg37[%c2, %c0_66] {strides = array<i32: 8, 1>} : memref<128x79xf32, #tpu.memory_space<vmem>>, vector<16x79xf32>
    %99 = arith.truncf %98 : vector<16x79xf32> to vector<16x79xbf16>
    %c2_67 = arith.constant 2 : index
    %c0_68 = arith.constant 0 : index
    %c0_69 = arith.constant 0 : index
    %100 = vector.load %arg21[%c2_67, %c0_68, %c0_69] : memref<8x79x79xbf16, #tpu.memory_space<vmem>>, vector<1x79x79xbf16>
    %101 = vector.shape_cast %100 : vector<1x79x79xbf16> to vector<79x79xbf16>
    %cst_70 = arith.constant dense<0.000000e+00> : vector<16x79xf32>
    %102 = tpu.matmul %99, %101, %cst_70 {dimension_numbers = #tpu.dot_dimension_numbers<[1], [0], [0], [1], [0, 0, 1, 1], [], []>} : vector<16x79xbf16>, vector<79x79xbf16>, vector<16x79xf32> -> vector<16x79xf32>
    %103 = arith.addf %97, %102 : vector<16x79xf32>
    %c3 = arith.constant 3 : index
    %c0_71 = arith.constant 0 : index
    %104 = tpu.strided_load %arg37[%c3, %c0_71] {strides = array<i32: 8, 1>} : memref<128x79xf32, #tpu.memory_space<vmem>>, vector<16x79xf32>
    %105 = arith.truncf %104 : vector<16x79xf32> to vector<16x79xbf16>
    %c3_72 = arith.constant 3 : index
    %c0_73 = arith.constant 0 : index
    %c0_74 = arith.constant 0 : index
    %106 = vector.load %arg21[%c3_72, %c0_73, %c0_74] : memref<8x79x79xbf16, #tpu.memory_space<vmem>>, vector<1x79x79xbf16>
    %107 = vector.shape_cast %106 : vector<1x79x79xbf16> to vector<79x79xbf16>
    %cst_75 = arith.constant dense<0.000000e+00> : vector<16x79xf32>
    %108 = tpu.matmul %105, %107, %cst_75 {dimension_numbers = #tpu.dot_dimension_numbers<[1], [0], [0], [1], [0, 0, 1, 1], [], []>} : vector<16x79xbf16>, vector<79x79xbf16>, vector<16x79xf32> -> vector<16x79xf32>
    %109 = arith.addf %103, %108 : vector<16x79xf32>
    %c4 = arith.constant 4 : index
    %c0_76 = arith.constant 0 : index
    %110 = tpu.strided_load %arg37[%c4, %c0_76] {strides = array<i32: 8, 1>} : memref<128x79xf32, #tpu.memory_space<vmem>>, vector<16x79xf32>
    %111 = arith.truncf %110 : vector<16x79xf32> to vector<16x79xbf16>
    %c4_77 = arith.constant 4 : index
    %c0_78 = arith.constant 0 : index
    %c0_79 = arith.constant 0 : index
    %112 = vector.load %arg21[%c4_77, %c0_78, %c0_79] : memref<8x79x79xbf16, #tpu.memory_space<vmem>>, vector<1x79x79xbf16>
    %113 = vector.shape_cast %112 : vector<1x79x79xbf16> to vector<79x79xbf16>
    %cst_80 = arith.constant dense<0.000000e+00> : vector<16x79xf32>
    %114 = tpu.matmul %111, %113, %cst_80 {dimension_numbers = #tpu.dot_dimension_numbers<[1], [0], [0], [1], [0, 0, 1, 1], [], []>} : vector<16x79xbf16>, vector<79x79xbf16>, vector<16x79xf32> -> vector<16x79xf32>
    %115 = arith.addf %109, %114 : vector<16x79xf32>
    %c5 = arith.constant 5 : index
    %c0_81 = arith.constant 0 : index
    %116 = tpu.strided_load %arg37[%c5, %c0_81] {strides = array<i32: 8, 1>} : memref<128x79xf32, #tpu.memory_space<vmem>>, vector<16x79xf32>
    %117 = arith.truncf %116 : vector<16x79xf32> to vector<16x79xbf16>
    %c5_82 = arith.constant 5 : index
    %c0_83 = arith.constant 0 : index
    %c0_84 = arith.constant 0 : index
    %118 = vector.load %arg21[%c5_82, %c0_83, %c0_84] : memref<8x79x79xbf16, #tpu.memory_space<vmem>>, vector<1x79x79xbf16>
    %119 = vector.shape_cast %118 : vector<1x79x79xbf16> to vector<79x79xbf16>
    %cst_85 = arith.constant dense<0.000000e+00> : vector<16x79xf32>
    %120 = tpu.matmul %117, %119, %cst_85 {dimension_numbers = #tpu.dot_dimension_numbers<[1], [0], [0], [1], [0, 0, 1, 1], [], []>} : vector<16x79xbf16>, vector<79x79xbf16>, vector<16x79xf32> -> vector<16x79xf32>
    %121 = arith.addf %115, %120 : vector<16x79xf32>
    %c6 = arith.constant 6 : index
    %c0_86 = arith.constant 0 : index
    %122 = tpu.strided_load %arg37[%c6, %c0_86] {strides = array<i32: 8, 1>} : memref<128x79xf32, #tpu.memory_space<vmem>>, vector<16x79xf32>
    %123 = arith.truncf %122 : vector<16x79xf32> to vector<16x79xbf16>
    %c6_87 = arith.constant 6 : index
    %c0_88 = arith.constant 0 : index
    %c0_89 = arith.constant 0 : index
    %124 = vector.load %arg21[%c6_87, %c0_88, %c0_89] : memref<8x79x79xbf16, #tpu.memory_space<vmem>>, vector<1x79x79xbf16>
    %125 = vector.shape_cast %124 : vector<1x79x79xbf16> to vector<79x79xbf16>
    %cst_90 = arith.constant dense<0.000000e+00> : vector<16x79xf32>
    %126 = tpu.matmul %123, %125, %cst_90 {dimension_numbers = #tpu.dot_dimension_numbers<[1], [0], [0], [1], [0, 0, 1, 1], [], []>} : vector<16x79xbf16>, vector<79x79xbf16>, vector<16x79xf32> -> vector<16x79xf32>
    %127 = arith.addf %121, %126 : vector<16x79xf32>
    %c7 = arith.constant 7 : index
    %c0_91 = arith.constant 0 : index
    %128 = tpu.strided_load %arg37[%c7, %c0_91] {strides = array<i32: 8, 1>} : memref<128x79xf32, #tpu.memory_space<vmem>>, vector<16x79xf32>
    %129 = arith.truncf %128 : vector<16x79xf32> to vector<16x79xbf16>
    %c7_92 = arith.constant 7 : index
    %c0_93 = arith.constant 0 : index
    %c0_94 = arith.constant 0 : index
    %130 = vector.load %arg21[%c7_92, %c0_93, %c0_94] : memref<8x79x79xbf16, #tpu.memory_space<vmem>>, vector<1x79x79xbf16>
    %131 = vector.shape_cast %130 : vector<1x79x79xbf16> to vector<79x79xbf16>
    %cst_95 = arith.constant dense<0.000000e+00> : vector<16x79xf32>
    %132 = tpu.matmul %129, %131, %cst_95 {dimension_numbers = #tpu.dot_dimension_numbers<[1], [0], [0], [1], [0, 0, 1, 1], [], []>} : vector<16x79xbf16>, vector<79x79xbf16>, vector<16x79xf32> -> vector<16x79xf32>
    %133 = arith.addf %127, %132 : vector<16x79xf32>
    %c0_96 = arith.constant 0 : index
    %c0_97 = arith.constant 0 : index
    %134 = vector.load %arg22[%c0_96, %c0_97] : memref<1x79xf32, #tpu.memory_space<vmem>>, vector<1x79xf32>
    %135 = vector.broadcast %134 : vector<1x79xf32> to vector<16x79xf32>
    %136 = arith.addf %133, %135 : vector<16x79xf32>
    %137 = arith.truncf %136 : vector<16x79xf32> to vector<16x79xbf16>
    %cst_98 = arith.constant 1.000980e-02 : bf16
    %138 = vector.broadcast %cst_98 : bf16 to vector<16x79xbf16>
    %139 = arith.mulf %138, %137 : vector<16x79xbf16>
    %140 = arith.maximumf %137, %139 : vector<16x79xbf16>
    %c0_99 = arith.constant 0 : index
    %c0_100 = arith.constant 0 : index
    %141 = vector.load %arg4[%c0_99, %c0_100] : memref<16x512xbf16, #tpu.memory_space<vmem>>, vector<16x512xbf16>
    %c0_101 = arith.constant 0 : index
    %c0_102 = arith.constant 0 : index
    %142 = vector.load %arg23[%c0_101, %c0_102] : memref<512x512xbf16, #tpu.memory_space<vmem>>, vector<512x512xbf16>
    %cst_103 = arith.constant dense<0.000000e+00> : vector<16x512xf32>
    %143 = tpu.matmul %141, %142, %cst_103 {dimension_numbers = #tpu.dot_dimension_numbers<[1], [0], [0], [1], [0, 0, 1, 1], [], []>} : vector<16x512xbf16>, vector<512x512xbf16>, vector<16x512xf32> -> vector<16x512xf32>
    %144 = arith.truncf %143 : vector<16x512xf32> to vector<16x512xbf16>
    %c0_104 = arith.constant 0 : index
    %c0_105 = arith.constant 0 : index
    %145 = vector.load %arg24[%c0_104, %c0_105] : memref<1x512xf32, #tpu.memory_space<vmem>>, vector<1x512xf32>
    %146 = arith.truncf %145 : vector<1x512xf32> to vector<1x512xbf16>
    %147 = vector.broadcast %146 : vector<1x512xbf16> to vector<16x512xbf16>
    %148 = arith.addf %144, %147 : vector<16x512xbf16>
    %cst_106 = arith.constant 1.000980e-02 : bf16
    %149 = vector.broadcast %cst_106 : bf16 to vector<16x512xbf16>
    %150 = arith.mulf %149, %148 : vector<16x512xbf16>
    %151 = arith.maximumf %148, %150 : vector<16x512xbf16>
    %c0_107 = arith.constant 0 : index
    %c0_108 = arith.constant 0 : index
    %152 = vector.load %arg25[%c0_107, %c0_108] : memref<512x128xbf16, #tpu.memory_space<vmem>>, vector<512x128xbf16>
    %cst_109 = arith.constant dense<0.000000e+00> : vector<16x128xf32>
    %153 = tpu.matmul %151, %152, %cst_109 {dimension_numbers = #tpu.dot_dimension_numbers<[1], [0], [0], [1], [0, 0, 1, 1], [], []>} : vector<16x512xbf16>, vector<512x128xbf16>, vector<16x128xf32> -> vector<16x128xf32>
    %154 = arith.truncf %153 : vector<16x128xf32> to vector<16x128xbf16>
    %c0_110 = arith.constant 0 : index
    %c0_111 = arith.constant 0 : index
    %155 = vector.load %arg26[%c0_110, %c0_111] : memref<1x128xf32, #tpu.memory_space<vmem>>, vector<1x128xf32>
    %156 = arith.truncf %155 : vector<1x128xf32> to vector<1x128xbf16>
    %157 = vector.broadcast %156 : vector<1x128xbf16> to vector<16x128xbf16>
    %158 = arith.addf %154, %157 : vector<16x128xbf16>
    %cst_112 = arith.constant 1.000980e-02 : bf16
    %159 = vector.broadcast %cst_112 : bf16 to vector<16x128xbf16>
    %160 = arith.mulf %159, %158 : vector<16x128xbf16>
    %161 = arith.maximumf %158, %160 : vector<16x128xbf16>
    %c0_113 = arith.constant 0 : index
    %c0_114 = arith.constant 0 : index
    %162 = vector.load %arg27[%c0_113, %c0_114] : memref<128x64xbf16, #tpu.memory_space<vmem>>, vector<128x64xbf16>
    %cst_115 = arith.constant dense<0.000000e+00> : vector<16x64xf32>
    %163 = tpu.matmul %161, %162, %cst_115 {dimension_numbers = #tpu.dot_dimension_numbers<[1], [0], [0], [1], [0, 0, 1, 1], [], []>} : vector<16x128xbf16>, vector<128x64xbf16>, vector<16x64xf32> -> vector<16x64xf32>
    %164 = arith.truncf %163 : vector<16x64xf32> to vector<16x64xbf16>
    %c0_116 = arith.constant 0 : index
    %c0_117 = arith.constant 0 : index
    %165 = vector.load %arg28[%c0_116, %c0_117] : memref<1x64xf32, #tpu.memory_space<vmem>>, vector<1x64xf32>
    %166 = arith.truncf %165 : vector<1x64xf32> to vector<1x64xbf16>
    %167 = vector.broadcast %166 : vector<1x64xbf16> to vector<16x64xbf16>
    %168 = arith.addf %164, %167 : vector<16x64xbf16>
    %cst_118 = arith.constant 1.000980e-02 : bf16
    %169 = vector.broadcast %cst_118 : bf16 to vector<16x64xbf16>
    %170 = arith.mulf %169, %168 : vector<16x64xbf16>
    %171 = arith.maximumf %168, %170 : vector<16x64xbf16>
    %c0_119 = arith.constant 0 : index
    %c0_120 = arith.constant 0 : index
    %172 = vector.load %arg29[%c0_119, %c0_120] : memref<79x64xbf16, #tpu.memory_space<vmem>>, vector<79x64xbf16>
    %cst_121 = arith.constant dense<0.000000e+00> : vector<16x64xf32>
    %173 = tpu.matmul %140, %172, %cst_121 {dimension_numbers = #tpu.dot_dimension_numbers<[1], [0], [0], [1], [0, 0, 1, 1], [], []>} : vector<16x79xbf16>, vector<79x64xbf16>, vector<16x64xf32> -> vector<16x64xf32>
    %c0_122 = arith.constant 0 : index
    %c0_123 = arith.constant 0 : index
    %174 = vector.load %arg30[%c0_122, %c0_123] : memref<64x64xbf16, #tpu.memory_space<vmem>>, vector<64x64xbf16>
    %cst_124 = arith.constant dense<0.000000e+00> : vector<16x64xf32>
    %175 = tpu.matmul %171, %174, %cst_124 {dimension_numbers = #tpu.dot_dimension_numbers<[1], [0], [0], [1], [0, 0, 1, 1], [], []>} : vector<16x64xbf16>, vector<64x64xbf16>, vector<16x64xf32> -> vector<16x64xf32>
    %176 = arith.addf %173, %175 : vector<16x64xf32>
    %c0_125 = arith.constant 0 : index
    %c0_126 = arith.constant 0 : index
    %177 = vector.load %arg31[%c0_125, %c0_126] : memref<1x64xf32, #tpu.memory_space<vmem>>, vector<1x64xf32>
    %178 = vector.broadcast %177 : vector<1x64xf32> to vector<16x64xf32>
    %179 = arith.addf %176, %178 : vector<16x64xf32>
    %cst_127 = arith.constant 0.00999999977 : f32
    %180 = vector.broadcast %cst_127 : f32 to vector<16x64xf32>
    %181 = arith.mulf %180, %179 : vector<16x64xf32>
    %182 = arith.maximumf %179, %181 : vector<16x64xf32>
    %183 = arith.truncf %182 : vector<16x64xf32> to vector<16x64xbf16>
    %c0_128 = arith.constant 0 : index
    %c0_129 = arith.constant 0 : index
    %184 = vector.load %arg32[%c0_128, %c0_129] : memref<64x16xbf16, #tpu.memory_space<vmem>>, vector<64x16xbf16>
    %cst_130 = arith.constant dense<0.000000e+00> : vector<16x16xf32>
    %185 = tpu.matmul %183, %184, %cst_130 {dimension_numbers = #tpu.dot_dimension_numbers<[1], [0], [0], [1], [0, 0, 1, 1], [], []>} : vector<16x64xbf16>, vector<64x16xbf16>, vector<16x16xf32> -> vector<16x16xf32>
    %c0_131 = arith.constant 0 : index
    %c0_132 = arith.constant 0 : index
    %186 = vector.load %arg33[%c0_131, %c0_132] : memref<1x16xf32, #tpu.memory_space<vmem>>, vector<1x16xf32>
    %187 = vector.broadcast %186 : vector<1x16xf32> to vector<16x16xf32>
    %188 = arith.addf %185, %187 : vector<16x16xf32>
    %cst_133 = arith.constant 0.00999999977 : f32
    %189 = vector.broadcast %cst_133 : f32 to vector<16x16xf32>
    %190 = arith.mulf %189, %188 : vector<16x16xf32>
    %191 = arith.maximumf %188, %190 : vector<16x16xf32>
    %c0_134 = arith.constant 0 : index
    %c0_135 = arith.constant 0 : index
    %192 = vector.load %arg34[%c0_134, %c0_135] : memref<16x1xf32, #tpu.memory_space<vmem>>, vector<16x1xf32>
    %cst_136 = arith.constant dense<0.000000e+00> : vector<16x1xf32>
    %193 = tpu.matmul %191, %192, %cst_136 {dimension_numbers = #tpu.dot_dimension_numbers<[1], [0], [0], [1], [0, 0, 1, 1], [], []>} : vector<16x16xf32>, vector<16x1xf32>, vector<16x1xf32> -> vector<16x1xf32>
    %c0_137 = arith.constant 0 : index
    %c0_138 = arith.constant 0 : index
    %194 = vector.load %arg35[%c0_137, %c0_138] : memref<1x1xf32, #tpu.memory_space<vmem>>, vector<1x1xf32>
    %195 = vector.broadcast %194 : vector<1x1xf32> to vector<16x1xf32>
    %196 = arith.addf %193, %195 : vector<16x1xf32>
    %cst_139 = arith.constant 0.00999999977 : f32
    %197 = vector.broadcast %cst_139 : f32 to vector<16x1xf32>
    %198 = arith.mulf %197, %196 : vector<16x1xf32>
    %199 = arith.maximumf %196, %198 : vector<16x1xf32>
    %c0_140 = arith.constant 0 : index
    %c0_141 = arith.constant 0 : index
    %200 = vector.load %arg36[%c0_140, %c0_141] : memref<16x1xf32, #tpu.memory_space<vmem>>, vector<16x1xf32>
    tpu.vector_store %arg36[%c0_140, %c0_141], %199 {strides = array<i32>} : memref<16x1xf32, #tpu.memory_space<vmem>>, vector<16x1xf32>,
    return
  }
  func.func @transform_0(%arg0: i32) -> (i32, i32) {
    %c0_i32 = arith.constant 0 : i32
    %c0_i32_0 = arith.constant 0 : i32
    return %arg0, %c0_i32 : i32, i32
  }
  func.func @transform_1(%arg0: i32) -> (i32, i32) {
    %c0_i32 = arith.constant 0 : i32
    %c0_i32_0 = arith.constant 0 : i32
    return %arg0, %c0_i32 : i32, i32
  }
  func.func @transform_2(%arg0: i32) -> (i32, i32) {
    %c0_i32 = arith.constant 0 : i32
    %c0_i32_0 = arith.constant 0 : i32
    return %arg0, %c0_i32 : i32, i32
  }
  func.func @transform_3(%arg0: i32) -> (i32, i32) {
    %c0_i32 = arith.constant 0 : i32
    %c0_i32_0 = arith.constant 0 : i32
    return %arg0, %c0_i32 : i32, i32
  }
  func.func @transform_4(%arg0: i32) -> (i32, i32) {
    %c0_i32 = arith.constant 0 : i32
    %c0_i32_0 = arith.constant 0 : i32
    %c0_i32_1 = arith.constant 0 : i32
    return %c0_i32, %c0_i32_0 : i32, i32
  }
  func.func @transform_5(%arg0: i32) -> (i32, i32) {
    %c0_i32 = arith.constant 0 : i32
    %c0_i32_0 = arith.constant 0 : i32
    %c0_i32_1 = arith.constant 0 : i32
    return %c0_i32, %c0_i32_0 : i32, i32
  }
  func.func @transform_6(%arg0: i32) -> (i32, i32) {
    %c0_i32 = arith.constant 0 : i32
    %c0_i32_0 = arith.constant 0 : i32
    %c0_i32_1 = arith.constant 0 : i32
    return %c0_i32, %c0_i32_0 : i32, i32
  }
  func.func @transform_7(%arg0: i32) -> (i32, i32) {
    %c0_i32 = arith.constant 0 : i32
    %c0_i32_0 = arith.constant 0 : i32
    %c0_i32_1 = arith.constant 0 : i32
    return %c0_i32, %c0_i32_0 : i32, i32
  }
  func.func @transform_8(%arg0: i32) -> (i32, i32) {
    %c0_i32 = arith.constant 0 : i32
    %c0_i32_0 = arith.constant 0 : i32
    %c0_i32_1 = arith.constant 0 : i32
    return %c0_i32, %c0_i32_0 : i32, i32
  }
  func.func @transform_9(%arg0: i32) -> (i32, i32) {
    %c0_i32 = arith.constant 0 : i32
    %c0_i32_0 = arith.constant 0 : i32
    %c0_i32_1 = arith.constant 0 : i32
    return %c0_i32, %c0_i32_0 : i32, i32
  }
  func.func @transform_10(%arg0: i32) -> (i32, i32) {
    %c0_i32 = arith.constant 0 : i32
    %c0_i32_0 = arith.constant 0 : i32
    %c0_i32_1 = arith.constant 0 : i32
    return %c0_i32, %c0_i32_0 : i32, i32
  }
  func.func @transform_11(%arg0: i32) -> (i32, i32) {
    %c0_i32 = arith.constant 0 : i32
    %c0_i32_0 = arith.constant 0 : i32
    %c0_i32_1 = arith.constant 0 : i32
    return %c0_i32, %c0_i32_0 : i32, i32
  }
  func.func @transform_12(%arg0: i32) -> (i32, i32) {
    %c0_i32 = arith.constant 0 : i32
    %c0_i32_0 = arith.constant 0 : i32
    %c0_i32_1 = arith.constant 0 : i32
    return %c0_i32, %c0_i32_0 : i32, i32
  }
  func.func @transform_13(%arg0: i32) -> (i32, i32) {
    %c0_i32 = arith.constant 0 : i32
    %c0_i32_0 = arith.constant 0 : i32
    %c0_i32_1 = arith.constant 0 : i32
    return %c0_i32, %c0_i32_0 : i32, i32
  }
  func.func @transform_14(%arg0: i32) -> (i32, i32) {
    %c0_i32 = arith.constant 0 : i32
    %c0_i32_0 = arith.constant 0 : i32
    %c0_i32_1 = arith.constant 0 : i32
    return %c0_i32, %c0_i32_0 : i32, i32
  }
  func.func @transform_15(%arg0: i32) -> (i32, i32) {
    %c0_i32 = arith.constant 0 : i32
    %c0_i32_0 = arith.constant 0 : i32
    %c0_i32_1 = arith.constant 0 : i32
    return %c0_i32, %c0_i32_0 : i32, i32
  }
  func.func @transform_16(%arg0: i32) -> (i32, i32) {
    %c0_i32 = arith.constant 0 : i32
    %c0_i32_0 = arith.constant 0 : i32
    %c0_i32_1 = arith.constant 0 : i32
    return %c0_i32, %c0_i32_0 : i32, i32
  }
  func.func @transform_17(%arg0: i32) -> (i32, i32) {
    %c0_i32 = arith.constant 0 : i32
    %c0_i32_0 = arith.constant 0 : i32
    %c0_i32_1 = arith.constant 0 : i32
    return %c0_i32, %c0_i32_0 : i32, i32
  }
  func.func @transform_18(%arg0: i32) -> (i32, i32) {
    %c0_i32 = arith.constant 0 : i32
    %c0_i32_0 = arith.constant 0 : i32
    %c0_i32_1 = arith.constant 0 : i32
    return %c0_i32, %c0_i32_0 : i32, i32
  }
  func.func @transform_19(%arg0: i32) -> (i32, i32) {
    %c0_i32 = arith.constant 0 : i32
    %c0_i32_0 = arith.constant 0 : i32
    %c0_i32_1 = arith.constant 0 : i32
    return %c0_i32, %c0_i32_0 : i32, i32
  }
  func.func @transform_20(%arg0: i32) -> (i32, i32, i32) {
    %c0_i32 = arith.constant 0 : i32
    %c0_i32_0 = arith.constant 0 : i32
    %c0_i32_1 = arith.constant 0 : i32
    %c0_i32_2 = arith.constant 0 : i32
    return %c0_i32, %c0_i32_0, %c0_i32_1 : i32, i32, i32
  }
  func.func @transform_21(%arg0: i32) -> (i32, i32) {
    %c0_i32 = arith.constant 0 : i32
    %c0_i32_0 = arith.constant 0 : i32
    %c0_i32_1 = arith.constant 0 : i32
    return %c0_i32, %c0_i32_0 : i32, i32
  }
  func.func @transform_22(%arg0: i32) -> (i32, i32) {
    %c0_i32 = arith.constant 0 : i32
    %c0_i32_0 = arith.constant 0 : i32
    %c0_i32_1 = arith.constant 0 : i32
    return %c0_i32, %c0_i32_0 : i32, i32
  }
  func.func @transform_23(%arg0: i32) -> (i32, i32) {
    %c0_i32 = arith.constant 0 : i32
    %c0_i32_0 = arith.constant 0 : i32
    %c0_i32_1 = arith.constant 0 : i32
    return %c0_i32, %c0_i32_0 : i32, i32
  }
  func.func @transform_24(%arg0: i32) -> (i32, i32) {
    %c0_i32 = arith.constant 0 : i32
    %c0_i32_0 = arith.constant 0 : i32
    %c0_i32_1 = arith.constant 0 : i32
    return %c0_i32, %c0_i32_0 : i32, i32
  }
  func.func @transform_25(%arg0: i32) -> (i32, i32) {
    %c0_i32 = arith.constant 0 : i32
    %c0_i32_0 = arith.constant 0 : i32
    %c0_i32_1 = arith.constant 0 : i32
    return %c0_i32, %c0_i32_0 : i32, i32
  }
  func.func @transform_26(%arg0: i32) -> (i32, i32) {
    %c0_i32 = arith.constant 0 : i32
    %c0_i32_0 = arith.constant 0 : i32
    %c0_i32_1 = arith.constant 0 : i32
    return %c0_i32, %c0_i32_0 : i32, i32
  }
  func.func @transform_27(%arg0: i32) -> (i32, i32) {
    %c0_i32 = arith.constant 0 : i32
    %c0_i32_0 = arith.constant 0 : i32
    %c0_i32_1 = arith.constant 0 : i32
    return %c0_i32, %c0_i32_0 : i32, i32
  }
  func.func @transform_28(%arg0: i32) -> (i32, i32) {
    %c0_i32 = arith.constant 0 : i32
    %c0_i32_0 = arith.constant 0 : i32
    %c0_i32_1 = arith.constant 0 : i32
    return %c0_i32, %c0_i32_0 : i32, i32
  }
  func.func @transform_29(%arg0: i32) -> (i32, i32) {
    %c0_i32 = arith.constant 0 : i32
    %c0_i32_0 = arith.constant 0 : i32
    %c0_i32_1 = arith.constant 0 : i32
    return %c0_i32, %c0_i32_0 : i32, i32
  }
  func.func @transform_30(%arg0: i32) -> (i32, i32) {
    %c0_i32 = arith.constant 0 : i32
    %c0_i32_0 = arith.constant 0 : i32
    %c0_i32_1 = arith.constant 0 : i32
    return %c0_i32, %c0_i32_0 : i32, i32
  }
  func.func @transform_31(%arg0: i32) -> (i32, i32) {
    %c0_i32 = arith.constant 0 : i32
    %c0_i32_0 = arith.constant 0 : i32
    %c0_i32_1 = arith.constant 0 : i32
    return %c0_i32, %c0_i32_0 : i32, i32
  }
  func.func @transform_32(%arg0: i32) -> (i32, i32) {
    %c0_i32 = arith.constant 0 : i32
    %c0_i32_0 = arith.constant 0 : i32
    %c0_i32_1 = arith.constant 0 : i32
    return %c0_i32, %c0_i32_0 : i32, i32
  }
  func.func @transform_33(%arg0: i32) -> (i32, i32) {
    %c0_i32 = arith.constant 0 : i32
    %c0_i32_0 = arith.constant 0 : i32
    %c0_i32_1 = arith.constant 0 : i32
    return %c0_i32, %c0_i32_0 : i32, i32
  }
  func.func @transform_34(%arg0: i32) -> (i32, i32) {
    %c0_i32 = arith.constant 0 : i32
    %c0_i32_0 = arith.constant 0 : i32
    %c0_i32_1 = arith.constant 0 : i32
    return %c0_i32, %c0_i32_0 : i32, i32
  }
  func.func @transform_35(%arg0: i32) -> (i32, i32) {
    %c0_i32 = arith.constant 0 : i32
    %c0_i32_0 = arith.constant 0 : i32
    return %arg0, %c0_i32 : i32, i32
  }
}

</mosaic_0001>

<llo_original>
// kernel: tpu_custom_call.1
$region0: #{tpu_custom_call.1}
  #allocation0 [shape = 'u32[]', space=smem, size = 0x4, offset = 0x4, fixed_abs, tag = 'smem constant byte address 0x4 - core index']
  #allocation1 [shape = 'u32[144,128]{1,0:T(1,128)}', space=vmem, size = 0x12000, scoped, tag = 'internal scratch']
  #allocation2 [shape = 'f32[128,79]{1,0:T(8,128)}', space=vmem, size = 0x10000, scoped, tag = 'scratch operand']
  #allocation3 [shape = 'f32[1,1]{1,0:T(1,128)S(1)}', space=vmem, size = 0x200, scoped, tag = 'scoped memory for tpu_custom_call.1']
  %s0 = inlined_call_operand.smem [shape: u32[36], index: -1, kind: input, shape index: {}]
  %s1 = sld [smem:[%s0]]
  %s2 = scalar_lea.smem %s0, 1
  %s3 = sld [smem:[%s2]]
  %s4 = scalar_lea.smem %s0, 2
  %s5 = sld [smem:[%s4]]
  %s6 = scalar_lea.smem %s0, 3
  %s7 = sld [smem:[%s6]]
  %s8 = scalar_lea.smem %s0, 4
  %s9 = sld [smem:[%s8]]
  %s10 = scalar_lea.smem %s0, 5
  %s11 = sld [smem:[%s10]]
  %s12 = scalar_lea.smem %s0, 6
  %s13 = sld [smem:[%s12]]
  %s14 = scalar_lea.smem %s0, 7
  %s15 = sld [smem:[%s14]]
  %s16 = scalar_lea.smem %s0, 8
  %s17 = sld [smem:[%s16]]
  %s18 = scalar_lea.smem %s0, 9
  %s19 = sld [smem:[%s18]]
  %s20 = scalar_lea.smem %s0, 10
  %s21 = sld [smem:[%s20]]
  %s22 = scalar_lea.smem %s0, 11
  %s23 = sld [smem:[%s22]]
  %s24 = scalar_lea.smem %s0, 12
  %s25 = sld [smem:[%s24]]
  %s26 = scalar_lea.smem %s0, 13
  %s27 = sld [smem:[%s26]]
  %s28 = scalar_lea.smem %s0, 14
  %s29 = sld [smem:[%s28]]
  %s30 = scalar_lea.smem %s0, 15
  %s31 = sld [smem:[%s30]]
  %s32 = scalar_lea.smem %s0, 16
  %s33 = sld [smem:[%s32]]
  %s34 = scalar_lea.smem %s0, 17
  %s35 = sld [smem:[%s34]]
  %s36 = scalar_lea.smem %s0, 18
  %s37 = sld [smem:[%s36]]
  %s38 = scalar_lea.smem %s0, 19
  %s39 = sld [smem:[%s38]]
  %s40 = scalar_lea.smem %s0, 20
  %s41 = sld [smem:[%s40]]
  %s42 = scalar_lea.smem %s0, 21
  %s43 = sld [smem:[%s42]]
  %s44 = scalar_lea.smem %s0, 22
  %s45 = sld [smem:[%s44]]
  %s46 = scalar_lea.smem %s0, 23
  %s47 = sld [smem:[%s46]]
  %s48 = scalar_lea.smem %s0, 24
  %s49 = sld [smem:[%s48]]
  %s50 = scalar_lea.smem %s0, 25
  %s51 = sld [smem:[%s50]]
  %s52 = scalar_lea.smem %s0, 26
  %s53 = sld [smem:[%s52]]
  %s54 = scalar_lea.smem %s0, 27
  %s55 = sld [smem:[%s54]]
  %s56 = scalar_lea.smem %s0, 28
  %s57 = sld [smem:[%s56]]
  %s58 = scalar_lea.smem %s0, 29
  %s59 = sld [smem:[%s58]]
  %s60 = scalar_lea.smem %s0, 30
  %s61 = sld [smem:[%s60]]
  %s62 = scalar_lea.smem %s0, 31
  %s63 = sld [smem:[%s62]]
  %s64 = scalar_lea.smem %s0, 32
  %s65 = sld [smem:[%s64]]
  %s66 = scalar_lea.smem %s0, 33
  %s67 = sld [smem:[%s66]]
  %s68 = scalar_lea.smem %s0, 34
  %s69 = sld [smem:[%s68]]
  %s70 = scalar_lea.smem %s0, 35
  %s71 = sld [smem:[%s70]]
  %s72 = sld [smem:[#allocation0]]
  $region309: #{tpu_custom_call.1} parent=0
    _
  %s74 = ssub.s32 1, %s72
  %s75 = scalar_select 0, %s74, %s72
  %v76 = vstv %s69
  %77 = vst [vmem:[#allocation3] sm:$0x1] %v76
  $region1: #{tpu_custom_call.1} parent=0
    #allocation4 [shape = 'u8[327680]{0}', space=vmem, size = 0x50000, scoped, tag = 'input window, operand 0']
    #allocation5 [shape = 's32[2]{0}', space=sflag, size = 0x8, scoped, tag = 'scoped memory for tpu_custom_call.1']
    #allocation6 [shape = 's32[2]{0}', space=sflag, size = 0x8, scoped, tag = 'scoped memory for tpu_custom_call.1']
    #allocation7 [shape = 'u8[327680]{0}', space=vmem, size = 0x50000, scoped, tag = 'input window, operand 1']
    #allocation8 [shape = 's32[2]{0}', space=sflag, size = 0x8, scoped, tag = 'scoped memory for tpu_custom_call.1']
    #allocation9 [shape = 'u8[131072]{0}', space=vmem, size = 0x20000, scoped, tag = 'input window, operand 2']
    #allocation10 [shape = 'u8[32768]{0}', space=vmem, size = 0x8000, scoped, tag = 'input window, operand 3']
    #allocation11 [shape = 's32[2]{0}', space=sflag, size = 0x8, scoped, tag = 'scoped memory for tpu_custom_call.1']
    #allocation12 [shape = 'u8[622592]{0}', space=vmem, size = 0x98000, scoped, tag = 'input window, operand 4, single buffered']
    #allocation13 [shape = 'u8[2048]{0}', space=vmem, size = 0x800, scoped, tag = 'input window, operand 5, single buffered']
    #allocation14 [shape = 's32[1]{0}', space=sflag, size = 0x4, scoped, tag = 'scoped memory for tpu_custom_call.1']
    #allocation15 [shape = 'u8[131072]{0}', space=vmem, size = 0x20000, scoped, tag = 'input window, operand 6, single buffered']
    #allocation16 [shape = 'u8[512]{0}', space=vmem, size = 0x400, scoped, tag = 'input window, operand 7, single buffered']
    #allocation17 [shape = 's32[1]{0}', space=sflag, size = 0x4, scoped, tag = 'scoped memory for tpu_custom_call.1']
    #allocation18 [shape = 'u8[32768]{0}', space=vmem, size = 0x8000, scoped, tag = 'input window, operand 8, single buffered']
    #allocation19 [shape = 'u8[512]{0}', space=vmem, size = 0x400, scoped, tag = 'input window, operand 9, single buffered']
    #allocation20 [shape = 's32[1]{0}', space=sflag, size = 0x4, scoped, tag = 'scoped memory for tpu_custom_call.1']
    #allocation21 [shape = 'u8[622592]{0}', space=vmem, size = 0x98000, scoped, tag = 'input window, operand 10, single buffered']
    #allocation22 [shape = 'u8[2048]{0}', space=vmem, size = 0x800, scoped, tag = 'input window, operand 11, single buffered']
    #allocation23 [shape = 's32[1]{0}', space=sflag, size = 0x4, scoped, tag = 'scoped memory for tpu_custom_call.1']
    #allocation24 [shape = 'u8[131072]{0}', space=vmem, size = 0x20000, scoped, tag = 'input window, operand 12, single buffered']
    #allocation25 [shape = 'u8[512]{0}', space=vmem, size = 0x400, scoped, tag = 'input window, operand 13, single buffered']
    #allocation26 [shape = 's32[1]{0}', space=sflag, size = 0x4, scoped, tag = 'scoped memory for tpu_custom_call.1']
    #allocation27 [shape = 'u8[32768]{0}', space=vmem, size = 0x8000, scoped, tag = 'input window, operand 14, single buffered']
    #allocation28 [shape = 'u8[512]{0}', space=vmem, size = 0x400, scoped, tag = 'input window, operand 15, single buffered']
    #allocation29 [shape = 's32[1]{0}', space=sflag, size = 0x4, scoped, tag = 'scoped memory for tpu_custom_call.1']
    #allocation30 [shape = 'u8[8192]{0}', space=vmem, size = 0x2000, scoped, tag = 'input window, operand 16, single buffered']
    #allocation31 [shape = 'u8[512]{0}', space=vmem, size = 0x400, scoped, tag = 'input window, operand 17, single buffered']
    #allocation32 [shape = 's32[1]{0}', space=sflag, size = 0x4, scoped, tag = 'scoped memory for tpu_custom_call.1']
    #allocation33 [shape = 'u8[4096]{0}', space=vmem, size = 0x1000, scoped, tag = 'input window, operand 18, single buffered']
    #allocation34 [shape = 'u8[512]{0}', space=vmem, size = 0x400, scoped, tag = 'input window, operand 19, single buffered']
    #allocation35 [shape = 's32[1]{0}', space=sflag, size = 0x4, scoped, tag = 'scoped memory for tpu_custom_call.1']
    #allocation36 [shape = 'u8[163840]{0}', space=vmem, size = 0x28000, scoped, tag = 'input window, operand 20, single buffered']
    #allocation37 [shape = 'u8[512]{0}', space=vmem, size = 0x400, scoped, tag = 'input window, operand 21, single buffered']
    #allocation38 [shape = 's32[1]{0}', space=sflag, size = 0x4, scoped, tag = 'scoped memory for tpu_custom_call.1']
    #allocation39 [shape = 'u8[524288]{0}', space=vmem, size = 0x80000, scoped, tag = 'input window, operand 22, single buffered']
    #allocation40 [shape = 'u8[2048]{0}', space=vmem, size = 0x800, scoped, tag = 'input window, operand 23, single buffered']
    #allocation41 [shape = 's32[1]{0}', space=sflag, size = 0x4, scoped, tag = 'scoped memory for tpu_custom_call.1']
    #allocation42 [shape = 'u8[131072]{0}', space=vmem, size = 0x20000, scoped, tag = 'input window, operand 24, single buffered']
    #allocation43 [shape = 'u8[512]{0}', space=vmem, size = 0x400, scoped, tag = 'input window, operand 25, single buffered']
    #allocation44 [shape = 's32[1]{0}', space=sflag, size = 0x4, scoped, tag = 'scoped memory for tpu_custom_call.1']
    #allocation45 [shape = 'u8[32768]{0}', space=vmem, size = 0x8000, scoped, tag = 'input window, operand 26, single buffered']
    #allocation46 [shape = 'u8[512]{0}', space=vmem, size = 0x400, scoped, tag = 'input window, operand 27, single buffered']
    #allocation47 [shape = 's32[1]{0}', space=sflag, size = 0x4, scoped, tag = 'scoped memory for tpu_custom_call.1']
    #allocation48 [shape = 'u8[20480]{0}', space=vmem, size = 0x5000, scoped, tag = 'input window, operand 28, single buffered']
    #allocation49 [shape = 'u8[16384]{0}', space=vmem, size = 0x4000, scoped, tag = 'input window, operand 29, single buffered']
    #allocation50 [shape = 's32[1]{0}', space=sflag, size = 0x4, scoped, tag = 'scoped memory for tpu_custom_call.1']
    #allocation51 [shape = 'u8[512]{0}', space=vmem, size = 0x400, scoped, tag = 'input window, operand 30, single buffered']
    #allocation52 [shape = 'u8[16384]{0}', space=vmem, size = 0x4000, scoped, tag = 'input window, operand 31, single buffered']
    #allocation53 [shape = 's32[1]{0}', space=sflag, size = 0x4, scoped, tag = 'scoped memory for tpu_custom_call.1']
    #allocation54 [shape = 'u8[512]{0}', space=vmem, size = 0x400, scoped, tag = 'input window, operand 32, single buffered']
    #allocation55 [shape = 'u8[8192]{0}', space=vmem, size = 0x2000, scoped, tag = 'input window, operand 33, single buffered']
    #allocation56 [shape = 's32[1]{0}', space=sflag, size = 0x4, scoped, tag = 'scoped memory for tpu_custom_call.1']
    #allocation57 [shape = 'u8[16384]{0}', space=vmem, size = 0x4000, scoped, tag = 'output window, operand 0']
    %78 = vsyncpa [#allocation5], 0
    %s79 = scalar_lea.sflag [#allocation5], 1
    %80 = vsyncpa %s79, 0
    %81 = vsyncpa [#allocation8], 0
    %s82 = scalar_lea.sflag [#allocation8], 1
    %83 = vsyncpa %s82, 0
    %84 = vsyncpa [#allocation11], 0
    %s85 = scalar_lea.sflag [#allocation11], 1
    %86 = vsyncpa %s85, 0
    %87 = vsyncpa [#allocation14], 0
    %88 = vsyncpa [#allocation17], 0
    %89 = vsyncpa [#allocation20], 0
    %90 = vsyncpa [#allocation23], 0
    %91 = vsyncpa [#allocation26], 0
    %92 = vsyncpa [#allocation29], 0
    %93 = vsyncpa [#allocation32], 0
    %94 = vsyncpa [#allocation35], 0
    %95 = vsyncpa [#allocation38], 0
    %96 = vsyncpa [#allocation41], 0
    %97 = vsyncpa [#allocation44], 0
    %98 = vsyncpa [#allocation47], 0
    %99 = vsyncpa [#allocation50], 0
    %100 = vsyncpa [#allocation53], 0
    %101 = vsyncpa [#allocation56], 0
    %102 = vsyncpa [#allocation6], 0
    %s103 = scalar_lea.sflag [#allocation6], 1
    %104 = vsyncpa %s103, 0
    loop: start=0, step=1, limit=4
    $region2: #{tpu_custom_call.1} parent=1 // loop_pre_header
      _
    $region3: #{tpu_custom_call.1} parent=1 // loop_header
      %s106 = sphi 0, %s110
      %p107 = scmp.ge.s32.totalorder %s106, 4
      %s116 = sphi 0, %s118
      %s119 = sphi 0, %s116
      %s120 = sphi 0, %s119
      %s136 = sphi 0, %s120
      %s142 = sphi 0, %s144
      %s145 = sphi 0, %s142
      %s146 = sphi 0, %s145
      %s162 = sphi 0, %s146
      %s168 = sphi 0, %s170
      %s171 = sphi 0, %s168
      %s172 = sphi 0, %s171
      %s188 = sphi 0, %s172
      %s194 = sphi 0, %s196
      %s197 = sphi 0, %s194
      %s198 = sphi 0, %s197
      %s214 = sphi 0, %s198
      %s218 = sphi 0, %s218
      %s220 = sphi 0, %s218
      %s221 = sphi 0, %s220
      %s235 = sphi 0, %s221
      %s239 = sphi 0, %s239
      %s241 = sphi 0, %s239
      %s242 = sphi 0, %s241
      %s256 = sphi 0, %s242
      %s260 = sphi 0, %s260
      %s262 = sphi 0, %s260
      %s263 = sphi 0, %s262
      %s277 = sphi 0, %s263
      %s281 = sphi 0, %s281
      %s283 = sphi 0, %s281
      %s284 = sphi 0, %s283
      %s298 = sphi 0, %s284
      %s302 = sphi 0, %s302
      %s304 = sphi 0, %s302
      %s305 = sphi 0, %s304
      %s319 = sphi 0, %s305
      %s323 = sphi 0, %s323
      %s325 = sphi 0, %s323
      %s326 = sphi 0, %s325
      %s340 = sphi 0, %s326
      %s344 = sphi 0, %s344
      %s346 = sphi 0, %s344
      %s347 = sphi 0, %s346
      %s361 = sphi 0, %s347
      %s365 = sphi 0, %s365
      %s367 = sphi 0, %s365
      %s368 = sphi 0, %s367
      %s382 = sphi 0, %s368
      %s386 = sphi 0, %s386
      %s388 = sphi 0, %s386
      %s389 = sphi 0, %s388
      %s403 = sphi 0, %s389
      %s407 = sphi 0, %s407
      %s409 = sphi 0, %s407
      %s410 = sphi 0, %s409
      %s424 = sphi 0, %s410
      %s428 = sphi 0, %s428
      %s430 = sphi 0, %s428
      %s431 = sphi 0, %s430
      %s445 = sphi 0, %s431
      %s449 = sphi 0, %s449
      %s451 = sphi 0, %s449
      %s452 = sphi 0, %s451
      %s466 = sphi 0, %s452
      %s470 = sphi 0, %s470
      %s472 = sphi 0, %s470
      %s473 = sphi 0, %s472
      %s487 = sphi 0, %s473
      %s491 = sphi 0, %s491
      %s493 = sphi 0, %s491
      %s494 = sphi 0, %s493
      %s508 = sphi 0, %s494
      %s512 = sphi 0, %s512
      %s514 = sphi 0, %s512
      %s515 = sphi 0, %s514
      %s529 = sphi 0, %s515
      %s533 = sphi 0, %s533
      %s535 = sphi 0, %s533
      %s536 = sphi 0, %s535
      %s550 = sphi 0, %s536
      %s554 = sphi 0, %s554
      %s556 = sphi 0, %s554
      %s557 = sphi 0, %s556
      %s571 = sphi 0, %s557
      %s575 = sphi 0, %s575
      %s577 = sphi 0, %s575
      %s578 = sphi 0, %s577
      %s592 = sphi 0, %s578
      %s596 = sphi 0, %s596
      %s598 = sphi 0, %s596
      %s599 = sphi 0, %s598
      %s613 = sphi 0, %s599
      %s617 = sphi 0, %s617
      %s619 = sphi 0, %s617
      %s620 = sphi 0, %s619
      %s634 = sphi 0, %s620
      %s638 = sphi 0, %s638
      %s640 = sphi 0, %s638
      %s641 = sphi 0, %s640
      %s655 = sphi 0, %s641
      %s659 = sphi 0, %s659
      %s661 = sphi 0, %s659
      %s662 = sphi 0, %s661
      %s676 = sphi 0, %s662
      %s680 = sphi 0, %s680
      %s682 = sphi 0, %s680
      %s683 = sphi 0, %s682
      %s697 = sphi 0, %s683
      %s701 = sphi 0, %s701
      %s703 = sphi 0, %s701
      %s704 = sphi 0, %s703
      %s718 = sphi 0, %s704
      %s722 = sphi 0, %s722
      %s724 = sphi 0, %s722
      %s725 = sphi 0, %s724
      %s739 = sphi 0, %s725
      %s743 = sphi 0, %s743
      %s745 = sphi 0, %s743
      %s746 = sphi 0, %s745
      %s760 = sphi 0, %s746
      %s764 = sphi 0, %s764
      %s766 = sphi 0, %s764
      %s767 = sphi 0, %s766
      %s781 = sphi 0, %s767
      %s785 = sphi 0, %s785
      %s787 = sphi 0, %s785
      %s788 = sphi 0, %s787
      %s802 = sphi 0, %s788
      %s806 = sphi 0, %s806
      %s808 = sphi 0, %s806
      %s809 = sphi 0, %s808
      %s823 = sphi 0, %s809
      %s827 = sphi 0, %s827
      %s829 = sphi 0, %s827
      %s830 = sphi 0, %s829
      %s844 = sphi 0, %s830
      %s848 = sphi 0, %s848
      %s850 = sphi 0, %s848
      %s851 = sphi 0, %s850
      %s865 = sphi 0, %s851
      %s871 = sphi 0, %s873
      %s874 = sphi 0, %s871
      %s875 = sphi 0, %s874
      %s891 = sphi 0, %s875
    $region4: #{tpu_custom_call.1} parent=1 // loop_header_branch
      %109 = sbr.rel (%p107) target = $region8
    $region5: #{tpu_custom_call.1} parent=1 // loop_body
      %s111 = ssub.s32 %s106, 1
      %s112 = ssub.s32 %s106, 2
      %s113 = sadd.s32 %s106, 1
      %s114 = ssub.s32 %s106, %s113
      %p115 = scmp.eq.s32.totalorder %s114, 0
      %s117 = sadd.s32 %s116, 1
      %s118 = scalar_select %p115, %s116, %s117
      %p121 = pneg %p115
      %p122 = scmp.eq.s32.totalorder %s106, 1
      %p123 = por %p121, %p122
      %p124 = scmp.ne.s32.totalorder %s116, %s119
      %p125 = scmp.eq.s32.totalorder %s106, 0
      %p126 = por %p124, %p125
      %p127 = scmp.ne.s32.totalorder %s116, %s119
      %p128 = scmp.eq.s32.totalorder %s111, 1
      %p129 = por %p127, %p128
      %p130 = scmp.ne.s32.totalorder %s119, %s120
      %p131 = scmp.eq.s32.totalorder %s111, 0
      %p132 = por %p130, %p131
      %p133 = scmp.ne.s32.totalorder %s119, %s120
      %p134 = scmp.eq.s32.totalorder %s112, 1
      %p135 = por %p133, %p134
      %p137 = scmp.ne.s32.totalorder %s120, %s136
      %p138 = scmp.eq.s32.totalorder %s112, 0
      %p139 = por %p137, %p138
      %s140 = ssub.s32 %s106, %s113
      %p141 = scmp.eq.s32.totalorder %s140, 0
      %s143 = sadd.s32 %s142, 1
      %s144 = scalar_select %p141, %s142, %s143
      %p147 = pneg %p141
      %p148 = scmp.eq.s32.totalorder %s106, 1
      %p149 = por %p147, %p148
      %p150 = scmp.ne.s32.totalorder %s142, %s145
      %p151 = scmp.eq.s32.totalorder %s106, 0
      %p152 = por %p150, %p151
      %p153 = scmp.ne.s32.totalorder %s142, %s145
      %p154 = scmp.eq.s32.totalorder %s111, 1
      %p155 = por %p153, %p154
      %p156 = scmp.ne.s32.totalorder %s145, %s146
      %p157 = scmp.eq.s32.totalorder %s111, 0
      %p158 = por %p156, %p157
      %p159 = scmp.ne.s32.totalorder %s145, %s146
      %p160 = scmp.eq.s32.totalorder %s112, 1
      %p161 = por %p159, %p160
      %p163 = scmp.ne.s32.totalorder %s146, %s162
      %p164 = scmp.eq.s32.totalorder %s112, 0
      %p165 = por %p163, %p164
      %s166 = ssub.s32 %s106, %s113
      %p167 = scmp.eq.s32.totalorder %s166, 0
      %s169 = sadd.s32 %s168, 1
      %s170 = scalar_select %p167, %s168, %s169
      %p173 = pneg %p167
      %p174 = scmp.eq.s32.totalorder %s106, 1
      %p175 = por %p173, %p174
      %p176 = scmp.ne.s32.totalorder %s168, %s171
      %p177 = scmp.eq.s32.totalorder %s106, 0
      %p178 = por %p176, %p177
      %p179 = scmp.ne.s32.totalorder %s168, %s171
      %p180 = scmp.eq.s32.totalorder %s111, 1
      %p181 = por %p179, %p180
      %p182 = scmp.ne.s32.totalorder %s171, %s172
      %p183 = scmp.eq.s32.totalorder %s111, 0
      %p184 = por %p182, %p183
      %p185 = scmp.ne.s32.totalorder %s171, %s172
      %p186 = scmp.eq.s32.totalorder %s112, 1
      %p187 = por %p185, %p186
      %p189 = scmp.ne.s32.totalorder %s172, %s188
      %p190 = scmp.eq.s32.totalorder %s112, 0
      %p191 = por %p189, %p190
      %s192 = ssub.s32 %s106, %s113
      %p193 = scmp.eq.s32.totalorder %s192, 0
      %s195 = sadd.s32 %s194, 1
      %s196 = scalar_select %p193, %s194, %s195
      %p199 = pneg %p193
      %p200 = scmp.eq.s32.totalorder %s106, 1
      %p201 = por %p199, %p200
      %p202 = scmp.ne.s32.totalorder %s194, %s197
      %p203 = scmp.eq.s32.totalorder %s106, 0
      %p204 = por %p202, %p203
      %p205 = scmp.ne.s32.totalorder %s194, %s197
      %p206 = scmp.eq.s32.totalorder %s111, 1
      %p207 = por %p205, %p206
      %p208 = scmp.ne.s32.totalorder %s197, %s198
      %p209 = scmp.eq.s32.totalorder %s111, 0
      %p210 = por %p208, %p209
      %p211 = scmp.ne.s32.totalorder %s197, %s198
      %p212 = scmp.eq.s32.totalorder %s112, 1
      %p213 = por %p211, %p212
      %p215 = scmp.ne.s32.totalorder %s198, %s214
      %p216 = scmp.eq.s32.totalorder %s112, 0
      %p217 = por %p215, %p216
      %s219 = sadd.s32 %s218, 1
      %p222 = scmp.eq.s32.totalorder %s106, 1
      %p223 = scmp.ne.s32.totalorder %s218, %s220
      %p224 = scmp.eq.s32.totalorder %s106, 0
      %p225 = por %p223, %p224
      %p226 = scmp.ne.s32.totalorder %s218, %s220
      %p227 = scmp.eq.s32.totalorder %s111, 1
      %p228 = por %p226, %p227
      %p229 = scmp.ne.s32.totalorder %s220, %s221
      %p230 = scmp.eq.s32.totalorder %s111, 0
      %p231 = por %p229, %p230
      %p232 = scmp.ne.s32.totalorder %s220, %s221
      %p233 = scmp.eq.s32.totalorder %s112, 1
      %p234 = por %p232, %p233
      %p236 = scmp.ne.s32.totalorder %s221, %s235
      %p237 = scmp.eq.s32.totalorder %s112, 0
      %p238 = por %p236, %p237
      %s240 = sadd.s32 %s239, 1
      %p243 = scmp.eq.s32.totalorder %s106, 1
      %p244 = scmp.ne.s32.totalorder %s239, %s241
      %p245 = scmp.eq.s32.totalorder %s106, 0
      %p246 = por %p244, %p245
      %p247 = scmp.ne.s32.totalorder %s239, %s241
      %p248 = scmp.eq.s32.totalorder %s111, 1
      %p249 = por %p247, %p248
      %p250 = scmp.ne.s32.totalorder %s241, %s242
      %p251 = scmp.eq.s32.totalorder %s111, 0
      %p252 = por %p250, %p251
      %p253 = scmp.ne.s32.totalorder %s241, %s242
      %p254 = scmp.eq.s32.totalorder %s112, 1
      %p255 = por %p253, %p254
      %p257 = scmp.ne.s32.totalorder %s242, %s256
      %p258 = scmp.eq.s32.totalorder %s112, 0
      %p259 = por %p257, %p258
      %s261 = sadd.s32 %s260, 1
      %p264 = scmp.eq.s32.totalorder %s106, 1
      %p265 = scmp.ne.s32.totalorder %s260, %s262
      %p266 = scmp.eq.s32.totalorder %s106, 0
      %p267 = por %p265, %p266
      %p268 = scmp.ne.s32.totalorder %s260, %s262
      %p269 = scmp.eq.s32.totalorder %s111, 1
      %p270 = por %p268, %p269
      %p271 = scmp.ne.s32.totalorder %s262, %s263
      %p272 = scmp.eq.s32.totalorder %s111, 0
      %p273 = por %p271, %p272
      %p274 = scmp.ne.s32.totalorder %s262, %s263
      %p275 = scmp.eq.s32.totalorder %s112, 1
      %p276 = por %p274, %p275
      %p278 = scmp.ne.s32.totalorder %s263, %s277
      %p279 = scmp.eq.s32.totalorder %s112, 0
      %p280 = por %p278, %p279
      %s282 = sadd.s32 %s281, 1
      %p285 = scmp.eq.s32.totalorder %s106, 1
      %p286 = scmp.ne.s32.totalorder %s281, %s283
      %p287 = scmp.eq.s32.totalorder %s106, 0
      %p288 = por %p286, %p287
      %p289 = scmp.ne.s32.totalorder %s281, %s283
      %p290 = scmp.eq.s32.totalorder %s111, 1
      %p291 = por %p289, %p290
      %p292 = scmp.ne.s32.totalorder %s283, %s284
      %p293 = scmp.eq.s32.totalorder %s111, 0
      %p294 = por %p292, %p293
      %p295 = scmp.ne.s32.totalorder %s283, %s284
      %p296 = scmp.eq.s32.totalorder %s112, 1
      %p297 = por %p295, %p296
      %p299 = scmp.ne.s32.totalorder %s284, %s298
      %p300 = scmp.eq.s32.totalorder %s112, 0
      %p301 = por %p299, %p300
      %s303 = sadd.s32 %s302, 1
      %p306 = scmp.eq.s32.totalorder %s106, 1
      %p307 = scmp.ne.s32.totalorder %s302, %s304
      %p308 = scmp.eq.s32.totalorder %s106, 0
      %p309 = por %p307, %p308
      %p310 = scmp.ne.s32.totalorder %s302, %s304
      %p311 = scmp.eq.s32.totalorder %s111, 1
      %p312 = por %p310, %p311
      %p313 = scmp.ne.s32.totalorder %s304, %s305
      %p314 = scmp.eq.s32.totalorder %s111, 0
      %p315 = por %p313, %p314
      %p316 = scmp.ne.s32.totalorder %s304, %s305
      %p317 = scmp.eq.s32.totalorder %s112, 1
      %p318 = por %p316, %p317
      %p320 = scmp.ne.s32.totalorder %s305, %s319
      %p321 = scmp.eq.s32.totalorder %s112, 0
      %p322 = por %p320, %p321
      %s324 = sadd.s32 %s323, 1
      %p327 = scmp.eq.s32.totalorder %s106, 1
      %p328 = scmp.ne.s32.totalorder %s323, %s325
      %p329 = scmp.eq.s32.totalorder %s106, 0
      %p330 = por %p328, %p329
      %p331 = scmp.ne.s32.totalorder %s323, %s325
      %p332 = scmp.eq.s32.totalorder %s111, 1
      %p333 = por %p331, %p332
      %p334 = scmp.ne.s32.totalorder %s325, %s326
      %p335 = scmp.eq.s32.totalorder %s111, 0
      %p336 = por %p334, %p335
      %p337 = scmp.ne.s32.totalorder %s325, %s326
      %p338 = scmp.eq.s32.totalorder %s112, 1
      %p339 = por %p337, %p338
      %p341 = scmp.ne.s32.totalorder %s326, %s340
      %p342 = scmp.eq.s32.totalorder %s112, 0
      %p343 = por %p341, %p342
      %s345 = sadd.s32 %s344, 1
      %p348 = scmp.eq.s32.totalorder %s106, 1
      %p349 = scmp.ne.s32.totalorder %s344, %s346
      %p350 = scmp.eq.s32.totalorder %s106, 0
      %p351 = por %p349, %p350
      %p352 = scmp.ne.s32.totalorder %s344, %s346
      %p353 = scmp.eq.s32.totalorder %s111, 1
      %p354 = por %p352, %p353
      %p355 = scmp.ne.s32.totalorder %s346, %s347
      %p356 = scmp.eq.s32.totalorder %s111, 0
      %p357 = por %p355, %p356
      %p358 = scmp.ne.s32.totalorder %s346, %s347
      %p359 = scmp.eq.s32.totalorder %s112, 1
      %p360 = por %p358, %p359
      %p362 = scmp.ne.s32.totalorder %s347, %s361
      %p363 = scmp.eq.s32.totalorder %s112, 0
      %p364 = por %p362, %p363
      %s366 = sadd.s32 %s365, 1
      %p369 = scmp.eq.s32.totalorder %s106, 1
      %p370 = scmp.ne.s32.totalorder %s365, %s367
      %p371 = scmp.eq.s32.totalorder %s106, 0
      %p372 = por %p370, %p371
      %p373 = scmp.ne.s32.totalorder %s365, %s367
      %p374 = scmp.eq.s32.totalorder %s111, 1
      %p375 = por %p373, %p374
      %p376 = scmp.ne.s32.totalorder %s367, %s368
      %p377 = scmp.eq.s32.totalorder %s111, 0
      %p378 = por %p376, %p377
      %p379 = scmp.ne.s32.totalorder %s367, %s368
      %p380 = scmp.eq.s32.totalorder %s112, 1
      %p381 = por %p379, %p380
      %p383 = scmp.ne.s32.totalorder %s368, %s382
      %p384 = scmp.eq.s32.totalorder %s112, 0
      %p385 = por %p383, %p384
      %s387 = sadd.s32 %s386, 1
      %p390 = scmp.eq.s32.totalorder %s106, 1
      %p391 = scmp.ne.s32.totalorder %s386, %s388
      %p392 = scmp.eq.s32.totalorder %s106, 0
      %p393 = por %p391, %p392
      %p394 = scmp.ne.s32.totalorder %s386, %s388
      %p395 = scmp.eq.s32.totalorder %s111, 1
      %p396 = por %p394, %p395
      %p397 = scmp.ne.s32.totalorder %s388, %s389
      %p398 = scmp.eq.s32.totalorder %s111, 0
      %p399 = por %p397, %p398
      %p400 = scmp.ne.s32.totalorder %s388, %s389
      %p401 = scmp.eq.s32.totalorder %s112, 1
      %p402 = por %p400, %p401
      %p404 = scmp.ne.s32.totalorder %s389, %s403
      %p405 = scmp.eq.s32.totalorder %s112, 0
      %p406 = por %p404, %p405
      %s408 = sadd.s32 %s407, 1
      %p411 = scmp.eq.s32.totalorder %s106, 1
      %p412 = scmp.ne.s32.totalorder %s407, %s409
      %p413 = scmp.eq.s32.totalorder %s106, 0
      %p414 = por %p412, %p413
      %p415 = scmp.ne.s32.totalorder %s407, %s409
      %p416 = scmp.eq.s32.totalorder %s111, 1
      %p417 = por %p415, %p416
      %p418 = scmp.ne.s32.totalorder %s409, %s410
      %p419 = scmp.eq.s32.totalorder %s111, 0
      %p420 = por %p418, %p419
      %p421 = scmp.ne.s32.totalorder %s409, %s410
      %p422 = scmp.eq.s32.totalorder %s112, 1
      %p423 = por %p421, %p422
      %p425 = scmp.ne.s32.totalorder %s410, %s424
      %p426 = scmp.eq.s32.totalorder %s112, 0
      %p427 = por %p425, %p426
      %s429 = sadd.s32 %s428, 1
      %p432 = scmp.eq.s32.totalorder %s106, 1
      %p433 = scmp.ne.s32.totalorder %s428, %s430
      %p434 = scmp.eq.s32.totalorder %s106, 0
      %p435 = por %p433, %p434
      %p436 = scmp.ne.s32.totalorder %s428, %s430
      %p437 = scmp.eq.s32.totalorder %s111, 1
      %p438 = por %p436, %p437
      %p439 = scmp.ne.s32.totalorder %s430, %s431
      %p440 = scmp.eq.s32.totalorder %s111, 0
      %p441 = por %p439, %p440
      %p442 = scmp.ne.s32.totalorder %s430, %s431
      %p443 = scmp.eq.s32.totalorder %s112, 1
      %p444 = por %p442, %p443
      %p446 = scmp.ne.s32.totalorder %s431, %s445
      %p447 = scmp.eq.s32.totalorder %s112, 0
      %p448 = por %p446, %p447
      %s450 = sadd.s32 %s449, 1
      %p453 = scmp.eq.s32.totalorder %s106, 1
      %p454 = scmp.ne.s32.totalorder %s449, %s451
      %p455 = scmp.eq.s32.totalorder %s106, 0
      %p456 = por %p454, %p455
      %p457 = scmp.ne.s32.totalorder %s449, %s451
      %p458 = scmp.eq.s32.totalorder %s111, 1
      %p459 = por %p457, %p458
      %p460 = scmp.ne.s32.totalorder %s451, %s452
      %p461 = scmp.eq.s32.totalorder %s111, 0
      %p462 = por %p460, %p461
      %p463 = scmp.ne.s32.totalorder %s451, %s452
      %p464 = scmp.eq.s32.totalorder %s112, 1
      %p465 = por %p463, %p464
      %p467 = scmp.ne.s32.totalorder %s452, %s466
      %p468 = scmp.eq.s32.totalorder %s112, 0
      %p469 = por %p467, %p468
      %s471 = sadd.s32 %s470, 1
      %p474 = scmp.eq.s32.totalorder %s106, 1
      %p475 = scmp.ne.s32.totalorder %s470, %s472
      %p476 = scmp.eq.s32.totalorder %s106, 0
      %p477 = por %p475, %p476
      %p478 = scmp.ne.s32.totalorder %s470, %s472
      %p479 = scmp.eq.s32.totalorder %s111, 1
      %p480 = por %p478, %p479
      %p481 = scmp.ne.s32.totalorder %s472, %s473
      %p482 = scmp.eq.s32.totalorder %s111, 0
      %p483 = por %p481, %p482
      %p484 = scmp.ne.s32.totalorder %s472, %s473
      %p485 = scmp.eq.s32.totalorder %s112, 1
      %p486 = por %p484, %p485
      %p488 = scmp.ne.s32.totalorder %s473, %s487
      %p489 = scmp.eq.s32.totalorder %s112, 0
      %p490 = por %p488, %p489
      %s492 = sadd.s32 %s491, 1
      %p495 = scmp.eq.s32.totalorder %s106, 1
      %p496 = scmp.ne.s32.totalorder %s491, %s493
      %p497 = scmp.eq.s32.totalorder %s106, 0
      %p498 = por %p496, %p497
      %p499 = scmp.ne.s32.totalorder %s491, %s493
      %p500 = scmp.eq.s32.totalorder %s111, 1
      %p501 = por %p499, %p500
      %p502 = scmp.ne.s32.totalorder %s493, %s494
      %p503 = scmp.eq.s32.totalorder %s111, 0
      %p504 = por %p502, %p503
      %p505 = scmp.ne.s32.totalorder %s493, %s494
      %p506 = scmp.eq.s32.totalorder %s112, 1
      %p507 = por %p505, %p506
      %p509 = scmp.ne.s32.totalorder %s494, %s508
      %p510 = scmp.eq.s32.totalorder %s112, 0
      %p511 = por %p509, %p510
      %s513 = sadd.s32 %s512, 1
      %p516 = scmp.eq.s32.totalorder %s106, 1
      %p517 = scmp.ne.s32.totalorder %s512, %s514
      %p518 = scmp.eq.s32.totalorder %s106, 0
      %p519 = por %p517, %p518
      %p520 = scmp.ne.s32.totalorder %s512, %s514
      %p521 = scmp.eq.s32.totalorder %s111, 1
      %p522 = por %p520, %p521
      %p523 = scmp.ne.s32.totalorder %s514, %s515
      %p524 = scmp.eq.s32.totalorder %s111, 0
      %p525 = por %p523, %p524
      %p526 = scmp.ne.s32.totalorder %s514, %s515
      %p527 = scmp.eq.s32.totalorder %s112, 1
      %p528 = por %p526, %p527
      %p530 = scmp.ne.s32.totalorder %s515, %s529
      %p531 = scmp.eq.s32.totalorder %s112, 0
      %p532 = por %p530, %p531
      %s534 = sadd.s32 %s533, 1
      %p537 = scmp.eq.s32.totalorder %s106, 1
      %p538 = scmp.ne.s32.totalorder %s533, %s535
      %p539 = scmp.eq.s32.totalorder %s106, 0
      %p540 = por %p538, %p539
      %p541 = scmp.ne.s32.totalorder %s533, %s535
      %p542 = scmp.eq.s32.totalorder %s111, 1
      %p543 = por %p541, %p542
      %p544 = scmp.ne.s32.totalorder %s535, %s536
      %p545 = scmp.eq.s32.totalorder %s111, 0
      %p546 = por %p544, %p545
      %p547 = scmp.ne.s32.totalorder %s535, %s536
      %p548 = scmp.eq.s32.totalorder %s112, 1
      %p549 = por %p547, %p548
      %p551 = scmp.ne.s32.totalorder %s536, %s550
      %p552 = scmp.eq.s32.totalorder %s112, 0
      %p553 = por %p551, %p552
      %s555 = sadd.s32 %s554, 1
      %p558 = scmp.eq.s32.totalorder %s106, 1
      %p559 = scmp.ne.s32.totalorder %s554, %s556
      %p560 = scmp.eq.s32.totalorder %s106, 0
      %p561 = por %p559, %p560
      %p562 = scmp.ne.s32.totalorder %s554, %s556
      %p563 = scmp.eq.s32.totalorder %s111, 1
      %p564 = por %p562, %p563
      %p565 = scmp.ne.s32.totalorder %s556, %s557
      %p566 = scmp.eq.s32.totalorder %s111, 0
      %p567 = por %p565, %p566
      %p568 = scmp.ne.s32.totalorder %s556, %s557
      %p569 = scmp.eq.s32.totalorder %s112, 1
      %p570 = por %p568, %p569
      %p572 = scmp.ne.s32.totalorder %s557, %s571
      %p573 = scmp.eq.s32.totalorder %s112, 0
      %p574 = por %p572, %p573
      %s576 = sadd.s32 %s575, 1
      %p579 = scmp.eq.s32.totalorder %s106, 1
      %p580 = scmp.ne.s32.totalorder %s575, %s577
      %p581 = scmp.eq.s32.totalorder %s106, 0
      %p582 = por %p580, %p581
      %p583 = scmp.ne.s32.totalorder %s575, %s577
      %p584 = scmp.eq.s32.totalorder %s111, 1
      %p585 = por %p583, %p584
      %p586 = scmp.ne.s32.totalorder %s577, %s578
      %p587 = scmp.eq.s32.totalorder %s111, 0
      %p588 = por %p586, %p587
      %p589 = scmp.ne.s32.totalorder %s577, %s578
      %p590 = scmp.eq.s32.totalorder %s112, 1
      %p591 = por %p589, %p590
      %p593 = scmp.ne.s32.totalorder %s578, %s592
      %p594 = scmp.eq.s32.totalorder %s112, 0
      %p595 = por %p593, %p594
      %s597 = sadd.s32 %s596, 1
      %p600 = scmp.eq.s32.totalorder %s106, 1
      %p601 = scmp.ne.s32.totalorder %s596, %s598
      %p602 = scmp.eq.s32.totalorder %s106, 0
      %p603 = por %p601, %p602
      %p604 = scmp.ne.s32.totalorder %s596, %s598
      %p605 = scmp.eq.s32.totalorder %s111, 1
      %p606 = por %p604, %p605
      %p607 = scmp.ne.s32.totalorder %s598, %s599
      %p608 = scmp.eq.s32.totalorder %s111, 0
      %p609 = por %p607, %p608
      %p610 = scmp.ne.s32.totalorder %s598, %s599
      %p611 = scmp.eq.s32.totalorder %s112, 1
      %p612 = por %p610, %p611
      %p614 = scmp.ne.s32.totalorder %s599, %s613
      %p615 = scmp.eq.s32.totalorder %s112, 0
      %p616 = por %p614, %p615
      %s618 = sadd.s32 %s617, 1
      %p621 = scmp.eq.s32.totalorder %s106, 1
      %p622 = scmp.ne.s32.totalorder %s617, %s619
      %p623 = scmp.eq.s32.totalorder %s106, 0
      %p624 = por %p622, %p623
      %p625 = scmp.ne.s32.totalorder %s617, %s619
      %p626 = scmp.eq.s32.totalorder %s111, 1
      %p627 = por %p625, %p626
      %p628 = scmp.ne.s32.totalorder %s619, %s620
      %p629 = scmp.eq.s32.totalorder %s111, 0
      %p630 = por %p628, %p629
      %p631 = scmp.ne.s32.totalorder %s619, %s620
      %p632 = scmp.eq.s32.totalorder %s112, 1
      %p633 = por %p631, %p632
      %p635 = scmp.ne.s32.totalorder %s620, %s634
      %p636 = scmp.eq.s32.totalorder %s112, 0
      %p637 = por %p635, %p636
      %s639 = sadd.s32 %s638, 1
      %p642 = scmp.eq.s32.totalorder %s106, 1
      %p643 = scmp.ne.s32.totalorder %s638, %s640
      %p644 = scmp.eq.s32.totalorder %s106, 0
      %p645 = por %p643, %p644
      %p646 = scmp.ne.s32.totalorder %s638, %s640
      %p647 = scmp.eq.s32.totalorder %s111, 1
      %p648 = por %p646, %p647
      %p649 = scmp.ne.s32.totalorder %s640, %s641
      %p650 = scmp.eq.s32.totalorder %s111, 0
      %p651 = por %p649, %p650
      %p652 = scmp.ne.s32.totalorder %s640, %s641
      %p653 = scmp.eq.s32.totalorder %s112, 1
      %p654 = por %p652, %p653
      %p656 = scmp.ne.s32.totalorder %s641, %s655
      %p657 = scmp.eq.s32.totalorder %s112, 0
      %p658 = por %p656, %p657
      %s660 = sadd.s32 %s659, 1
      %p663 = scmp.eq.s32.totalorder %s106, 1
      %p664 = scmp.ne.s32.totalorder %s659, %s661
      %p665 = scmp.eq.s32.totalorder %s106, 0
      %p666 = por %p664, %p665
      %p667 = scmp.ne.s32.totalorder %s659, %s661
      %p668 = scmp.eq.s32.totalorder %s111, 1
      %p669 = por %p667, %p668
      %p670 = scmp.ne.s32.totalorder %s661, %s662
      %p671 = scmp.eq.s32.totalorder %s111, 0
      %p672 = por %p670, %p671
      %p673 = scmp.ne.s32.totalorder %s661, %s662
      %p674 = scmp.eq.s32.totalorder %s112, 1
      %p675 = por %p673, %p674
      %p677 = scmp.ne.s32.totalorder %s662, %s676
      %p678 = scmp.eq.s32.totalorder %s112, 0
      %p679 = por %p677, %p678
      %s681 = sadd.s32 %s680, 1
      %p684 = scmp.eq.s32.totalorder %s106, 1
      %p685 = scmp.ne.s32.totalorder %s680, %s682
      %p686 = scmp.eq.s32.totalorder %s106, 0
      %p687 = por %p685, %p686
      %p688 = scmp.ne.s32.totalorder %s680, %s682
      %p689 = scmp.eq.s32.totalorder %s111, 1
      %p690 = por %p688, %p689
      %p691 = scmp.ne.s32.totalorder %s682, %s683
      %p692 = scmp.eq.s32.totalorder %s111, 0
      %p693 = por %p691, %p692
      %p694 = scmp.ne.s32.totalorder %s682, %s683
      %p695 = scmp.eq.s32.totalorder %s112, 1
      %p696 = por %p694, %p695
      %p698 = scmp.ne.s32.totalorder %s683, %s697
      %p699 = scmp.eq.s32.totalorder %s112, 0
      %p700 = por %p698, %p699
      %s702 = sadd.s32 %s701, 1
      %p705 = scmp.eq.s32.totalorder %s106, 1
      %p706 = scmp.ne.s32.totalorder %s701, %s703
      %p707 = scmp.eq.s32.totalorder %s106, 0
      %p708 = por %p706, %p707
      %p709 = scmp.ne.s32.totalorder %s701, %s703
      %p710 = scmp.eq.s32.totalorder %s111, 1
      %p711 = por %p709, %p710
      %p712 = scmp.ne.s32.totalorder %s703, %s704
      %p713 = scmp.eq.s32.totalorder %s111, 0
      %p714 = por %p712, %p713
      %p715 = scmp.ne.s32.totalorder %s703, %s704
      %p716 = scmp.eq.s32.totalorder %s112, 1
      %p717 = por %p715, %p716
      %p719 = scmp.ne.s32.totalorder %s704, %s718
      %p720 = scmp.eq.s32.totalorder %s112, 0
      %p721 = por %p719, %p720
      %s723 = sadd.s32 %s722, 1
      %p726 = scmp.eq.s32.totalorder %s106, 1
      %p727 = scmp.ne.s32.totalorder %s722, %s724
      %p728 = scmp.eq.s32.totalorder %s106, 0
      %p729 = por %p727, %p728
      %p730 = scmp.ne.s32.totalorder %s722, %s724
      %p731 = scmp.eq.s32.totalorder %s111, 1
      %p732 = por %p730, %p731
      %p733 = scmp.ne.s32.totalorder %s724, %s725
      %p734 = scmp.eq.s32.totalorder %s111, 0
      %p735 = por %p733, %p734
      %p736 = scmp.ne.s32.totalorder %s724, %s725
      %p737 = scmp.eq.s32.totalorder %s112, 1
      %p738 = por %p736, %p737
      %p740 = scmp.ne.s32.totalorder %s725, %s739
      %p741 = scmp.eq.s32.totalorder %s112, 0
      %p742 = por %p740, %p741
      %s744 = sadd.s32 %s743, 1
      %p747 = scmp.eq.s32.totalorder %s106, 1
      %p748 = scmp.ne.s32.totalorder %s743, %s745
      %p749 = scmp.eq.s32.totalorder %s106, 0
      %p750 = por %p748, %p749
      %p751 = scmp.ne.s32.totalorder %s743, %s745
      %p752 = scmp.eq.s32.totalorder %s111, 1
      %p753 = por %p751, %p752
      %p754 = scmp.ne.s32.totalorder %s745, %s746
      %p755 = scmp.eq.s32.totalorder %s111, 0
      %p756 = por %p754, %p755
      %p757 = scmp.ne.s32.totalorder %s745, %s746
      %p758 = scmp.eq.s32.totalorder %s112, 1
      %p759 = por %p757, %p758
      %p761 = scmp.ne.s32.totalorder %s746, %s760
      %p762 = scmp.eq.s32.totalorder %s112, 0
      %p763 = por %p761, %p762
      %s765 = sadd.s32 %s764, 1
      %p768 = scmp.eq.s32.totalorder %s106, 1
      %p769 = scmp.ne.s32.totalorder %s764, %s766
      %p770 = scmp.eq.s32.totalorder %s106, 0
      %p771 = por %p769, %p770
      %p772 = scmp.ne.s32.totalorder %s764, %s766
      %p773 = scmp.eq.s32.totalorder %s111, 1
      %p774 = por %p772, %p773
      %p775 = scmp.ne.s32.totalorder %s766, %s767
      %p776 = scmp.eq.s32.totalorder %s111, 0
      %p777 = por %p775, %p776
      %p778 = scmp.ne.s32.totalorder %s766, %s767
      %p779 = scmp.eq.s32.totalorder %s112, 1
      %p780 = por %p778, %p779
      %p782 = scmp.ne.s32.totalorder %s767, %s781
      %p783 = scmp.eq.s32.totalorder %s112, 0
      %p784 = por %p782, %p783
      %s786 = sadd.s32 %s785, 1
      %p789 = scmp.eq.s32.totalorder %s106, 1
      %p790 = scmp.ne.s32.totalorder %s785, %s787
      %p791 = scmp.eq.s32.totalorder %s106, 0
      %p792 = por %p790, %p791
      %p793 = scmp.ne.s32.totalorder %s785, %s787
      %p794 = scmp.eq.s32.totalorder %s111, 1
      %p795 = por %p793, %p794
      %p796 = scmp.ne.s32.totalorder %s787, %s788
      %p797 = scmp.eq.s32.totalorder %s111, 0
      %p798 = por %p796, %p797
      %p799 = scmp.ne.s32.totalorder %s787, %s788
      %p800 = scmp.eq.s32.totalorder %s112, 1
      %p801 = por %p799, %p800
      %p803 = scmp.ne.s32.totalorder %s788, %s802
      %p804 = scmp.eq.s32.totalorder %s112, 0
      %p805 = por %p803, %p804
      %s807 = sadd.s32 %s806, 1
      %p810 = scmp.eq.s32.totalorder %s106, 1
      %p811 = scmp.ne.s32.totalorder %s806, %s808
      %p812 = scmp.eq.s32.totalorder %s106, 0
      %p813 = por %p811, %p812
      %p814 = scmp.ne.s32.totalorder %s806, %s808
      %p815 = scmp.eq.s32.totalorder %s111, 1
      %p816 = por %p814, %p815
      %p817 = scmp.ne.s32.totalorder %s808, %s809
      %p818 = scmp.eq.s32.totalorder %s111, 0
      %p819 = por %p817, %p818
      %p820 = scmp.ne.s32.totalorder %s808, %s809
      %p821 = scmp.eq.s32.totalorder %s112, 1
      %p822 = por %p820, %p821
      %p824 = scmp.ne.s32.totalorder %s809, %s823
      %p825 = scmp.eq.s32.totalorder %s112, 0
      %p826 = por %p824, %p825
      %s828 = sadd.s32 %s827, 1
      %p831 = scmp.eq.s32.totalorder %s106, 1
      %p832 = scmp.ne.s32.totalorder %s827, %s829
      %p833 = scmp.eq.s32.totalorder %s106, 0
      %p834 = por %p832, %p833
      %p835 = scmp.ne.s32.totalorder %s827, %s829
      %p836 = scmp.eq.s32.totalorder %s111, 1
      %p837 = por %p835, %p836
      %p838 = scmp.ne.s32.totalorder %s829, %s830
      %p839 = scmp.eq.s32.totalorder %s111, 0
      %p840 = por %p838, %p839
      %p841 = scmp.ne.s32.totalorder %s829, %s830
      %p842 = scmp.eq.s32.totalorder %s112, 1
      %p843 = por %p841, %p842
      %p845 = scmp.ne.s32.totalorder %s830, %s844
      %p846 = scmp.eq.s32.totalorder %s112, 0
      %p847 = por %p845, %p846
      %s849 = sadd.s32 %s848, 1
      %p852 = scmp.eq.s32.totalorder %s106, 1
      %p853 = scmp.ne.s32.totalorder %s848, %s850
      %p854 = scmp.eq.s32.totalorder %s106, 0
      %p855 = por %p853, %p854
      %p856 = scmp.ne.s32.totalorder %s848, %s850
      %p857 = scmp.eq.s32.totalorder %s111, 1
      %p858 = por %p856, %p857
      %p859 = scmp.ne.s32.totalorder %s850, %s851
      %p860 = scmp.eq.s32.totalorder %s111, 0
      %p861 = por %p859, %p860
      %p862 = scmp.ne.s32.totalorder %s850, %s851
      %p863 = scmp.eq.s32.totalorder %s112, 1
      %p864 = por %p862, %p863
      %p866 = scmp.ne.s32.totalorder %s851, %s865
      %p867 = scmp.eq.s32.totalorder %s112, 0
      %p868 = por %p866, %p867
      %s869 = ssub.s32 %s106, %s113
      %p870 = scmp.eq.s32.totalorder %s869, 0
      %s872 = sadd.s32 %s871, 1
      %s873 = scalar_select %p870, %s871, %s872
      %p876 = pneg %p870
      %p877 = scmp.eq.s32.totalorder %s106, 1
      %p878 = por %p876, %p877
      %p879 = scmp.ne.s32.totalorder %s871, %s874
      %p880 = scmp.eq.s32.totalorder %s106, 0
      %p881 = por %p879, %p880
      %p882 = scmp.ne.s32.totalorder %s871, %s874
      %p883 = scmp.eq.s32.totalorder %s111, 1
      %p884 = por %p882, %p883
      %p885 = scmp.ne.s32.totalorder %s874, %s875
      %p886 = scmp.eq.s32.totalorder %s111, 0
      %p887 = por %p885, %p886
      %p888 = scmp.ne.s32.totalorder %s874, %s875
      %p889 = scmp.eq.s32.totalorder %s112, 1
      %p890 = por %p888, %p889
      %p892 = scmp.ne.s32.totalorder %s875, %s891
      %p893 = scmp.eq.s32.totalorder %s112, 0
      %p894 = por %p892, %p893
      %p895 = scmp.le.s32.totalorder 1, %s106
      %p896 = scmp.lt.s32.totalorder %s106, 3
      %p897 = pnand %p895, %p896
      %p898 = pneg %p897
      // Predicated region
      $region9: #{tpu_custom_call.1} parent=5 // pred_check
        _
      $region10: #{tpu_custom_call.1} parent=5 // pred_check_branch
        %900 = sbr.rel (%p897) target = $region12
      $region11: #{tpu_custom_call.1} parent=5 // pred_region
        %s901 = ssub.s32 %s106, 1
        // Predicated region
        $region13: #{tpu_custom_call.1} parent=11 // pred_check
          %p902 = pneg %p231
        $region14: #{tpu_custom_call.1} parent=11 // pred_check_branch
          %904 = sbr.rel (%p902) target = $region16
        $region15: #{tpu_custom_call.1} parent=11 // pred_region
          %s906 = ssub.s32 19456, 19456
          %907 = vsyncadd [#allocation11], %s906
          %s908 = sshll.u32 [#allocation12], 4
          %s909 = int_to_ptr.vmem [resolvable:$true] %s908
          %914 = dma.hbm_to_vmem [thread:$0]  %s9, 19456, %s909, [#allocation11], 256, 256, 16
        $region16: #{tpu_custom_call.1} parent=11 // pred_fallthru
          _
        // Predicated region
        $region17: #{tpu_custom_call.1} parent=11 // pred_check
          %p915 = pneg %p252
        $region18: #{tpu_custom_call.1} parent=11 // pred_check_branch
          %917 = sbr.rel (%p915) target = $region20
        $region19: #{tpu_custom_call.1} parent=11 // pred_region
          %s919 = ssub.s32 64, 64
          %920 = vsyncadd [#allocation14], %s919
          %s922 = sshll.u32 [#allocation13], 4
          %s923 = int_to_ptr.vmem [resolvable:$true] %s922
          %925 = dma.hbm_to_vmem [thread:$0]  %s11, 64, %s923, [#allocation14]
        $region20: #{tpu_custom_call.1} parent=11 // pred_fallthru
          _
        // Predicated region
        $region21: #{tpu_custom_call.1} parent=11 // pred_check
          %p926 = pneg %p273
        $region22: #{tpu_custom_call.1} parent=11 // pred_check_branch
          %928 = sbr.rel (%p926) target = $region24
        $region23: #{tpu_custom_call.1} parent=11 // pred_region
          %s930 = ssub.s32 4096, 4096
          %931 = vsyncadd [#allocation14], %s930
          %s932 = sshll.u32 [#allocation15], 4
          %s933 = int_to_ptr.vmem [resolvable:$true] %s932
          %938 = dma.hbm_to_vmem [thread:$0]  %s13, 4096, %s933, [#allocation14], 64, 64, 4
        $region24: #{tpu_custom_call.1} parent=11 // pred_fallthru
          _
        // Predicated region
        $region25: #{tpu_custom_call.1} parent=11 // pred_check
          %p939 = pneg %p294
        $region26: #{tpu_custom_call.1} parent=11 // pred_check_branch
          %941 = sbr.rel (%p939) target = $region28
        $region27: #{tpu_custom_call.1} parent=11 // pred_region
          %s943 = ssub.s32 16, 16
          %944 = vsyncadd [#allocation17], %s943
          %s946 = sshll.u32 [#allocation16], 4
          %s947 = int_to_ptr.vmem [resolvable:$true] %s946
          %949 = dma.hbm_to_vmem [thread:$0]  %s15, 16, %s947, [#allocation17]
        $region28: #{tpu_custom_call.1} parent=11 // pred_fallthru
          _
        // Predicated region
        $region29: #{tpu_custom_call.1} parent=11 // pred_check
          %p950 = pneg %p315
        $region30: #{tpu_custom_call.1} parent=11 // pred_check_branch
          %952 = sbr.rel (%p950) target = $region32
        $region31: #{tpu_custom_call.1} parent=11 // pred_region
          %s954 = ssub.s32 1024, 1024
          %955 = vsyncadd [#allocation17], %s954
          %s956 = sshll.u32 [#allocation18], 4
          %s957 = int_to_ptr.vmem [resolvable:$true] %s956
          %962 = dma.hbm_to_vmem [thread:$0]  %s17, 1024, %s957, [#allocation17], 64, 64, 4
        $region32: #{tpu_custom_call.1} parent=11 // pred_fallthru
          _
        // Predicated region
        $region33: #{tpu_custom_call.1} parent=11 // pred_check
          %p963 = pneg %p336
        $region34: #{tpu_custom_call.1} parent=11 // pred_check_branch
          %965 = sbr.rel (%p963) target = $region36
        $region35: #{tpu_custom_call.1} parent=11 // pred_region
          %s967 = ssub.s32 16, 16
          %968 = vsyncadd [#allocation20], %s967
          %s970 = sshll.u32 [#allocation19], 4
          %s971 = int_to_ptr.vmem [resolvable:$true] %s970
          %973 = dma.hbm_to_vmem [thread:$0]  %s19, 16, %s971, [#allocation20]
        $region36: #{tpu_custom_call.1} parent=11 // pred_fallthru
          _
        // Predicated region
        $region37: #{tpu_custom_call.1} parent=11 // pred_check
          %p974 = pneg %p357
        $region38: #{tpu_custom_call.1} parent=11 // pred_check_branch
          %976 = sbr.rel (%p974) target = $region40
        $region39: #{tpu_custom_call.1} parent=11 // pred_region
          %s978 = ssub.s32 19456, 19456
          %979 = vsyncadd [#allocation20], %s978
          %s980 = sshll.u32 [#allocation21], 4
          %s981 = int_to_ptr.vmem [resolvable:$true] %s980
          %986 = dma.hbm_to_vmem [thread:$0]  %s21, 19456, %s981, [#allocation20], 256, 256, 16
        $region40: #{tpu_custom_call.1} parent=11 // pred_fallthru
          _
        // Predicated region
        $region41: #{tpu_custom_call.1} parent=11 // pred_check
          %p987 = pneg %p378
        $region42: #{tpu_custom_call.1} parent=11 // pred_check_branch
          %989 = sbr.rel (%p987) target = $region44
        $region43: #{tpu_custom_call.1} parent=11 // pred_region
          %s991 = ssub.s32 64, 64
          %992 = vsyncadd [#allocation23], %s991
          %s994 = sshll.u32 [#allocation22], 4
          %s995 = int_to_ptr.vmem [resolvable:$true] %s994
          %997 = dma.hbm_to_vmem [thread:$0]  %s23, 64, %s995, [#allocation23]
        $region44: #{tpu_custom_call.1} parent=11 // pred_fallthru
          _
        // Predicated region
        $region45: #{tpu_custom_call.1} parent=11 // pred_check
          %p998 = pneg %p399
        $region46: #{tpu_custom_call.1} parent=11 // pred_check_branch
          %1000 = sbr.rel (%p998) target = $region48
        $region47: #{tpu_custom_call.1} parent=11 // pred_region
          %s1002 = ssub.s32 4096, 4096
          %1003 = vsyncadd [#allocation23], %s1002
          %s1004 = sshll.u32 [#allocation24], 4
          %s1005 = int_to_ptr.vmem [resolvable:$true] %s1004
          %1010 = dma.hbm_to_vmem [thread:$0]  %s25, 4096, %s1005, [#allocation23], 64, 64, 4
        $region48: #{tpu_custom_call.1} parent=11 // pred_fallthru
          _
        // Predicated region
        $region49: #{tpu_custom_call.1} parent=11 // pred_check
          %p1011 = pneg %p420
        $region50: #{tpu_custom_call.1} parent=11 // pred_check_branch
          %1013 = sbr.rel (%p1011) target = $region52
        $region51: #{tpu_custom_call.1} parent=11 // pred_region
          %s1015 = ssub.s32 16, 16
          %1016 = vsyncadd [#allocation26], %s1015
          %s1018 = sshll.u32 [#allocation25], 4
          %s1019 = int_to_ptr.vmem [resolvable:$true] %s1018
          %1021 = dma.hbm_to_vmem [thread:$0]  %s27, 16, %s1019, [#allocation26]
        $region52: #{tpu_custom_call.1} parent=11 // pred_fallthru
          _
        // Predicated region
        $region53: #{tpu_custom_call.1} parent=11 // pred_check
          %p1022 = pneg %p441
        $region54: #{tpu_custom_call.1} parent=11 // pred_check_branch
          %1024 = sbr.rel (%p1022) target = $region56
        $region55: #{tpu_custom_call.1} parent=11 // pred_region
          %s1026 = ssub.s32 1024, 1024
          %1027 = vsyncadd [#allocation26], %s1026
          %s1028 = sshll.u32 [#allocation27], 4
          %s1029 = int_to_ptr.vmem [resolvable:$true] %s1028
          %1034 = dma.hbm_to_vmem [thread:$0]  %s29, 1024, %s1029, [#allocation26], 64, 64, 4
        $region56: #{tpu_custom_call.1} parent=11 // pred_fallthru
          _
        // Predicated region
        $region57: #{tpu_custom_call.1} parent=11 // pred_check
          %p1035 = pneg %p462
        $region58: #{tpu_custom_call.1} parent=11 // pred_check_branch
          %1037 = sbr.rel (%p1035) target = $region60
        $region59: #{tpu_custom_call.1} parent=11 // pred_region
          %s1039 = ssub.s32 16, 16
          %1040 = vsyncadd [#allocation29], %s1039
          %s1042 = sshll.u32 [#allocation28], 4
          %s1043 = int_to_ptr.vmem [resolvable:$true] %s1042
          %1045 = dma.hbm_to_vmem [thread:$0]  %s31, 16, %s1043, [#allocation29]
        $region60: #{tpu_custom_call.1} parent=11 // pred_fallthru
          _
        // Predicated region
        $region61: #{tpu_custom_call.1} parent=11 // pred_check
          %p1046 = pneg %p483
        $region62: #{tpu_custom_call.1} parent=11 // pred_check_branch
          %1048 = sbr.rel (%p1046) target = $region64
        $region63: #{tpu_custom_call.1} parent=11 // pred_region
          %s1050 = ssub.s32 256, 256
          %1051 = vsyncadd [#allocation29], %s1050
          %s1052 = sshll.u32 [#allocation30], 4
          %s1053 = int_to_ptr.vmem [resolvable:$true] %s1052
          %1058 = dma.hbm_to_vmem [thread:$0]  %s33, 256, %s1053, [#allocation29], 128, 128, 8
        $region64: #{tpu_custom_call.1} parent=11 // pred_fallthru
          _
        // Predicated region
        $region65: #{tpu_custom_call.1} parent=11 // pred_check
          %p1059 = pneg %p504
        $region66: #{tpu_custom_call.1} parent=11 // pred_check_branch
          %1061 = sbr.rel (%p1059) target = $region68
        $region67: #{tpu_custom_call.1} parent=11 // pred_region
          %s1063 = ssub.s32 16, 16
          %1064 = vsyncadd [#allocation32], %s1063
          %s1066 = sshll.u32 [#allocation31], 4
          %s1067 = int_to_ptr.vmem [resolvable:$true] %s1066
          %1069 = dma.hbm_to_vmem [thread:$0]  %s35, 16, %s1067, [#allocation32]
        $region68: #{tpu_custom_call.1} parent=11 // pred_fallthru
          _
        // Predicated region
        $region69: #{tpu_custom_call.1} parent=11 // pred_check
          %p1070 = pneg %p525
        $region70: #{tpu_custom_call.1} parent=11 // pred_check_branch
          %1072 = sbr.rel (%p1070) target = $region72
        $region71: #{tpu_custom_call.1} parent=11 // pred_region
          %s1074 = ssub.s32 128, 128
          %1075 = vsyncadd [#allocation32], %s1074
          %s1077 = sshll.u32 [#allocation33], 4
          %s1078 = int_to_ptr.vmem [resolvable:$true] %s1077
          %1080 = dma.hbm_to_vmem [thread:$0]  %s37, 128, %s1078, [#allocation32]
        $region72: #{tpu_custom_call.1} parent=11 // pred_fallthru
          _
        // Predicated region
        $region73: #{tpu_custom_call.1} parent=11 // pred_check
          %p1081 = pneg %p546
        $region74: #{tpu_custom_call.1} parent=11 // pred_check_branch
          %1083 = sbr.rel (%p1081) target = $region76
        $region75: #{tpu_custom_call.1} parent=11 // pred_region
          %s1085 = ssub.s32 16, 16
          %1086 = vsyncadd [#allocation35], %s1085
          %s1088 = sshll.u32 [#allocation34], 4
          %s1089 = int_to_ptr.vmem [resolvable:$true] %s1088
          %1091 = dma.hbm_to_vmem [thread:$0]  %s39, 16, %s1089, [#allocation35]
        $region76: #{tpu_custom_call.1} parent=11 // pred_fallthru
          _
        // Predicated region
        $region77: #{tpu_custom_call.1} parent=11 // pred_check
          %p1092 = pneg %p567
        $region78: #{tpu_custom_call.1} parent=11 // pred_check_branch
          %1094 = sbr.rel (%p1092) target = $region80
        $region79: #{tpu_custom_call.1} parent=11 // pred_region
          %s1096 = ssub.s32 5120, 5120
          %1097 = vsyncadd [#allocation35], %s1096
          %s1098 = sshll.u32 [#allocation36], 4
          %s1099 = int_to_ptr.vmem [resolvable:$true] %s1098
          %1104 = dma.hbm_to_vmem [thread:$0]  %s41, 5120, %s1099, [#allocation35], 64, 64, 4
        $region80: #{tpu_custom_call.1} parent=11 // pred_fallthru
          _
        // Predicated region
        $region81: #{tpu_custom_call.1} parent=11 // pred_check
          %p1105 = pneg %p588
        $region82: #{tpu_custom_call.1} parent=11 // pred_check_branch
          %1107 = sbr.rel (%p1105) target = $region84
        $region83: #{tpu_custom_call.1} parent=11 // pred_region
          %s1109 = ssub.s32 16, 16
          %1110 = vsyncadd [#allocation38], %s1109
          %s1112 = sshll.u32 [#allocation37], 4
          %s1113 = int_to_ptr.vmem [resolvable:$true] %s1112
          %1115 = dma.hbm_to_vmem [thread:$0]  %s43, 16, %s1113, [#allocation38]
        $region84: #{tpu_custom_call.1} parent=11 // pred_fallthru
          _
        // Predicated region
        $region85: #{tpu_custom_call.1} parent=11 // pred_check
          %p1116 = pneg %p609
        $region86: #{tpu_custom_call.1} parent=11 // pred_check_branch
          %1118 = sbr.rel (%p1116) target = $region88
        $region87: #{tpu_custom_call.1} parent=11 // pred_region
          %s1120 = ssub.s32 16384, 16384
          %1121 = vsyncadd [#allocation38], %s1120
          %s1122 = sshll.u32 [#allocation39], 4
          %s1123 = int_to_ptr.vmem [resolvable:$true] %s1122
          %1128 = dma.hbm_to_vmem [thread:$0]  %s45, 16384, %s1123, [#allocation38], 256, 256, 16
        $region88: #{tpu_custom_call.1} parent=11 // pred_fallthru
          _
        // Predicated region
        $region89: #{tpu_custom_call.1} parent=11 // pred_check
          %p1129 = pneg %p630
        $region90: #{tpu_custom_call.1} parent=11 // pred_check_branch
          %1131 = sbr.rel (%p1129) target = $region92
        $region91: #{tpu_custom_call.1} parent=11 // pred_region
          %s1133 = ssub.s32 64, 64
          %1134 = vsyncadd [#allocation41], %s1133
          %s1136 = sshll.u32 [#allocation40], 4
          %s1137 = int_to_ptr.vmem [resolvable:$true] %s1136
          %1139 = dma.hbm_to_vmem [thread:$0]  %s47, 64, %s1137, [#allocation41]
        $region92: #{tpu_custom_call.1} parent=11 // pred_fallthru
          _
        // Predicated region
        $region93: #{tpu_custom_call.1} parent=11 // pred_check
          %p1140 = pneg %p651
        $region94: #{tpu_custom_call.1} parent=11 // pred_check_branch
          %1142 = sbr.rel (%p1140) target = $region96
        $region95: #{tpu_custom_call.1} parent=11 // pred_region
          %s1144 = ssub.s32 4096, 4096
          %1145 = vsyncadd [#allocation41], %s1144
          %s1146 = sshll.u32 [#allocation42], 4
          %s1147 = int_to_ptr.vmem [resolvable:$true] %s1146
          %1152 = dma.hbm_to_vmem [thread:$0]  %s49, 4096, %s1147, [#allocation41], 64, 64, 4
        $region96: #{tpu_custom_call.1} parent=11 // pred_fallthru
          _
        // Predicated region
        $region97: #{tpu_custom_call.1} parent=11 // pred_check
          %p1153 = pneg %p672
        $region98: #{tpu_custom_call.1} parent=11 // pred_check_branch
          %1155 = sbr.rel (%p1153) target = $region100
        $region99: #{tpu_custom_call.1} parent=11 // pred_region
          %s1157 = ssub.s32 16, 16
          %1158 = vsyncadd [#allocation44], %s1157
          %s1160 = sshll.u32 [#allocation43], 4
          %s1161 = int_to_ptr.vmem [resolvable:$true] %s1160
          %1163 = dma.hbm_to_vmem [thread:$0]  %s51, 16, %s1161, [#allocation44]
        $region100: #{tpu_custom_call.1} parent=11 // pred_fallthru
          _
        // Predicated region
        $region101: #{tpu_custom_call.1} parent=11 // pred_check
          %p1164 = pneg %p693
        $region102: #{tpu_custom_call.1} parent=11 // pred_check_branch
          %1166 = sbr.rel (%p1164) target = $region104
        $region103: #{tpu_custom_call.1} parent=11 // pred_region
          %s1168 = ssub.s32 1024, 1024
          %1169 = vsyncadd [#allocation44], %s1168
          %s1170 = sshll.u32 [#allocation45], 4
          %s1171 = int_to_ptr.vmem [resolvable:$true] %s1170
          %1176 = dma.hbm_to_vmem [thread:$0]  %s53, 1024, %s1171, [#allocation44], 64, 64, 4
        $region104: #{tpu_custom_call.1} parent=11 // pred_fallthru
          _
        // Predicated region
        $region105: #{tpu_custom_call.1} parent=11 // pred_check
          %p1177 = pneg %p714
        $region106: #{tpu_custom_call.1} parent=11 // pred_check_branch
          %1179 = sbr.rel (%p1177) target = $region108
        $region107: #{tpu_custom_call.1} parent=11 // pred_region
          %s1181 = ssub.s32 16, 16
          %1182 = vsyncadd [#allocation47], %s1181
          %s1184 = sshll.u32 [#allocation46], 4
          %s1185 = int_to_ptr.vmem [resolvable:$true] %s1184
          %1187 = dma.hbm_to_vmem [thread:$0]  %s55, 16, %s1185, [#allocation47]
        $region108: #{tpu_custom_call.1} parent=11 // pred_fallthru
          _
        // Predicated region
        $region109: #{tpu_custom_call.1} parent=11 // pred_check
          %p1188 = pneg %p735
        $region110: #{tpu_custom_call.1} parent=11 // pred_check_branch
          %1190 = sbr.rel (%p1188) target = $region112
        $region111: #{tpu_custom_call.1} parent=11 // pred_region
          %s1192 = ssub.s32 640, 640
          %1193 = vsyncadd [#allocation47], %s1192
          %s1194 = sshll.u32 [#allocation48], 4
          %s1195 = int_to_ptr.vmem [resolvable:$true] %s1194
          %1200 = dma.hbm_to_vmem [thread:$0]  %s57, 640, %s1195, [#allocation47], 64, 64, 4
        $region112: #{tpu_custom_call.1} parent=11 // pred_fallthru
          _
        // Predicated region
        $region113: #{tpu_custom_call.1} parent=11 // pred_check
          %p1201 = pneg %p756
        $region114: #{tpu_custom_call.1} parent=11 // pred_check_branch
          %1203 = sbr.rel (%p1201) target = $region116
        $region115: #{tpu_custom_call.1} parent=11 // pred_region
          %s1205 = ssub.s32 512, 512
          %1206 = vsyncadd [#allocation50], %s1205
          %s1207 = sshll.u32 [#allocation49], 4
          %s1208 = int_to_ptr.vmem [resolvable:$true] %s1207
          %1213 = dma.hbm_to_vmem [thread:$0]  %s59, 512, %s1208, [#allocation50], 64, 64, 4
        $region116: #{tpu_custom_call.1} parent=11 // pred_fallthru
          _
        // Predicated region
        $region117: #{tpu_custom_call.1} parent=11 // pred_check
          %p1214 = pneg %p777
        $region118: #{tpu_custom_call.1} parent=11 // pred_check_branch
          %1216 = sbr.rel (%p1214) target = $region120
        $region119: #{tpu_custom_call.1} parent=11 // pred_region
          %s1218 = ssub.s32 16, 16
          %1219 = vsyncadd [#allocation50], %s1218
          %s1221 = sshll.u32 [#allocation51], 4
          %s1222 = int_to_ptr.vmem [resolvable:$true] %s1221
          %1224 = dma.hbm_to_vmem [thread:$0]  %s61, 16, %s1222, [#allocation50]
        $region120: #{tpu_custom_call.1} parent=11 // pred_fallthru
          _
        // Predicated region
        $region121: #{tpu_custom_call.1} parent=11 // pred_check
          %p1225 = pneg %p798
        $region122: #{tpu_custom_call.1} parent=11 // pred_check_branch
          %1227 = sbr.rel (%p1225) target = $region124
        $region123: #{tpu_custom_call.1} parent=11 // pred_region
          %s1229 = ssub.s32 512, 512
          %1230 = vsyncadd [#allocation53], %s1229
          %s1231 = sshll.u32 [#allocation52], 4
          %s1232 = int_to_ptr.vmem [resolvable:$true] %s1231
          %1237 = dma.hbm_to_vmem [thread:$0]  %s63, 512, %s1232, [#allocation53], 64, 64, 4
        $region124: #{tpu_custom_call.1} parent=11 // pred_fallthru
          _
        // Predicated region
        $region125: #{tpu_custom_call.1} parent=11 // pred_check
          %p1238 = pneg %p819
        $region126: #{tpu_custom_call.1} parent=11 // pred_check_branch
          %1240 = sbr.rel (%p1238) target = $region128
        $region127: #{tpu_custom_call.1} parent=11 // pred_region
          %s1242 = ssub.s32 16, 16
          %1243 = vsyncadd [#allocation53], %s1242
          %s1245 = sshll.u32 [#allocation54], 4
          %s1246 = int_to_ptr.vmem [resolvable:$true] %s1245
          %1248 = dma.hbm_to_vmem [thread:$0]  %s65, 16, %s1246, [#allocation53]
        $region128: #{tpu_custom_call.1} parent=11 // pred_fallthru
          _
        // Predicated region
        $region129: #{tpu_custom_call.1} parent=11 // pred_check
          %p1249 = pneg %p840
        $region130: #{tpu_custom_call.1} parent=11 // pred_check_branch
          %1251 = sbr.rel (%p1249) target = $region132
        $region131: #{tpu_custom_call.1} parent=11 // pred_region
          %s1253 = ssub.s32 256, 256
          %1254 = vsyncadd [#allocation56], %s1253
          %s1255 = sshll.u32 [#allocation55], 4
          %s1256 = int_to_ptr.vmem [resolvable:$true] %s1255
          %1261 = dma.hbm_to_vmem [thread:$0]  %s67, 256, %s1256, [#allocation56], 128, 128, 8
        $region132: #{tpu_custom_call.1} parent=11 // pred_fallthru
          _
        // Predicated region
        $region133: #{tpu_custom_call.1} parent=11 // pred_check
          %p1262 = pneg %p861
        $region134: #{tpu_custom_call.1} parent=11 // pred_check_branch
          %1264 = sbr.rel (%p1262) target = $region136
        $region135: #{tpu_custom_call.1} parent=11 // pred_region
          _
        $region136: #{tpu_custom_call.1} parent=11 // pred_fallthru
          _
      $region12: #{tpu_custom_call.1} parent=5 // pred_fallthru
        _
      %p1265 = scmp.lt.s32.totalorder %s106, 2
      // Predicated region
      $region137: #{tpu_custom_call.1} parent=5 // pred_check
        %p1266 = pneg %p1265
      $region138: #{tpu_custom_call.1} parent=5 // pred_check_branch
        %1268 = sbr.rel (%p1266) target = $region140
      $region139: #{tpu_custom_call.1} parent=5 // pred_region
        // Predicated region
        $region141: #{tpu_custom_call.1} parent=139 // pred_check
          %p1269 = pneg %p126
        $region142: #{tpu_custom_call.1} parent=139 // pred_check_branch
          %1271 = sbr.rel (%p1269) target = $region144
        $region143: #{tpu_custom_call.1} parent=139 // pred_region
          %s1272 = sand.u32 %s116, 1
          %s1273 = scalar_lea.sflag [#allocation5], %s1272
          %s1274 = sand.u32 %s116, 1
          %s1275 = smul.addr %s1274, 320
          %s1276 = scalar_lea.vmem [#allocation4], %s1275
          %s1277 = smul.u32 16, %s106
          %s1279 = ssub.s32 5120, 5120
          %1280 = vsyncadd %s1273, %s1279
          %s1281 = smul.addr %s1277, 5
          %s1282 = smul.addr %s1281, 64
          %s1283 = scalar_lea.hbm %s1, %s1282
          %s1284 = sshll.u32 %s1276, 4
          %s1285 = int_to_ptr.vmem [resolvable:$true] %s1284
          %1290 = dma.hbm_to_vmem [thread:$0]  %s1283, 5120, %s1285, %s1273, 320, 320, 20
        $region144: #{tpu_custom_call.1} parent=139 // pred_fallthru
          _
        // Predicated region
        $region145: #{tpu_custom_call.1} parent=139 // pred_check
          %p1291 = pneg %p152
        $region146: #{tpu_custom_call.1} parent=139 // pred_check_branch
          %1293 = sbr.rel (%p1291) target = $region148
        $region147: #{tpu_custom_call.1} parent=139 // pred_region
          %s1294 = sand.u32 %s106, 1
          %s1295 = scalar_lea.sflag [#allocation8], %s1294
          %s1296 = sand.u32 %s142, 1
          %s1297 = smul.addr %s1296, 320
          %s1298 = scalar_lea.vmem [#allocation7], %s1297
          %s1299 = smul.u32 16, %s106
          %s1301 = ssub.s32 5120, 5120
          %1302 = vsyncadd %s1295, %s1301
          %s1303 = smul.addr %s1299, 5
          %s1304 = smul.addr %s1303, 64
          %s1305 = scalar_lea.hbm %s3, %s1304
          %s1306 = sshll.u32 %s1298, 4
          %s1307 = int_to_ptr.vmem [resolvable:$true] %s1306
          %1312 = dma.hbm_to_vmem [thread:$0]  %s1305, 5120, %s1307, %s1295, 320, 320, 20
        $region148: #{tpu_custom_call.1} parent=139 // pred_fallthru
          _
        // Predicated region
        $region149: #{tpu_custom_call.1} parent=139 // pred_check
          %p1313 = pneg %p178
        $region150: #{tpu_custom_call.1} parent=139 // pred_check_branch
          %1315 = sbr.rel (%p1313) target = $region152
        $region151: #{tpu_custom_call.1} parent=139 // pred_region
          %s1316 = sand.u32 %s106, 1
          %s1317 = scalar_lea.sflag [#allocation8], %s1316
          %s1318 = sand.u32 %s168, 1
          %s1319 = smul.addr %s1318, 128
          %s1320 = scalar_lea.vmem [#allocation9], %s1319
          %s1321 = smul.u32 16, %s106
          %s1323 = ssub.s32 2048, 2048
          %1324 = vsyncadd %s1317, %s1323
          %s1325 = smul.addr %s1321, 128
          %s1326 = scalar_lea.hbm %s5, %s1325
          %s1327 = sshll.u32 %s1320, 4
          %s1328 = int_to_ptr.vmem [resolvable:$true] %s1327
          %1333 = dma.hbm_to_vmem [thread:$0]  %s1326, 2048, %s1328, %s1317, 128, 128, 8
        $region152: #{tpu_custom_call.1} parent=139 // pred_fallthru
          _
        // Predicated region
        $region153: #{tpu_custom_call.1} parent=139 // pred_check
          %p1334 = pneg %p204
        $region154: #{tpu_custom_call.1} parent=139 // pred_check_branch
          %1336 = sbr.rel (%p1334) target = $region156
        $region155: #{tpu_custom_call.1} parent=139 // pred_region
          %s1337 = sand.u32 %s106, 1
          %s1338 = scalar_lea.sflag [#allocation11], %s1337
          %s1339 = sand.u32 %s194, 1
          %s1340 = smul.addr %s1339, 32
          %s1341 = scalar_lea.vmem [#allocation10], %s1340
          %s1342 = smul.u32 2, %s106
          %s1344 = ssub.s32 512, 512
          %1345 = vsyncadd %s1338, %s1344
          %s1346 = smul.addr %s1342, 4
          %s1347 = smul.addr %s1346, 64
          %s1348 = scalar_lea.hbm %s7, %s1347
          %s1349 = sshll.u32 %s1341, 4
          %s1350 = int_to_ptr.vmem [resolvable:$true] %s1349
          %1355 = dma.hbm_to_vmem [thread:$0]  %s1348, 512, %s1350, %s1338, 256, 256, 16
        $region156: #{tpu_custom_call.1} parent=139 // pred_fallthru
          _
      $region140: #{tpu_custom_call.1} parent=5 // pred_fallthru
        _
      %p1356 = scmp.le.s32.totalorder 1, %s106
      %p1357 = scmp.lt.s32.totalorder %s106, 3
      %p1358 = pnand %p1356, %p1357
      %p1359 = pneg %p1358
      // Predicated region
      $region157: #{tpu_custom_call.1} parent=5 // pred_check
        _
      $region158: #{tpu_custom_call.1} parent=5 // pred_check_branch
        %1361 = sbr.rel (%p1358) target = $region160
      $region159: #{tpu_custom_call.1} parent=5 // pred_region
        %s1362 = ssub.s32 %s106, 1
        %s1363 = sand.u32 %s119, 1
        %s1364 = scalar_lea.sflag [#allocation5], %s1363
        %s1365 = sand.u32 %s119, 1
        %s1366 = smul.addr %s1365, 320
        %s1367 = scalar_lea.vmem [#allocation4], %s1366
        // Predicated region
        $region161: #{tpu_custom_call.1} parent=159 // pred_check
          %p1368 = pneg %p132
        $region162: #{tpu_custom_call.1} parent=159 // pred_check_branch
          %1370 = sbr.rel (%p1368) target = $region164
        $region163: #{tpu_custom_call.1} parent=159 // pred_region
          %1371 = dma.done %s1364, 5120
        $region164: #{tpu_custom_call.1} parent=159 // pred_fallthru
          _
        %s1372 = sand.u32 %s111, 1
        %s1373 = scalar_lea.sflag [#allocation8], %s1372
        %s1374 = sand.u32 %s145, 1
        %s1375 = smul.addr %s1374, 320
        %s1376 = scalar_lea.vmem [#allocation7], %s1375
        // Predicated region
        $region165: #{tpu_custom_call.1} parent=159 // pred_check
          %p1377 = pneg %p158
        $region166: #{tpu_custom_call.1} parent=159 // pred_check_branch
          %1379 = sbr.rel (%p1377) target = $region168
        $region167: #{tpu_custom_call.1} parent=159 // pred_region
          %1380 = dma.done %s1373, 5120
        $region168: #{tpu_custom_call.1} parent=159 // pred_fallthru
          _
        %s1381 = sand.u32 %s111, 1
        %s1382 = scalar_lea.sflag [#allocation8], %s1381
        %s1383 = sand.u32 %s171, 1
        %s1384 = smul.addr %s1383, 128
        %s1385 = scalar_lea.vmem [#allocation9], %s1384
        // Predicated region
        $region169: #{tpu_custom_call.1} parent=159 // pred_check
          %p1386 = pneg %p184
        $region170: #{tpu_custom_call.1} parent=159 // pred_check_branch
          %1388 = sbr.rel (%p1386) target = $region172
        $region171: #{tpu_custom_call.1} parent=159 // pred_region
          %1389 = dma.done %s1382, 2048
        $region172: #{tpu_custom_call.1} parent=159 // pred_fallthru
          _
        %s1390 = sand.u32 %s111, 1
        %s1391 = scalar_lea.sflag [#allocation11], %s1390
        %s1392 = sand.u32 %s197, 1
        %s1393 = smul.addr %s1392, 32
        %s1394 = scalar_lea.vmem [#allocation10], %s1393
        // Predicated region
        $region173: #{tpu_custom_call.1} parent=159 // pred_check
          %p1395 = pneg %p210
        $region174: #{tpu_custom_call.1} parent=159 // pred_check_branch
          %1397 = sbr.rel (%p1395) target = $region176
        $region175: #{tpu_custom_call.1} parent=159 // pred_region
          %1398 = dma.done %s1391, 512
        $region176: #{tpu_custom_call.1} parent=159 // pred_fallthru
          _
        // Predicated region
        $region177: #{tpu_custom_call.1} parent=159 // pred_check
          %p1399 = pneg %p231
        $region178: #{tpu_custom_call.1} parent=159 // pred_check_branch
          %1401 = sbr.rel (%p1399) target = $region180
        $region179: #{tpu_custom_call.1} parent=159 // pred_region
          %1402 = dma.done [#allocation11], 19456
        $region180: #{tpu_custom_call.1} parent=159 // pred_fallthru
          _
        // Predicated region
        $region181: #{tpu_custom_call.1} parent=159 // pred_check
          %p1403 = pneg %p252
        $region182: #{tpu_custom_call.1} parent=159 // pred_check_branch
          %1405 = sbr.rel (%p1403) target = $region184
        $region183: #{tpu_custom_call.1} parent=159 // pred_region
          %1406 = dma.done [#allocation14], 64
        $region184: #{tpu_custom_call.1} parent=159 // pred_fallthru
          _
        // Predicated region
        $region185: #{tpu_custom_call.1} parent=159 // pred_check
          %p1407 = pneg %p273
        $region186: #{tpu_custom_call.1} parent=159 // pred_check_branch
          %1409 = sbr.rel (%p1407) target = $region188
        $region187: #{tpu_custom_call.1} parent=159 // pred_region
          %1410 = dma.done [#allocation14], 4096
        $region188: #{tpu_custom_call.1} parent=159 // pred_fallthru
          _
        // Predicated region
        $region189: #{tpu_custom_call.1} parent=159 // pred_check
          %p1411 = pneg %p294
        $region190: #{tpu_custom_call.1} parent=159 // pred_check_branch
          %1413 = sbr.rel (%p1411) target = $region192
        $region191: #{tpu_custom_call.1} parent=159 // pred_region
          %1414 = dma.done [#allocation17], 16
        $region192: #{tpu_custom_call.1} parent=159 // pred_fallthru
          _
        // Predicated region
        $region193: #{tpu_custom_call.1} parent=159 // pred_check
          %p1415 = pneg %p315
        $region194: #{tpu_custom_call.1} parent=159 // pred_check_branch
          %1417 = sbr.rel (%p1415) target = $region196
        $region195: #{tpu_custom_call.1} parent=159 // pred_region
          %1418 = dma.done [#allocation17], 1024
        $region196: #{tpu_custom_call.1} parent=159 // pred_fallthru
          _
        // Predicated region
        $region197: #{tpu_custom_call.1} parent=159 // pred_check
          %p1419 = pneg %p336
        $region198: #{tpu_custom_call.1} parent=159 // pred_check_branch
          %1421 = sbr.rel (%p1419) target = $region200
        $region199: #{tpu_custom_call.1} parent=159 // pred_region
          %1422 = dma.done [#allocation20], 16
        $region200: #{tpu_custom_call.1} parent=159 // pred_fallthru
          _
        // Predicated region
        $region201: #{tpu_custom_call.1} parent=159 // pred_check
          %p1423 = pneg %p357
        $region202: #{tpu_custom_call.1} parent=159 // pred_check_branch
          %1425 = sbr.rel (%p1423) target = $region204
        $region203: #{tpu_custom_call.1} parent=159 // pred_region
          %1426 = dma.done [#allocation20], 19456
        $region204: #{tpu_custom_call.1} parent=159 // pred_fallthru
          _
        // Predicated region
        $region205: #{tpu_custom_call.1} parent=159 // pred_check
          %p1427 = pneg %p378
        $region206: #{tpu_custom_call.1} parent=159 // pred_check_branch
          %1429 = sbr.rel (%p1427) target = $region208
        $region207: #{tpu_custom_call.1} parent=159 // pred_region
          %1430 = dma.done [#allocation23], 64
        $region208: #{tpu_custom_call.1} parent=159 // pred_fallthru
          _
        // Predicated region
        $region209: #{tpu_custom_call.1} parent=159 // pred_check
          %p1431 = pneg %p399
        $region210: #{tpu_custom_call.1} parent=159 // pred_check_branch
          %1433 = sbr.rel (%p1431) target = $region212
        $region211: #{tpu_custom_call.1} parent=159 // pred_region
          %1434 = dma.done [#allocation23], 4096
        $region212: #{tpu_custom_call.1} parent=159 // pred_fallthru
          _
        // Predicated region
        $region213: #{tpu_custom_call.1} parent=159 // pred_check
          %p1435 = pneg %p420
        $region214: #{tpu_custom_call.1} parent=159 // pred_check_branch
          %1437 = sbr.rel (%p1435) target = $region216
        $region215: #{tpu_custom_call.1} parent=159 // pred_region
          %1438 = dma.done [#allocation26], 16
        $region216: #{tpu_custom_call.1} parent=159 // pred_fallthru
          _
        // Predicated region
        $region217: #{tpu_custom_call.1} parent=159 // pred_check
          %p1439 = pneg %p441
        $region218: #{tpu_custom_call.1} parent=159 // pred_check_branch
          %1441 = sbr.rel (%p1439) target = $region220
        $region219: #{tpu_custom_call.1} parent=159 // pred_region
          %1442 = dma.done [#allocation26], 1024
        $region220: #{tpu_custom_call.1} parent=159 // pred_fallthru
          _
        // Predicated region
        $region221: #{tpu_custom_call.1} parent=159 // pred_check
          %p1443 = pneg %p462
        $region222: #{tpu_custom_call.1} parent=159 // pred_check_branch
          %1445 = sbr.rel (%p1443) target = $region224
        $region223: #{tpu_custom_call.1} parent=159 // pred_region
          %1446 = dma.done [#allocation29], 16
        $region224: #{tpu_custom_call.1} parent=159 // pred_fallthru
          _
        // Predicated region
        $region225: #{tpu_custom_call.1} parent=159 // pred_check
          %p1447 = pneg %p483
        $region226: #{tpu_custom_call.1} parent=159 // pred_check_branch
          %1449 = sbr.rel (%p1447) target = $region228
        $region227: #{tpu_custom_call.1} parent=159 // pred_region
          %1450 = dma.done [#allocation29], 256
        $region228: #{tpu_custom_call.1} parent=159 // pred_fallthru
          _
        // Predicated region
        $region229: #{tpu_custom_call.1} parent=159 // pred_check
          %p1451 = pneg %p504
        $region230: #{tpu_custom_call.1} parent=159 // pred_check_branch
          %1453 = sbr.rel (%p1451) target = $region232
        $region231: #{tpu_custom_call.1} parent=159 // pred_region
          %1454 = dma.done [#allocation32], 16
        $region232: #{tpu_custom_call.1} parent=159 // pred_fallthru
          _
        // Predicated region
        $region233: #{tpu_custom_call.1} parent=159 // pred_check
          %p1455 = pneg %p525
        $region234: #{tpu_custom_call.1} parent=159 // pred_check_branch
          %1457 = sbr.rel (%p1455) target = $region236
        $region235: #{tpu_custom_call.1} parent=159 // pred_region
          %1458 = dma.done [#allocation32], 128
        $region236: #{tpu_custom_call.1} parent=159 // pred_fallthru
          _
        // Predicated region
        $region237: #{tpu_custom_call.1} parent=159 // pred_check
          %p1459 = pneg %p546
        $region238: #{tpu_custom_call.1} parent=159 // pred_check_branch
          %1461 = sbr.rel (%p1459) target = $region240
        $region239: #{tpu_custom_call.1} parent=159 // pred_region
          %1462 = dma.done [#allocation35], 16
        $region240: #{tpu_custom_call.1} parent=159 // pred_fallthru
          _
        // Predicated region
        $region241: #{tpu_custom_call.1} parent=159 // pred_check
          %p1463 = pneg %p567
        $region242: #{tpu_custom_call.1} parent=159 // pred_check_branch
          %1465 = sbr.rel (%p1463) target = $region244
        $region243: #{tpu_custom_call.1} parent=159 // pred_region
          %1466 = dma.done [#allocation35], 5120
        $region244: #{tpu_custom_call.1} parent=159 // pred_fallthru
          _
        // Predicated region
        $region245: #{tpu_custom_call.1} parent=159 // pred_check
          %p1467 = pneg %p588
        $region246: #{tpu_custom_call.1} parent=159 // pred_check_branch
          %1469 = sbr.rel (%p1467) target = $region248
        $region247: #{tpu_custom_call.1} parent=159 // pred_region
          %1470 = dma.done [#allocation38], 16
        $region248: #{tpu_custom_call.1} parent=159 // pred_fallthru
          _
        // Predicated region
        $region249: #{tpu_custom_call.1} parent=159 // pred_check
          %p1471 = pneg %p609
        $region250: #{tpu_custom_call.1} parent=159 // pred_check_branch
          %1473 = sbr.rel (%p1471) target = $region252
        $region251: #{tpu_custom_call.1} parent=159 // pred_region
          %1474 = dma.done [#allocation38], 16384
        $region252: #{tpu_custom_call.1} parent=159 // pred_fallthru
          _
        // Predicated region
        $region253: #{tpu_custom_call.1} parent=159 // pred_check
          %p1475 = pneg %p630
        $region254: #{tpu_custom_call.1} parent=159 // pred_check_branch
          %1477 = sbr.rel (%p1475) target = $region256
        $region255: #{tpu_custom_call.1} parent=159 // pred_region
          %1478 = dma.done [#allocation41], 64
        $region256: #{tpu_custom_call.1} parent=159 // pred_fallthru
          _
        // Predicated region
        $region257: #{tpu_custom_call.1} parent=159 // pred_check
          %p1479 = pneg %p651
        $region258: #{tpu_custom_call.1} parent=159 // pred_check_branch
          %1481 = sbr.rel (%p1479) target = $region260
        $region259: #{tpu_custom_call.1} parent=159 // pred_region
          %1482 = dma.done [#allocation41], 4096
        $region260: #{tpu_custom_call.1} parent=159 // pred_fallthru
          _
        // Predicated region
        $region261: #{tpu_custom_call.1} parent=159 // pred_check
          %p1483 = pneg %p672
        $region262: #{tpu_custom_call.1} parent=159 // pred_check_branch
          %1485 = sbr.rel (%p1483) target = $region264
        $region263: #{tpu_custom_call.1} parent=159 // pred_region
          %1486 = dma.done [#allocation44], 16
        $region264: #{tpu_custom_call.1} parent=159 // pred_fallthru
          _
        // Predicated region
        $region265: #{tpu_custom_call.1} parent=159 // pred_check
          %p1487 = pneg %p693
        $region266: #{tpu_custom_call.1} parent=159 // pred_check_branch
          %1489 = sbr.rel (%p1487) target = $region268
        $region267: #{tpu_custom_call.1} parent=159 // pred_region
          %1490 = dma.done [#allocation44], 1024
        $region268: #{tpu_custom_call.1} parent=159 // pred_fallthru
          _
        // Predicated region
        $region269: #{tpu_custom_call.1} parent=159 // pred_check
          %p1491 = pneg %p714
        $region270: #{tpu_custom_call.1} parent=159 // pred_check_branch
          %1493 = sbr.rel (%p1491) target = $region272
        $region271: #{tpu_custom_call.1} parent=159 // pred_region
          %1494 = dma.done [#allocation47], 16
        $region272: #{tpu_custom_call.1} parent=159 // pred_fallthru
          _
        // Predicated region
        $region273: #{tpu_custom_call.1} parent=159 // pred_check
          %p1495 = pneg %p735
        $region274: #{tpu_custom_call.1} parent=159 // pred_check_branch
          %1497 = sbr.rel (%p1495) target = $region276
        $region275: #{tpu_custom_call.1} parent=159 // pred_region
          %1498 = dma.done [#allocation47], 640
        $region276: #{tpu_custom_call.1} parent=159 // pred_fallthru
          _
        // Predicated region
        $region277: #{tpu_custom_call.1} parent=159 // pred_check
          %p1499 = pneg %p756
        $region278: #{tpu_custom_call.1} parent=159 // pred_check_branch
          %1501 = sbr.rel (%p1499) target = $region280
        $region279: #{tpu_custom_call.1} parent=159 // pred_region
          %1502 = dma.done [#allocation50], 512
        $region280: #{tpu_custom_call.1} parent=159 // pred_fallthru
          _
        // Predicated region
        $region281: #{tpu_custom_call.1} parent=159 // pred_check
          %p1503 = pneg %p777
        $region282: #{tpu_custom_call.1} parent=159 // pred_check_branch
          %1505 = sbr.rel (%p1503) target = $region284
        $region283: #{tpu_custom_call.1} parent=159 // pred_region
          %1506 = dma.done [#allocation50], 16
        $region284: #{tpu_custom_call.1} parent=159 // pred_fallthru
          _
        // Predicated region
        $region285: #{tpu_custom_call.1} parent=159 // pred_check
          %p1507 = pneg %p798
        $region286: #{tpu_custom_call.1} parent=159 // pred_check_branch
          %1509 = sbr.rel (%p1507) target = $region288
        $region287: #{tpu_custom_call.1} parent=159 // pred_region
          %1510 = dma.done [#allocation53], 512
        $region288: #{tpu_custom_call.1} parent=159 // pred_fallthru
          _
        // Predicated region
        $region289: #{tpu_custom_call.1} parent=159 // pred_check
          %p1511 = pneg %p819
        $region290: #{tpu_custom_call.1} parent=159 // pred_check_branch
          %1513 = sbr.rel (%p1511) target = $region292
        $region291: #{tpu_custom_call.1} parent=159 // pred_region
          %1514 = dma.done [#allocation53], 16
        $region292: #{tpu_custom_call.1} parent=159 // pred_fallthru
          _
        // Predicated region
        $region293: #{tpu_custom_call.1} parent=159 // pred_check
          %p1515 = pneg %p840
        $region294: #{tpu_custom_call.1} parent=159 // pred_check_branch
          %1517 = sbr.rel (%p1515) target = $region296
        $region295: #{tpu_custom_call.1} parent=159 // pred_region
          %1518 = dma.done [#allocation56], 256
        $region296: #{tpu_custom_call.1} parent=159 // pred_fallthru
          _
        %s1519 = sand.u32 %s119, 1
        %s1520 = scalar_lea.sflag [#allocation5], %s1519
        %s1521 = sand.u32 %s119, 1
        %s1522 = smul.addr %s1521, 320
        %s1523 = scalar_lea.vmem [#allocation4], %s1522
        %p1524 = pneg %p132
        %p1525 = pneg %p129
        %s1526 = sand.u32 %s111, 1
        %s1527 = scalar_lea.sflag [#allocation8], %s1526
        %s1528 = sand.u32 %s145, 1
        %s1529 = smul.addr %s1528, 320
        %s1530 = scalar_lea.vmem [#allocation7], %s1529
        %p1531 = pneg %p158
        %p1532 = pneg %p155
        %s1533 = sand.u32 %s111, 1
        %s1534 = scalar_lea.sflag [#allocation8], %s1533
        %s1535 = sand.u32 %s171, 1
        %s1536 = smul.addr %s1535, 128
        %s1537 = scalar_lea.vmem [#allocation9], %s1536
        %p1538 = pneg %p184
        %p1539 = pneg %p181
        %s1540 = sand.u32 %s111, 1
        %s1541 = scalar_lea.sflag [#allocation11], %s1540
        %s1542 = sand.u32 %s197, 1
        %s1543 = smul.addr %s1542, 32
        %s1544 = scalar_lea.vmem [#allocation10], %s1543
        %p1545 = pneg %p210
        %p1546 = pneg %p207
        %p1547 = pneg %p231
        %p1548 = pneg %p228
        %p1549 = pneg %p252
        %p1550 = pneg %p249
        %p1551 = pneg %p273
        %p1552 = pneg %p270
        %p1553 = pneg %p294
        %p1554 = pneg %p291
        %p1555 = pneg %p315
        %p1556 = pneg %p312
        %p1557 = pneg %p336
        %p1558 = pneg %p333
        %p1559 = pneg %p357
        %p1560 = pneg %p354
        %p1561 = pneg %p378
        %p1562 = pneg %p375
        %p1563 = pneg %p399
        %p1564 = pneg %p396
        %p1565 = pneg %p420
        %p1566 = pneg %p417
        %p1567 = pneg %p441
        %p1568 = pneg %p438
        %p1569 = pneg %p462
        %p1570 = pneg %p459
        %p1571 = pneg %p483
        %p1572 = pneg %p480
        %p1573 = pneg %p504
        %p1574 = pneg %p501
        %p1575 = pneg %p525
        %p1576 = pneg %p522
        %p1577 = pneg %p546
        %p1578 = pneg %p543
        %p1579 = pneg %p567
        %p1580 = pneg %p564
        %p1581 = pneg %p588
        %p1582 = pneg %p585
        %p1583 = pneg %p609
        %p1584 = pneg %p606
        %p1585 = pneg %p630
        %p1586 = pneg %p627
        %p1587 = pneg %p651
        %p1588 = pneg %p648
        %p1589 = pneg %p672
        %p1590 = pneg %p669
        %p1591 = pneg %p693
        %p1592 = pneg %p690
        %p1593 = pneg %p714
        %p1594 = pneg %p711
        %p1595 = pneg %p735
        %p1596 = pneg %p732
        %p1597 = pneg %p756
        %p1598 = pneg %p753
        %p1599 = pneg %p777
        %p1600 = pneg %p774
        %p1601 = pneg %p798
        %p1602 = pneg %p795
        %p1603 = pneg %p819
        %p1604 = pneg %p816
        %p1605 = pneg %p840
        %p1606 = pneg %p837
        %p1607 = pneg %p861
        %p1608 = pneg %p858
        %p1609 = pneg %p887
        %p1610 = pneg %p884
        %s1611 = sand.u32 %s874, 1
        %s1612 = scalar_lea.sflag [#allocation6], %s1611
        %s1613 = sand.u32 %s874, 1
        %s1614 = smul.addr %s1613, 16
        %s1615 = scalar_lea.vmem [#allocation57], %s1614
        %s1616 = smul.u32 16, %s111
        %s1617 = smul.u32 16, %s111
        %s1618 = smul.u32 16, %s111
        %s1619 = smul.u32 2, %s111
        %s1620 = smul.u32 2, %s111
        %v1623 = vld [vmem:[%s1367] sm:$0xff]
        %v1624 = vld [vmem:[%s1367 + $0x8] sm:$0xff]
        %v1625 = vld [vmem:[%s1367 + $0x10] sm:$0xf]
        %v1626 = vld [vmem:[%s1367 + $0x14] sm:$0xff]
        %v1627 = vld [vmem:[%s1367 + $0x1c] sm:$0xff]
        %v1628 = vld [vmem:[%s1367 + $0x24] sm:$0xf]
        %v1629 = vld [vmem:[%s1367 + $0x28] sm:$0xff]
        %v1630 = vld [vmem:[%s1367 + $0x30] sm:$0xff]
        %v1631 = vld [vmem:[%s1367 + $0x38] sm:$0xf]
        %v1632 = vld [vmem:[%s1367 + $0x3c] sm:$0xff]
        %v1633 = vld [vmem:[%s1367 + $0x44] sm:$0xff]
        %v1634 = vld [vmem:[%s1367 + $0x4c] sm:$0xf]
        %v1635 = vld [vmem:[%s1367 + $0x50] sm:$0xff]
        %v1636 = vld [vmem:[%s1367 + $0x58] sm:$0xff]
        %v1637 = vld [vmem:[%s1367 + $0x60] sm:$0xf]
        %v1638 = vld [vmem:[%s1367 + $0x64] sm:$0xff]
        %v1639 = vld [vmem:[%s1367 + $0x6c] sm:$0xff]
        %v1640 = vld [vmem:[%s1367 + $0x74] sm:$0xf]
        %v1641 = vld [vmem:[%s1367 + $0x78] sm:$0xff]
        %v1642 = vld [vmem:[%s1367 + $0x80] sm:$0xff]
        %v1643 = vld [vmem:[%s1367 + $0x88] sm:$0xf]
        %v1644 = vld [vmem:[%s1367 + $0x8c] sm:$0xff]
        %v1645 = vld [vmem:[%s1367 + $0x94] sm:$0xff]
        %v1646 = vld [vmem:[%s1367 + $0x9c] sm:$0xf]
        %v1647 = vld [vmem:[%s1367 + $0xa0] sm:$0xff]
        %v1648 = vld [vmem:[%s1367 + $0xa8] sm:$0xff]
        %v1649 = vld [vmem:[%s1367 + $0xb0] sm:$0xf]
        %v1650 = vld [vmem:[%s1367 + $0xb4] sm:$0xff]
        %v1651 = vld [vmem:[%s1367 + $0xbc] sm:$0xff]
        %v1652 = vld [vmem:[%s1367 + $0xc4] sm:$0xf]
        %v1653 = vld [vmem:[%s1367 + $0xc8] sm:$0xff]
        %v1654 = vld [vmem:[%s1367 + $0xd0] sm:$0xff]
        %v1655 = vld [vmem:[%s1367 + $0xd8] sm:$0xf]
        %v1656 = vld [vmem:[%s1367 + $0xdc] sm:$0xff]
        %v1657 = vld [vmem:[%s1367 + $0xe4] sm:$0xff]
        %v1658 = vld [vmem:[%s1367 + $0xec] sm:$0xf]
        %v1659 = vld [vmem:[%s1367 + $0xf0] sm:$0xff]
        %v1660 = vld [vmem:[%s1367 + $0xf8] sm:$0xff]
        %v1661 = vld [vmem:[%s1367 + $0x100] sm:$0xf]
        %v1662 = vld [vmem:[%s1367 + $0x104] sm:$0xff]
        %v1663 = vld [vmem:[%s1367 + $0x10c] sm:$0xff]
        %v1664 = vld [vmem:[%s1367 + $0x114] sm:$0xf]
        %v1665 = vld [vmem:[%s1367 + $0x118] sm:$0xff]
        %v1666 = vld [vmem:[%s1367 + $0x120] sm:$0xff]
        %v1667 = vld [vmem:[%s1367 + $0x128] sm:$0xf]
        %v1668 = vld [vmem:[%s1367 + $0x12c] sm:$0xff]
        %v1669 = vld [vmem:[%s1367 + $0x134] sm:$0xff]
        %v1670 = vld [vmem:[%s1367 + $0x13c] sm:$0xf]
        %v1671 = vld [vmem:[#allocation12] sm:$0xff]
        %v1672 = vld [vmem:[#allocation12 + $0x8] sm:$0xff]
        %v1673 = vld [vmem:[#allocation12 + $0x10] sm:$0xff]
        %v1674 = vld [vmem:[#allocation12 + $0x18] sm:$0xff]
        %v1675 = vld [vmem:[#allocation12 + $0x20] sm:$0xff]
        %v1676 = vld [vmem:[#allocation12 + $0x28] sm:$0xff]
        %v1677 = vld [vmem:[#allocation12 + $0x30] sm:$0xff]
        %v1678 = vld [vmem:[#allocation12 + $0x38] sm:$0xff]
        %v1679 = vld [vmem:[#allocation12 + $0x40] sm:$0xff]
        %v1680 = vld [vmem:[#allocation12 + $0x48] sm:$0xff]
        %v1681 = vld [vmem:[#allocation12 + $0x50] sm:$0xff]
        %v1682 = vld [vmem:[#allocation12 + $0x58] sm:$0xff]
        %v1683 = vld [vmem:[#allocation12 + $0x60] sm:$0xff]
        %v1684 = vld [vmem:[#allocation12 + $0x68] sm:$0xff]
        %v1685 = vld [vmem:[#allocation12 + $0x70] sm:$0xff]
        %v1686 = vld [vmem:[#allocation12 + $0x78] sm:$0xff]
        %v1687 = vld [vmem:[#allocation12 + $0x80] sm:$0xff]
        %v1688 = vld [vmem:[#allocation12 + $0x88] sm:$0xff]
        %v1689 = vld [vmem:[#allocation12 + $0x90] sm:$0xff]
        %v1690 = vld [vmem:[#allocation12 + $0x98] sm:$0xff]
        %v1691 = vld [vmem:[#allocation12 + $0xa0] sm:$0xff]
        %v1692 = vld [vmem:[#allocation12 + $0xa8] sm:$0xff]
        %v1693 = vld [vmem:[#allocation12 + $0xb0] sm:$0xff]
        %v1694 = vld [vmem:[#allocation12 + $0xb8] sm:$0xff]
        %v1695 = vld [vmem:[#allocation12 + $0xc0] sm:$0xff]
        %v1696 = vld [vmem:[#allocation12 + $0xc8] sm:$0xff]
        %v1697 = vld [vmem:[#allocation12 + $0xd0] sm:$0xff]
        %v1698 = vld [vmem:[#allocation12 + $0xd8] sm:$0xff]
        %v1699 = vld [vmem:[#allocation12 + $0xe0] sm:$0xff]
        %v1700 = vld [vmem:[#allocation12 + $0xe8] sm:$0xff]
        %v1701 = vld [vmem:[#allocation12 + $0xf0] sm:$0xff]
        %v1702 = vld [vmem:[#allocation12 + $0xf8] sm:$0xff]
        %v1703 = vld [vmem:[#allocation12 + $0x100] sm:$0xff]
        %v1704 = vld [vmem:[#allocation12 + $0x108] sm:$0xff]
        %v1705 = vld [vmem:[#allocation12 + $0x110] sm:$0xff]
        %v1706 = vld [vmem:[#allocation12 + $0x118] sm:$0xff]
        %v1707 = vld [vmem:[#allocation12 + $0x120] sm:$0xff]
        %v1708 = vld [vmem:[#allocation12 + $0x128] sm:$0xff]
        %v1709 = vld [vmem:[#allocation12 + $0x130] sm:$0xff]
        %v1710 = vld [vmem:[#allocation12 + $0x138] sm:$0xff]
        %v1711 = vld [vmem:[#allocation12 + $0x140] sm:$0xff]
        %v1712 = vld [vmem:[#allocation12 + $0x148] sm:$0xff]
        %v1713 = vld [vmem:[#allocation12 + $0x150] sm:$0xff]
        %v1714 = vld [vmem:[#allocation12 + $0x158] sm:$0xff]
        %v1715 = vld [vmem:[#allocation12 + $0x160] sm:$0xff]
        %v1716 = vld [vmem:[#allocation12 + $0x168] sm:$0xff]
        %v1717 = vld [vmem:[#allocation12 + $0x170] sm:$0xff]
        %v1718 = vld [vmem:[#allocation12 + $0x178] sm:$0xff]
        %v1719 = vld [vmem:[#allocation12 + $0x180] sm:$0xff]
        %v1720 = vld [vmem:[#allocation12 + $0x188] sm:$0xff]
        %v1721 = vld [vmem:[#allocation12 + $0x190] sm:$0xff]
        %v1722 = vld [vmem:[#allocation12 + $0x198] sm:$0xff]
        %v1723 = vld [vmem:[#allocation12 + $0x1a0] sm:$0xff]
        %v1724 = vld [vmem:[#allocation12 + $0x1a8] sm:$0xff]
        %v1725 = vld [vmem:[#allocation12 + $0x1b0] sm:$0xff]
        %v1726 = vld [vmem:[#allocation12 + $0x1b8] sm:$0xff]
        %v1727 = vld [vmem:[#allocation12 + $0x1c0] sm:$0xff]
        %v1728 = vld [vmem:[#allocation12 + $0x1c8] sm:$0xff]
        %v1729 = vld [vmem:[#allocation12 + $0x1d0] sm:$0xff]
        %v1730 = vld [vmem:[#allocation12 + $0x1d8] sm:$0xff]
        %v1731 = vld [vmem:[#allocation12 + $0x1e0] sm:$0xff]
        %v1732 = vld [vmem:[#allocation12 + $0x1e8] sm:$0xff]
        %v1733 = vld [vmem:[#allocation12 + $0x1f0] sm:$0xff]
        %v1734 = vld [vmem:[#allocation12 + $0x1f8] sm:$0xff]
        %v1735 = vld [vmem:[#allocation12 + $0x200] sm:$0xff]
        %v1736 = vld [vmem:[#allocation12 + $0x208] sm:$0xff]
        %v1737 = vld [vmem:[#allocation12 + $0x210] sm:$0xff]
        %v1738 = vld [vmem:[#allocation12 + $0x218] sm:$0xff]
        %v1739 = vld [vmem:[#allocation12 + $0x220] sm:$0xff]
        %v1740 = vld [vmem:[#allocation12 + $0x228] sm:$0xff]
        %v1741 = vld [vmem:[#allocation12 + $0x230] sm:$0xff]
        %v1742 = vld [vmem:[#allocation12 + $0x238] sm:$0xff]
        %v1743 = vld [vmem:[#allocation12 + $0x240] sm:$0xff]
        %v1744 = vld [vmem:[#allocation12 + $0x248] sm:$0xff]
        %v1745 = vld [vmem:[#allocation12 + $0x250] sm:$0xff]
        %v1746 = vld [vmem:[#allocation12 + $0x258] sm:$0xff]
        %v1747 = vld [vmem:[#allocation12 + $0x260] sm:$0xff]
        %v1748 = vld [vmem:[#allocation12 + $0x268] sm:$0xff]
        %v1749 = vld [vmem:[#allocation12 + $0x270] sm:$0xff]
        %v1750 = vld [vmem:[#allocation12 + $0x278] sm:$0xff]
        %v1751 = vld [vmem:[#allocation12 + $0x280] sm:$0xff]
        %v1752 = vld [vmem:[#allocation12 + $0x288] sm:$0xff]
        %v1753 = vld [vmem:[#allocation12 + $0x290] sm:$0xff]
        %v1754 = vld [vmem:[#allocation12 + $0x298] sm:$0xff]
        %v1755 = vld [vmem:[#allocation12 + $0x2a0] sm:$0xff]
        %v1756 = vld [vmem:[#allocation12 + $0x2a8] sm:$0xff]
        %v1757 = vld [vmem:[#allocation12 + $0x2b0] sm:$0xff]
        %v1758 = vld [vmem:[#allocation12 + $0x2b8] sm:$0xff]
        %v1759 = vld [vmem:[#allocation12 + $0x2c0] sm:$0xff]
        %v1760 = vld [vmem:[#allocation12 + $0x2c8] sm:$0xff]
        %v1761 = vld [vmem:[#allocation12 + $0x2d0] sm:$0xff]
        %v1762 = vld [vmem:[#allocation12 + $0x2d8] sm:$0xff]
        %v1763 = vld [vmem:[#allocation12 + $0x2e0] sm:$0xff]
        %v1764 = vld [vmem:[#allocation12 + $0x2e8] sm:$0xff]
        %v1765 = vld [vmem:[#allocation12 + $0x2f0] sm:$0xff]
        %v1766 = vld [vmem:[#allocation12 + $0x2f8] sm:$0xff]
        %v1767 = vld [vmem:[#allocation12 + $0x300] sm:$0xff]
        %v1768 = vld [vmem:[#allocation12 + $0x308] sm:$0xff]
        %v1769 = vld [vmem:[#allocation12 + $0x310] sm:$0xff]
        %v1770 = vld [vmem:[#allocation12 + $0x318] sm:$0xff]
        %v1771 = vld [vmem:[#allocation12 + $0x320] sm:$0xff]
        %v1772 = vld [vmem:[#allocation12 + $0x328] sm:$0xff]
        %v1773 = vld [vmem:[#allocation12 + $0x330] sm:$0xff]
        %v1774 = vld [vmem:[#allocation12 + $0x338] sm:$0xff]
        %v1775 = vld [vmem:[#allocation12 + $0x340] sm:$0xff]
        %v1776 = vld [vmem:[#allocation12 + $0x348] sm:$0xff]
        %v1777 = vld [vmem:[#allocation12 + $0x350] sm:$0xff]
        %v1778 = vld [vmem:[#allocation12 + $0x358] sm:$0xff]
        %v1779 = vld [vmem:[#allocation12 + $0x360] sm:$0xff]
        %v1780 = vld [vmem:[#allocation12 + $0x368] sm:$0xff]
        %v1781 = vld [vmem:[#allocation12 + $0x370] sm:$0xff]
        %v1782 = vld [vmem:[#allocation12 + $0x378] sm:$0xff]
        %v1783 = vld [vmem:[#allocation12 + $0x380] sm:$0xff]
        %v1784 = vld [vmem:[#allocation12 + $0x388] sm:$0xff]
        %v1785 = vld [vmem:[#allocation12 + $0x390] sm:$0xff]
        %v1786 = vld [vmem:[#allocation12 + $0x398] sm:$0xff]
        %v1787 = vld [vmem:[#allocation12 + $0x3a0] sm:$0xff]
        %v1788 = vld [vmem:[#allocation12 + $0x3a8] sm:$0xff]
        %v1789 = vld [vmem:[#allocation12 + $0x3b0] sm:$0xff]
        %v1790 = vld [vmem:[#allocation12 + $0x3b8] sm:$0xff]
        %v1791 = vld [vmem:[#allocation12 + $0x3c0] sm:$0xff]
        %v1792 = vld [vmem:[#allocation12 + $0x3c8] sm:$0xff]
        %v1793 = vld [vmem:[#allocation12 + $0x3d0] sm:$0xff]
        %v1794 = vld [vmem:[#allocation12 + $0x3d8] sm:$0xff]
        %v1795 = vld [vmem:[#allocation12 + $0x3e0] sm:$0xff]
        %v1796 = vld [vmem:[#allocation12 + $0x3e8] sm:$0xff]
        %v1797 = vld [vmem:[#allocation12 + $0x3f0] sm:$0xff]
        %v1798 = vld [vmem:[#allocation12 + $0x3f8] sm:$0xff]
        %v1799 = vld [vmem:[#allocation12 + $0x400] sm:$0xff]
        %v1800 = vld [vmem:[#allocation12 + $0x408] sm:$0xff]
        %v1801 = vld [vmem:[#allocation12 + $0x410] sm:$0xff]
        %v1802 = vld [vmem:[#allocation12 + $0x418] sm:$0xff]
        %v1803 = vld [vmem:[#allocation12 + $0x420] sm:$0xff]
        %v1804 = vld [vmem:[#allocation12 + $0x428] sm:$0xff]
        %v1805 = vld [vmem:[#allocation12 + $0x430] sm:$0xff]
        %v1806 = vld [vmem:[#allocation12 + $0x438] sm:$0xff]
        %v1807 = vld [vmem:[#allocation12 + $0x440] sm:$0xff]
        %v1808 = vld [vmem:[#allocation12 + $0x448] sm:$0xff]
        %v1809 = vld [vmem:[#allocation12 + $0x450] sm:$0xff]
        %v1810 = vld [vmem:[#allocation12 + $0x458] sm:$0xff]
        %v1811 = vld [vmem:[#allocation12 + $0x460] sm:$0xff]
        %v1812 = vld [vmem:[#allocation12 + $0x468] sm:$0xff]
        %v1813 = vld [vmem:[#allocation12 + $0x470] sm:$0xff]
        %v1814 = vld [vmem:[#allocation12 + $0x478] sm:$0xff]
        %v1815 = vld [vmem:[#allocation12 + $0x480] sm:$0xff]
        %v1816 = vld [vmem:[#allocation12 + $0x488] sm:$0xff]
        %v1817 = vld [vmem:[#allocation12 + $0x490] sm:$0xff]
        %v1818 = vld [vmem:[#allocation12 + $0x498] sm:$0xff]
        %v1819 = vld [vmem:[#allocation12 + $0x4a0] sm:$0xff]
        %v1820 = vld [vmem:[#allocation12 + $0x4a8] sm:$0xff]
        %v1821 = vld [vmem:[#allocation12 + $0x4b0] sm:$0xff]
        %v1822 = vld [vmem:[#allocation12 + $0x4b8] sm:$0xff]
        %v1871 = vunpack.c.l.b16 %v1623
        %v1872 = vunpack.c.h.b16 %v1623
        %v1873 = vunpack.c.l.b16 %v1624
        %v1874 = vunpack.c.h.b16 %v1624
        %v1875 = vunpack.c.l.b16 %v1625
        %v1876 = vunpack.c.l.b16 %v1626
        %v1877 = vunpack.c.h.b16 %v1626
        %v1878 = vunpack.c.l.b16 %v1627
        %v1879 = vunpack.c.h.b16 %v1627
        %v1880 = vunpack.c.l.b16 %v1628
        %v1881 = vunpack.c.l.b16 %v1629
        %v1882 = vunpack.c.h.b16 %v1629
        %v1883 = vunpack.c.l.b16 %v1630
        %v1884 = vunpack.c.h.b16 %v1630
        %v1885 = vunpack.c.l.b16 %v1631
        %v1886 = vunpack.c.l.b16 %v1632
        %v1887 = vunpack.c.h.b16 %v1632
        %v1888 = vunpack.c.l.b16 %v1633
        %v1889 = vunpack.c.h.b16 %v1633
        %v1890 = vunpack.c.l.b16 %v1634
        %v1891 = vunpack.c.l.b16 %v1635
        %v1892 = vunpack.c.h.b16 %v1635
        %v1893 = vunpack.c.l.b16 %v1636
        %v1894 = vunpack.c.h.b16 %v1636
        %v1895 = vunpack.c.l.b16 %v1637
        %v1896 = vunpack.c.l.b16 %v1638
        %v1897 = vunpack.c.h.b16 %v1638
        %v1898 = vunpack.c.l.b16 %v1639
        %v1899 = vunpack.c.h.b16 %v1639
        %v1900 = vunpack.c.l.b16 %v1640
        %v1901 = vunpack.c.l.b16 %v1641
        %v1902 = vunpack.c.h.b16 %v1641
        %v1903 = vunpack.c.l.b16 %v1642
        %v1904 = vunpack.c.h.b16 %v1642
        %v1905 = vunpack.c.l.b16 %v1643
        %v1906 = vunpack.c.l.b16 %v1644
        %v1907 = vunpack.c.h.b16 %v1644
        %v1908 = vunpack.c.l.b16 %v1645
        %v1909 = vunpack.c.h.b16 %v1645
        %v1910 = vunpack.c.l.b16 %v1646
        %v1911 = vunpack.c.l.b16 %v1647
        %v1912 = vunpack.c.h.b16 %v1647
        %v1913 = vunpack.c.l.b16 %v1648
        %v1914 = vunpack.c.h.b16 %v1648
        %v1915 = vunpack.c.l.b16 %v1649
        %v1916 = vunpack.c.l.b16 %v1650
        %v1917 = vunpack.c.h.b16 %v1650
        %v1918 = vunpack.c.l.b16 %v1651
        %v1919 = vunpack.c.h.b16 %v1651
        %v1920 = vunpack.c.l.b16 %v1652
        %v1921 = vunpack.c.l.b16 %v1653
        %v1922 = vunpack.c.h.b16 %v1653
        %v1923 = vunpack.c.l.b16 %v1654
        %v1924 = vunpack.c.h.b16 %v1654
        %v1925 = vunpack.c.l.b16 %v1655
        %v1926 = vunpack.c.l.b16 %v1656
        %v1927 = vunpack.c.h.b16 %v1656
        %v1928 = vunpack.c.l.b16 %v1657
        %v1929 = vunpack.c.h.b16 %v1657
        %v1930 = vunpack.c.l.b16 %v1658
        %v1931 = vunpack.c.l.b16 %v1659
        %v1932 = vunpack.c.h.b16 %v1659
        %v1933 = vunpack.c.l.b16 %v1660
        %v1934 = vunpack.c.h.b16 %v1660
        %v1935 = vunpack.c.l.b16 %v1661
        %v1936 = vunpack.c.l.b16 %v1662
        %v1937 = vunpack.c.h.b16 %v1662
        %v1938 = vunpack.c.l.b16 %v1663
        %v1939 = vunpack.c.h.b16 %v1663
        %v1940 = vunpack.c.l.b16 %v1664
        %v1941 = vunpack.c.l.b16 %v1665
        %v1942 = vunpack.c.h.b16 %v1665
        %v1943 = vunpack.c.l.b16 %v1666
        %v1944 = vunpack.c.h.b16 %v1666
        %v1945 = vunpack.c.l.b16 %v1667
        %v1946 = vunpack.c.l.b16 %v1668
        %v1947 = vunpack.c.h.b16 %v1668
        %v1948 = vunpack.c.l.b16 %v1669
        %v1949 = vunpack.c.h.b16 %v1669
        %v1950 = vunpack.c.l.b16 %v1670
        %v1951 = vpack.c.b16 %v1876, %v1871
        %v1952 = vpack.c.b16 %v1877, %v1872
        %v1953 = vpack.c.b16 %v1878, %v1873
        %v1954 = vpack.c.b16 %v1879, %v1874
        %v1955 = vpack.c.b16 %v1880, %v1875
        %v1956 = vpack.c.b16 %v1886, %v1881
        %v1957 = vpack.c.b16 %v1887, %v1882
        %v1958 = vpack.c.b16 %v1888, %v1883
        %v1959 = vpack.c.b16 %v1889, %v1884
        %v1960 = vpack.c.b16 %v1890, %v1885
        %v1961 = vpack.c.b16 %v1896, %v1891
        %v1962 = vpack.c.b16 %v1897, %v1892
        %v1963 = vpack.c.b16 %v1898, %v1893
        %v1964 = vpack.c.b16 %v1899, %v1894
        %v1965 = vpack.c.b16 %v1900, %v1895
        %v1966 = vpack.c.b16 %v1906, %v1901
        %v1967 = vpack.c.b16 %v1907, %v1902
        %v1968 = vpack.c.b16 %v1908, %v1903
        %v1969 = vpack.c.b16 %v1909, %v1904
        %v1970 = vpack.c.b16 %v1910, %v1905
        %v1971 = vpack.c.b16 %v1916, %v1911
        %v1972 = vpack.c.b16 %v1917, %v1912
        %v1973 = vpack.c.b16 %v1918, %v1913
        %v1974 = vpack.c.b16 %v1919, %v1914
        %v1975 = vpack.c.b16 %v1920, %v1915
        %v1976 = vpack.c.b16 %v1926, %v1921
        %v1977 = vpack.c.b16 %v1927, %v1922
        %v1978 = vpack.c.b16 %v1928, %v1923
        %v1979 = vpack.c.b16 %v1929, %v1924
        %v1980 = vpack.c.b16 %v1930, %v1925
        %v1981 = vpack.c.b16 %v1936, %v1931
        %v1982 = vpack.c.b16 %v1937, %v1932
        %v1983 = vpack.c.b16 %v1938, %v1933
        %v1984 = vpack.c.b16 %v1939, %v1934
        %v1985 = vpack.c.b16 %v1940, %v1935
        %v1986 = vpack.c.b16 %v1946, %v1941
        %v1987 = vpack.c.b16 %v1947, %v1942
        %v1988 = vpack.c.b16 %v1948, %v1943
        %v1989 = vpack.c.b16 %v1949, %v1944
        %v1990 = vpack.c.b16 %v1950, %v1945
        %v2175 = vunpack.c.l.b16 %v1671
        %v2176 = vunpack.c.h.b16 %v1671
        %v2177 = vunpack.c.l.b16 %v1672
        %v2178 = vunpack.c.h.b16 %v1672
        %v2179 = vunpack.c.l.b16 %v1673
        %v2180 = vunpack.c.h.b16 %v1673
        %v2181 = vunpack.c.l.b16 %v1674
        %v2182 = vunpack.c.h.b16 %v1674
        %v2183 = vunpack.c.l.b16 %v1675
        %v2184 = vunpack.c.h.b16 %v1675
        %v2185 = vunpack.c.l.b16 %v1676
        %v2186 = vunpack.c.h.b16 %v1676
        %v2187 = vunpack.c.l.b16 %v1677
        %v2188 = vunpack.c.h.b16 %v1677
        %v2189 = vunpack.c.l.b16 %v1678
        %v2190 = vunpack.c.h.b16 %v1678
        %v2191 = vunpack.c.l.b16 %v1679
        %v2192 = vunpack.c.h.b16 %v1679
        %v2193 = vunpack.c.l.b16 %v1680
        %v2194 = vunpack.c.h.b16 %v1680
        %v2195 = vunpack.c.l.b16 %v1681
        %v2196 = vunpack.c.h.b16 %v1681
        %v2197 = vunpack.c.l.b16 %v1682
        %v2198 = vunpack.c.h.b16 %v1682
        %v2199 = vunpack.c.l.b16 %v1683
        %v2200 = vunpack.c.h.b16 %v1683
        %v2201 = vunpack.c.l.b16 %v1684
        %v2202 = vunpack.c.h.b16 %v1684
        %v2203 = vunpack.c.l.b16 %v1685
        %v2204 = vunpack.c.h.b16 %v1685
        %v2205 = vunpack.c.l.b16 %v1686
        %v2206 = vunpack.c.h.b16 %v1686
        %v2207 = vunpack.c.l.b16 %v1687
        %v2208 = vunpack.c.h.b16 %v1687
        %v2209 = vunpack.c.l.b16 %v1688
        %v2210 = vunpack.c.h.b16 %v1688
        %v2211 = vunpack.c.l.b16 %v1689
        %v2212 = vunpack.c.h.b16 %v1689
        %v2213 = vunpack.c.l.b16 %v1690
        %v2214 = vunpack.c.h.b16 %v1690
        %v2215 = vunpack.c.l.b16 %v1691
        %v2216 = vunpack.c.h.b16 %v1691
        %v2217 = vunpack.c.l.b16 %v1692
        %v2218 = vunpack.c.h.b16 %v1692
        %v2219 = vunpack.c.l.b16 %v1693
        %v2220 = vunpack.c.h.b16 %v1693
        %v2221 = vunpack.c.l.b16 %v1694
        %v2222 = vunpack.c.h.b16 %v1694
        %v2223 = vunpack.c.l.b16 %v1695
        %v2224 = vunpack.c.h.b16 %v1695
        %v2225 = vunpack.c.l.b16 %v1696
        %v2226 = vunpack.c.h.b16 %v1696
        %v2227 = vunpack.c.l.b16 %v1697
        %v2228 = vunpack.c.h.b16 %v1697
        %v2229 = vunpack.c.l.b16 %v1698
        %v2230 = vunpack.c.h.b16 %v1698
        %v2231 = vunpack.c.l.b16 %v1699
        %v2232 = vunpack.c.h.b16 %v1699
        %v2233 = vunpack.c.l.b16 %v1700
        %v2234 = vunpack.c.h.b16 %v1700
        %v2235 = vunpack.c.l.b16 %v1701
        %v2236 = vunpack.c.h.b16 %v1701
        %v2237 = vunpack.c.l.b16 %v1702
        %v2238 = vunpack.c.h.b16 %v1702
        %v2239 = vunpack.c.l.b16 %v1703
        %v2240 = vunpack.c.h.b16 %v1703
        %v2241 = vunpack.c.l.b16 %v1704
        %v2242 = vunpack.c.h.b16 %v1704
        %v2243 = vunpack.c.l.b16 %v1705
        %v2244 = vunpack.c.h.b16 %v1705
        %v2245 = vunpack.c.l.b16 %v1706
        %v2246 = vunpack.c.h.b16 %v1706
        %v2247 = vunpack.c.l.b16 %v1707
        %v2248 = vunpack.c.h.b16 %v1707
        %v2249 = vunpack.c.l.b16 %v1708
        %v2250 = vunpack.c.h.b16 %v1708
        %v2251 = vunpack.c.l.b16 %v1709
        %v2252 = vunpack.c.h.b16 %v1709
        %v2253 = vunpack.c.l.b16 %v1710
        %v2254 = vunpack.c.h.b16 %v1710
        %v2255 = vunpack.c.l.b16 %v1711
        %v2256 = vunpack.c.h.b16 %v1711
        %v2257 = vunpack.c.l.b16 %v1712
        %v2258 = vunpack.c.h.b16 %v1712
        %v2259 = vunpack.c.l.b16 %v1713
        %v2260 = vunpack.c.h.b16 %v1713
        %v2261 = vunpack.c.l.b16 %v1714
        %v2262 = vunpack.c.h.b16 %v1714
        %v2263 = vunpack.c.l.b16 %v1715
        %v2264 = vunpack.c.h.b16 %v1715
        %v2265 = vunpack.c.l.b16 %v1716
        %v2266 = vunpack.c.h.b16 %v1716
        %v2267 = vunpack.c.l.b16 %v1717
        %v2268 = vunpack.c.h.b16 %v1717
        %v2269 = vunpack.c.l.b16 %v1718
        %v2270 = vunpack.c.h.b16 %v1718
        %v2271 = vunpack.c.l.b16 %v1719
        %v2272 = vunpack.c.h.b16 %v1719
        %v2273 = vunpack.c.l.b16 %v1720
        %v2274 = vunpack.c.h.b16 %v1720
        %v2275 = vunpack.c.l.b16 %v1721
        %v2276 = vunpack.c.h.b16 %v1721
        %v2277 = vunpack.c.l.b16 %v1722
        %v2278 = vunpack.c.h.b16 %v1722
        %v2279 = vunpack.c.l.b16 %v1723
        %v2280 = vunpack.c.h.b16 %v1723
        %v2281 = vunpack.c.l.b16 %v1724
        %v2282 = vunpack.c.h.b16 %v1724
        %v2283 = vunpack.c.l.b16 %v1725
        %v2284 = vunpack.c.h.b16 %v1725
        %v2285 = vunpack.c.l.b16 %v1726
        %v2286 = vunpack.c.h.b16 %v1726
        %v2287 = vunpack.c.l.b16 %v1727
        %v2288 = vunpack.c.h.b16 %v1727
        %v2289 = vunpack.c.l.b16 %v1728
        %v2290 = vunpack.c.h.b16 %v1728
        %v2291 = vunpack.c.l.b16 %v1729
        %v2292 = vunpack.c.h.b16 %v1729
        %v2293 = vunpack.c.l.b16 %v1730
        %v2294 = vunpack.c.h.b16 %v1730
        %v2295 = vunpack.c.l.b16 %v1731
        %v2296 = vunpack.c.h.b16 %v1731
        %v2297 = vunpack.c.l.b16 %v1732
        %v2298 = vunpack.c.h.b16 %v1732
        %v2299 = vunpack.c.l.b16 %v1733
        %v2300 = vunpack.c.h.b16 %v1733
        %v2301 = vunpack.c.l.b16 %v1734
        %v2302 = vunpack.c.h.b16 %v1734
        %v2303 = vunpack.c.l.b16 %v1735
        %v2304 = vunpack.c.h.b16 %v1735
        %v2305 = vunpack.c.l.b16 %v1736
        %v2306 = vunpack.c.h.b16 %v1736
        %v2307 = vunpack.c.l.b16 %v1737
        %v2308 = vunpack.c.h.b16 %v1737
        %v2309 = vunpack.c.l.b16 %v1738
        %v2310 = vunpack.c.h.b16 %v1738
        %v2311 = vunpack.c.l.b16 %v1739
        %v2312 = vunpack.c.h.b16 %v1739
        %v2313 = vunpack.c.l.b16 %v1740
        %v2314 = vunpack.c.h.b16 %v1740
        %v2315 = vunpack.c.l.b16 %v1741
        %v2316 = vunpack.c.h.b16 %v1741
        %v2317 = vunpack.c.l.b16 %v1742
        %v2318 = vunpack.c.h.b16 %v1742
        %v2319 = vunpack.c.l.b16 %v1743
        %v2320 = vunpack.c.h.b16 %v1743
        %v2321 = vunpack.c.l.b16 %v1744
        %v2322 = vunpack.c.h.b16 %v1744
        %v2323 = vunpack.c.l.b16 %v1745
        %v2324 = vunpack.c.h.b16 %v1745
        %v2325 = vunpack.c.l.b16 %v1746
        %v2326 = vunpack.c.h.b16 %v1746
        %v2327 = vunpack.c.l.b16 %v1747
        %v2328 = vunpack.c.h.b16 %v1747
        %v2329 = vunpack.c.l.b16 %v1748
        %v2330 = vunpack.c.h.b16 %v1748
        %v2331 = vunpack.c.l.b16 %v1749
        %v2332 = vunpack.c.h.b16 %v1749
        %v2333 = vunpack.c.l.b16 %v1750
        %v2334 = vunpack.c.h.b16 %v1750
        %v2335 = vunpack.c.l.b16 %v1751
        %v2336 = vunpack.c.h.b16 %v1751
        %v2337 = vunpack.c.l.b16 %v1752
        %v2338 = vunpack.c.h.b16 %v1752
        %v2339 = vunpack.c.l.b16 %v1753
        %v2340 = vunpack.c.h.b16 %v1753
        %v2341 = vunpack.c.l.b16 %v1754
        %v2342 = vunpack.c.h.b16 %v1754
        %v2343 = vunpack.c.l.b16 %v1755
        %v2344 = vunpack.c.h.b16 %v1755
        %v2345 = vunpack.c.l.b16 %v1756
        %v2346 = vunpack.c.h.b16 %v1756
        %v2347 = vunpack.c.l.b16 %v1757
        %v2348 = vunpack.c.h.b16 %v1757
        %v2349 = vunpack.c.l.b16 %v1758
        %v2350 = vunpack.c.h.b16 %v1758
        %v2351 = vunpack.c.l.b16 %v1759
        %v2352 = vunpack.c.h.b16 %v1759
        %v2353 = vunpack.c.l.b16 %v1760
        %v2354 = vunpack.c.h.b16 %v1760
        %v2355 = vunpack.c.l.b16 %v1761
        %v2356 = vunpack.c.h.b16 %v1761
        %v2357 = vunpack.c.l.b16 %v1762
        %v2358 = vunpack.c.h.b16 %v1762
        %v2359 = vunpack.c.l.b16 %v1763
        %v2360 = vunpack.c.h.b16 %v1763
        %v2361 = vunpack.c.l.b16 %v1764
        %v2362 = vunpack.c.h.b16 %v1764
        %v2363 = vunpack.c.l.b16 %v1765
        %v2364 = vunpack.c.h.b16 %v1765
        %v2365 = vunpack.c.l.b16 %v1766
        %v2366 = vunpack.c.h.b16 %v1766
        %v2367 = vunpack.c.l.b16 %v1767
        %v2368 = vunpack.c.h.b16 %v1767
        %v2369 = vunpack.c.l.b16 %v1768
        %v2370 = vunpack.c.h.b16 %v1768
        %v2371 = vunpack.c.l.b16 %v1769
        %v2372 = vunpack.c.h.b16 %v1769
        %v2373 = vunpack.c.l.b16 %v1770
        %v2374 = vunpack.c.h.b16 %v1770
        %v2375 = vunpack.c.l.b16 %v1771
        %v2376 = vunpack.c.h.b16 %v1771
        %v2377 = vunpack.c.l.b16 %v1772
        %v2378 = vunpack.c.h.b16 %v1772
        %v2379 = vunpack.c.l.b16 %v1773
        %v2380 = vunpack.c.h.b16 %v1773
        %v2381 = vunpack.c.l.b16 %v1774
        %v2382 = vunpack.c.h.b16 %v1774
        %v2383 = vunpack.c.l.b16 %v1775
        %v2384 = vunpack.c.h.b16 %v1775
        %v2385 = vunpack.c.l.b16 %v1776
        %v2386 = vunpack.c.h.b16 %v1776
        %v2387 = vunpack.c.l.b16 %v1777
        %v2388 = vunpack.c.h.b16 %v1777
        %v2389 = vunpack.c.l.b16 %v1778
        %v2390 = vunpack.c.h.b16 %v1778
        %v2391 = vunpack.c.l.b16 %v1779
        %v2392 = vunpack.c.h.b16 %v1779
        %v2393 = vunpack.c.l.b16 %v1780
        %v2394 = vunpack.c.h.b16 %v1780
        %v2395 = vunpack.c.l.b16 %v1781
        %v2396 = vunpack.c.h.b16 %v1781
        %v2397 = vunpack.c.l.b16 %v1782
        %v2398 = vunpack.c.h.b16 %v1782
        %v2399 = vunpack.c.l.b16 %v1783
        %v2400 = vunpack.c.h.b16 %v1783
        %v2401 = vunpack.c.l.b16 %v1784
        %v2402 = vunpack.c.h.b16 %v1784
        %v2403 = vunpack.c.l.b16 %v1785
        %v2404 = vunpack.c.h.b16 %v1785
        %v2405 = vunpack.c.l.b16 %v1786
        %v2406 = vunpack.c.h.b16 %v1786
        %v2407 = vunpack.c.l.b16 %v1787
        %v2408 = vunpack.c.h.b16 %v1787
        %v2409 = vunpack.c.l.b16 %v1788
        %v2410 = vunpack.c.h.b16 %v1788
        %v2411 = vunpack.c.l.b16 %v1789
        %v2412 = vunpack.c.h.b16 %v1789
        %v2413 = vunpack.c.l.b16 %v1790
        %v2414 = vunpack.c.h.b16 %v1790
        %v2415 = vunpack.c.l.b16 %v1791
        %v2416 = vunpack.c.h.b16 %v1791
        %v2417 = vunpack.c.l.b16 %v1792
        %v2418 = vunpack.c.h.b16 %v1792
        %v2419 = vunpack.c.l.b16 %v1793
        %v2420 = vunpack.c.h.b16 %v1793
        %v2421 = vunpack.c.l.b16 %v1794
        %v2422 = vunpack.c.h.b16 %v1794
        %v2423 = vunpack.c.l.b16 %v1795
        %v2424 = vunpack.c.h.b16 %v1795
        %v2425 = vunpack.c.l.b16 %v1796
        %v2426 = vunpack.c.h.b16 %v1796
        %v2427 = vunpack.c.l.b16 %v1797
        %v2428 = vunpack.c.h.b16 %v1797
        %v2429 = vunpack.c.l.b16 %v1798
        %v2430 = vunpack.c.h.b16 %v1798
        %v2431 = vunpack.c.l.b16 %v1799
        %v2432 = vunpack.c.h.b16 %v1799
        %v2433 = vunpack.c.l.b16 %v1800
        %v2434 = vunpack.c.h.b16 %v1800
        %v2435 = vunpack.c.l.b16 %v1801
        %v2436 = vunpack.c.h.b16 %v1801
        %v2437 = vunpack.c.l.b16 %v1802
        %v2438 = vunpack.c.h.b16 %v1802
        %v2439 = vunpack.c.l.b16 %v1803
        %v2440 = vunpack.c.h.b16 %v1803
        %v2441 = vunpack.c.l.b16 %v1804
        %v2442 = vunpack.c.h.b16 %v1804
        %v2443 = vunpack.c.l.b16 %v1805
        %v2444 = vunpack.c.h.b16 %v1805
        %v2445 = vunpack.c.l.b16 %v1806
        %v2446 = vunpack.c.h.b16 %v1806
        %v2447 = vunpack.c.l.b16 %v1807
        %v2448 = vunpack.c.h.b16 %v1807
        %v2449 = vunpack.c.l.b16 %v1808
        %v2450 = vunpack.c.h.b16 %v1808
        %v2451 = vunpack.c.l.b16 %v1809
        %v2452 = vunpack.c.h.b16 %v1809
        %v2453 = vunpack.c.l.b16 %v1810
        %v2454 = vunpack.c.h.b16 %v1810
        %v2455 = vunpack.c.l.b16 %v1811
        %v2456 = vunpack.c.h.b16 %v1811
        %v2457 = vunpack.c.l.b16 %v1812
        %v2458 = vunpack.c.h.b16 %v1812
        %v2459 = vunpack.c.l.b16 %v1813
        %v2460 = vunpack.c.h.b16 %v1813
        %v2461 = vunpack.c.l.b16 %v1814
        %v2462 = vunpack.c.h.b16 %v1814
        %v2463 = vunpack.c.l.b16 %v1815
        %v2464 = vunpack.c.h.b16 %v1815
        %v2465 = vunpack.c.l.b16 %v1816
        %v2466 = vunpack.c.h.b16 %v1816
        %v2467 = vunpack.c.l.b16 %v1817
        %v2468 = vunpack.c.h.b16 %v1817
        %v2469 = vunpack.c.l.b16 %v1818
        %v2470 = vunpack.c.h.b16 %v1818
        %v2471 = vunpack.c.l.b16 %v1819
        %v2472 = vunpack.c.h.b16 %v1819
        %v2473 = vunpack.c.l.b16 %v1820
        %v2474 = vunpack.c.h.b16 %v1820
        %v2475 = vunpack.c.l.b16 %v1821
        %v2476 = vunpack.c.h.b16 %v1821
        %v2477 = vunpack.c.l.b16 %v1822
        %v2478 = vunpack.c.h.b16 %v1822
        %v2479 = vpack.c.b16 %v2179, %v2175
        %v2480 = vpack.c.b16 %v2180, %v2176
        %v2481 = vpack.c.b16 %v2181, %v2177
        %v2482 = vpack.c.b16 %v2182, %v2178
        %v2483 = vpack.c.b16 %v2187, %v2183
        %v2484 = vpack.c.b16 %v2188, %v2184
        %v2485 = vpack.c.b16 %v2189, %v2185
        %v2486 = vpack.c.b16 %v2190, %v2186
        %v2487 = vpack.c.b16 %v2195, %v2191
        %v2488 = vpack.c.b16 %v2196, %v2192
        %v2489 = vpack.c.b16 %v2197, %v2193
        %v2490 = vpack.c.b16 %v2198, %v2194
        %v2491 = vpack.c.b16 %v2203, %v2199
        %v2492 = vpack.c.b16 %v2204, %v2200
        %v2493 = vpack.c.b16 %v2205, %v2201
        %v2494 = vpack.c.b16 %v2206, %v2202
        %v2495 = vpack.c.b16 %v2211, %v2207
        %v2496 = vpack.c.b16 %v2212, %v2208
        %v2497 = vpack.c.b16 %v2213, %v2209
        %v2498 = vpack.c.b16 %v2214, %v2210
        %v2499 = vpack.c.b16 %v2219, %v2215
        %v2500 = vpack.c.b16 %v2220, %v2216
        %v2501 = vpack.c.b16 %v2221, %v2217
        %v2502 = vpack.c.b16 %v2222, %v2218
        %v2503 = vpack.c.b16 %v2227, %v2223
        %v2504 = vpack.c.b16 %v2228, %v2224
        %v2505 = vpack.c.b16 %v2229, %v2225
        %v2506 = vpack.c.b16 %v2230, %v2226
        %v2507 = vpack.c.b16 %v2235, %v2231
        %v2508 = vpack.c.b16 %v2236, %v2232
        %v2509 = vpack.c.b16 %v2237, %v2233
        %v2510 = vpack.c.b16 %v2238, %v2234
        %v2511 = vpack.c.b16 %v2243, %v2239
        %v2512 = vpack.c.b16 %v2244, %v2240
        %v2513 = vpack.c.b16 %v2245, %v2241
        %v2514 = vpack.c.b16 %v2246, %v2242
        %v2515 = vpack.c.b16 %v2251, %v2247
        %v2516 = vpack.c.b16 %v2252, %v2248
        %v2517 = vpack.c.b16 %v2253, %v2249
        %v2518 = vpack.c.b16 %v2254, %v2250
        %v2519 = vpack.c.b16 %v2259, %v2255
        %v2520 = vpack.c.b16 %v2260, %v2256
        %v2521 = vpack.c.b16 %v2261, %v2257
        %v2522 = vpack.c.b16 %v2262, %v2258
        %v2523 = vpack.c.b16 %v2267, %v2263
        %v2524 = vpack.c.b16 %v2268, %v2264
        %v2525 = vpack.c.b16 %v2269, %v2265
        %v2526 = vpack.c.b16 %v2270, %v2266
        %v2527 = vpack.c.b16 %v2275, %v2271
        %v2528 = vpack.c.b16 %v2276, %v2272
        %v2529 = vpack.c.b16 %v2277, %v2273
        %v2530 = vpack.c.b16 %v2278, %v2274
        %v2531 = vpack.c.b16 %v2283, %v2279
        %v2532 = vpack.c.b16 %v2284, %v2280
        %v2533 = vpack.c.b16 %v2285, %v2281
        %v2534 = vpack.c.b16 %v2286, %v2282
        %v2535 = vpack.c.b16 %v2291, %v2287
        %v2536 = vpack.c.b16 %v2292, %v2288
        %v2537 = vpack.c.b16 %v2293, %v2289
        %v2538 = vpack.c.b16 %v2294, %v2290
        %v2539 = vpack.c.b16 %v2299, %v2295
        %v2540 = vpack.c.b16 %v2300, %v2296
        %v2541 = vpack.c.b16 %v2301, %v2297
        %v2542 = vpack.c.b16 %v2302, %v2298
        %v2543 = vpack.c.b16 %v2307, %v2303
        %v2544 = vpack.c.b16 %v2308, %v2304
        %v2545 = vpack.c.b16 %v2309, %v2305
        %v2546 = vpack.c.b16 %v2310, %v2306
        %v2547 = vpack.c.b16 %v2315, %v2311
        %v2548 = vpack.c.b16 %v2316, %v2312
        %v2549 = vpack.c.b16 %v2317, %v2313
        %v2550 = vpack.c.b16 %v2318, %v2314
        %v2551 = vpack.c.b16 %v2323, %v2319
        %v2552 = vpack.c.b16 %v2324, %v2320
        %v2553 = vpack.c.b16 %v2325, %v2321
        %v2554 = vpack.c.b16 %v2326, %v2322
        %v2555 = vpack.c.b16 %v2331, %v2327
        %v2556 = vpack.c.b16 %v2332, %v2328
        %v2557 = vpack.c.b16 %v2333, %v2329
        %v2558 = vpack.c.b16 %v2334, %v2330
        %v2559 = vpack.c.b16 %v2339, %v2335
        %v2560 = vpack.c.b16 %v2340, %v2336
        %v2561 = vpack.c.b16 %v2341, %v2337
        %v2562 = vpack.c.b16 %v2342, %v2338
        %v2563 = vpack.c.b16 %v2347, %v2343
        %v2564 = vpack.c.b16 %v2348, %v2344
        %v2565 = vpack.c.b16 %v2349, %v2345
        %v2566 = vpack.c.b16 %v2350, %v2346
        %v2567 = vpack.c.b16 %v2355, %v2351
        %v2568 = vpack.c.b16 %v2356, %v2352
        %v2569 = vpack.c.b16 %v2357, %v2353
        %v2570 = vpack.c.b16 %v2358, %v2354
        %v2571 = vpack.c.b16 %v2363, %v2359
        %v2572 = vpack.c.b16 %v2364, %v2360
        %v2573 = vpack.c.b16 %v2365, %v2361
        %v2574 = vpack.c.b16 %v2366, %v2362
        %v2575 = vpack.c.b16 %v2371, %v2367
        %v2576 = vpack.c.b16 %v2372, %v2368
        %v2577 = vpack.c.b16 %v2373, %v2369
        %v2578 = vpack.c.b16 %v2374, %v2370
        %v2579 = vpack.c.b16 %v2379, %v2375
        %v2580 = vpack.c.b16 %v2380, %v2376
        %v2581 = vpack.c.b16 %v2381, %v2377
        %v2582 = vpack.c.b16 %v2382, %v2378
        %v2583 = vpack.c.b16 %v2387, %v2383
        %v2584 = vpack.c.b16 %v2388, %v2384
        %v2585 = vpack.c.b16 %v2389, %v2385
        %v2586 = vpack.c.b16 %v2390, %v2386
        %v2587 = vpack.c.b16 %v2395, %v2391
        %v2588 = vpack.c.b16 %v2396, %v2392
        %v2589 = vpack.c.b16 %v2397, %v2393
        %v2590 = vpack.c.b16 %v2398, %v2394
        %v2591 = vpack.c.b16 %v2403, %v2399
        %v2592 = vpack.c.b16 %v2404, %v2400
        %v2593 = vpack.c.b16 %v2405, %v2401
        %v2594 = vpack.c.b16 %v2406, %v2402
        %v2595 = vpack.c.b16 %v2411, %v2407
        %v2596 = vpack.c.b16 %v2412, %v2408
        %v2597 = vpack.c.b16 %v2413, %v2409
        %v2598 = vpack.c.b16 %v2414, %v2410
        %v2599 = vpack.c.b16 %v2419, %v2415
        %v2600 = vpack.c.b16 %v2420, %v2416
        %v2601 = vpack.c.b16 %v2421, %v2417
        %v2602 = vpack.c.b16 %v2422, %v2418
        %v2603 = vpack.c.b16 %v2427, %v2423
        %v2604 = vpack.c.b16 %v2428, %v2424
        %v2605 = vpack.c.b16 %v2429, %v2425
        %v2606 = vpack.c.b16 %v2430, %v2426
        %v2607 = vpack.c.b16 %v2435, %v2431
        %v2608 = vpack.c.b16 %v2436, %v2432
        %v2609 = vpack.c.b16 %v2437, %v2433
        %v2610 = vpack.c.b16 %v2438, %v2434
        %v2611 = vpack.c.b16 %v2443, %v2439
        %v2612 = vpack.c.b16 %v2444, %v2440
        %v2613 = vpack.c.b16 %v2445, %v2441
        %v2614 = vpack.c.b16 %v2446, %v2442
        %v2615 = vpack.c.b16 %v2451, %v2447
        %v2616 = vpack.c.b16 %v2452, %v2448
        %v2617 = vpack.c.b16 %v2453, %v2449
        %v2618 = vpack.c.b16 %v2454, %v2450
        %v2619 = vpack.c.b16 %v2459, %v2455
        %v2620 = vpack.c.b16 %v2460, %v2456
        %v2621 = vpack.c.b16 %v2461, %v2457
        %v2622 = vpack.c.b16 %v2462, %v2458
        %v2623 = vpack.c.b16 %v2467, %v2463
        %v2624 = vpack.c.b16 %v2468, %v2464
        %v2625 = vpack.c.b16 %v2469, %v2465
        %v2626 = vpack.c.b16 %v2470, %v2466
        %v2627 = vpack.c.b16 %v2475, %v2471
        %v2628 = vpack.c.b16 %v2476, %v2472
        %v2629 = vpack.c.b16 %v2477, %v2473
        %v2630 = vpack.c.b16 %v2478, %v2474
        %vm2783 = vcmask 785408
        %v2785 = vsel %vm2783, %v1955, 0
        %v2788 = vsel %vm2783, %v1960, 0
        %v2791 = vsel %vm2783, %v1965, 0
        %v2794 = vsel %vm2783, %v1970, 0
        %v2797 = vsel %vm2783, %v1975, 0
        %v2800 = vsel %vm2783, %v1980, 0
        %v2803 = vsel %vm2783, %v1985, 0
        %v2806 = vsel %vm2783, %v1990, 0
        %2808 = vmatprep.subr.bf16.mxu0 %v2480
        %2809 = vmatpush1.bf16.msra.mxu0 %v2479
        %2810 = vmatprep.subr.bf16.mxu0 %v2484
        %2811 = vmatpush1.bf16.msra.mxu0 %v2483
        %2812 = vmatprep.subr.bf16.mxu0 %v2488
        %2813 = vmatpush1.bf16.msra.mxu0 %v2487
        %2814 = vmatprep.subr.bf16.mxu0 %v2492
        %2815 = vmatpush1.bf16.msra.mxu0 %v2491
        %2816 = vmatprep.subr.bf16.mxu0 %v2496
        %2817 = vmatpush1.bf16.msra.mxu0 %v2495
        %2818 = vmatprep.subr.bf16.mxu0 %v2500
        %2819 = vmatpush1.bf16.msra.mxu0 %v2499
        %2820 = vmatprep.subr.bf16.mxu0 %v2504
        %2821 = vmatpush1.bf16.msra.mxu0 %v2503
        %2822 = vmatprep.subr.bf16.mxu0 %v2508
        %2823 = vmatpush1.bf16.msra.mxu0 %v2507
        %2824 = vmatprep.subr.bf16.mxu0 %v2512
        %2825 = vmatpush1.bf16.msra.mxu0 %v2511
        %2826 = vmatprep.subr.bf16.mxu0 %v2516
        %2827 = vmatpush1.bf16.msra.mxu0 %v2515
        %2828 = vmatprep.subr.bf16.mxu0 %v2520
        %2829 = vmatpush1.bf16.msra.mxu0 %v2519
        %2830 = vmatprep.subr.bf16.mxu0 %v2524
        %2831 = vmatpush1.bf16.msra.mxu0 %v2523
        %2832 = vmatprep.subr.bf16.mxu0 %v2528
        %2833 = vmatpush1.bf16.msra.mxu0 %v2527
        %2834 = vmatprep.subr.bf16.mxu0 %v2532
        %2835 = vmatpush1.bf16.msra.mxu0 %v2531
        %2836 = vmatprep.subr.bf16.mxu0 %v2536
        %2837 = vmatpush1.bf16.msra.mxu0 %v2535
        %2838 = vmatprep.subr.bf16.mxu0 %v2540
        %2839 = vmatpush1.bf16.msra.mxu0 %v2539
        %2840 = vmatprep.mubr.bf16.mxu0 %v1952
        %2841 = vmatmul.mubr.bf16.gmra.mrb[0].mxu0 %v1951
        %v2842 = vpop.f32.mrb[0].mxu0
        %v2843 = vadd.f32 0.0, %v2842
        %v2844 = vpop.f32.mrb[0].mxu0
        %v2845 = vadd.f32 0.0, %v2844
        %v2846 = vpop.f32.mrb[0].mxu0
        %v2847 = vadd.f32 0.0, %v2846
        %v2848 = vpop.f32.mrb[0].mxu0
        %v2849 = vadd.f32 0.0, %v2848
        %2850 = vmatprep.mubr.bf16.mxu0 %v1957
        %2851 = vmatmul.mubr.bf16.gmra.mrb[0].mxu0 %v1956
        %v2852 = vpop.f32.mrb[0].mxu0
        %v2853 = vadd.f32 0.0, %v2852
        %v2854 = vpop.f32.mrb[0].mxu0
        %v2855 = vadd.f32 0.0, %v2854
        %v2856 = vpop.f32.mrb[0].mxu0
        %v2857 = vadd.f32 0.0, %v2856
        %v2858 = vpop.f32.mrb[0].mxu0
        %v2859 = vadd.f32 0.0, %v2858
        %2860 = vmatprep.mubr.bf16.mxu0 %v1962
        %2861 = vmatmul.mubr.bf16.gmra.mrb[0].mxu0 %v1961
        %v2862 = vpop.f32.mrb[0].mxu0
        %v2863 = vadd.f32 0.0, %v2862
        %v2864 = vpop.f32.mrb[0].mxu0
        %v2865 = vadd.f32 0.0, %v2864
        %v2866 = vpop.f32.mrb[0].mxu0
        %v2867 = vadd.f32 0.0, %v2866
        %v2868 = vpop.f32.mrb[0].mxu0
        %v2869 = vadd.f32 0.0, %v2868
        %2870 = vmatprep.mubr.bf16.mxu0 %v1967
        %2871 = vmatmul.mubr.bf16.gmra.mrb[0].mxu0 %v1966
        %v2872 = vpop.f32.mrb[0].mxu0
        %v2873 = vadd.f32 0.0, %v2872
        %v2874 = vpop.f32.mrb[0].mxu0
        %v2875 = vadd.f32 0.0, %v2874
        %v2876 = vpop.f32.mrb[0].mxu0
        %v2877 = vadd.f32 0.0, %v2876
        %v2878 = vpop.f32.mrb[0].mxu0
        %v2879 = vadd.f32 0.0, %v2878
        %2880 = vmatprep.mubr.bf16.mxu0 %v1972
        %2881 = vmatmul.mubr.bf16.gmra.mrb[0].mxu0 %v1971
        %v2882 = vpop.f32.mrb[0].mxu0
        %v2883 = vadd.f32 0.0, %v2882
        %v2884 = vpop.f32.mrb[0].mxu0
        %v2885 = vadd.f32 0.0, %v2884
        %v2886 = vpop.f32.mrb[0].mxu0
        %v2887 = vadd.f32 0.0, %v2886
        %v2888 = vpop.f32.mrb[0].mxu0
        %v2889 = vadd.f32 0.0, %v2888
        %2890 = vmatprep.mubr.bf16.mxu0 %v1977
        %2891 = vmatmul.mubr.bf16.gmra.mrb[0].mxu0 %v1976
        %v2892 = vpop.f32.mrb[0].mxu0
        %v2893 = vadd.f32 0.0, %v2892
        %v2894 = vpop.f32.mrb[0].mxu0
        %v2895 = vadd.f32 0.0, %v2894
        %v2896 = vpop.f32.mrb[0].mxu0
        %v2897 = vadd.f32 0.0, %v2896
        %v2898 = vpop.f32.mrb[0].mxu0
        %v2899 = vadd.f32 0.0, %v2898
        %2900 = vmatprep.mubr.bf16.mxu0 %v1982
        %2901 = vmatmul.mubr.bf16.gmra.mrb[0].mxu0 %v1981
        %v2902 = vpop.f32.mrb[0].mxu0
        %v2903 = vadd.f32 0.0, %v2902
        %v2904 = vpop.f32.mrb[0].mxu0
        %v2905 = vadd.f32 0.0, %v2904
        %v2906 = vpop.f32.mrb[0].mxu0
        %v2907 = vadd.f32 0.0, %v2906
        %v2908 = vpop.f32.mrb[0].mxu0
        %v2909 = vadd.f32 0.0, %v2908
        %2910 = vmatprep.mubr.bf16.mxu0 %v1987
        %2911 = vmatmul.mubr.bf16.gmra.mrb[0].mxu0 %v1986
        %v2912 = vpop.f32.mrb[0].mxu0
        %v2913 = vadd.f32 0.0, %v2912
        %v2914 = vpop.f32.mrb[0].mxu0
        %v2915 = vadd.f32 0.0, %v2914
        %v2916 = vpop.f32.mrb[0].mxu0
        %v2917 = vadd.f32 0.0, %v2916
        %v2918 = vpop.f32.mrb[0].mxu0
        %v2919 = vadd.f32 0.0, %v2918
        %2920 = vdwg.mxu0
        %2921 = vmatprep.subr.bf16.mxu0 %v2544
        %2922 = vmatpush1.bf16.msra.mxu0 %v2543
        %2923 = vmatprep.subr.bf16.mxu0 %v2548
        %2924 = vmatpush1.bf16.msra.mxu0 %v2547
        %2925 = vmatprep.subr.bf16.mxu0 %v2552
        %2926 = vmatpush1.bf16.msra.mxu0 %v2551
        %2927 = vmatprep.subr.bf16.mxu0 %v2556
        %2928 = vmatpush1.bf16.msra.mxu0 %v2555
        %2929 = vmatprep.subr.bf16.mxu0 %v2560
        %2930 = vmatpush1.bf16.msra.mxu0 %v2559
        %2931 = vmatprep.subr.bf16.mxu0 %v2564
        %2932 = vmatpush1.bf16.msra.mxu0 %v2563
        %2933 = vmatprep.subr.bf16.mxu0 %v2568
        %2934 = vmatpush1.bf16.msra.mxu0 %v2567
        %2935 = vmatprep.subr.bf16.mxu0 %v2572
        %2936 = vmatpush1.bf16.msra.mxu0 %v2571
        %2937 = vmatprep.subr.bf16.mxu0 %v2576
        %2938 = vmatpush1.bf16.msra.mxu0 %v2575
        %2939 = vmatprep.subr.bf16.mxu0 %v2580
        %2940 = vmatpush1.bf16.msra.mxu0 %v2579
        %2941 = vmatprep.subr.bf16.mxu0 %v2584
        %2942 = vmatpush1.bf16.msra.mxu0 %v2583
        %2943 = vmatprep.subr.bf16.mxu0 %v2588
        %2944 = vmatpush1.bf16.msra.mxu0 %v2587
        %2945 = vmatprep.subr.bf16.mxu0 %v2592
        %2946 = vmatpush1.bf16.msra.mxu0 %v2591
        %2947 = vmatprep.subr.bf16.mxu0 %v2596
        %2948 = vmatpush1.bf16.msra.mxu0 %v2595
        %2949 = vmatprep.subr.bf16.mxu0 %v2600
        %2950 = vmatpush1.bf16.msra.mxu0 %v2599
        %2951 = vmatprep.subr.bf16.mxu0 %v2604
        %2952 = vmatpush1.bf16.msra.mxu0 %v2603
        %2953 = vmatprep.mubr.bf16.mxu0 %v1954
        %2954 = vmatmul.mubr.bf16.gmra.mrb[0].mxu0 %v1953
        %v2955 = vpop.f32.mrb[0].mxu0
        %v2956 = vadd.f32 %v2843, %v2955
        %v2957 = vpop.f32.mrb[0].mxu0
        %v2958 = vadd.f32 %v2845, %v2957
        %v2959 = vpop.f32.mrb[0].mxu0
        %v2960 = vadd.f32 %v2847, %v2959
        %v2961 = vpop.f32.mrb[0].mxu0
        %v2962 = vadd.f32 %v2849, %v2961
        %2963 = vmatprep.mubr.bf16.mxu0 %v1959
        %2964 = vmatmul.mubr.bf16.gmra.mrb[0].mxu0 %v1958
        %v2965 = vpop.f32.mrb[0].mxu0
        %v2966 = vadd.f32 %v2853, %v2965
        %v2967 = vpop.f32.mrb[0].mxu0
        %v2968 = vadd.f32 %v2855, %v2967
        %v2969 = vpop.f32.mrb[0].mxu0
        %v2970 = vadd.f32 %v2857, %v2969
        %v2971 = vpop.f32.mrb[0].mxu0
        %v2972 = vadd.f32 %v2859, %v2971
        %2973 = vmatprep.mubr.bf16.mxu0 %v1964
        %2974 = vmatmul.mubr.bf16.gmra.mrb[0].mxu0 %v1963
        %v2975 = vpop.f32.mrb[0].mxu0
        %v2976 = vadd.f32 %v2863, %v2975
        %v2977 = vpop.f32.mrb[0].mxu0
        %v2978 = vadd.f32 %v2865, %v2977
        %v2979 = vpop.f32.mrb[0].mxu0
        %v2980 = vadd.f32 %v2867, %v2979
        %v2981 = vpop.f32.mrb[0].mxu0
        %v2982 = vadd.f32 %v2869, %v2981
        %2983 = vmatprep.mubr.bf16.mxu0 %v1969
        %2984 = vmatmul.mubr.bf16.gmra.mrb[0].mxu0 %v1968
        %v2985 = vpop.f32.mrb[0].mxu0
        %v2986 = vadd.f32 %v2873, %v2985
        %v2987 = vpop.f32.mrb[0].mxu0
        %v2988 = vadd.f32 %v2875, %v2987
        %v2989 = vpop.f32.mrb[0].mxu0
        %v2990 = vadd.f32 %v2877, %v2989
        %v2991 = vpop.f32.mrb[0].mxu0
        %v2992 = vadd.f32 %v2879, %v2991
        %2993 = vmatprep.mubr.bf16.mxu0 %v1974
        %2994 = vmatmul.mubr.bf16.gmra.mrb[0].mxu0 %v1973
        %v2995 = vpop.f32.mrb[0].mxu0
        %v2996 = vadd.f32 %v2883, %v2995
        %v2997 = vpop.f32.mrb[0].mxu0
        %v2998 = vadd.f32 %v2885, %v2997
        %v2999 = vpop.f32.mrb[0].mxu0
        %v3000 = vadd.f32 %v2887, %v2999
        %v3001 = vpop.f32.mrb[0].mxu0
        %v3002 = vadd.f32 %v2889, %v3001
        %3003 = vmatprep.mubr.bf16.mxu0 %v1979
        %3004 = vmatmul.mubr.bf16.gmra.mrb[0].mxu0 %v1978
        %v3005 = vpop.f32.mrb[0].mxu0
        %v3006 = vadd.f32 %v2893, %v3005
        %v3007 = vpop.f32.mrb[0].mxu0
        %v3008 = vadd.f32 %v2895, %v3007
        %v3009 = vpop.f32.mrb[0].mxu0
        %v3010 = vadd.f32 %v2897, %v3009
        %v3011 = vpop.f32.mrb[0].mxu0
        %v3012 = vadd.f32 %v2899, %v3011
        %3013 = vmatprep.mubr.bf16.mxu0 %v1984
        %3014 = vmatmul.mubr.bf16.gmra.mrb[0].mxu0 %v1983
        %v3015 = vpop.f32.mrb[0].mxu0
        %v3016 = vadd.f32 %v2903, %v3015
        %v3017 = vpop.f32.mrb[0].mxu0
        %v3018 = vadd.f32 %v2905, %v3017
        %v3019 = vpop.f32.mrb[0].mxu0
        %v3020 = vadd.f32 %v2907, %v3019
        %v3021 = vpop.f32.mrb[0].mxu0
        %v3022 = vadd.f32 %v2909, %v3021
        %3023 = vmatprep.mubr.bf16.mxu0 %v1989
        %3024 = vmatmul.mubr.bf16.gmra.mrb[0].mxu0 %v1988
        %v3025 = vpop.f32.mrb[0].mxu0
        %v3026 = vadd.f32 %v2913, %v3025
        %v3027 = vpop.f32.mrb[0].mxu0
        %v3028 = vadd.f32 %v2915, %v3027
        %v3029 = vpop.f32.mrb[0].mxu0
        %v3030 = vadd.f32 %v2917, %v3029
        %v3031 = vpop.f32.mrb[0].mxu0
        %v3032 = vadd.f32 %v2919, %v3031
        %3033 = vdwg.mxu0
        %3034 = vmatprep.subr.bf16.mxu0 %v2608
        %3035 = vmatpush1.bf16.msra.mxu0 %v2607
        %3036 = vmatprep.subr.bf16.mxu0 %v2612
        %3037 = vmatpush1.bf16.msra.mxu0 %v2611
        %3038 = vmatprep.subr.bf16.mxu0 %v2616
        %3039 = vmatpush1.bf16.msra.mxu0 %v2615
        %3040 = vmatprep.subr.bf16.mxu0 %v2620
        %3041 = vmatpush1.bf16.msra.mxu0 %v2619
        %3042 = vmatprep.subr.bf16.mxu0 %v2624
        %3043 = vmatpush1.bf16.msra.mxu0 %v2623
        %3044 = vmatprep.subr.bf16.mxu0 %v2628
        %3045 = vmatpush1.bf16.msra.mxu0 %v2627
        %3046 = vmatprep.subr.bf16.mxu0 0
        %3047 = vmatpush1.bf16.msra.mxu0 0
        %3048 = vmatprep.subr.bf16.mxu0 0
        %3049 = vmatpush1.bf16.msra.mxu0 0
        %3050 = vmatprep.subr.bf16.mxu0 0
        %3051 = vmatpush1.bf16.msra.mxu0 0
        %3052 = vmatprep.subr.bf16.mxu0 0
        %3053 = vmatpush1.bf16.msra.mxu0 0
        %3054 = vmatprep.subr.bf16.mxu0 0
        %3055 = vmatpush1.bf16.msra.mxu0 0
        %3056 = vmatprep.subr.bf16.mxu0 0
        %3057 = vmatpush1.bf16.msra.mxu0 0
        %3058 = vmatprep.subr.bf16.mxu0 0
        %3059 = vmatpush1.bf16.msra.mxu0 0
        %3060 = vmatprep.subr.bf16.mxu0 0
        %3061 = vmatpush1.bf16.msra.mxu0 0
        %3062 = vmatprep.subr.bf16.mxu0 0
        %3063 = vmatpush1.bf16.msra.mxu0 0
        %3064 = vmatprep.subr.bf16.mxu0 0
        %3065 = vmatpush1.bf16.msra.mxu0 0
        %3066 = vmatprep.mubr.bf16.mxu0 0
        %3067 = vmatmul.mubr.bf16.gmra.mrb[0].mxu0 %v2785
        %v3068 = vpop.f32.mrb[0].mxu0
        %v3069 = vadd.f32 %v2956, %v3068
        %v3070 = vpop.f32.mrb[0].mxu0
        %v3071 = vadd.f32 %v2958, %v3070
        %v3072 = vpop.f32.mrb[0].mxu0
        %v3073 = vadd.f32 %v2960, %v3072
        %v3074 = vpop.f32.mrb[0].mxu0
        %v3075 = vadd.f32 %v2962, %v3074
        %3076 = vmatprep.mubr.bf16.mxu0 0
        %3077 = vmatmul.mubr.bf16.gmra.mrb[0].mxu0 %v2788
        %v3078 = vpop.f32.mrb[0].mxu0
        %v3079 = vadd.f32 %v2966, %v3078
        %v3080 = vpop.f32.mrb[0].mxu0
        %v3081 = vadd.f32 %v2968, %v3080
        %v3082 = vpop.f32.mrb[0].mxu0
        %v3083 = vadd.f32 %v2970, %v3082
        %v3084 = vpop.f32.mrb[0].mxu0
        %v3085 = vadd.f32 %v2972, %v3084
        %3086 = vmatprep.mubr.bf16.mxu0 0
        %3087 = vmatmul.mubr.bf16.gmra.mrb[0].mxu0 %v2791
        %v3088 = vpop.f32.mrb[0].mxu0
        %v3089 = vadd.f32 %v2976, %v3088
        %v3090 = vpop.f32.mrb[0].mxu0
        %v3091 = vadd.f32 %v2978, %v3090
        %v3092 = vpop.f32.mrb[0].mxu0
        %v3093 = vadd.f32 %v2980, %v3092
        %v3094 = vpop.f32.mrb[0].mxu0
        %v3095 = vadd.f32 %v2982, %v3094
        %3096 = vmatprep.mubr.bf16.mxu0 0
        %3097 = vmatmul.mubr.bf16.gmra.mrb[0].mxu0 %v2794
        %v3098 = vpop.f32.mrb[0].mxu0
        %v3099 = vadd.f32 %v2986, %v3098
        %v3100 = vpop.f32.mrb[0].mxu0
        %v3101 = vadd.f32 %v2988, %v3100
        %v3102 = vpop.f32.mrb[0].mxu0
        %v3103 = vadd.f32 %v2990, %v3102
        %v3104 = vpop.f32.mrb[0].mxu0
        %v3105 = vadd.f32 %v2992, %v3104
        %3106 = vmatprep.mubr.bf16.mxu0 0
        %3107 = vmatmul.mubr.bf16.gmra.mrb[0].mxu0 %v2797
        %v3108 = vpop.f32.mrb[0].mxu0
        %v3109 = vadd.f32 %v2996, %v3108
        %v3110 = vpop.f32.mrb[0].mxu0
        %v3111 = vadd.f32 %v2998, %v3110
        %v3112 = vpop.f32.mrb[0].mxu0
        %v3113 = vadd.f32 %v3000, %v3112
        %v3114 = vpop.f32.mrb[0].mxu0
        %v3115 = vadd.f32 %v3002, %v3114
        %3116 = vmatprep.mubr.bf16.mxu0 0
        %3117 = vmatmul.mubr.bf16.gmra.mrb[0].mxu0 %v2800
        %v3118 = vpop.f32.mrb[0].mxu0
        %v3119 = vadd.f32 %v3006, %v3118
        %v3120 = vpop.f32.mrb[0].mxu0
        %v3121 = vadd.f32 %v3008, %v3120
        %v3122 = vpop.f32.mrb[0].mxu0
        %v3123 = vadd.f32 %v3010, %v3122
        %v3124 = vpop.f32.mrb[0].mxu0
        %v3125 = vadd.f32 %v3012, %v3124
        %3126 = vmatprep.mubr.bf16.mxu0 0
        %3127 = vmatmul.mubr.bf16.gmra.mrb[0].mxu0 %v2803
        %v3128 = vpop.f32.mrb[0].mxu0
        %v3129 = vadd.f32 %v3016, %v3128
        %v3130 = vpop.f32.mrb[0].mxu0
        %v3131 = vadd.f32 %v3018, %v3130
        %v3132 = vpop.f32.mrb[0].mxu0
        %v3133 = vadd.f32 %v3020, %v3132
        %v3134 = vpop.f32.mrb[0].mxu0
        %v3135 = vadd.f32 %v3022, %v3134
        %3136 = vmatprep.mubr.bf16.mxu0 0
        %3137 = vmatmul.mubr.bf16.gmra.mrb[0].mxu0 %v2806
        %v3138 = vpop.f32.mrb[0].mxu0
        %v3139 = vadd.f32 %v3026, %v3138
        %v3140 = vpop.f32.mrb[0].mxu0
        %v3141 = vadd.f32 %v3028, %v3140
        %v3142 = vpop.f32.mrb[0].mxu0
        %v3143 = vadd.f32 %v3030, %v3142
        %v3144 = vpop.f32.mrb[0].mxu0
        %v3145 = vadd.f32 %v3032, %v3144
        %3146 = vdwg.mxu0
        %3147 = vmatprep.subr.bf16.mxu0 %v2482
        %3148 = vmatpush1.bf16.msra.mxu0 %v2481
        %3149 = vmatprep.subr.bf16.mxu0 %v2486
        %3150 = vmatpush1.bf16.msra.mxu0 %v2485
        %3151 = vmatprep.subr.bf16.mxu0 %v2490
        %3152 = vmatpush1.bf16.msra.mxu0 %v2489
        %3153 = vmatprep.subr.bf16.mxu0 %v2494
        %3154 = vmatpush1.bf16.msra.mxu0 %v2493
        %3155 = vmatprep.subr.bf16.mxu0 %v2498
        %3156 = vmatpush1.bf16.msra.mxu0 %v2497
        %3157 = vmatprep.subr.bf16.mxu0 %v2502
        %3158 = vmatpush1.bf16.msra.mxu0 %v2501
        %3159 = vmatprep.subr.bf16.mxu0 %v2506
        %3160 = vmatpush1.bf16.msra.mxu0 %v2505
        %3161 = vmatprep.subr.bf16.mxu0 %v2510
        %3162 = vmatpush1.bf16.msra.mxu0 %v2509
        %3163 = vmatprep.subr.bf16.mxu0 %v2514
        %3164 = vmatpush1.bf16.msra.mxu0 %v2513
        %3165 = vmatprep.subr.bf16.mxu0 %v2518
        %3166 = vmatpush1.bf16.msra.mxu0 %v2517
        %3167 = vmatprep.subr.bf16.mxu0 %v2522
        %3168 = vmatpush1.bf16.msra.mxu0 %v2521
        %3169 = vmatprep.subr.bf16.mxu0 %v2526
        %3170 = vmatpush1.bf16.msra.mxu0 %v2525
        %3171 = vmatprep.subr.bf16.mxu0 %v2530
        %3172 = vmatpush1.bf16.msra.mxu0 %v2529
        %3173 = vmatprep.subr.bf16.mxu0 %v2534
        %3174 = vmatpush1.bf16.msra.mxu0 %v2533
        %3175 = vmatprep.subr.bf16.mxu0 %v2538
        %3176 = vmatpush1.bf16.msra.mxu0 %v2537
        %3177 = vmatprep.subr.bf16.mxu0 %v2542
        %3178 = vmatpush1.bf16.msra.mxu0 %v2541
        %3179 = vmatprep.mubr.bf16.mxu0 %v1952
        %3180 = vmatmul.mubr.bf16.gmra.mrb[0].mxu0 %v1951
        %v3181 = vpop.f32.mrb[0].mxu0
        %v3182 = vadd.f32 0.0, %v3181
        %v3183 = vpop.f32.mrb[0].mxu0
        %v3184 = vadd.f32 0.0, %v3183
        %v3185 = vpop.f32.mrb[0].mxu0
        %v3186 = vadd.f32 0.0, %v3185
        %v3187 = vpop.f32.mrb[0].mxu0
        %v3188 = vadd.f32 0.0, %v3187
        %3189 = vmatprep.mubr.bf16.mxu0 %v1957
        %3190 = vmatmul.mubr.bf16.gmra.mrb[0].mxu0 %v1956
        %v3191 = vpop.f32.mrb[0].mxu0
        %v3192 = vadd.f32 0.0, %v3191
        %v3193 = vpop.f32.mrb[0].mxu0
        %v3194 = vadd.f32 0.0, %v3193
        %v3195 = vpop.f32.mrb[0].mxu0
        %v3196 = vadd.f32 0.0, %v3195
        %v3197 = vpop.f32.mrb[0].mxu0
        %v3198 = vadd.f32 0.0, %v3197
        %3199 = vmatprep.mubr.bf16.mxu0 %v1962
        %3200 = vmatmul.mubr.bf16.gmra.mrb[0].mxu0 %v1961
        %v3201 = vpop.f32.mrb[0].mxu0
        %v3202 = vadd.f32 0.0, %v3201
        %v3203 = vpop.f32.mrb[0].mxu0
        %v3204 = vadd.f32 0.0, %v3203
        %v3205 = vpop.f32.mrb[0].mxu0
        %v3206 = vadd.f32 0.0, %v3205
        %v3207 = vpop.f32.mrb[0].mxu0
        %v3208 = vadd.f32 0.0, %v3207
        %3209 = vmatprep.mubr.bf16.mxu0 %v1967
        %3210 = vmatmul.mubr.bf16.gmra.mrb[0].mxu0 %v1966
        %v3211 = vpop.f32.mrb[0].mxu0
        %v3212 = vadd.f32 0.0, %v3211
        %v3213 = vpop.f32.mrb[0].mxu0
        %v3214 = vadd.f32 0.0, %v3213
        %v3215 = vpop.f32.mrb[0].mxu0
        %v3216 = vadd.f32 0.0, %v3215
        %v3217 = vpop.f32.mrb[0].mxu0
        %v3218 = vadd.f32 0.0, %v3217
        %3219 = vmatprep.mubr.bf16.mxu0 %v1972
        %3220 = vmatmul.mubr.bf16.gmra.mrb[0].mxu0 %v1971
        %v3221 = vpop.f32.mrb[0].mxu0
        %v3222 = vadd.f32 0.0, %v3221
        %v3223 = vpop.f32.mrb[0].mxu0
        %v3224 = vadd.f32 0.0, %v3223
        %v3225 = vpop.f32.mrb[0].mxu0
        %v3226 = vadd.f32 0.0, %v3225
        %v3227 = vpop.f32.mrb[0].mxu0
        %v3228 = vadd.f32 0.0, %v3227
        %3229 = vmatprep.mubr.bf16.mxu0 %v1977
        %3230 = vmatmul.mubr.bf16.gmra.mrb[0].mxu0 %v1976
        %v3231 = vpop.f32.mrb[0].mxu0
        %v3232 = vadd.f32 0.0, %v3231
        %v3233 = vpop.f32.mrb[0].mxu0
        %v3234 = vadd.f32 0.0, %v3233
        %v3235 = vpop.f32.mrb[0].mxu0
        %v3236 = vadd.f32 0.0, %v3235
        %v3237 = vpop.f32.mrb[0].mxu0
        %v3238 = vadd.f32 0.0, %v3237
        %3239 = vmatprep.mubr.bf16.mxu0 %v1982
        %3240 = vmatmul.mubr.bf16.gmra.mrb[0].mxu0 %v1981
        %v3241 = vpop.f32.mrb[0].mxu0
        %v3242 = vadd.f32 0.0, %v3241
        %v3243 = vpop.f32.mrb[0].mxu0
        %v3244 = vadd.f32 0.0, %v3243
        %v3245 = vpop.f32.mrb[0].mxu0
        %v3246 = vadd.f32 0.0, %v3245
        %v3247 = vpop.f32.mrb[0].mxu0
        %v3248 = vadd.f32 0.0, %v3247
        %3249 = vmatprep.mubr.bf16.mxu0 %v1987
        %3250 = vmatmul.mubr.bf16.gmra.mrb[0].mxu0 %v1986
        %v3251 = vpop.f32.mrb[0].mxu0
        %v3252 = vadd.f32 0.0, %v3251
        %v3253 = vpop.f32.mrb[0].mxu0
        %v3254 = vadd.f32 0.0, %v3253
        %v3255 = vpop.f32.mrb[0].mxu0
        %v3256 = vadd.f32 0.0, %v3255
        %v3257 = vpop.f32.mrb[0].mxu0
        %v3258 = vadd.f32 0.0, %v3257
        %3259 = vdwg.mxu0
        %3260 = vmatprep.subr.bf16.mxu0 %v2546
        %3261 = vmatpush1.bf16.msra.mxu0 %v2545
        %3262 = vmatprep.subr.bf16.mxu0 %v2550
        %3263 = vmatpush1.bf16.msra.mxu0 %v2549
        %3264 = vmatprep.subr.bf16.mxu0 %v2554
        %3265 = vmatpush1.bf16.msra.mxu0 %v2553
        %3266 = vmatprep.subr.bf16.mxu0 %v2558
        %3267 = vmatpush1.bf16.msra.mxu0 %v2557
        %3268 = vmatprep.subr.bf16.mxu0 %v2562
        %3269 = vmatpush1.bf16.msra.mxu0 %v2561
        %3270 = vmatprep.subr.bf16.mxu0 %v2566
        %3271 = vmatpush1.bf16.msra.mxu0 %v2565
        %3272 = vmatprep.subr.bf16.mxu0 %v2570
        %3273 = vmatpush1.bf16.msra.mxu0 %v2569
        %3274 = vmatprep.subr.bf16.mxu0 %v2574
        %3275 = vmatpush1.bf16.msra.mxu0 %v2573
        %3276 = vmatprep.subr.bf16.mxu0 %v2578
        %3277 = vmatpush1.bf16.msra.mxu0 %v2577
        %3278 = vmatprep.subr.bf16.mxu0 %v2582
        %3279 = vmatpush1.bf16.msra.mxu0 %v2581
        %3280 = vmatprep.subr.bf16.mxu0 %v2586
        %3281 = vmatpush1.bf16.msra.mxu0 %v2585
        %3282 = vmatprep.subr.bf16.mxu0 %v2590
        %3283 = vmatpush1.bf16.msra.mxu0 %v2589
        %3284 = vmatprep.subr.bf16.mxu0 %v2594
        %3285 = vmatpush1.bf16.msra.mxu0 %v2593
        %3286 = vmatprep.subr.bf16.mxu0 %v2598
        %3287 = vmatpush1.bf16.msra.mxu0 %v2597
        %3288 = vmatprep.subr.bf16.mxu0 %v2602
        %3289 = vmatpush1.bf16.msra.mxu0 %v2601
        %3290 = vmatprep.subr.bf16.mxu0 %v2606
        %3291 = vmatpush1.bf16.msra.mxu0 %v2605
        %3292 = vmatprep.mubr.bf16.mxu0 %v1954
        %3293 = vmatmul.mubr.bf16.gmra.mrb[0].mxu0 %v1953
        %v3294 = vpop.f32.mrb[0].mxu0
        %v3295 = vadd.f32 %v3182, %v3294
        %v3296 = vpop.f32.mrb[0].mxu0
        %v3297 = vadd.f32 %v3184, %v3296
        %v3298 = vpop.f32.mrb[0].mxu0
        %v3299 = vadd.f32 %v3186, %v3298
        %v3300 = vpop.f32.mrb[0].mxu0
        %v3301 = vadd.f32 %v3188, %v3300
        %3302 = vmatprep.mubr.bf16.mxu0 %v1959
        %3303 = vmatmul.mubr.bf16.gmra.mrb[0].mxu0 %v1958
        %v3304 = vpop.f32.mrb[0].mxu0
        %v3305 = vadd.f32 %v3192, %v3304
        %v3306 = vpop.f32.mrb[0].mxu0
        %v3307 = vadd.f32 %v3194, %v3306
        %v3308 = vpop.f32.mrb[0].mxu0
        %v3309 = vadd.f32 %v3196, %v3308
        %v3310 = vpop.f32.mrb[0].mxu0
        %v3311 = vadd.f32 %v3198, %v3310
        %3312 = vmatprep.mubr.bf16.mxu0 %v1964
        %3313 = vmatmul.mubr.bf16.gmra.mrb[0].mxu0 %v1963
        %v3314 = vpop.f32.mrb[0].mxu0
        %v3315 = vadd.f32 %v3202, %v3314
        %v3316 = vpop.f32.mrb[0].mxu0
        %v3317 = vadd.f32 %v3204, %v3316
        %v3318 = vpop.f32.mrb[0].mxu0
        %v3319 = vadd.f32 %v3206, %v3318
        %v3320 = vpop.f32.mrb[0].mxu0
        %v3321 = vadd.f32 %v3208, %v3320
        %3322 = vmatprep.mubr.bf16.mxu0 %v1969
        %3323 = vmatmul.mubr.bf16.gmra.mrb[0].mxu0 %v1968
        %v3324 = vpop.f32.mrb[0].mxu0
        %v3325 = vadd.f32 %v3212, %v3324
        %v3326 = vpop.f32.mrb[0].mxu0
        %v3327 = vadd.f32 %v3214, %v3326
        %v3328 = vpop.f32.mrb[0].mxu0
        %v3329 = vadd.f32 %v3216, %v3328
        %v3330 = vpop.f32.mrb[0].mxu0
        %v3331 = vadd.f32 %v3218, %v3330
        %3332 = vmatprep.mubr.bf16.mxu0 %v1974
        %3333 = vmatmul.mubr.bf16.gmra.mrb[0].mxu0 %v1973
        %v3334 = vpop.f32.mrb[0].mxu0
        %v3335 = vadd.f32 %v3222, %v3334
        %v3336 = vpop.f32.mrb[0].mxu0
        %v3337 = vadd.f32 %v3224, %v3336
        %v3338 = vpop.f32.mrb[0].mxu0
        %v3339 = vadd.f32 %v3226, %v3338
        %v3340 = vpop.f32.mrb[0].mxu0
        %v3341 = vadd.f32 %v3228, %v3340
        %3342 = vmatprep.mubr.bf16.mxu0 %v1979
        %3343 = vmatmul.mubr.bf16.gmra.mrb[0].mxu0 %v1978
        %v3344 = vpop.f32.mrb[0].mxu0
        %v3345 = vadd.f32 %v3232, %v3344
        %v3346 = vpop.f32.mrb[0].mxu0
        %v3347 = vadd.f32 %v3234, %v3346
        %v3348 = vpop.f32.mrb[0].mxu0
        %v3349 = vadd.f32 %v3236, %v3348
        %v3350 = vpop.f32.mrb[0].mxu0
        %v3351 = vadd.f32 %v3238, %v3350
        %3352 = vmatprep.mubr.bf16.mxu0 %v1984
        %3353 = vmatmul.mubr.bf16.gmra.mrb[0].mxu0 %v1983
        %v3354 = vpop.f32.mrb[0].mxu0
        %v3355 = vadd.f32 %v3242, %v3354
        %v3356 = vpop.f32.mrb[0].mxu0
        %v3357 = vadd.f32 %v3244, %v3356
        %v3358 = vpop.f32.mrb[0].mxu0
        %v3359 = vadd.f32 %v3246, %v3358
        %v3360 = vpop.f32.mrb[0].mxu0
        %v3361 = vadd.f32 %v3248, %v3360
        %3362 = vmatprep.mubr.bf16.mxu0 %v1989
        %3363 = vmatmul.mubr.bf16.gmra.mrb[0].mxu0 %v1988
        %v3364 = vpop.f32.mrb[0].mxu0
        %v3365 = vadd.f32 %v3252, %v3364
        %v3366 = vpop.f32.mrb[0].mxu0
        %v3367 = vadd.f32 %v3254, %v3366
        %v3368 = vpop.f32.mrb[0].mxu0
        %v3369 = vadd.f32 %v3256, %v3368
        %v3370 = vpop.f32.mrb[0].mxu0
        %v3371 = vadd.f32 %v3258, %v3370
        %3372 = vdwg.mxu0
        %3373 = vmatprep.subr.bf16.mxu0 %v2610
        %3374 = vmatpush1.bf16.msra.mxu0 %v2609
        %3375 = vmatprep.subr.bf16.mxu0 %v2614
        %3376 = vmatpush1.bf16.msra.mxu0 %v2613
        %3377 = vmatprep.subr.bf16.mxu0 %v2618
        %3378 = vmatpush1.bf16.msra.mxu0 %v2617
        %3379 = vmatprep.subr.bf16.mxu0 %v2622
        %3380 = vmatpush1.bf16.msra.mxu0 %v2621
        %3381 = vmatprep.subr.bf16.mxu0 %v2626
        %3382 = vmatpush1.bf16.msra.mxu0 %v2625
        %3383 = vmatprep.subr.bf16.mxu0 %v2630
        %3384 = vmatpush1.bf16.msra.mxu0 %v2629
        %3385 = vmatprep.subr.bf16.mxu0 0
        %3386 = vmatpush1.bf16.msra.mxu0 0
        %3387 = vmatprep.subr.bf16.mxu0 0
        %3388 = vmatpush1.bf16.msra.mxu0 0
        %3389 = vmatprep.subr.bf16.mxu0 0
        %3390 = vmatpush1.bf16.msra.mxu0 0
        %3391 = vmatprep.subr.bf16.mxu0 0
        %3392 = vmatpush1.bf16.msra.mxu0 0
        %3393 = vmatprep.subr.bf16.mxu0 0
        %3394 = vmatpush1.bf16.msra.mxu0 0
        %3395 = vmatprep.subr.bf16.mxu0 0
        %3396 = vmatpush1.bf16.msra.mxu0 0
        %3397 = vmatprep.subr.bf16.mxu0 0
        %3398 = vmatpush1.bf16.msra.mxu0 0
        %3399 = vmatprep.subr.bf16.mxu0 0
        %3400 = vmatpush1.bf16.msra.mxu0 0
        %3401 = vmatprep.subr.bf16.mxu0 0
        %3402 = vmatpush1.bf16.msra.mxu0 0
        %3403 = vmatprep.subr.bf16.mxu0 0
        %3404 = vmatpush1.bf16.msra.mxu0 0
        %3405 = vmatprep.mubr.bf16.mxu0 0
        %3406 = vmatmul.mubr.bf16.gmra.mrb[0].mxu0 %v2785
        %v3407 = vpop.f32.mrb[0].mxu0
        %v3408 = vadd.f32 %v3295, %v3407
        %v3409 = vpop.f32.mrb[0].mxu0
        %v3410 = vadd.f32 %v3297, %v3409
        %v3411 = vpop.f32.mrb[0].mxu0
        %v3412 = vadd.f32 %v3299, %v3411
        %v3413 = vpop.f32.mrb[0].mxu0
        %v3414 = vadd.f32 %v3301, %v3413
        %3415 = vmatprep.mubr.bf16.mxu0 0
        %3416 = vmatmul.mubr.bf16.gmra.mrb[0].mxu0 %v2788
        %v3417 = vpop.f32.mrb[0].mxu0
        %v3418 = vadd.f32 %v3305, %v3417
        %v3419 = vpop.f32.mrb[0].mxu0
        %v3420 = vadd.f32 %v3307, %v3419
        %v3421 = vpop.f32.mrb[0].mxu0
        %v3422 = vadd.f32 %v3309, %v3421
        %v3423 = vpop.f32.mrb[0].mxu0
        %v3424 = vadd.f32 %v3311, %v3423
        %3425 = vmatprep.mubr.bf16.mxu0 0
        %3426 = vmatmul.mubr.bf16.gmra.mrb[0].mxu0 %v2791
        %v3427 = vpop.f32.mrb[0].mxu0
        %v3428 = vadd.f32 %v3315, %v3427
        %v3429 = vpop.f32.mrb[0].mxu0
        %v3430 = vadd.f32 %v3317, %v3429
        %v3431 = vpop.f32.mrb[0].mxu0
        %v3432 = vadd.f32 %v3319, %v3431
        %v3433 = vpop.f32.mrb[0].mxu0
        %v3434 = vadd.f32 %v3321, %v3433
        %3435 = vmatprep.mubr.bf16.mxu0 0
        %3436 = vmatmul.mubr.bf16.gmra.mrb[0].mxu0 %v2794
        %v3437 = vpop.f32.mrb[0].mxu0
        %v3438 = vadd.f32 %v3325, %v3437
        %v3439 = vpop.f32.mrb[0].mxu0
        %v3440 = vadd.f32 %v3327, %v3439
        %v3441 = vpop.f32.mrb[0].mxu0
        %v3442 = vadd.f32 %v3329, %v3441
        %v3443 = vpop.f32.mrb[0].mxu0
        %v3444 = vadd.f32 %v3331, %v3443
        %3445 = vmatprep.mubr.bf16.mxu0 0
        %3446 = vmatmul.mubr.bf16.gmra.mrb[0].mxu0 %v2797
        %v3447 = vpop.f32.mrb[0].mxu0
        %v3448 = vadd.f32 %v3335, %v3447
        %v3449 = vpop.f32.mrb[0].mxu0
        %v3450 = vadd.f32 %v3337, %v3449
        %v3451 = vpop.f32.mrb[0].mxu0
        %v3452 = vadd.f32 %v3339, %v3451
        %v3453 = vpop.f32.mrb[0].mxu0
        %v3454 = vadd.f32 %v3341, %v3453
        %3455 = vmatprep.mubr.bf16.mxu0 0
        %3456 = vmatmul.mubr.bf16.gmra.mrb[0].mxu0 %v2800
        %v3457 = vpop.f32.mrb[0].mxu0
        %v3458 = vadd.f32 %v3345, %v3457
        %v3459 = vpop.f32.mrb[0].mxu0
        %v3460 = vadd.f32 %v3347, %v3459
        %v3461 = vpop.f32.mrb[0].mxu0
        %v3462 = vadd.f32 %v3349, %v3461
        %v3463 = vpop.f32.mrb[0].mxu0
        %v3464 = vadd.f32 %v3351, %v3463
        %3465 = vmatprep.mubr.bf16.mxu0 0
        %3466 = vmatmul.mubr.bf16.gmra.mrb[0].mxu0 %v2803
        %v3467 = vpop.f32.mrb[0].mxu0
        %v3468 = vadd.f32 %v3355, %v3467
        %v3469 = vpop.f32.mrb[0].mxu0
        %v3470 = vadd.f32 %v3357, %v3469
        %v3471 = vpop.f32.mrb[0].mxu0
        %v3472 = vadd.f32 %v3359, %v3471
        %v3473 = vpop.f32.mrb[0].mxu0
        %v3474 = vadd.f32 %v3361, %v3473
        %3475 = vmatprep.mubr.bf16.mxu0 0
        %3476 = vmatmul.mubr.bf16.gmra.mrb[0].mxu0 %v2806
        %v3477 = vpop.f32.mrb[0].mxu0
        %v3478 = vadd.f32 %v3365, %v3477
        %v3479 = vpop.f32.mrb[0].mxu0
        %v3480 = vadd.f32 %v3367, %v3479
        %v3481 = vpop.f32.mrb[0].mxu0
        %v3482 = vadd.f32 %v3369, %v3481
        %v3483 = vpop.f32.mrb[0].mxu0
        %v3484 = vadd.f32 %v3371, %v3483
        %3485 = vdwg.mxu0
        %v3486 = vpack.c.bf16 %v3073, %v3069
        %v3487 = vpack.c.bf16 %v3075, %v3071
        %v3488 = vpack.c.bf16 %v3412, %v3408
        %v3489 = vpack.c.bf16 %v3414, %v3410
        %v3490 = vpack.c.bf16 %v3083, %v3079
        %v3491 = vpack.c.bf16 %v3085, %v3081
        %v3492 = vpack.c.bf16 %v3422, %v3418
        %v3493 = vpack.c.bf16 %v3424, %v3420
        %v3494 = vpack.c.bf16 %v3093, %v3089
        %v3495 = vpack.c.bf16 %v3095, %v3091
        %v3496 = vpack.c.bf16 %v3432, %v3428
        %v3497 = vpack.c.bf16 %v3434, %v3430
        %v3498 = vpack.c.bf16 %v3103, %v3099
        %v3499 = vpack.c.bf16 %v3105, %v3101
        %v3500 = vpack.c.bf16 %v3442, %v3438
        %v3501 = vpack.c.bf16 %v3444, %v3440
        %v3502 = vpack.c.bf16 %v3113, %v3109
        %v3503 = vpack.c.bf16 %v3115, %v3111
        %v3504 = vpack.c.bf16 %v3452, %v3448
        %v3505 = vpack.c.bf16 %v3454, %v3450
        %v3506 = vpack.c.bf16 %v3123, %v3119
        %v3507 = vpack.c.bf16 %v3125, %v3121
        %v3508 = vpack.c.bf16 %v3462, %v3458
        %v3509 = vpack.c.bf16 %v3464, %v3460
        %v3510 = vpack.c.bf16 %v3133, %v3129
        %v3511 = vpack.c.bf16 %v3135, %v3131
        %v3512 = vpack.c.bf16 %v3472, %v3468
        %v3513 = vpack.c.bf16 %v3474, %v3470
        %v3514 = vpack.c.bf16 %v3143, %v3139
        %v3515 = vpack.c.bf16 %v3145, %v3141
        %v3516 = vpack.c.bf16 %v3482, %v3478
        %v3517 = vpack.c.bf16 %v3484, %v3480
        %v3518 = vld [vmem:[#allocation13] sm:$0xf]
        %v3520 = vlaneseq
        %v3521 = vshrl.u32 %v3520, 7
        %v3522 = vsub.s32 0, %v3521
        %v3523 = vrot.slane %v3518, %v3522
        %v3524 = vlaneseq
        %v3525 = vshrl.u32 %v3524, 7
        %v3526 = vsub.s32 1, %v3525
        %v3527 = vrot.slane %v3518, %v3526
        %v3528 = vlaneseq
        %v3529 = vshrl.u32 %v3528, 7
        %v3530 = vsub.s32 2, %v3529
        %v3531 = vrot.slane %v3518, %v3530
        %v3532 = vlaneseq
        %v3533 = vshrl.u32 %v3532, 7
        %v3534 = vsub.s32 3, %v3533
        %v3535 = vrot.slane %v3518, %v3534
        %v3540 = vpack.c.bf16 %v3523, %v3523
        %v3541 = vpack.c.bf16 %v3527, %v3527
        %v3542 = vpack.c.bf16 %v3531, %v3531
        %v3543 = vpack.c.bf16 %v3535, %v3535
        %v3545 = vpack.i.b16 %v3540, %v3540
        %v3547 = vlaneseq
        %v3548 = vshrl.u32 %v3547, 7
        %v3549 = vsub.s32 0, %v3548
        %v3550 = vrot.slane %v3545, %v3549
        %v3552 = vpack.i.b16 %v3541, %v3541
        %v3554 = vlaneseq
        %v3555 = vshrl.u32 %v3554, 7
        %v3556 = vsub.s32 0, %v3555
        %v3557 = vrot.slane %v3552, %v3556
        %v3559 = vpack.i.b16 %v3542, %v3542
        %v3561 = vlaneseq
        %v3562 = vshrl.u32 %v3561, 7
        %v3563 = vsub.s32 0, %v3562
        %v3564 = vrot.slane %v3559, %v3563
        %v3566 = vpack.i.b16 %v3543, %v3543
        %v3568 = vlaneseq
        %v3569 = vshrl.u32 %v3568, 7
        %v3570 = vsub.s32 0, %v3569
        %v3571 = vrot.slane %v3566, %v3570
        %v3572 = vadd.bf16 %v3486, %v3550
        %v3573 = vadd.bf16 %v3487, %v3557
        %v3574 = vadd.bf16 %v3488, %v3564
        %v3575 = vadd.bf16 %v3489, %v3571
        %v3576 = vadd.bf16 %v3490, %v3550
        %v3577 = vadd.bf16 %v3491, %v3557
        %v3578 = vadd.bf16 %v3492, %v3564
        %v3579 = vadd.bf16 %v3493, %v3571
        %v3580 = vadd.bf16 %v3494, %v3550
        %v3581 = vadd.bf16 %v3495, %v3557
        %v3582 = vadd.bf16 %v3496, %v3564
        %v3583 = vadd.bf16 %v3497, %v3571
        %v3584 = vadd.bf16 %v3498, %v3550
        %v3585 = vadd.bf16 %v3499, %v3557
        %v3586 = vadd.bf16 %v3500, %v3564
        %v3587 = vadd.bf16 %v3501, %v3571
        %v3588 = vadd.bf16 %v3502, %v3550
        %v3589 = vadd.bf16 %v3503, %v3557
        %v3590 = vadd.bf16 %v3504, %v3564
        %v3591 = vadd.bf16 %v3505, %v3571
        %v3592 = vadd.bf16 %v3506, %v3550
        %v3593 = vadd.bf16 %v3507, %v3557
        %v3594 = vadd.bf16 %v3508, %v3564
        %v3595 = vadd.bf16 %v3509, %v3571
        %v3596 = vadd.bf16 %v3510, %v3550
        %v3597 = vadd.bf16 %v3511, %v3557
        %v3598 = vadd.bf16 %v3512, %v3564
        %v3599 = vadd.bf16 %v3513, %v3571
        %v3600 = vadd.bf16 %v3514, %v3550
        %v3601 = vadd.bf16 %v3515, %v3557
        %v3602 = vadd.bf16 %v3516, %v3564
        %v3603 = vadd.bf16 %v3517, %v3571
        %v3604 = vmul.bf16 %v3572, 1009007652
        %v3605 = vmul.bf16 %v3573, 1009007652
        %v3606 = vmul.bf16 %v3574, 1009007652
        %v3607 = vmul.bf16 %v3575, 1009007652
        %v3608 = vmul.bf16 %v3576, 1009007652
        %v3609 = vmul.bf16 %v3577, 1009007652
        %v3610 = vmul.bf16 %v3578, 1009007652
        %v3611 = vmul.bf16 %v3579, 1009007652
        %v3612 = vmul.bf16 %v3580, 1009007652
        %v3613 = vmul.bf16 %v3581, 1009007652
        %v3614 = vmul.bf16 %v3582, 1009007652
        %v3615 = vmul.bf16 %v3583, 1009007652
        %v3616 = vmul.bf16 %v3584, 1009007652
        %v3617 = vmul.bf16 %v3585, 1009007652
        %v3618 = vmul.bf16 %v3586, 1009007652
        %v3619 = vmul.bf16 %v3587, 1009007652
        %v3620 = vmul.bf16 %v3588, 1009007652
        %v3621 = vmul.bf16 %v3589, 1009007652
        %v3622 = vmul.bf16 %v3590, 1009007652
        %v3623 = vmul.bf16 %v3591, 1009007652
        %v3624 = vmul.bf16 %v3592, 1009007652
        %v3625 = vmul.bf16 %v3593, 1009007652
        %v3626 = vmul.bf16 %v3594, 1009007652
        %v3627 = vmul.bf16 %v3595, 1009007652
        %v3628 = vmul.bf16 %v3596, 1009007652
        %v3629 = vmul.bf16 %v3597, 1009007652
        %v3630 = vmul.bf16 %v3598, 1009007652
        %v3631 = vmul.bf16 %v3599, 1009007652
        %v3632 = vmul.bf16 %v3600, 1009007652
        %v3633 = vmul.bf16 %v3601, 1009007652
        %v3634 = vmul.bf16 %v3602, 1009007652
        %v3635 = vmul.bf16 %v3603, 1009007652
        %v3636 = vmax.bf16 %v3572, %v3604
        %v3637 = vmax.bf16 %v3573, %v3605
        %v3638 = vmax.bf16 %v3574, %v3606
        %v3639 = vmax.bf16 %v3575, %v3607
        %v3640 = vmax.bf16 %v3576, %v3608
        %v3641 = vmax.bf16 %v3577, %v3609
        %v3642 = vmax.bf16 %v3578, %v3610
        %v3643 = vmax.bf16 %v3579, %v3611
        %v3644 = vmax.bf16 %v3580, %v3612
        %v3645 = vmax.bf16 %v3581, %v3613
        %v3646 = vmax.bf16 %v3582, %v3614
        %v3647 = vmax.bf16 %v3583, %v3615
        %v3648 = vmax.bf16 %v3584, %v3616
        %v3649 = vmax.bf16 %v3585, %v3617
        %v3650 = vmax.bf16 %v3586, %v3618
        %v3651 = vmax.bf16 %v3587, %v3619
        %v3652 = vmax.bf16 %v3588, %v3620
        %v3653 = vmax.bf16 %v3589, %v3621
        %v3654 = vmax.bf16 %v3590, %v3622
        %v3655 = vmax.bf16 %v3591, %v3623
        %v3656 = vmax.bf16 %v3592, %v3624
        %v3657 = vmax.bf16 %v3593, %v3625
        %v3658 = vmax.bf16 %v3594, %v3626
        %v3659 = vmax.bf16 %v3595, %v3627
        %v3660 = vmax.bf16 %v3596, %v3628
        %v3661 = vmax.bf16 %v3597, %v3629
        %v3662 = vmax.bf16 %v3598, %v3630
        %v3663 = vmax.bf16 %v3599, %v3631
        %v3664 = vmax.bf16 %v3600, %v3632
        %v3665 = vmax.bf16 %v3601, %v3633
        %v3666 = vmax.bf16 %v3602, %v3634
        %v3667 = vmax.bf16 %v3603, %v3635
        %v3668 = vld [vmem:[#allocation15] sm:$0xf]
        %v3669 = vld [vmem:[#allocation15 + $0x4] sm:$0xf]
        %v3670 = vld [vmem:[#allocation15 + $0x8] sm:$0xf]
        %v3671 = vld [vmem:[#allocation15 + $0xc] sm:$0xf]
        %v3672 = vld [vmem:[#allocation15 + $0x10] sm:$0xf]
        %v3673 = vld [vmem:[#allocation15 + $0x14] sm:$0xf]
        %v3674 = vld [vmem:[#allocation15 + $0x18] sm:$0xf]
        %v3675 = vld [vmem:[#allocation15 + $0x1c] sm:$0xf]
        %v3676 = vld [vmem:[#allocation15 + $0x20] sm:$0xf]
        %v3677 = vld [vmem:[#allocation15 + $0x24] sm:$0xf]
        %v3678 = vld [vmem:[#allocation15 + $0x28] sm:$0xf]
        %v3679 = vld [vmem:[#allocation15 + $0x2c] sm:$0xf]
        %v3680 = vld [vmem:[#allocation15 + $0x30] sm:$0xf]
        %v3681 = vld [vmem:[#allocation15 + $0x34] sm:$0xf]
        %v3682 = vld [vmem:[#allocation15 + $0x38] sm:$0xf]
        %v3683 = vld [vmem:[#allocation15 + $0x3c] sm:$0xf]
        %v3684 = vld [vmem:[#allocation15 + $0x40] sm:$0xf]
        %v3685 = vld [vmem:[#allocation15 + $0x44] sm:$0xf]
        %v3686 = vld [vmem:[#allocation15 + $0x48] sm:$0xf]
        %v3687 = vld [vmem:[#allocation15 + $0x4c] sm:$0xf]
        %v3688 = vld [vmem:[#allocation15 + $0x50] sm:$0xf]
        %v3689 = vld [vmem:[#allocation15 + $0x54] sm:$0xf]
        %v3690 = vld [vmem:[#allocation15 + $0x58] sm:$0xf]
        %v3691 = vld [vmem:[#allocation15 + $0x5c] sm:$0xf]
        %v3692 = vld [vmem:[#allocation15 + $0x60] sm:$0xf]
        %v3693 = vld [vmem:[#allocation15 + $0x64] sm:$0xf]
        %v3694 = vld [vmem:[#allocation15 + $0x68] sm:$0xf]
        %v3695 = vld [vmem:[#allocation15 + $0x6c] sm:$0xf]
        %v3696 = vld [vmem:[#allocation15 + $0x70] sm:$0xf]
        %v3697 = vld [vmem:[#allocation15 + $0x74] sm:$0xf]
        %v3698 = vld [vmem:[#allocation15 + $0x78] sm:$0xf]
        %v3699 = vld [vmem:[#allocation15 + $0x7c] sm:$0xf]
        %v3700 = vld [vmem:[#allocation15 + $0x80] sm:$0xf]
        %v3701 = vld [vmem:[#allocation15 + $0x84] sm:$0xf]
        %v3702 = vld [vmem:[#allocation15 + $0x88] sm:$0xf]
        %v3703 = vld [vmem:[#allocation15 + $0x8c] sm:$0xf]
        %v3704 = vld [vmem:[#allocation15 + $0x90] sm:$0xf]
        %v3705 = vld [vmem:[#allocation15 + $0x94] sm:$0xf]
        %v3706 = vld [vmem:[#allocation15 + $0x98] sm:$0xf]
        %v3707 = vld [vmem:[#allocation15 + $0x9c] sm:$0xf]
        %v3708 = vld [vmem:[#allocation15 + $0xa0] sm:$0xf]
        %v3709 = vld [vmem:[#allocation15 + $0xa4] sm:$0xf]
        %v3710 = vld [vmem:[#allocation15 + $0xa8] sm:$0xf]
        %v3711 = vld [vmem:[#allocation15 + $0xac] sm:$0xf]
        %v3712 = vld [vmem:[#allocation15 + $0xb0] sm:$0xf]
        %v3713 = vld [vmem:[#allocation15 + $0xb4] sm:$0xf]
        %v3714 = vld [vmem:[#allocation15 + $0xb8] sm:$0xf]
        %v3715 = vld [vmem:[#allocation15 + $0xbc] sm:$0xf]
        %v3716 = vld [vmem:[#allocation15 + $0xc0] sm:$0xf]
        %v3717 = vld [vmem:[#allocation15 + $0xc4] sm:$0xf]
        %v3718 = vld [vmem:[#allocation15 + $0xc8] sm:$0xf]
        %v3719 = vld [vmem:[#allocation15 + $0xcc] sm:$0xf]
        %v3720 = vld [vmem:[#allocation15 + $0xd0] sm:$0xf]
        %v3721 = vld [vmem:[#allocation15 + $0xd4] sm:$0xf]
        %v3722 = vld [vmem:[#allocation15 + $0xd8] sm:$0xf]
        %v3723 = vld [vmem:[#allocation15 + $0xdc] sm:$0xf]
        %v3724 = vld [vmem:[#allocation15 + $0xe0] sm:$0xf]
        %v3725 = vld [vmem:[#allocation15 + $0xe4] sm:$0xf]
        %v3726 = vld [vmem:[#allocation15 + $0xe8] sm:$0xf]
        %v3727 = vld [vmem:[#allocation15 + $0xec] sm:$0xf]
        %v3728 = vld [vmem:[#allocation15 + $0xf0] sm:$0xf]
        %v3729 = vld [vmem:[#allocation15 + $0xf4] sm:$0xf]
        %v3730 = vld [vmem:[#allocation15 + $0xf8] sm:$0xf]
        %v3731 = vld [vmem:[#allocation15 + $0xfc] sm:$0xf]
        %v3796 = vunpack.c.l.b16 %v3668
        %v3797 = vunpack.c.l.b16 %v3669
        %v3798 = vunpack.c.l.b16 %v3670
        %v3799 = vunpack.c.l.b16 %v3671
        %v3800 = vunpack.c.l.b16 %v3672
        %v3801 = vunpack.c.l.b16 %v3673
        %v3802 = vunpack.c.l.b16 %v3674
        %v3803 = vunpack.c.l.b16 %v3675
        %v3804 = vunpack.c.l.b16 %v3676
        %v3805 = vunpack.c.l.b16 %v3677
        %v3806 = vunpack.c.l.b16 %v3678
        %v3807 = vunpack.c.l.b16 %v3679
        %v3808 = vunpack.c.l.b16 %v3680
        %v3809 = vunpack.c.l.b16 %v3681
        %v3810 = vunpack.c.l.b16 %v3682
        %v3811 = vunpack.c.l.b16 %v3683
        %v3812 = vunpack.c.l.b16 %v3684
        %v3813 = vunpack.c.l.b16 %v3685
        %v3814 = vunpack.c.l.b16 %v3686
        %v3815 = vunpack.c.l.b16 %v3687
        %v3816 = vunpack.c.l.b16 %v3688
        %v3817 = vunpack.c.l.b16 %v3689
        %v3818 = vunpack.c.l.b16 %v3690
        %v3819 = vunpack.c.l.b16 %v3691
        %v3820 = vunpack.c.l.b16 %v3692
        %v3821 = vunpack.c.l.b16 %v3693
        %v3822 = vunpack.c.l.b16 %v3694
        %v3823 = vunpack.c.l.b16 %v3695
        %v3824 = vunpack.c.l.b16 %v3696
        %v3825 = vunpack.c.l.b16 %v3697
        %v3826 = vunpack.c.l.b16 %v3698
        %v3827 = vunpack.c.l.b16 %v3699
        %v3828 = vunpack.c.l.b16 %v3700
        %v3829 = vunpack.c.l.b16 %v3701
        %v3830 = vunpack.c.l.b16 %v3702
        %v3831 = vunpack.c.l.b16 %v3703
        %v3832 = vunpack.c.l.b16 %v3704
        %v3833 = vunpack.c.l.b16 %v3705
        %v3834 = vunpack.c.l.b16 %v3706
        %v3835 = vunpack.c.l.b16 %v3707
        %v3836 = vunpack.c.l.b16 %v3708
        %v3837 = vunpack.c.l.b16 %v3709
        %v3838 = vunpack.c.l.b16 %v3710
        %v3839 = vunpack.c.l.b16 %v3711
        %v3840 = vunpack.c.l.b16 %v3712
        %v3841 = vunpack.c.l.b16 %v3713
        %v3842 = vunpack.c.l.b16 %v3714
        %v3843 = vunpack.c.l.b16 %v3715
        %v3844 = vunpack.c.l.b16 %v3716
        %v3845 = vunpack.c.l.b16 %v3717
        %v3846 = vunpack.c.l.b16 %v3718
        %v3847 = vunpack.c.l.b16 %v3719
        %v3848 = vunpack.c.l.b16 %v3720
        %v3849 = vunpack.c.l.b16 %v3721
        %v3850 = vunpack.c.l.b16 %v3722
        %v3851 = vunpack.c.l.b16 %v3723
        %v3852 = vunpack.c.l.b16 %v3724
        %v3853 = vunpack.c.l.b16 %v3725
        %v3854 = vunpack.c.l.b16 %v3726
        %v3855 = vunpack.c.l.b16 %v3727
        %v3856 = vunpack.c.l.b16 %v3728
        %v3857 = vunpack.c.l.b16 %v3729
        %v3858 = vunpack.c.l.b16 %v3730
        %v3859 = vunpack.c.l.b16 %v3731
        %v3860 = vpack.c.b16 %v3797, %v3796
        %v3861 = vpack.c.b16 %v3799, %v3798
        %v3862 = vpack.c.b16 %v3801, %v3800
        %v3863 = vpack.c.b16 %v3803, %v3802
        %v3864 = vpack.c.b16 %v3805, %v3804
        %v3865 = vpack.c.b16 %v3807, %v3806
        %v3866 = vpack.c.b16 %v3809, %v3808
        %v3867 = vpack.c.b16 %v3811, %v3810
        %v3868 = vpack.c.b16 %v3813, %v3812
        %v3869 = vpack.c.b16 %v3815, %v3814
        %v3870 = vpack.c.b16 %v3817, %v3816
        %v3871 = vpack.c.b16 %v3819, %v3818
        %v3872 = vpack.c.b16 %v3821, %v3820
        %v3873 = vpack.c.b16 %v3823, %v3822
        %v3874 = vpack.c.b16 %v3825, %v3824
        %v3875 = vpack.c.b16 %v3827, %v3826
        %v3876 = vpack.c.b16 %v3829, %v3828
        %v3877 = vpack.c.b16 %v3831, %v3830
        %v3878 = vpack.c.b16 %v3833, %v3832
        %v3879 = vpack.c.b16 %v3835, %v3834
        %v3880 = vpack.c.b16 %v3837, %v3836
        %v3881 = vpack.c.b16 %v3839, %v3838
        %v3882 = vpack.c.b16 %v3841, %v3840
        %v3883 = vpack.c.b16 %v3843, %v3842
        %v3884 = vpack.c.b16 %v3845, %v3844
        %v3885 = vpack.c.b16 %v3847, %v3846
        %v3886 = vpack.c.b16 %v3849, %v3848
        %v3887 = vpack.c.b16 %v3851, %v3850
        %v3888 = vpack.c.b16 %v3853, %v3852
        %v3889 = vpack.c.b16 %v3855, %v3854
        %v3890 = vpack.c.b16 %v3857, %v3856
        %v3891 = vpack.c.b16 %v3859, %v3858
        %3924 = vmatprep.subr.bf16.mxu0 0
        %3925 = vmatpush1.bf16.msra.mxu0 %v3860
        %3926 = vmatprep.subr.bf16.mxu0 0
        %3927 = vmatpush1.bf16.msra.mxu0 %v3861
        %3928 = vmatprep.subr.bf16.mxu0 0
        %3929 = vmatpush1.bf16.msra.mxu0 %v3862
        %3930 = vmatprep.subr.bf16.mxu0 0
        %3931 = vmatpush1.bf16.msra.mxu0 %v3863
        %3932 = vmatprep.subr.bf16.mxu0 0
        %3933 = vmatpush1.bf16.msra.mxu0 %v3864
        %3934 = vmatprep.subr.bf16.mxu0 0
        %3935 = vmatpush1.bf16.msra.mxu0 %v3865
        %3936 = vmatprep.subr.bf16.mxu0 0
        %3937 = vmatpush1.bf16.msra.mxu0 %v3866
        %3938 = vmatprep.subr.bf16.mxu0 0
        %3939 = vmatpush1.bf16.msra.mxu0 %v3867
        %3940 = vmatprep.subr.bf16.mxu0 0
        %3941 = vmatpush1.bf16.msra.mxu0 %v3868
        %3942 = vmatprep.subr.bf16.mxu0 0
        %3943 = vmatpush1.bf16.msra.mxu0 %v3869
        %3944 = vmatprep.subr.bf16.mxu0 0
        %3945 = vmatpush1.bf16.msra.mxu0 %v3870
        %3946 = vmatprep.subr.bf16.mxu0 0
        %3947 = vmatpush1.bf16.msra.mxu0 %v3871
        %3948 = vmatprep.subr.bf16.mxu0 0
        %3949 = vmatpush1.bf16.msra.mxu0 %v3872
        %3950 = vmatprep.subr.bf16.mxu0 0
        %3951 = vmatpush1.bf16.msra.mxu0 %v3873
        %3952 = vmatprep.subr.bf16.mxu0 0
        %3953 = vmatpush1.bf16.msra.mxu0 %v3874
        %3954 = vmatprep.subr.bf16.mxu0 0
        %3955 = vmatpush1.bf16.msra.mxu0 %v3875
        %3956 = vmatprep.mubr.bf16.mxu0 %v3637
        %3957 = vmatmul.mubr.bf16.gmra.mrb[0].mxu0 %v3636
        %v3958 = vpop.f32.mrb[0].mxu0
        %v3959 = vadd.f32 0.0, %v3958
        %v3960 = vpop.f32.mrb[0].mxu0
        %v3961 = vpop.f32.mrb[0].mxu0
        %v3962 = vadd.f32 0.0, %v3961
        %v3963 = vpop.f32.mrb[0].mxu0
        %3964 = vmatprep.mubr.bf16.mxu0 %v3641
        %3965 = vmatmul.mubr.bf16.gmra.mrb[0].mxu0 %v3640
        %v3966 = vpop.f32.mrb[0].mxu0
        %v3967 = vadd.f32 0.0, %v3966
        %v3968 = vpop.f32.mrb[0].mxu0
        %v3969 = vpop.f32.mrb[0].mxu0
        %v3970 = vadd.f32 0.0, %v3969
        %v3971 = vpop.f32.mrb[0].mxu0
        %3972 = vmatprep.mubr.bf16.mxu0 %v3645
        %3973 = vmatmul.mubr.bf16.gmra.mrb[0].mxu0 %v3644
        %v3974 = vpop.f32.mrb[0].mxu0
        %v3975 = vadd.f32 0.0, %v3974
        %v3976 = vpop.f32.mrb[0].mxu0
        %v3977 = vpop.f32.mrb[0].mxu0
        %v3978 = vadd.f32 0.0, %v3977
        %v3979 = vpop.f32.mrb[0].mxu0
        %3980 = vmatprep.mubr.bf16.mxu0 %v3649
        %3981 = vmatmul.mubr.bf16.gmra.mrb[0].mxu0 %v3648
        %v3982 = vpop.f32.mrb[0].mxu0
        %v3983 = vadd.f32 0.0, %v3982
        %v3984 = vpop.f32.mrb[0].mxu0
        %v3985 = vpop.f32.mrb[0].mxu0
        %v3986 = vadd.f32 0.0, %v3985
        %v3987 = vpop.f32.mrb[0].mxu0
        %3988 = vmatprep.mubr.bf16.mxu0 %v3653
        %3989 = vmatmul.mubr.bf16.gmra.mrb[0].mxu0 %v3652
        %v3990 = vpop.f32.mrb[0].mxu0
        %v3991 = vadd.f32 0.0, %v3990
        %v3992 = vpop.f32.mrb[0].mxu0
        %v3993 = vpop.f32.mrb[0].mxu0
        %v3994 = vadd.f32 0.0, %v3993
        %v3995 = vpop.f32.mrb[0].mxu0
        %3996 = vmatprep.mubr.bf16.mxu0 %v3657
        %3997 = vmatmul.mubr.bf16.gmra.mrb[0].mxu0 %v3656
        %v3998 = vpop.f32.mrb[0].mxu0
        %v3999 = vadd.f32 0.0, %v3998
        %v4000 = vpop.f32.mrb[0].mxu0
        %v4001 = vpop.f32.mrb[0].mxu0
        %v4002 = vadd.f32 0.0, %v4001
        %v4003 = vpop.f32.mrb[0].mxu0
        %4004 = vmatprep.mubr.bf16.mxu0 %v3661
        %4005 = vmatmul.mubr.bf16.gmra.mrb[0].mxu0 %v3660
        %v4006 = vpop.f32.mrb[0].mxu0
        %v4007 = vadd.f32 0.0, %v4006
        %v4008 = vpop.f32.mrb[0].mxu0
        %v4009 = vpop.f32.mrb[0].mxu0
        %v4010 = vadd.f32 0.0, %v4009
        %v4011 = vpop.f32.mrb[0].mxu0
        %4012 = vmatprep.mubr.bf16.mxu0 %v3665
        %4013 = vmatmul.mubr.bf16.gmra.mrb[0].mxu0 %v3664
        %v4014 = vpop.f32.mrb[0].mxu0
        %v4015 = vadd.f32 0.0, %v4014
        %v4016 = vpop.f32.mrb[0].mxu0
        %v4017 = vpop.f32.mrb[0].mxu0
        %v4018 = vadd.f32 0.0, %v4017
        %v4019 = vpop.f32.mrb[0].mxu0
        %4020 = vdwg.mxu0
        %4021 = vmatprep.subr.bf16.mxu0 0
        %4022 = vmatpush1.bf16.msra.mxu0 %v3876
        %4023 = vmatprep.subr.bf16.mxu0 0
        %4024 = vmatpush1.bf16.msra.mxu0 %v3877
        %4025 = vmatprep.subr.bf16.mxu0 0
        %4026 = vmatpush1.bf16.msra.mxu0 %v3878
        %4027 = vmatprep.subr.bf16.mxu0 0
        %4028 = vmatpush1.bf16.msra.mxu0 %v3879
        %4029 = vmatprep.subr.bf16.mxu0 0
        %4030 = vmatpush1.bf16.msra.mxu0 %v3880
        %4031 = vmatprep.subr.bf16.mxu0 0
        %4032 = vmatpush1.bf16.msra.mxu0 %v3881
        %4033 = vmatprep.subr.bf16.mxu0 0
        %4034 = vmatpush1.bf16.msra.mxu0 %v3882
        %4035 = vmatprep.subr.bf16.mxu0 0
        %4036 = vmatpush1.bf16.msra.mxu0 %v3883
        %4037 = vmatprep.subr.bf16.mxu0 0
        %4038 = vmatpush1.bf16.msra.mxu0 %v3884
        %4039 = vmatprep.subr.bf16.mxu0 0
        %4040 = vmatpush1.bf16.msra.mxu0 %v3885
        %4041 = vmatprep.subr.bf16.mxu0 0
        %4042 = vmatpush1.bf16.msra.mxu0 %v3886
        %4043 = vmatprep.subr.bf16.mxu0 0
        %4044 = vmatpush1.bf16.msra.mxu0 %v3887
        %4045 = vmatprep.subr.bf16.mxu0 0
        %4046 = vmatpush1.bf16.msra.mxu0 %v3888
        %4047 = vmatprep.subr.bf16.mxu0 0
        %4048 = vmatpush1.bf16.msra.mxu0 %v3889
        %4049 = vmatprep.subr.bf16.mxu0 0
        %4050 = vmatpush1.bf16.msra.mxu0 %v3890
        %4051 = vmatprep.subr.bf16.mxu0 0
        %4052 = vmatpush1.bf16.msra.mxu0 %v3891
        %4053 = vmatprep.mubr.bf16.mxu0 %v3639
        %4054 = vmatmul.mubr.bf16.gmra.mrb[0].mxu0 %v3638
        %v4055 = vpop.f32.mrb[0].mxu0
        %v4056 = vadd.f32 %v3959, %v4055
        %v4057 = vpop.f32.mrb[0].mxu0
        %v4058 = vpop.f32.mrb[0].mxu0
        %v4059 = vadd.f32 %v3962, %v4058
        %v4060 = vpop.f32.mrb[0].mxu0
        %4061 = vmatprep.mubr.bf16.mxu0 %v3643
        %4062 = vmatmul.mubr.bf16.gmra.mrb[0].mxu0 %v3642
        %v4063 = vpop.f32.mrb[0].mxu0
        %v4064 = vadd.f32 %v3967, %v4063
        %v4065 = vpop.f32.mrb[0].mxu0
        %v4066 = vpop.f32.mrb[0].mxu0
        %v4067 = vadd.f32 %v3970, %v4066
        %v4068 = vpop.f32.mrb[0].mxu0
        %4069 = vmatprep.mubr.bf16.mxu0 %v3647
        %4070 = vmatmul.mubr.bf16.gmra.mrb[0].mxu0 %v3646
        %v4071 = vpop.f32.mrb[0].mxu0
        %v4072 = vadd.f32 %v3975, %v4071
        %v4073 = vpop.f32.mrb[0].mxu0
        %v4074 = vpop.f32.mrb[0].mxu0
        %v4075 = vadd.f32 %v3978, %v4074
        %v4076 = vpop.f32.mrb[0].mxu0
        %4077 = vmatprep.mubr.bf16.mxu0 %v3651
        %4078 = vmatmul.mubr.bf16.gmra.mrb[0].mxu0 %v3650
        %v4079 = vpop.f32.mrb[0].mxu0
        %v4080 = vadd.f32 %v3983, %v4079
        %v4081 = vpop.f32.mrb[0].mxu0
        %v4082 = vpop.f32.mrb[0].mxu0
        %v4083 = vadd.f32 %v3986, %v4082
        %v4084 = vpop.f32.mrb[0].mxu0
        %4085 = vmatprep.mubr.bf16.mxu0 %v3655
        %4086 = vmatmul.mubr.bf16.gmra.mrb[0].mxu0 %v3654
        %v4087 = vpop.f32.mrb[0].mxu0
        %v4088 = vadd.f32 %v3991, %v4087
        %v4089 = vpop.f32.mrb[0].mxu0
        %v4090 = vpop.f32.mrb[0].mxu0
        %v4091 = vadd.f32 %v3994, %v4090
        %v4092 = vpop.f32.mrb[0].mxu0
        %4093 = vmatprep.mubr.bf16.mxu0 %v3659
        %4094 = vmatmul.mubr.bf16.gmra.mrb[0].mxu0 %v3658
        %v4095 = vpop.f32.mrb[0].mxu0
        %v4096 = vadd.f32 %v3999, %v4095
        %v4097 = vpop.f32.mrb[0].mxu0
        %v4098 = vpop.f32.mrb[0].mxu0
        %v4099 = vadd.f32 %v4002, %v4098
        %v4100 = vpop.f32.mrb[0].mxu0
        %4101 = vmatprep.mubr.bf16.mxu0 %v3663
        %4102 = vmatmul.mubr.bf16.gmra.mrb[0].mxu0 %v3662
        %v4103 = vpop.f32.mrb[0].mxu0
        %v4104 = vadd.f32 %v4007, %v4103
        %v4105 = vpop.f32.mrb[0].mxu0
        %v4106 = vpop.f32.mrb[0].mxu0
        %v4107 = vadd.f32 %v4010, %v4106
        %v4108 = vpop.f32.mrb[0].mxu0
        %4109 = vmatprep.mubr.bf16.mxu0 %v3667
        %4110 = vmatmul.mubr.bf16.gmra.mrb[0].mxu0 %v3666
        %v4111 = vpop.f32.mrb[0].mxu0
        %v4112 = vadd.f32 %v4015, %v4111
        %v4113 = vpop.f32.mrb[0].mxu0
        %v4114 = vpop.f32.mrb[0].mxu0
        %v4115 = vadd.f32 %v4018, %v4114
        %v4116 = vpop.f32.mrb[0].mxu0
        %4117 = vdwg.mxu0
        %v4118 = vpack.c.bf16 %v4059, %v4056
        %v4119 = vpack.c.bf16 %v4067, %v4064
        %v4120 = vpack.c.bf16 %v4075, %v4072
        %v4121 = vpack.c.bf16 %v4083, %v4080
        %v4122 = vpack.c.bf16 %v4091, %v4088
        %v4123 = vpack.c.bf16 %v4099, %v4096
        %v4124 = vpack.c.bf16 %v4107, %v4104
        %v4125 = vpack.c.bf16 %v4115, %v4112
        %v4126 = vld [vmem:[#allocation16] sm:$0x1]
        %v4127 = vpack.c.bf16 %v4126, %v4126
        %v4129 = vpack.i.b16 %v4127, %v4127
        %v4131 = vlaneseq
        %v4132 = vshrl.u32 %v4131, 7
        %v4133 = vsub.s32 0, %v4132
        %v4134 = vrot.slane %v4129, %v4133
        %v4135 = vadd.bf16 %v4118, %v4134
        %v4136 = vadd.bf16 %v4119, %v4134
        %v4137 = vadd.bf16 %v4120, %v4134
        %v4138 = vadd.bf16 %v4121, %v4134
        %v4139 = vadd.bf16 %v4122, %v4134
        %v4140 = vadd.bf16 %v4123, %v4134
        %v4141 = vadd.bf16 %v4124, %v4134
        %v4142 = vadd.bf16 %v4125, %v4134
        %v4143 = vmul.bf16 %v4135, 1009007652
        %v4144 = vmul.bf16 %v4136, 1009007652
        %v4145 = vmul.bf16 %v4137, 1009007652
        %v4146 = vmul.bf16 %v4138, 1009007652
        %v4147 = vmul.bf16 %v4139, 1009007652
        %v4148 = vmul.bf16 %v4140, 1009007652
        %v4149 = vmul.bf16 %v4141, 1009007652
        %v4150 = vmul.bf16 %v4142, 1009007652
        %v4151 = vmax.bf16 %v4135, %v4143
        %v4152 = vmax.bf16 %v4136, %v4144
        %v4153 = vmax.bf16 %v4137, %v4145
        %v4154 = vmax.bf16 %v4138, %v4146
        %v4155 = vmax.bf16 %v4139, %v4147
        %v4156 = vmax.bf16 %v4140, %v4148
        %v4157 = vmax.bf16 %v4141, %v4149
        %v4158 = vmax.bf16 %v4142, %v4150
        %v4159 = vld [vmem:[#allocation18] sm:$0xf]
        %v4160 = vld [vmem:[#allocation18 + $0x4] sm:$0xf]
        %v4161 = vld [vmem:[#allocation18 + $0x8] sm:$0xf]
        %v4162 = vld [vmem:[#allocation18 + $0xc] sm:$0xf]
        %v4163 = vld [vmem:[#allocation18 + $0x10] sm:$0xf]
        %v4164 = vld [vmem:[#allocation18 + $0x14] sm:$0xf]
        %v4165 = vld [vmem:[#allocation18 + $0x18] sm:$0xf]
        %v4166 = vld [vmem:[#allocation18 + $0x1c] sm:$0xf]
        %v4167 = vld [vmem:[#allocation18 + $0x20] sm:$0xf]
        %v4168 = vld [vmem:[#allocation18 + $0x24] sm:$0xf]
        %v4169 = vld [vmem:[#allocation18 + $0x28] sm:$0xf]
        %v4170 = vld [vmem:[#allocation18 + $0x2c] sm:$0xf]
        %v4171 = vld [vmem:[#allocation18 + $0x30] sm:$0xf]
        %v4172 = vld [vmem:[#allocation18 + $0x34] sm:$0xf]
        %v4173 = vld [vmem:[#allocation18 + $0x38] sm:$0xf]
        %v4174 = vld [vmem:[#allocation18 + $0x3c] sm:$0xf]
        %v4191 = vunpack.c.l.b16 %v4159
        %v4192 = vunpack.c.l.b16 %v4160
        %v4193 = vunpack.c.l.b16 %v4161
        %v4194 = vunpack.c.l.b16 %v4162
        %v4195 = vunpack.c.l.b16 %v4163
        %v4196 = vunpack.c.l.b16 %v4164
        %v4197 = vunpack.c.l.b16 %v4165
        %v4198 = vunpack.c.l.b16 %v4166
        %v4199 = vunpack.c.l.b16 %v4167
        %v4200 = vunpack.c.l.b16 %v4168
        %v4201 = vunpack.c.l.b16 %v4169
        %v4202 = vunpack.c.l.b16 %v4170
        %v4203 = vunpack.c.l.b16 %v4171
        %v4204 = vunpack.c.l.b16 %v4172
        %v4205 = vunpack.c.l.b16 %v4173
        %v4206 = vunpack.c.l.b16 %v4174
        %v4207 = vpack.c.b16 %v4192, %v4191
        %v4208 = vpack.c.b16 %v4194, %v4193
        %v4209 = vpack.c.b16 %v4196, %v4195
        %v4210 = vpack.c.b16 %v4198, %v4197
        %v4211 = vpack.c.b16 %v4200, %v4199
        %v4212 = vpack.c.b16 %v4202, %v4201
        %v4213 = vpack.c.b16 %v4204, %v4203
        %v4214 = vpack.c.b16 %v4206, %v4205
        %4223 = vmatprep.subr.bf16.mxu0 0
        %4224 = vmatpush1.bf16.msra.mxu0 %v4207
        %4225 = vmatprep.subr.bf16.mxu0 0
        %4226 = vmatpush1.bf16.msra.mxu0 %v4208
        %4227 = vmatprep.subr.bf16.mxu0 0
        %4228 = vmatpush1.bf16.msra.mxu0 %v4209
        %4229 = vmatprep.subr.bf16.mxu0 0
        %4230 = vmatpush1.bf16.msra.mxu0 %v4210
        %4231 = vmatprep.subr.bf16.mxu0 0
        %4232 = vmatpush1.bf16.msra.mxu0 %v4211
        %4233 = vmatprep.subr.bf16.mxu0 0
        %4234 = vmatpush1.bf16.msra.mxu0 %v4212
        %4235 = vmatprep.subr.bf16.mxu0 0
        %4236 = vmatpush1.bf16.msra.mxu0 %v4213
        %4237 = vmatprep.subr.bf16.mxu0 0
        %4238 = vmatpush1.bf16.msra.mxu0 %v4214
        %4239 = vmatprep.subr.bf16.mxu0 0
        %4240 = vmatpush1.bf16.msra.mxu0 0
        %4241 = vmatprep.subr.bf16.mxu0 0
        %4242 = vmatpush1.bf16.msra.mxu0 0
        %4243 = vmatprep.subr.bf16.mxu0 0
        %4244 = vmatpush1.bf16.msra.mxu0 0
        %4245 = vmatprep.subr.bf16.mxu0 0
        %4246 = vmatpush1.bf16.msra.mxu0 0
        %4247 = vmatprep.subr.bf16.mxu0 0
        %4248 = vmatpush1.bf16.msra.mxu0 0
        %4249 = vmatprep.subr.bf16.mxu0 0
        %4250 = vmatpush1.bf16.msra.mxu0 0
        %4251 = vmatprep.subr.bf16.mxu0 0
        %4252 = vmatpush1.bf16.msra.mxu0 0
        %4253 = vmatprep.subr.bf16.mxu0 0
        %4254 = vmatpush1.bf16.msra.mxu0 0
        %4255 = vmatprep.mubr.bf16.mxu0 0
        %4256 = vmatmul.mubr.bf16.gmra.mrb[0].mxu0 %v4151
        %v4257 = vpop.f32.mrb[0].mxu0
        %v4258 = vadd.f32 0.0, %v4257
        %v4259 = vpop.f32.mrb[0].mxu0
        %v4260 = vpop.f32.mrb[0].mxu0
        %v4261 = vadd.f32 0.0, %v4260
        %v4262 = vpop.f32.mrb[0].mxu0
        %4263 = vmatprep.mubr.bf16.mxu0 0
        %4264 = vmatmul.mubr.bf16.gmra.mrb[0].mxu0 %v4152
        %v4265 = vpop.f32.mrb[0].mxu0
        %v4266 = vadd.f32 0.0, %v4265
        %v4267 = vpop.f32.mrb[0].mxu0
        %v4268 = vpop.f32.mrb[0].mxu0
        %v4269 = vadd.f32 0.0, %v4268
        %v4270 = vpop.f32.mrb[0].mxu0
        %4271 = vmatprep.mubr.bf16.mxu0 0
        %4272 = vmatmul.mubr.bf16.gmra.mrb[0].mxu0 %v4153
        %v4273 = vpop.f32.mrb[0].mxu0
        %v4274 = vadd.f32 0.0, %v4273
        %v4275 = vpop.f32.mrb[0].mxu0
        %v4276 = vpop.f32.mrb[0].mxu0
        %v4277 = vadd.f32 0.0, %v4276
        %v4278 = vpop.f32.mrb[0].mxu0
        %4279 = vmatprep.mubr.bf16.mxu0 0
        %4280 = vmatmul.mubr.bf16.gmra.mrb[0].mxu0 %v4154
        %v4281 = vpop.f32.mrb[0].mxu0
        %v4282 = vadd.f32 0.0, %v4281
        %v4283 = vpop.f32.mrb[0].mxu0
        %v4284 = vpop.f32.mrb[0].mxu0
        %v4285 = vadd.f32 0.0, %v4284
        %v4286 = vpop.f32.mrb[0].mxu0
        %4287 = vmatprep.mubr.bf16.mxu0 0
        %4288 = vmatmul.mubr.bf16.gmra.mrb[0].mxu0 %v4155
        %v4289 = vpop.f32.mrb[0].mxu0
        %v4290 = vadd.f32 0.0, %v4289
        %v4291 = vpop.f32.mrb[0].mxu0
        %v4292 = vpop.f32.mrb[0].mxu0
        %v4293 = vadd.f32 0.0, %v4292
        %v4294 = vpop.f32.mrb[0].mxu0
        %4295 = vmatprep.mubr.bf16.mxu0 0
        %4296 = vmatmul.mubr.bf16.gmra.mrb[0].mxu0 %v4156
        %v4297 = vpop.f32.mrb[0].mxu0
        %v4298 = vadd.f32 0.0, %v4297
        %v4299 = vpop.f32.mrb[0].mxu0
        %v4300 = vpop.f32.mrb[0].mxu0
        %v4301 = vadd.f32 0.0, %v4300
        %v4302 = vpop.f32.mrb[0].mxu0
        %4303 = vmatprep.mubr.bf16.mxu0 0
        %4304 = vmatmul.mubr.bf16.gmra.mrb[0].mxu0 %v4157
        %v4305 = vpop.f32.mrb[0].mxu0
        %v4306 = vadd.f32 0.0, %v4305
        %v4307 = vpop.f32.mrb[0].mxu0
        %v4308 = vpop.f32.mrb[0].mxu0
        %v4309 = vadd.f32 0.0, %v4308
        %v4310 = vpop.f32.mrb[0].mxu0
        %4311 = vmatprep.mubr.bf16.mxu0 0
        %4312 = vmatmul.mubr.bf16.gmra.mrb[0].mxu0 %v4158
        %v4313 = vpop.f32.mrb[0].mxu0
        %v4314 = vadd.f32 0.0, %v4313
        %v4315 = vpop.f32.mrb[0].mxu0
        %v4316 = vpop.f32.mrb[0].mxu0
        %v4317 = vadd.f32 0.0, %v4316
        %v4318 = vpop.f32.mrb[0].mxu0
        %4319 = vdwg.mxu0
        %v4320 = vpack.c.bf16 %v4261, %v4258
        %v4321 = vpack.c.bf16 %v4269, %v4266
        %v4322 = vpack.c.bf16 %v4277, %v4274
        %v4323 = vpack.c.bf16 %v4285, %v4282
        %v4324 = vpack.c.bf16 %v4293, %v4290
        %v4325 = vpack.c.bf16 %v4301, %v4298
        %v4326 = vpack.c.bf16 %v4309, %v4306
        %v4327 = vpack.c.bf16 %v4317, %v4314
        %v4328 = vld [vmem:[#allocation19] sm:$0x1]
        %v4329 = vpack.c.bf16 %v4328, %v4328
        %v4331 = vpack.i.b16 %v4329, %v4329
        %v4333 = vlaneseq
        %v4334 = vshrl.u32 %v4333, 7
        %v4335 = vsub.s32 0, %v4334
        %v4336 = vrot.slane %v4331, %v4335
        %v4337 = vadd.bf16 %v4320, %v4336
        %v4338 = vadd.bf16 %v4321, %v4336
        %v4339 = vadd.bf16 %v4322, %v4336
        %v4340 = vadd.bf16 %v4323, %v4336
        %v4341 = vadd.bf16 %v4324, %v4336
        %v4342 = vadd.bf16 %v4325, %v4336
        %v4343 = vadd.bf16 %v4326, %v4336
        %v4344 = vadd.bf16 %v4327, %v4336
        %v4345 = vmul.bf16 %v4337, 1009007652
        %v4346 = vmul.bf16 %v4338, 1009007652
        %v4347 = vmul.bf16 %v4339, 1009007652
        %v4348 = vmul.bf16 %v4340, 1009007652
        %v4349 = vmul.bf16 %v4341, 1009007652
        %v4350 = vmul.bf16 %v4342, 1009007652
        %v4351 = vmul.bf16 %v4343, 1009007652
        %v4352 = vmul.bf16 %v4344, 1009007652
        %v4353 = vmax.bf16 %v4337, %v4345
        %v4354 = vmax.bf16 %v4338, %v4346
        %v4355 = vmax.bf16 %v4339, %v4347
        %v4356 = vmax.bf16 %v4340, %v4348
        %v4357 = vmax.bf16 %v4341, %v4349
        %v4358 = vmax.bf16 %v4342, %v4350
        %v4359 = vmax.bf16 %v4343, %v4351
        %v4360 = vmax.bf16 %v4344, %v4352
        %v4361 = vld [vmem:[%s1376] sm:$0xff]
        %v4362 = vld [vmem:[%s1376 + $0x8] sm:$0xff]
        %v4363 = vld [vmem:[%s1376 + $0x10] sm:$0xf]
        %v4364 = vld [vmem:[%s1376 + $0x14] sm:$0xff]
        %v4365 = vld [vmem:[%s1376 + $0x1c] sm:$0xff]
        %v4366 = vld [vmem:[%s1376 + $0x24] sm:$0xf]
        %v4367 = vld [vmem:[%s1376 + $0x28] sm:$0xff]
        %v4368 = vld [vmem:[%s1376 + $0x30] sm:$0xff]
        %v4369 = vld [vmem:[%s1376 + $0x38] sm:$0xf]
        %v4370 = vld [vmem:[%s1376 + $0x3c] sm:$0xff]
        %v4371 = vld [vmem:[%s1376 + $0x44] sm:$0xff]
        %v4372 = vld [vmem:[%s1376 + $0x4c] sm:$0xf]
        %v4373 = vld [vmem:[%s1376 + $0x50] sm:$0xff]
        %v4374 = vld [vmem:[%s1376 + $0x58] sm:$0xff]
        %v4375 = vld [vmem:[%s1376 + $0x60] sm:$0xf]
        %v4376 = vld [vmem:[%s1376 + $0x64] sm:$0xff]
        %v4377 = vld [vmem:[%s1376 + $0x6c] sm:$0xff]
        %v4378 = vld [vmem:[%s1376 + $0x74] sm:$0xf]
        %v4379 = vld [vmem:[%s1376 + $0x78] sm:$0xff]
        %v4380 = vld [vmem:[%s1376 + $0x80] sm:$0xff]
        %v4381 = vld [vmem:[%s1376 + $0x88] sm:$0xf]
        %v4382 = vld [vmem:[%s1376 + $0x8c] sm:$0xff]
        %v4383 = vld [vmem:[%s1376 + $0x94] sm:$0xff]
        %v4384 = vld [vmem:[%s1376 + $0x9c] sm:$0xf]
        %v4385 = vld [vmem:[%s1376 + $0xa0] sm:$0xff]
        %v4386 = vld [vmem:[%s1376 + $0xa8] sm:$0xff]
        %v4387 = vld [vmem:[%s1376 + $0xb0] sm:$0xf]
        %v4388 = vld [vmem:[%s1376 + $0xb4] sm:$0xff]
        %v4389 = vld [vmem:[%s1376 + $0xbc] sm:$0xff]
        %v4390 = vld [vmem:[%s1376 + $0xc4] sm:$0xf]
        %v4391 = vld [vmem:[%s1376 + $0xc8] sm:$0xff]
        %v4392 = vld [vmem:[%s1376 + $0xd0] sm:$0xff]
        %v4393 = vld [vmem:[%s1376 + $0xd8] sm:$0xf]
        %v4394 = vld [vmem:[%s1376 + $0xdc] sm:$0xff]
        %v4395 = vld [vmem:[%s1376 + $0xe4] sm:$0xff]
        %v4396 = vld [vmem:[%s1376 + $0xec] sm:$0xf]
        %v4397 = vld [vmem:[%s1376 + $0xf0] sm:$0xff]
        %v4398 = vld [vmem:[%s1376 + $0xf8] sm:$0xff]
        %v4399 = vld [vmem:[%s1376 + $0x100] sm:$0xf]
        %v4400 = vld [vmem:[%s1376 + $0x104] sm:$0xff]
        %v4401 = vld [vmem:[%s1376 + $0x10c] sm:$0xff]
        %v4402 = vld [vmem:[%s1376 + $0x114] sm:$0xf]
        %v4403 = vld [vmem:[%s1376 + $0x118] sm:$0xff]
        %v4404 = vld [vmem:[%s1376 + $0x120] sm:$0xff]
        %v4405 = vld [vmem:[%s1376 + $0x128] sm:$0xf]
        %v4406 = vld [vmem:[%s1376 + $0x12c] sm:$0xff]
        %v4407 = vld [vmem:[%s1376 + $0x134] sm:$0xff]
        %v4408 = vld [vmem:[%s1376 + $0x13c] sm:$0xf]
        %v4409 = vld [vmem:[#allocation21] sm:$0xff]
        %v4410 = vld [vmem:[#allocation21 + $0x8] sm:$0xff]
        %v4411 = vld [vmem:[#allocation21 + $0x10] sm:$0xff]
        %v4412 = vld [vmem:[#allocation21 + $0x18] sm:$0xff]
        %v4413 = vld [vmem:[#allocation21 + $0x20] sm:$0xff]
        %v4414 = vld [vmem:[#allocation21 + $0x28] sm:$0xff]
        %v4415 = vld [vmem:[#allocation21 + $0x30] sm:$0xff]
        %v4416 = vld [vmem:[#allocation21 + $0x38] sm:$0xff]
        %v4417 = vld [vmem:[#allocation21 + $0x40] sm:$0xff]
        %v4418 = vld [vmem:[#allocation21 + $0x48] sm:$0xff]
        %v4419 = vld [vmem:[#allocation21 + $0x50] sm:$0xff]
        %v4420 = vld [vmem:[#allocation21 + $0x58] sm:$0xff]
        %v4421 = vld [vmem:[#allocation21 + $0x60] sm:$0xff]
        %v4422 = vld [vmem:[#allocation21 + $0x68] sm:$0xff]
        %v4423 = vld [vmem:[#allocation21 + $0x70] sm:$0xff]
        %v4424 = vld [vmem:[#allocation21 + $0x78] sm:$0xff]
        %v4425 = vld [vmem:[#allocation21 + $0x80] sm:$0xff]
        %v4426 = vld [vmem:[#allocation21 + $0x88] sm:$0xff]
        %v4427 = vld [vmem:[#allocation21 + $0x90] sm:$0xff]
        %v4428 = vld [vmem:[#allocation21 + $0x98] sm:$0xff]
        %v4429 = vld [vmem:[#allocation21 + $0xa0] sm:$0xff]
        %v4430 = vld [vmem:[#allocation21 + $0xa8] sm:$0xff]
        %v4431 = vld [vmem:[#allocation21 + $0xb0] sm:$0xff]
        %v4432 = vld [vmem:[#allocation21 + $0xb8] sm:$0xff]
        %v4433 = vld [vmem:[#allocation21 + $0xc0] sm:$0xff]
        %v4434 = vld [vmem:[#allocation21 + $0xc8] sm:$0xff]
        %v4435 = vld [vmem:[#allocation21 + $0xd0] sm:$0xff]
        %v4436 = vld [vmem:[#allocation21 + $0xd8] sm:$0xff]
        %v4437 = vld [vmem:[#allocation21 + $0xe0] sm:$0xff]
        %v4438 = vld [vmem:[#allocation21 + $0xe8] sm:$0xff]
        %v4439 = vld [vmem:[#allocation21 + $0xf0] sm:$0xff]
        %v4440 = vld [vmem:[#allocation21 + $0xf8] sm:$0xff]
        %v4441 = vld [vmem:[#allocation21 + $0x100] sm:$0xff]
        %v4442 = vld [vmem:[#allocation21 + $0x108] sm:$0xff]
        %v4443 = vld [vmem:[#allocation21 + $0x110] sm:$0xff]
        %v4444 = vld [vmem:[#allocation21 + $0x118] sm:$0xff]
        %v4445 = vld [vmem:[#allocation21 + $0x120] sm:$0xff]
        %v4446 = vld [vmem:[#allocation21 + $0x128] sm:$0xff]
        %v4447 = vld [vmem:[#allocation21 + $0x130] sm:$0xff]
        %v4448 = vld [vmem:[#allocation21 + $0x138] sm:$0xff]
        %v4449 = vld [vmem:[#allocation21 + $0x140] sm:$0xff]
        %v4450 = vld [vmem:[#allocation21 + $0x148] sm:$0xff]
        %v4451 = vld [vmem:[#allocation21 + $0x150] sm:$0xff]
        %v4452 = vld [vmem:[#allocation21 + $0x158] sm:$0xff]
        %v4453 = vld [vmem:[#allocation21 + $0x160] sm:$0xff]
        %v4454 = vld [vmem:[#allocation21 + $0x168] sm:$0xff]
        %v4455 = vld [vmem:[#allocation21 + $0x170] sm:$0xff]
        %v4456 = vld [vmem:[#allocation21 + $0x178] sm:$0xff]
        %v4457 = vld [vmem:[#allocation21 + $0x180] sm:$0xff]
        %v4458 = vld [vmem:[#allocation21 + $0x188] sm:$0xff]
        %v4459 = vld [vmem:[#allocation21 + $0x190] sm:$0xff]
        %v4460 = vld [vmem:[#allocation21 + $0x198] sm:$0xff]
        %v4461 = vld [vmem:[#allocation21 + $0x1a0] sm:$0xff]
        %v4462 = vld [vmem:[#allocation21 + $0x1a8] sm:$0xff]
        %v4463 = vld [vmem:[#allocation21 + $0x1b0] sm:$0xff]
        %v4464 = vld [vmem:[#allocation21 + $0x1b8] sm:$0xff]
        %v4465 = vld [vmem:[#allocation21 + $0x1c0] sm:$0xff]
        %v4466 = vld [vmem:[#allocation21 + $0x1c8] sm:$0xff]
        %v4467 = vld [vmem:[#allocation21 + $0x1d0] sm:$0xff]
        %v4468 = vld [vmem:[#allocation21 + $0x1d8] sm:$0xff]
        %v4469 = vld [vmem:[#allocation21 + $0x1e0] sm:$0xff]
        %v4470 = vld [vmem:[#allocation21 + $0x1e8] sm:$0xff]
        %v4471 = vld [vmem:[#allocation21 + $0x1f0] sm:$0xff]
        %v4472 = vld [vmem:[#allocation21 + $0x1f8] sm:$0xff]
        %v4473 = vld [vmem:[#allocation21 + $0x200] sm:$0xff]
        %v4474 = vld [vmem:[#allocation21 + $0x208] sm:$0xff]
        %v4475 = vld [vmem:[#allocation21 + $0x210] sm:$0xff]
        %v4476 = vld [vmem:[#allocation21 + $0x218] sm:$0xff]
        %v4477 = vld [vmem:[#allocation21 + $0x220] sm:$0xff]
        %v4478 = vld [vmem:[#allocation21 + $0x228] sm:$0xff]
        %v4479 = vld [vmem:[#allocation21 + $0x230] sm:$0xff]
        %v4480 = vld [vmem:[#allocation21 + $0x238] sm:$0xff]
        %v4481 = vld [vmem:[#allocation21 + $0x240] sm:$0xff]
        %v4482 = vld [vmem:[#allocation21 + $0x248] sm:$0xff]
        %v4483 = vld [vmem:[#allocation21 + $0x250] sm:$0xff]
        %v4484 = vld [vmem:[#allocation21 + $0x258] sm:$0xff]
        %v4485 = vld [vmem:[#allocation21 + $0x260] sm:$0xff]
        %v4486 = vld [vmem:[#allocation21 + $0x268] sm:$0xff]
        %v4487 = vld [vmem:[#allocation21 + $0x270] sm:$0xff]
        %v4488 = vld [vmem:[#allocation21 + $0x278] sm:$0xff]
        %v4489 = vld [vmem:[#allocation21 + $0x280] sm:$0xff]
        %v4490 = vld [vmem:[#allocation21 + $0x288] sm:$0xff]
        %v4491 = vld [vmem:[#allocation21 + $0x290] sm:$0xff]
        %v4492 = vld [vmem:[#allocation21 + $0x298] sm:$0xff]
        %v4493 = vld [vmem:[#allocation21 + $0x2a0] sm:$0xff]
        %v4494 = vld [vmem:[#allocation21 + $0x2a8] sm:$0xff]
        %v4495 = vld [vmem:[#allocation21 + $0x2b0] sm:$0xff]
        %v4496 = vld [vmem:[#allocation21 + $0x2b8] sm:$0xff]
        %v4497 = vld [vmem:[#allocation21 + $0x2c0] sm:$0xff]
        %v4498 = vld [vmem:[#allocation21 + $0x2c8] sm:$0xff]
        %v4499 = vld [vmem:[#allocation21 + $0x2d0] sm:$0xff]
        %v4500 = vld [vmem:[#allocation21 + $0x2d8] sm:$0xff]
        %v4501 = vld [vmem:[#allocation21 + $0x2e0] sm:$0xff]
        %v4502 = vld [vmem:[#allocation21 + $0x2e8] sm:$0xff]
        %v4503 = vld [vmem:[#allocation21 + $0x2f0] sm:$0xff]
        %v4504 = vld [vmem:[#allocation21 + $0x2f8] sm:$0xff]
        %v4505 = vld [vmem:[#allocation21 + $0x300] sm:$0xff]
        %v4506 = vld [vmem:[#allocation21 + $0x308] sm:$0xff]
        %v4507 = vld [vmem:[#allocation21 + $0x310] sm:$0xff]
        %v4508 = vld [vmem:[#allocation21 + $0x318] sm:$0xff]
        %v4509 = vld [vmem:[#allocation21 + $0x320] sm:$0xff]
        %v4510 = vld [vmem:[#allocation21 + $0x328] sm:$0xff]
        %v4511 = vld [vmem:[#allocation21 + $0x330] sm:$0xff]
        %v4512 = vld [vmem:[#allocation21 + $0x338] sm:$0xff]
        %v4513 = vld [vmem:[#allocation21 + $0x340] sm:$0xff]
        %v4514 = vld [vmem:[#allocation21 + $0x348] sm:$0xff]
        %v4515 = vld [vmem:[#allocation21 + $0x350] sm:$0xff]
        %v4516 = vld [vmem:[#allocation21 + $0x358] sm:$0xff]
        %v4517 = vld [vmem:[#allocation21 + $0x360] sm:$0xff]
        %v4518 = vld [vmem:[#allocation21 + $0x368] sm:$0xff]
        %v4519 = vld [vmem:[#allocation21 + $0x370] sm:$0xff]
        %v4520 = vld [vmem:[#allocation21 + $0x378] sm:$0xff]
        %v4521 = vld [vmem:[#allocation21 + $0x380] sm:$0xff]
        %v4522 = vld [vmem:[#allocation21 + $0x388] sm:$0xff]
        %v4523 = vld [vmem:[#allocation21 + $0x390] sm:$0xff]
        %v4524 = vld [vmem:[#allocation21 + $0x398] sm:$0xff]
        %v4525 = vld [vmem:[#allocation21 + $0x3a0] sm:$0xff]
        %v4526 = vld [vmem:[#allocation21 + $0x3a8] sm:$0xff]
        %v4527 = vld [vmem:[#allocation21 + $0x3b0] sm:$0xff]
        %v4528 = vld [vmem:[#allocation21 + $0x3b8] sm:$0xff]
        %v4529 = vld [vmem:[#allocation21 + $0x3c0] sm:$0xff]
        %v4530 = vld [vmem:[#allocation21 + $0x3c8] sm:$0xff]
        %v4531 = vld [vmem:[#allocation21 + $0x3d0] sm:$0xff]
        %v4532 = vld [vmem:[#allocation21 + $0x3d8] sm:$0xff]
        %v4533 = vld [vmem:[#allocation21 + $0x3e0] sm:$0xff]
        %v4534 = vld [vmem:[#allocation21 + $0x3e8] sm:$0xff]
        %v4535 = vld [vmem:[#allocation21 + $0x3f0] sm:$0xff]
        %v4536 = vld [vmem:[#allocation21 + $0x3f8] sm:$0xff]
        %v4537 = vld [vmem:[#allocation21 + $0x400] sm:$0xff]
        %v4538 = vld [vmem:[#allocation21 + $0x408] sm:$0xff]
        %v4539 = vld [vmem:[#allocation21 + $0x410] sm:$0xff]
        %v4540 = vld [vmem:[#allocation21 + $0x418] sm:$0xff]
        %v4541 = vld [vmem:[#allocation21 + $0x420] sm:$0xff]
        %v4542 = vld [vmem:[#allocation21 + $0x428] sm:$0xff]
        %v4543 = vld [vmem:[#allocation21 + $0x430] sm:$0xff]
        %v4544 = vld [vmem:[#allocation21 + $0x438] sm:$0xff]
        %v4545 = vld [vmem:[#allocation21 + $0x440] sm:$0xff]
        %v4546 = vld [vmem:[#allocation21 + $0x448] sm:$0xff]
        %v4547 = vld [vmem:[#allocation21 + $0x450] sm:$0xff]
        %v4548 = vld [vmem:[#allocation21 + $0x458] sm:$0xff]
        %v4549 = vld [vmem:[#allocation21 + $0x460] sm:$0xff]
        %v4550 = vld [vmem:[#allocation21 + $0x468] sm:$0xff]
        %v4551 = vld [vmem:[#allocation21 + $0x470] sm:$0xff]
        %v4552 = vld [vmem:[#allocation21 + $0x478] sm:$0xff]
        %v4553 = vld [vmem:[#allocation21 + $0x480] sm:$0xff]
        %v4554 = vld [vmem:[#allocation21 + $0x488] sm:$0xff]
        %v4555 = vld [vmem:[#allocation21 + $0x490] sm:$0xff]
        %v4556 = vld [vmem:[#allocation21 + $0x498] sm:$0xff]
        %v4557 = vld [vmem:[#allocation21 + $0x4a0] sm:$0xff]
        %v4558 = vld [vmem:[#allocation21 + $0x4a8] sm:$0xff]
        %v4559 = vld [vmem:[#allocation21 + $0x4b0] sm:$0xff]
        %v4560 = vld [vmem:[#allocation21 + $0x4b8] sm:$0xff]
        %v4609 = vunpack.c.l.b16 %v4361
        %v4610 = vunpack.c.h.b16 %v4361
        %v4611 = vunpack.c.l.b16 %v4362
        %v4612 = vunpack.c.h.b16 %v4362
        %v4613 = vunpack.c.l.b16 %v4363
        %v4614 = vunpack.c.l.b16 %v4364
        %v4615 = vunpack.c.h.b16 %v4364
        %v4616 = vunpack.c.l.b16 %v4365
        %v4617 = vunpack.c.h.b16 %v4365
        %v4618 = vunpack.c.l.b16 %v4366
        %v4619 = vunpack.c.l.b16 %v4367
        %v4620 = vunpack.c.h.b16 %v4367
        %v4621 = vunpack.c.l.b16 %v4368
        %v4622 = vunpack.c.h.b16 %v4368
        %v4623 = vunpack.c.l.b16 %v4369
        %v4624 = vunpack.c.l.b16 %v4370
        %v4625 = vunpack.c.h.b16 %v4370
        %v4626 = vunpack.c.l.b16 %v4371
        %v4627 = vunpack.c.h.b16 %v4371
        %v4628 = vunpack.c.l.b16 %v4372
        %v4629 = vunpack.c.l.b16 %v4373
        %v4630 = vunpack.c.h.b16 %v4373
        %v4631 = vunpack.c.l.b16 %v4374
        %v4632 = vunpack.c.h.b16 %v4374
        %v4633 = vunpack.c.l.b16 %v4375
        %v4634 = vunpack.c.l.b16 %v4376
        %v4635 = vunpack.c.h.b16 %v4376
        %v4636 = vunpack.c.l.b16 %v4377
        %v4637 = vunpack.c.h.b16 %v4377
        %v4638 = vunpack.c.l.b16 %v4378
        %v4639 = vunpack.c.l.b16 %v4379
        %v4640 = vunpack.c.h.b16 %v4379
        %v4641 = vunpack.c.l.b16 %v4380
        %v4642 = vunpack.c.h.b16 %v4380
        %v4643 = vunpack.c.l.b16 %v4381
        %v4644 = vunpack.c.l.b16 %v4382
        %v4645 = vunpack.c.h.b16 %v4382
        %v4646 = vunpack.c.l.b16 %v4383
        %v4647 = vunpack.c.h.b16 %v4383
        %v4648 = vunpack.c.l.b16 %v4384
        %v4649 = vunpack.c.l.b16 %v4385
        %v4650 = vunpack.c.h.b16 %v4385
        %v4651 = vunpack.c.l.b16 %v4386
        %v4652 = vunpack.c.h.b16 %v4386
        %v4653 = vunpack.c.l.b16 %v4387
        %v4654 = vunpack.c.l.b16 %v4388
        %v4655 = vunpack.c.h.b16 %v4388
        %v4656 = vunpack.c.l.b16 %v4389
        %v4657 = vunpack.c.h.b16 %v4389
        %v4658 = vunpack.c.l.b16 %v4390
        %v4659 = vunpack.c.l.b16 %v4391
        %v4660 = vunpack.c.h.b16 %v4391
        %v4661 = vunpack.c.l.b16 %v4392
        %v4662 = vunpack.c.h.b16 %v4392
        %v4663 = vunpack.c.l.b16 %v4393
        %v4664 = vunpack.c.l.b16 %v4394
        %v4665 = vunpack.c.h.b16 %v4394
        %v4666 = vunpack.c.l.b16 %v4395
        %v4667 = vunpack.c.h.b16 %v4395
        %v4668 = vunpack.c.l.b16 %v4396
        %v4669 = vunpack.c.l.b16 %v4397
        %v4670 = vunpack.c.h.b16 %v4397
        %v4671 = vunpack.c.l.b16 %v4398
        %v4672 = vunpack.c.h.b16 %v4398
        %v4673 = vunpack.c.l.b16 %v4399
        %v4674 = vunpack.c.l.b16 %v4400
        %v4675 = vunpack.c.h.b16 %v4400
        %v4676 = vunpack.c.l.b16 %v4401
        %v4677 = vunpack.c.h.b16 %v4401
        %v4678 = vunpack.c.l.b16 %v4402
        %v4679 = vunpack.c.l.b16 %v4403
        %v4680 = vunpack.c.h.b16 %v4403
        %v4681 = vunpack.c.l.b16 %v4404
        %v4682 = vunpack.c.h.b16 %v4404
        %v4683 = vunpack.c.l.b16 %v4405
        %v4684 = vunpack.c.l.b16 %v4406
        %v4685 = vunpack.c.h.b16 %v4406
        %v4686 = vunpack.c.l.b16 %v4407
        %v4687 = vunpack.c.h.b16 %v4407
        %v4688 = vunpack.c.l.b16 %v4408
        %v4689 = vpack.c.b16 %v4614, %v4609
        %v4690 = vpack.c.b16 %v4615, %v4610
        %v4691 = vpack.c.b16 %v4616, %v4611
        %v4692 = vpack.c.b16 %v4617, %v4612
        %v4693 = vpack.c.b16 %v4618, %v4613
        %v4694 = vpack.c.b16 %v4624, %v4619
        %v4695 = vpack.c.b16 %v4625, %v4620
        %v4696 = vpack.c.b16 %v4626, %v4621
        %v4697 = vpack.c.b16 %v4627, %v4622
        %v4698 = vpack.c.b16 %v4628, %v4623
        %v4699 = vpack.c.b16 %v4634, %v4629
        %v4700 = vpack.c.b16 %v4635, %v4630
        %v4701 = vpack.c.b16 %v4636, %v4631
        %v4702 = vpack.c.b16 %v4637, %v4632
        %v4703 = vpack.c.b16 %v4638, %v4633
        %v4704 = vpack.c.b16 %v4644, %v4639
        %v4705 = vpack.c.b16 %v4645, %v4640
        %v4706 = vpack.c.b16 %v4646, %v4641
        %v4707 = vpack.c.b16 %v4647, %v4642
        %v4708 = vpack.c.b16 %v4648, %v4643
        %v4709 = vpack.c.b16 %v4654, %v4649
        %v4710 = vpack.c.b16 %v4655, %v4650
        %v4711 = vpack.c.b16 %v4656, %v4651
        %v4712 = vpack.c.b16 %v4657, %v4652
        %v4713 = vpack.c.b16 %v4658, %v4653
        %v4714 = vpack.c.b16 %v4664, %v4659
        %v4715 = vpack.c.b16 %v4665, %v4660
        %v4716 = vpack.c.b16 %v4666, %v4661
        %v4717 = vpack.c.b16 %v4667, %v4662
        %v4718 = vpack.c.b16 %v4668, %v4663
        %v4719 = vpack.c.b16 %v4674, %v4669
        %v4720 = vpack.c.b16 %v4675, %v4670
        %v4721 = vpack.c.b16 %v4676, %v4671
        %v4722 = vpack.c.b16 %v4677, %v4672
        %v4723 = vpack.c.b16 %v4678, %v4673
        %v4724 = vpack.c.b16 %v4684, %v4679
        %v4725 = vpack.c.b16 %v4685, %v4680
        %v4726 = vpack.c.b16 %v4686, %v4681
        %v4727 = vpack.c.b16 %v4687, %v4682
        %v4728 = vpack.c.b16 %v4688, %v4683
        %v4913 = vunpack.c.l.b16 %v4409
        %v4914 = vunpack.c.h.b16 %v4409
        %v4915 = vunpack.c.l.b16 %v4410
        %v4916 = vunpack.c.h.b16 %v4410
        %v4917 = vunpack.c.l.b16 %v4411
        %v4918 = vunpack.c.h.b16 %v4411
        %v4919 = vunpack.c.l.b16 %v4412
        %v4920 = vunpack.c.h.b16 %v4412
        %v4921 = vunpack.c.l.b16 %v4413
        %v4922 = vunpack.c.h.b16 %v4413
        %v4923 = vunpack.c.l.b16 %v4414
        %v4924 = vunpack.c.h.b16 %v4414
        %v4925 = vunpack.c.l.b16 %v4415
        %v4926 = vunpack.c.h.b16 %v4415
        %v4927 = vunpack.c.l.b16 %v4416
        %v4928 = vunpack.c.h.b16 %v4416
        %v4929 = vunpack.c.l.b16 %v4417
        %v4930 = vunpack.c.h.b16 %v4417
        %v4931 = vunpack.c.l.b16 %v4418
        %v4932 = vunpack.c.h.b16 %v4418
        %v4933 = vunpack.c.l.b16 %v4419
        %v4934 = vunpack.c.h.b16 %v4419
        %v4935 = vunpack.c.l.b16 %v4420
        %v4936 = vunpack.c.h.b16 %v4420
        %v4937 = vunpack.c.l.b16 %v4421
        %v4938 = vunpack.c.h.b16 %v4421
        %v4939 = vunpack.c.l.b16 %v4422
        %v4940 = vunpack.c.h.b16 %v4422
        %v4941 = vunpack.c.l.b16 %v4423
        %v4942 = vunpack.c.h.b16 %v4423
        %v4943 = vunpack.c.l.b16 %v4424
        %v4944 = vunpack.c.h.b16 %v4424
        %v4945 = vunpack.c.l.b16 %v4425
        %v4946 = vunpack.c.h.b16 %v4425
        %v4947 = vunpack.c.l.b16 %v4426
        %v4948 = vunpack.c.h.b16 %v4426
        %v4949 = vunpack.c.l.b16 %v4427
        %v4950 = vunpack.c.h.b16 %v4427
        %v4951 = vunpack.c.l.b16 %v4428
        %v4952 = vunpack.c.h.b16 %v4428
        %v4953 = vunpack.c.l.b16 %v4429
        %v4954 = vunpack.c.h.b16 %v4429
        %v4955 = vunpack.c.l.b16 %v4430
        %v4956 = vunpack.c.h.b16 %v4430
        %v4957 = vunpack.c.l.b16 %v4431
        %v4958 = vunpack.c.h.b16 %v4431
        %v4959 = vunpack.c.l.b16 %v4432
        %v4960 = vunpack.c.h.b16 %v4432
        %v4961 = vunpack.c.l.b16 %v4433
        %v4962 = vunpack.c.h.b16 %v4433
        %v4963 = vunpack.c.l.b16 %v4434
        %v4964 = vunpack.c.h.b16 %v4434
        %v4965 = vunpack.c.l.b16 %v4435
        %v4966 = vunpack.c.h.b16 %v4435
        %v4967 = vunpack.c.l.b16 %v4436
        %v4968 = vunpack.c.h.b16 %v4436
        %v4969 = vunpack.c.l.b16 %v4437
        %v4970 = vunpack.c.h.b16 %v4437
        %v4971 = vunpack.c.l.b16 %v4438
        %v4972 = vunpack.c.h.b16 %v4438
        %v4973 = vunpack.c.l.b16 %v4439
        %v4974 = vunpack.c.h.b16 %v4439
        %v4975 = vunpack.c.l.b16 %v4440
        %v4976 = vunpack.c.h.b16 %v4440
        %v4977 = vunpack.c.l.b16 %v4441
        %v4978 = vunpack.c.h.b16 %v4441
        %v4979 = vunpack.c.l.b16 %v4442
        %v4980 = vunpack.c.h.b16 %v4442
        %v4981 = vunpack.c.l.b16 %v4443
        %v4982 = vunpack.c.h.b16 %v4443
        %v4983 = vunpack.c.l.b16 %v4444
        %v4984 = vunpack.c.h.b16 %v4444
        %v4985 = vunpack.c.l.b16 %v4445
        %v4986 = vunpack.c.h.b16 %v4445
        %v4987 = vunpack.c.l.b16 %v4446
        %v4988 = vunpack.c.h.b16 %v4446
        %v4989 = vunpack.c.l.b16 %v4447
        %v4990 = vunpack.c.h.b16 %v4447
        %v4991 = vunpack.c.l.b16 %v4448
        %v4992 = vunpack.c.h.b16 %v4448
        %v4993 = vunpack.c.l.b16 %v4449
        %v4994 = vunpack.c.h.b16 %v4449
        %v4995 = vunpack.c.l.b16 %v4450
        %v4996 = vunpack.c.h.b16 %v4450
        %v4997 = vunpack.c.l.b16 %v4451
        %v4998 = vunpack.c.h.b16 %v4451
        %v4999 = vunpack.c.l.b16 %v4452
        %v5000 = vunpack.c.h.b16 %v4452
        %v5001 = vunpack.c.l.b16 %v4453
        %v5002 = vunpack.c.h.b16 %v4453
        %v5003 = vunpack.c.l.b16 %v4454
        %v5004 = vunpack.c.h.b16 %v4454
        %v5005 = vunpack.c.l.b16 %v4455
        %v5006 = vunpack.c.h.b16 %v4455
        %v5007 = vunpack.c.l.b16 %v4456
        %v5008 = vunpack.c.h.b16 %v4456
        %v5009 = vunpack.c.l.b16 %v4457
        %v5010 = vunpack.c.h.b16 %v4457
        %v5011 = vunpack.c.l.b16 %v4458
        %v5012 = vunpack.c.h.b16 %v4458
        %v5013 = vunpack.c.l.b16 %v4459
        %v5014 = vunpack.c.h.b16 %v4459
        %v5015 = vunpack.c.l.b16 %v4460
        %v5016 = vunpack.c.h.b16 %v4460
        %v5017 = vunpack.c.l.b16 %v4461
        %v5018 = vunpack.c.h.b16 %v4461
        %v5019 = vunpack.c.l.b16 %v4462
        %v5020 = vunpack.c.h.b16 %v4462
        %v5021 = vunpack.c.l.b16 %v4463
        %v5022 = vunpack.c.h.b16 %v4463
        %v5023 = vunpack.c.l.b16 %v4464
        %v5024 = vunpack.c.h.b16 %v4464
        %v5025 = vunpack.c.l.b16 %v4465
        %v5026 = vunpack.c.h.b16 %v4465
        %v5027 = vunpack.c.l.b16 %v4466
        %v5028 = vunpack.c.h.b16 %v4466
        %v5029 = vunpack.c.l.b16 %v4467
        %v5030 = vunpack.c.h.b16 %v4467
        %v5031 = vunpack.c.l.b16 %v4468
        %v5032 = vunpack.c.h.b16 %v4468
        %v5033 = vunpack.c.l.b16 %v4469
        %v5034 = vunpack.c.h.b16 %v4469
        %v5035 = vunpack.c.l.b16 %v4470
        %v5036 = vunpack.c.h.b16 %v4470
        %v5037 = vunpack.c.l.b16 %v4471
        %v5038 = vunpack.c.h.b16 %v4471
        %v5039 = vunpack.c.l.b16 %v4472
        %v5040 = vunpack.c.h.b16 %v4472
        %v5041 = vunpack.c.l.b16 %v4473
        %v5042 = vunpack.c.h.b16 %v4473
        %v5043 = vunpack.c.l.b16 %v4474
        %v5044 = vunpack.c.h.b16 %v4474
        %v5045 = vunpack.c.l.b16 %v4475
        %v5046 = vunpack.c.h.b16 %v4475
        %v5047 = vunpack.c.l.b16 %v4476
        %v5048 = vunpack.c.h.b16 %v4476
        %v5049 = vunpack.c.l.b16 %v4477
        %v5050 = vunpack.c.h.b16 %v4477
        %v5051 = vunpack.c.l.b16 %v4478
        %v5052 = vunpack.c.h.b16 %v4478
        %v5053 = vunpack.c.l.b16 %v4479
        %v5054 = vunpack.c.h.b16 %v4479
        %v5055 = vunpack.c.l.b16 %v4480
        %v5056 = vunpack.c.h.b16 %v4480
        %v5057 = vunpack.c.l.b16 %v4481
        %v5058 = vunpack.c.h.b16 %v4481
        %v5059 = vunpack.c.l.b16 %v4482
        %v5060 = vunpack.c.h.b16 %v4482
        %v5061 = vunpack.c.l.b16 %v4483
        %v5062 = vunpack.c.h.b16 %v4483
        %v5063 = vunpack.c.l.b16 %v4484
        %v5064 = vunpack.c.h.b16 %v4484
        %v5065 = vunpack.c.l.b16 %v4485
        %v5066 = vunpack.c.h.b16 %v4485
        %v5067 = vunpack.c.l.b16 %v4486
        %v5068 = vunpack.c.h.b16 %v4486
        %v5069 = vunpack.c.l.b16 %v4487
        %v5070 = vunpack.c.h.b16 %v4487
        %v5071 = vunpack.c.l.b16 %v4488
        %v5072 = vunpack.c.h.b16 %v4488
        %v5073 = vunpack.c.l.b16 %v4489
        %v5074 = vunpack.c.h.b16 %v4489
        %v5075 = vunpack.c.l.b16 %v4490
        %v5076 = vunpack.c.h.b16 %v4490
        %v5077 = vunpack.c.l.b16 %v4491
        %v5078 = vunpack.c.h.b16 %v4491
        %v5079 = vunpack.c.l.b16 %v4492
        %v5080 = vunpack.c.h.b16 %v4492
        %v5081 = vunpack.c.l.b16 %v4493
        %v5082 = vunpack.c.h.b16 %v4493
        %v5083 = vunpack.c.l.b16 %v4494
        %v5084 = vunpack.c.h.b16 %v4494
        %v5085 = vunpack.c.l.b16 %v4495
        %v5086 = vunpack.c.h.b16 %v4495
        %v5087 = vunpack.c.l.b16 %v4496
        %v5088 = vunpack.c.h.b16 %v4496
        %v5089 = vunpack.c.l.b16 %v4497
        %v5090 = vunpack.c.h.b16 %v4497
        %v5091 = vunpack.c.l.b16 %v4498
        %v5092 = vunpack.c.h.b16 %v4498
        %v5093 = vunpack.c.l.b16 %v4499
        %v5094 = vunpack.c.h.b16 %v4499
        %v5095 = vunpack.c.l.b16 %v4500
        %v5096 = vunpack.c.h.b16 %v4500
        %v5097 = vunpack.c.l.b16 %v4501
        %v5098 = vunpack.c.h.b16 %v4501
        %v5099 = vunpack.c.l.b16 %v4502
        %v5100 = vunpack.c.h.b16 %v4502
        %v5101 = vunpack.c.l.b16 %v4503
        %v5102 = vunpack.c.h.b16 %v4503
        %v5103 = vunpack.c.l.b16 %v4504
        %v5104 = vunpack.c.h.b16 %v4504
        %v5105 = vunpack.c.l.b16 %v4505
        %v5106 = vunpack.c.h.b16 %v4505
        %v5107 = vunpack.c.l.b16 %v4506
        %v5108 = vunpack.c.h.b16 %v4506
        %v5109 = vunpack.c.l.b16 %v4507
        %v5110 = vunpack.c.h.b16 %v4507
        %v5111 = vunpack.c.l.b16 %v4508
        %v5112 = vunpack.c.h.b16 %v4508
        %v5113 = vunpack.c.l.b16 %v4509
        %v5114 = vunpack.c.h.b16 %v4509
        %v5115 = vunpack.c.l.b16 %v4510
        %v5116 = vunpack.c.h.b16 %v4510
        %v5117 = vunpack.c.l.b16 %v4511
        %v5118 = vunpack.c.h.b16 %v4511
        %v5119 = vunpack.c.l.b16 %v4512
        %v5120 = vunpack.c.h.b16 %v4512
        %v5121 = vunpack.c.l.b16 %v4513
        %v5122 = vunpack.c.h.b16 %v4513
        %v5123 = vunpack.c.l.b16 %v4514
        %v5124 = vunpack.c.h.b16 %v4514
        %v5125 = vunpack.c.l.b16 %v4515
        %v5126 = vunpack.c.h.b16 %v4515
        %v5127 = vunpack.c.l.b16 %v4516
        %v5128 = vunpack.c.h.b16 %v4516
        %v5129 = vunpack.c.l.b16 %v4517
        %v5130 = vunpack.c.h.b16 %v4517
        %v5131 = vunpack.c.l.b16 %v4518
        %v5132 = vunpack.c.h.b16 %v4518
        %v5133 = vunpack.c.l.b16 %v4519
        %v5134 = vunpack.c.h.b16 %v4519
        %v5135 = vunpack.c.l.b16 %v4520
        %v5136 = vunpack.c.h.b16 %v4520
        %v5137 = vunpack.c.l.b16 %v4521
        %v5138 = vunpack.c.h.b16 %v4521
        %v5139 = vunpack.c.l.b16 %v4522
        %v5140 = vunpack.c.h.b16 %v4522
        %v5141 = vunpack.c.l.b16 %v4523
        %v5142 = vunpack.c.h.b16 %v4523
        %v5143 = vunpack.c.l.b16 %v4524
        %v5144 = vunpack.c.h.b16 %v4524
        %v5145 = vunpack.c.l.b16 %v4525
        %v5146 = vunpack.c.h.b16 %v4525
        %v5147 = vunpack.c.l.b16 %v4526
        %v5148 = vunpack.c.h.b16 %v4526
        %v5149 = vunpack.c.l.b16 %v4527
        %v5150 = vunpack.c.h.b16 %v4527
        %v5151 = vunpack.c.l.b16 %v4528
        %v5152 = vunpack.c.h.b16 %v4528
        %v5153 = vunpack.c.l.b16 %v4529
        %v5154 = vunpack.c.h.b16 %v4529
        %v5155 = vunpack.c.l.b16 %v4530
        %v5156 = vunpack.c.h.b16 %v4530
        %v5157 = vunpack.c.l.b16 %v4531
        %v5158 = vunpack.c.h.b16 %v4531
        %v5159 = vunpack.c.l.b16 %v4532
        %v5160 = vunpack.c.h.b16 %v4532
        %v5161 = vunpack.c.l.b16 %v4533
        %v5162 = vunpack.c.h.b16 %v4533
        %v5163 = vunpack.c.l.b16 %v4534
        %v5164 = vunpack.c.h.b16 %v4534
        %v5165 = vunpack.c.l.b16 %v4535
        %v5166 = vunpack.c.h.b16 %v4535
        %v5167 = vunpack.c.l.b16 %v4536
        %v5168 = vunpack.c.h.b16 %v4536
        %v5169 = vunpack.c.l.b16 %v4537
        %v5170 = vunpack.c.h.b16 %v4537
        %v5171 = vunpack.c.l.b16 %v4538
        %v5172 = vunpack.c.h.b16 %v4538
        %v5173 = vunpack.c.l.b16 %v4539
        %v5174 = vunpack.c.h.b16 %v4539
        %v5175 = vunpack.c.l.b16 %v4540
        %v5176 = vunpack.c.h.b16 %v4540
        %v5177 = vunpack.c.l.b16 %v4541
        %v5178 = vunpack.c.h.b16 %v4541
        %v5179 = vunpack.c.l.b16 %v4542
        %v5180 = vunpack.c.h.b16 %v4542
        %v5181 = vunpack.c.l.b16 %v4543
        %v5182 = vunpack.c.h.b16 %v4543
        %v5183 = vunpack.c.l.b16 %v4544
        %v5184 = vunpack.c.h.b16 %v4544
        %v5185 = vunpack.c.l.b16 %v4545
        %v5186 = vunpack.c.h.b16 %v4545
        %v5187 = vunpack.c.l.b16 %v4546
        %v5188 = vunpack.c.h.b16 %v4546
        %v5189 = vunpack.c.l.b16 %v4547
        %v5190 = vunpack.c.h.b16 %v4547
        %v5191 = vunpack.c.l.b16 %v4548
        %v5192 = vunpack.c.h.b16 %v4548
        %v5193 = vunpack.c.l.b16 %v4549
        %v5194 = vunpack.c.h.b16 %v4549
        %v5195 = vunpack.c.l.b16 %v4550
        %v5196 = vunpack.c.h.b16 %v4550
        %v5197 = vunpack.c.l.b16 %v4551
        %v5198 = vunpack.c.h.b16 %v4551
        %v5199 = vunpack.c.l.b16 %v4552
        %v5200 = vunpack.c.h.b16 %v4552
        %v5201 = vunpack.c.l.b16 %v4553
        %v5202 = vunpack.c.h.b16 %v4553
        %v5203 = vunpack.c.l.b16 %v4554
        %v5204 = vunpack.c.h.b16 %v4554
        %v5205 = vunpack.c.l.b16 %v4555
        %v5206 = vunpack.c.h.b16 %v4555
        %v5207 = vunpack.c.l.b16 %v4556
        %v5208 = vunpack.c.h.b16 %v4556
        %v5209 = vunpack.c.l.b16 %v4557
        %v5210 = vunpack.c.h.b16 %v4557
        %v5211 = vunpack.c.l.b16 %v4558
        %v5212 = vunpack.c.h.b16 %v4558
        %v5213 = vunpack.c.l.b16 %v4559
        %v5214 = vunpack.c.h.b16 %v4559
        %v5215 = vunpack.c.l.b16 %v4560
        %v5216 = vunpack.c.h.b16 %v4560
        %v5217 = vpack.c.b16 %v4917, %v4913
        %v5218 = vpack.c.b16 %v4918, %v4914
        %v5219 = vpack.c.b16 %v4919, %v4915
        %v5220 = vpack.c.b16 %v4920, %v4916
        %v5221 = vpack.c.b16 %v4925, %v4921
        %v5222 = vpack.c.b16 %v4926, %v4922
        %v5223 = vpack.c.b16 %v4927, %v4923
        %v5224 = vpack.c.b16 %v4928, %v4924
        %v5225 = vpack.c.b16 %v4933, %v4929
        %v5226 = vpack.c.b16 %v4934, %v4930
        %v5227 = vpack.c.b16 %v4935, %v4931
        %v5228 = vpack.c.b16 %v4936, %v4932
        %v5229 = vpack.c.b16 %v4941, %v4937
        %v5230 = vpack.c.b16 %v4942, %v4938
        %v5231 = vpack.c.b16 %v4943, %v4939
        %v5232 = vpack.c.b16 %v4944, %v4940
        %v5233 = vpack.c.b16 %v4949, %v4945
        %v5234 = vpack.c.b16 %v4950, %v4946
        %v5235 = vpack.c.b16 %v4951, %v4947
        %v5236 = vpack.c.b16 %v4952, %v4948
        %v5237 = vpack.c.b16 %v4957, %v4953
        %v5238 = vpack.c.b16 %v4958, %v4954
        %v5239 = vpack.c.b16 %v4959, %v4955
        %v5240 = vpack.c.b16 %v4960, %v4956
        %v5241 = vpack.c.b16 %v4965, %v4961
        %v5242 = vpack.c.b16 %v4966, %v4962
        %v5243 = vpack.c.b16 %v4967, %v4963
        %v5244 = vpack.c.b16 %v4968, %v4964
        %v5245 = vpack.c.b16 %v4973, %v4969
        %v5246 = vpack.c.b16 %v4974, %v4970
        %v5247 = vpack.c.b16 %v4975, %v4971
        %v5248 = vpack.c.b16 %v4976, %v4972
        %v5249 = vpack.c.b16 %v4981, %v4977
        %v5250 = vpack.c.b16 %v4982, %v4978
        %v5251 = vpack.c.b16 %v4983, %v4979
        %v5252 = vpack.c.b16 %v4984, %v4980
        %v5253 = vpack.c.b16 %v4989, %v4985
        %v5254 = vpack.c.b16 %v4990, %v4986
        %v5255 = vpack.c.b16 %v4991, %v4987
        %v5256 = vpack.c.b16 %v4992, %v4988
        %v5257 = vpack.c.b16 %v4997, %v4993
        %v5258 = vpack.c.b16 %v4998, %v4994
        %v5259 = vpack.c.b16 %v4999, %v4995
        %v5260 = vpack.c.b16 %v5000, %v4996
        %v5261 = vpack.c.b16 %v5005, %v5001
        %v5262 = vpack.c.b16 %v5006, %v5002
        %v5263 = vpack.c.b16 %v5007, %v5003
        %v5264 = vpack.c.b16 %v5008, %v5004
        %v5265 = vpack.c.b16 %v5013, %v5009
        %v5266 = vpack.c.b16 %v5014, %v5010
        %v5267 = vpack.c.b16 %v5015, %v5011
        %v5268 = vpack.c.b16 %v5016, %v5012
        %v5269 = vpack.c.b16 %v5021, %v5017
        %v5270 = vpack.c.b16 %v5022, %v5018
        %v5271 = vpack.c.b16 %v5023, %v5019
        %v5272 = vpack.c.b16 %v5024, %v5020
        %v5273 = vpack.c.b16 %v5029, %v5025
        %v5274 = vpack.c.b16 %v5030, %v5026
        %v5275 = vpack.c.b16 %v5031, %v5027
        %v5276 = vpack.c.b16 %v5032, %v5028
        %v5277 = vpack.c.b16 %v5037, %v5033
        %v5278 = vpack.c.b16 %v5038, %v5034
        %v5279 = vpack.c.b16 %v5039, %v5035
        %v5280 = vpack.c.b16 %v5040, %v5036
        %v5281 = vpack.c.b16 %v5045, %v5041
        %v5282 = vpack.c.b16 %v5046, %v5042
        %v5283 = vpack.c.b16 %v5047, %v5043
        %v5284 = vpack.c.b16 %v5048, %v5044
        %v5285 = vpack.c.b16 %v5053, %v5049
        %v5286 = vpack.c.b16 %v5054, %v5050
        %v5287 = vpack.c.b16 %v5055, %v5051
        %v5288 = vpack.c.b16 %v5056, %v5052
        %v5289 = vpack.c.b16 %v5061, %v5057
        %v5290 = vpack.c.b16 %v5062, %v5058
        %v5291 = vpack.c.b16 %v5063, %v5059
        %v5292 = vpack.c.b16 %v5064, %v5060
        %v5293 = vpack.c.b16 %v5069, %v5065
        %v5294 = vpack.c.b16 %v5070, %v5066
        %v5295 = vpack.c.b16 %v5071, %v5067
        %v5296 = vpack.c.b16 %v5072, %v5068
        %v5297 = vpack.c.b16 %v5077, %v5073
        %v5298 = vpack.c.b16 %v5078, %v5074
        %v5299 = vpack.c.b16 %v5079, %v5075
        %v5300 = vpack.c.b16 %v5080, %v5076
        %v5301 = vpack.c.b16 %v5085, %v5081
        %v5302 = vpack.c.b16 %v5086, %v5082
        %v5303 = vpack.c.b16 %v5087, %v5083
        %v5304 = vpack.c.b16 %v5088, %v5084
        %v5305 = vpack.c.b16 %v5093, %v5089
        %v5306 = vpack.c.b16 %v5094, %v5090
        %v5307 = vpack.c.b16 %v5095, %v5091
        %v5308 = vpack.c.b16 %v5096, %v5092
        %v5309 = vpack.c.b16 %v5101, %v5097
        %v5310 = vpack.c.b16 %v5102, %v5098
        %v5311 = vpack.c.b16 %v5103, %v5099
        %v5312 = vpack.c.b16 %v5104, %v5100
        %v5313 = vpack.c.b16 %v5109, %v5105
        %v5314 = vpack.c.b16 %v5110, %v5106
        %v5315 = vpack.c.b16 %v5111, %v5107
        %v5316 = vpack.c.b16 %v5112, %v5108
        %v5317 = vpack.c.b16 %v5117, %v5113
        %v5318 = vpack.c.b16 %v5118, %v5114
        %v5319 = vpack.c.b16 %v5119, %v5115
        %v5320 = vpack.c.b16 %v5120, %v5116
        %v5321 = vpack.c.b16 %v5125, %v5121
        %v5322 = vpack.c.b16 %v5126, %v5122
        %v5323 = vpack.c.b16 %v5127, %v5123
        %v5324 = vpack.c.b16 %v5128, %v5124
        %v5325 = vpack.c.b16 %v5133, %v5129
        %v5326 = vpack.c.b16 %v5134, %v5130
        %v5327 = vpack.c.b16 %v5135, %v5131
        %v5328 = vpack.c.b16 %v5136, %v5132
        %v5329 = vpack.c.b16 %v5141, %v5137
        %v5330 = vpack.c.b16 %v5142, %v5138
        %v5331 = vpack.c.b16 %v5143, %v5139
        %v5332 = vpack.c.b16 %v5144, %v5140
        %v5333 = vpack.c.b16 %v5149, %v5145
        %v5334 = vpack.c.b16 %v5150, %v5146
        %v5335 = vpack.c.b16 %v5151, %v5147
        %v5336 = vpack.c.b16 %v5152, %v5148
        %v5337 = vpack.c.b16 %v5157, %v5153
        %v5338 = vpack.c.b16 %v5158, %v5154
        %v5339 = vpack.c.b16 %v5159, %v5155
        %v5340 = vpack.c.b16 %v5160, %v5156
        %v5341 = vpack.c.b16 %v5165, %v5161
        %v5342 = vpack.c.b16 %v5166, %v5162
        %v5343 = vpack.c.b16 %v5167, %v5163
        %v5344 = vpack.c.b16 %v5168, %v5164
        %v5345 = vpack.c.b16 %v5173, %v5169
        %v5346 = vpack.c.b16 %v5174, %v5170
        %v5347 = vpack.c.b16 %v5175, %v5171
        %v5348 = vpack.c.b16 %v5176, %v5172
        %v5349 = vpack.c.b16 %v5181, %v5177
        %v5350 = vpack.c.b16 %v5182, %v5178
        %v5351 = vpack.c.b16 %v5183, %v5179
        %v5352 = vpack.c.b16 %v5184, %v5180
        %v5353 = vpack.c.b16 %v5189, %v5185
        %v5354 = vpack.c.b16 %v5190, %v5186
        %v5355 = vpack.c.b16 %v5191, %v5187
        %v5356 = vpack.c.b16 %v5192, %v5188
        %v5357 = vpack.c.b16 %v5197, %v5193
        %v5358 = vpack.c.b16 %v5198, %v5194
        %v5359 = vpack.c.b16 %v5199, %v5195
        %v5360 = vpack.c.b16 %v5200, %v5196
        %v5361 = vpack.c.b16 %v5205, %v5201
        %v5362 = vpack.c.b16 %v5206, %v5202
        %v5363 = vpack.c.b16 %v5207, %v5203
        %v5364 = vpack.c.b16 %v5208, %v5204
        %v5365 = vpack.c.b16 %v5213, %v5209
        %v5366 = vpack.c.b16 %v5214, %v5210
        %v5367 = vpack.c.b16 %v5215, %v5211
        %v5368 = vpack.c.b16 %v5216, %v5212
        %v5522 = vsel %vm2783, %v4693, 0
        %v5525 = vsel %vm2783, %v4698, 0
        %v5528 = vsel %vm2783, %v4703, 0
        %v5531 = vsel %vm2783, %v4708, 0
        %v5534 = vsel %vm2783, %v4713, 0
        %v5537 = vsel %vm2783, %v4718, 0
        %v5540 = vsel %vm2783, %v4723, 0
        %v5543 = vsel %vm2783, %v4728, 0
        %5545 = vmatprep.subr.bf16.mxu0 %v5218
        %5546 = vmatpush1.bf16.msra.mxu0 %v5217
        %5547 = vmatprep.subr.bf16.mxu0 %v5222
        %5548 = vmatpush1.bf16.msra.mxu0 %v5221
        %5549 = vmatprep.subr.bf16.mxu0 %v5226
        %5550 = vmatpush1.bf16.msra.mxu0 %v5225
        %5551 = vmatprep.subr.bf16.mxu0 %v5230
        %5552 = vmatpush1.bf16.msra.mxu0 %v5229
        %5553 = vmatprep.subr.bf16.mxu0 %v5234
        %5554 = vmatpush1.bf16.msra.mxu0 %v5233
        %5555 = vmatprep.subr.bf16.mxu0 %v5238
        %5556 = vmatpush1.bf16.msra.mxu0 %v5237
        %5557 = vmatprep.subr.bf16.mxu0 %v5242
        %5558 = vmatpush1.bf16.msra.mxu0 %v5241
        %5559 = vmatprep.subr.bf16.mxu0 %v5246
        %5560 = vmatpush1.bf16.msra.mxu0 %v5245
        %5561 = vmatprep.subr.bf16.mxu0 %v5250
        %5562 = vmatpush1.bf16.msra.mxu0 %v5249
        %5563 = vmatprep.subr.bf16.mxu0 %v5254
        %5564 = vmatpush1.bf16.msra.mxu0 %v5253
        %5565 = vmatprep.subr.bf16.mxu0 %v5258
        %5566 = vmatpush1.bf16.msra.mxu0 %v5257
        %5567 = vmatprep.subr.bf16.mxu0 %v5262
        %5568 = vmatpush1.bf16.msra.mxu0 %v5261
        %5569 = vmatprep.subr.bf16.mxu0 %v5266
        %5570 = vmatpush1.bf16.msra.mxu0 %v5265
        %5571 = vmatprep.subr.bf16.mxu0 %v5270
        %5572 = vmatpush1.bf16.msra.mxu0 %v5269
        %5573 = vmatprep.subr.bf16.mxu0 %v5274
        %5574 = vmatpush1.bf16.msra.mxu0 %v5273
        %5575 = vmatprep.subr.bf16.mxu0 %v5278
        %5576 = vmatpush1.bf16.msra.mxu0 %v5277
        %5577 = vmatprep.mubr.bf16.mxu0 %v4690
        %5578 = vmatmul.mubr.bf16.gmra.mrb[0].mxu0 %v4689
        %v5579 = vpop.f32.mrb[0].mxu0
        %v5580 = vadd.f32 0.0, %v5579
        %v5581 = vpop.f32.mrb[0].mxu0
        %v5582 = vadd.f32 0.0, %v5581
        %v5583 = vpop.f32.mrb[0].mxu0
        %v5584 = vadd.f32 0.0, %v5583
        %v5585 = vpop.f32.mrb[0].mxu0
        %v5586 = vadd.f32 0.0, %v5585
        %5587 = vmatprep.mubr.bf16.mxu0 %v4695
        %5588 = vmatmul.mubr.bf16.gmra.mrb[0].mxu0 %v4694
        %v5589 = vpop.f32.mrb[0].mxu0
        %v5590 = vadd.f32 0.0, %v5589
        %v5591 = vpop.f32.mrb[0].mxu0
        %v5592 = vadd.f32 0.0, %v5591
        %v5593 = vpop.f32.mrb[0].mxu0
        %v5594 = vadd.f32 0.0, %v5593
        %v5595 = vpop.f32.mrb[0].mxu0
        %v5596 = vadd.f32 0.0, %v5595
        %5597 = vmatprep.mubr.bf16.mxu0 %v4700
        %5598 = vmatmul.mubr.bf16.gmra.mrb[0].mxu0 %v4699
        %v5599 = vpop.f32.mrb[0].mxu0
        %v5600 = vadd.f32 0.0, %v5599
        %v5601 = vpop.f32.mrb[0].mxu0
        %v5602 = vadd.f32 0.0, %v5601
        %v5603 = vpop.f32.mrb[0].mxu0
        %v5604 = vadd.f32 0.0, %v5603
        %v5605 = vpop.f32.mrb[0].mxu0
        %v5606 = vadd.f32 0.0, %v5605
        %5607 = vmatprep.mubr.bf16.mxu0 %v4705
        %5608 = vmatmul.mubr.bf16.gmra.mrb[0].mxu0 %v4704
        %v5609 = vpop.f32.mrb[0].mxu0
        %v5610 = vadd.f32 0.0, %v5609
        %v5611 = vpop.f32.mrb[0].mxu0
        %v5612 = vadd.f32 0.0, %v5611
        %v5613 = vpop.f32.mrb[0].mxu0
        %v5614 = vadd.f32 0.0, %v5613
        %v5615 = vpop.f32.mrb[0].mxu0
        %v5616 = vadd.f32 0.0, %v5615
        %5617 = vmatprep.mubr.bf16.mxu0 %v4710
        %5618 = vmatmul.mubr.bf16.gmra.mrb[0].mxu0 %v4709
        %v5619 = vpop.f32.mrb[0].mxu0
        %v5620 = vadd.f32 0.0, %v5619
        %v5621 = vpop.f32.mrb[0].mxu0
        %v5622 = vadd.f32 0.0, %v5621
        %v5623 = vpop.f32.mrb[0].mxu0
        %v5624 = vadd.f32 0.0, %v5623
        %v5625 = vpop.f32.mrb[0].mxu0
        %v5626 = vadd.f32 0.0, %v5625
        %5627 = vmatprep.mubr.bf16.mxu0 %v4715
        %5628 = vmatmul.mubr.bf16.gmra.mrb[0].mxu0 %v4714
        %v5629 = vpop.f32.mrb[0].mxu0
        %v5630 = vadd.f32 0.0, %v5629
        %v5631 = vpop.f32.mrb[0].mxu0
        %v5632 = vadd.f32 0.0, %v5631
        %v5633 = vpop.f32.mrb[0].mxu0
        %v5634 = vadd.f32 0.0, %v5633
        %v5635 = vpop.f32.mrb[0].mxu0
        %v5636 = vadd.f32 0.0, %v5635
        %5637 = vmatprep.mubr.bf16.mxu0 %v4720
        %5638 = vmatmul.mubr.bf16.gmra.mrb[0].mxu0 %v4719
        %v5639 = vpop.f32.mrb[0].mxu0
        %v5640 = vadd.f32 0.0, %v5639
        %v5641 = vpop.f32.mrb[0].mxu0
        %v5642 = vadd.f32 0.0, %v5641
        %v5643 = vpop.f32.mrb[0].mxu0
        %v5644 = vadd.f32 0.0, %v5643
        %v5645 = vpop.f32.mrb[0].mxu0
        %v5646 = vadd.f32 0.0, %v5645
        %5647 = vmatprep.mubr.bf16.mxu0 %v4725
        %5648 = vmatmul.mubr.bf16.gmra.mrb[0].mxu0 %v4724
        %v5649 = vpop.f32.mrb[0].mxu0
        %v5650 = vadd.f32 0.0, %v5649
        %v5651 = vpop.f32.mrb[0].mxu0
        %v5652 = vadd.f32 0.0, %v5651
        %v5653 = vpop.f32.mrb[0].mxu0
        %v5654 = vadd.f32 0.0, %v5653
        %v5655 = vpop.f32.mrb[0].mxu0
        %v5656 = vadd.f32 0.0, %v5655
        %5657 = vdwg.mxu0
        %5658 = vmatprep.subr.bf16.mxu0 %v5282
        %5659 = vmatpush1.bf16.msra.mxu0 %v5281
        %5660 = vmatprep.subr.bf16.mxu0 %v5286
        %5661 = vmatpush1.bf16.msra.mxu0 %v5285
        %5662 = vmatprep.subr.bf16.mxu0 %v5290
        %5663 = vmatpush1.bf16.msra.mxu0 %v5289
        %5664 = vmatprep.subr.bf16.mxu0 %v5294
        %5665 = vmatpush1.bf16.msra.mxu0 %v5293
        %5666 = vmatprep.subr.bf16.mxu0 %v5298
        %5667 = vmatpush1.bf16.msra.mxu0 %v5297
        %5668 = vmatprep.subr.bf16.mxu0 %v5302
        %5669 = vmatpush1.bf16.msra.mxu0 %v5301
        %5670 = vmatprep.subr.bf16.mxu0 %v5306
        %5671 = vmatpush1.bf16.msra.mxu0 %v5305
        %5672 = vmatprep.subr.bf16.mxu0 %v5310
        %5673 = vmatpush1.bf16.msra.mxu0 %v5309
        %5674 = vmatprep.subr.bf16.mxu0 %v5314
        %5675 = vmatpush1.bf16.msra.mxu0 %v5313
        %5676 = vmatprep.subr.bf16.mxu0 %v5318
        %5677 = vmatpush1.bf16.msra.mxu0 %v5317
        %5678 = vmatprep.subr.bf16.mxu0 %v5322
        %5679 = vmatpush1.bf16.msra.mxu0 %v5321
        %5680 = vmatprep.subr.bf16.mxu0 %v5326
        %5681 = vmatpush1.bf16.msra.mxu0 %v5325
        %5682 = vmatprep.subr.bf16.mxu0 %v5330
        %5683 = vmatpush1.bf16.msra.mxu0 %v5329
        %5684 = vmatprep.subr.bf16.mxu0 %v5334
        %5685 = vmatpush1.bf16.msra.mxu0 %v5333
        %5686 = vmatprep.subr.bf16.mxu0 %v5338
        %5687 = vmatpush1.bf16.msra.mxu0 %v5337
        %5688 = vmatprep.subr.bf16.mxu0 %v5342
        %5689 = vmatpush1.bf16.msra.mxu0 %v5341
        %5690 = vmatprep.mubr.bf16.mxu0 %v4692
        %5691 = vmatmul.mubr.bf16.gmra.mrb[0].mxu0 %v4691
        %v5692 = vpop.f32.mrb[0].mxu0
        %v5693 = vadd.f32 %v5580, %v5692
        %v5694 = vpop.f32.mrb[0].mxu0
        %v5695 = vadd.f32 %v5582, %v5694
        %v5696 = vpop.f32.mrb[0].mxu0
        %v5697 = vadd.f32 %v5584, %v5696
        %v5698 = vpop.f32.mrb[0].mxu0
        %v5699 = vadd.f32 %v5586, %v5698
        %5700 = vmatprep.mubr.bf16.mxu0 %v4697
        %5701 = vmatmul.mubr.bf16.gmra.mrb[0].mxu0 %v4696
        %v5702 = vpop.f32.mrb[0].mxu0
        %v5703 = vadd.f32 %v5590, %v5702
        %v5704 = vpop.f32.mrb[0].mxu0
        %v5705 = vadd.f32 %v5592, %v5704
        %v5706 = vpop.f32.mrb[0].mxu0
        %v5707 = vadd.f32 %v5594, %v5706
        %v5708 = vpop.f32.mrb[0].mxu0
        %v5709 = vadd.f32 %v5596, %v5708
        %5710 = vmatprep.mubr.bf16.mxu0 %v4702
        %5711 = vmatmul.mubr.bf16.gmra.mrb[0].mxu0 %v4701
        %v5712 = vpop.f32.mrb[0].mxu0
        %v5713 = vadd.f32 %v5600, %v5712
        %v5714 = vpop.f32.mrb[0].mxu0
        %v5715 = vadd.f32 %v5602, %v5714
        %v5716 = vpop.f32.mrb[0].mxu0
        %v5717 = vadd.f32 %v5604, %v5716
        %v5718 = vpop.f32.mrb[0].mxu0
        %v5719 = vadd.f32 %v5606, %v5718
        %5720 = vmatprep.mubr.bf16.mxu0 %v4707
        %5721 = vmatmul.mubr.bf16.gmra.mrb[0].mxu0 %v4706
        %v5722 = vpop.f32.mrb[0].mxu0
        %v5723 = vadd.f32 %v5610, %v5722
        %v5724 = vpop.f32.mrb[0].mxu0
        %v5725 = vadd.f32 %v5612, %v5724
        %v5726 = vpop.f32.mrb[0].mxu0
        %v5727 = vadd.f32 %v5614, %v5726
        %v5728 = vpop.f32.mrb[0].mxu0
        %v5729 = vadd.f32 %v5616, %v5728
        %5730 = vmatprep.mubr.bf16.mxu0 %v4712
        %5731 = vmatmul.mubr.bf16.gmra.mrb[0].mxu0 %v4711
        %v5732 = vpop.f32.mrb[0].mxu0
        %v5733 = vadd.f32 %v5620, %v5732
        %v5734 = vpop.f32.mrb[0].mxu0
        %v5735 = vadd.f32 %v5622, %v5734
        %v5736 = vpop.f32.mrb[0].mxu0
        %v5737 = vadd.f32 %v5624, %v5736
        %v5738 = vpop.f32.mrb[0].mxu0
        %v5739 = vadd.f32 %v5626, %v5738
        %5740 = vmatprep.mubr.bf16.mxu0 %v4717
        %5741 = vmatmul.mubr.bf16.gmra.mrb[0].mxu0 %v4716
        %v5742 = vpop.f32.mrb[0].mxu0
        %v5743 = vadd.f32 %v5630, %v5742
        %v5744 = vpop.f32.mrb[0].mxu0
        %v5745 = vadd.f32 %v5632, %v5744
        %v5746 = vpop.f32.mrb[0].mxu0
        %v5747 = vadd.f32 %v5634, %v5746
        %v5748 = vpop.f32.mrb[0].mxu0
        %v5749 = vadd.f32 %v5636, %v5748
        %5750 = vmatprep.mubr.bf16.mxu0 %v4722
        %5751 = vmatmul.mubr.bf16.gmra.mrb[0].mxu0 %v4721
        %v5752 = vpop.f32.mrb[0].mxu0
        %v5753 = vadd.f32 %v5640, %v5752
        %v5754 = vpop.f32.mrb[0].mxu0
        %v5755 = vadd.f32 %v5642, %v5754
        %v5756 = vpop.f32.mrb[0].mxu0
        %v5757 = vadd.f32 %v5644, %v5756
        %v5758 = vpop.f32.mrb[0].mxu0
        %v5759 = vadd.f32 %v5646, %v5758
        %5760 = vmatprep.mubr.bf16.mxu0 %v4727
        %5761 = vmatmul.mubr.bf16.gmra.mrb[0].mxu0 %v4726
        %v5762 = vpop.f32.mrb[0].mxu0
        %v5763 = vadd.f32 %v5650, %v5762
        %v5764 = vpop.f32.mrb[0].mxu0
        %v5765 = vadd.f32 %v5652, %v5764
        %v5766 = vpop.f32.mrb[0].mxu0
        %v5767 = vadd.f32 %v5654, %v5766
        %v5768 = vpop.f32.mrb[0].mxu0
        %v5769 = vadd.f32 %v5656, %v5768
        %5770 = vdwg.mxu0
        %5771 = vmatprep.subr.bf16.mxu0 %v5346
        %5772 = vmatpush1.bf16.msra.mxu0 %v5345
        %5773 = vmatprep.subr.bf16.mxu0 %v5350
        %5774 = vmatpush1.bf16.msra.mxu0 %v5349
        %5775 = vmatprep.subr.bf16.mxu0 %v5354
        %5776 = vmatpush1.bf16.msra.mxu0 %v5353
        %5777 = vmatprep.subr.bf16.mxu0 %v5358
        %5778 = vmatpush1.bf16.msra.mxu0 %v5357
        %5779 = vmatprep.subr.bf16.mxu0 %v5362
        %5780 = vmatpush1.bf16.msra.mxu0 %v5361
        %5781 = vmatprep.subr.bf16.mxu0 %v5366
        %5782 = vmatpush1.bf16.msra.mxu0 %v5365
        %5783 = vmatprep.subr.bf16.mxu0 0
        %5784 = vmatpush1.bf16.msra.mxu0 0
        %5785 = vmatprep.subr.bf16.mxu0 0
        %5786 = vmatpush1.bf16.msra.mxu0 0
        %5787 = vmatprep.subr.bf16.mxu0 0
        %5788 = vmatpush1.bf16.msra.mxu0 0
        %5789 = vmatprep.subr.bf16.mxu0 0
        %5790 = vmatpush1.bf16.msra.mxu0 0
        %5791 = vmatprep.subr.bf16.mxu0 0
        %5792 = vmatpush1.bf16.msra.mxu0 0
        %5793 = vmatprep.subr.bf16.mxu0 0
        %5794 = vmatpush1.bf16.msra.mxu0 0
        %5795 = vmatprep.subr.bf16.mxu0 0
        %5796 = vmatpush1.bf16.msra.mxu0 0
        %5797 = vmatprep.subr.bf16.mxu0 0
        %5798 = vmatpush1.bf16.msra.mxu0 0
        %5799 = vmatprep.subr.bf16.mxu0 0
        %5800 = vmatpush1.bf16.msra.mxu0 0
        %5801 = vmatprep.subr.bf16.mxu0 0
        %5802 = vmatpush1.bf16.msra.mxu0 0
        %5803 = vmatprep.mubr.bf16.mxu0 0
        %5804 = vmatmul.mubr.bf16.gmra.mrb[0].mxu0 %v5522
        %v5805 = vpop.f32.mrb[0].mxu0
        %v5806 = vadd.f32 %v5693, %v5805
        %v5807 = vpop.f32.mrb[0].mxu0
        %v5808 = vadd.f32 %v5695, %v5807
        %v5809 = vpop.f32.mrb[0].mxu0
        %v5810 = vadd.f32 %v5697, %v5809
        %v5811 = vpop.f32.mrb[0].mxu0
        %v5812 = vadd.f32 %v5699, %v5811
        %5813 = vmatprep.mubr.bf16.mxu0 0
        %5814 = vmatmul.mubr.bf16.gmra.mrb[0].mxu0 %v5525
        %v5815 = vpop.f32.mrb[0].mxu0
        %v5816 = vadd.f32 %v5703, %v5815
        %v5817 = vpop.f32.mrb[0].mxu0
        %v5818 = vadd.f32 %v5705, %v5817
        %v5819 = vpop.f32.mrb[0].mxu0
        %v5820 = vadd.f32 %v5707, %v5819
        %v5821 = vpop.f32.mrb[0].mxu0
        %v5822 = vadd.f32 %v5709, %v5821
        %5823 = vmatprep.mubr.bf16.mxu0 0
        %5824 = vmatmul.mubr.bf16.gmra.mrb[0].mxu0 %v5528
        %v5825 = vpop.f32.mrb[0].mxu0
        %v5826 = vadd.f32 %v5713, %v5825
        %v5827 = vpop.f32.mrb[0].mxu0
        %v5828 = vadd.f32 %v5715, %v5827
        %v5829 = vpop.f32.mrb[0].mxu0
        %v5830 = vadd.f32 %v5717, %v5829
        %v5831 = vpop.f32.mrb[0].mxu0
        %v5832 = vadd.f32 %v5719, %v5831
        %5833 = vmatprep.mubr.bf16.mxu0 0
        %5834 = vmatmul.mubr.bf16.gmra.mrb[0].mxu0 %v5531
        %v5835 = vpop.f32.mrb[0].mxu0
        %v5836 = vadd.f32 %v5723, %v5835
        %v5837 = vpop.f32.mrb[0].mxu0
        %v5838 = vadd.f32 %v5725, %v5837
        %v5839 = vpop.f32.mrb[0].mxu0
        %v5840 = vadd.f32 %v5727, %v5839
        %v5841 = vpop.f32.mrb[0].mxu0
        %v5842 = vadd.f32 %v5729, %v5841
        %5843 = vmatprep.mubr.bf16.mxu0 0
        %5844 = vmatmul.mubr.bf16.gmra.mrb[0].mxu0 %v5534
        %v5845 = vpop.f32.mrb[0].mxu0
        %v5846 = vadd.f32 %v5733, %v5845
        %v5847 = vpop.f32.mrb[0].mxu0
        %v5848 = vadd.f32 %v5735, %v5847
        %v5849 = vpop.f32.mrb[0].mxu0
        %v5850 = vadd.f32 %v5737, %v5849
        %v5851 = vpop.f32.mrb[0].mxu0
        %v5852 = vadd.f32 %v5739, %v5851
        %5853 = vmatprep.mubr.bf16.mxu0 0
        %5854 = vmatmul.mubr.bf16.gmra.mrb[0].mxu0 %v5537
        %v5855 = vpop.f32.mrb[0].mxu0
        %v5856 = vadd.f32 %v5743, %v5855
        %v5857 = vpop.f32.mrb[0].mxu0
        %v5858 = vadd.f32 %v5745, %v5857
        %v5859 = vpop.f32.mrb[0].mxu0
        %v5860 = vadd.f32 %v5747, %v5859
        %v5861 = vpop.f32.mrb[0].mxu0
        %v5862 = vadd.f32 %v5749, %v5861
        %5863 = vmatprep.mubr.bf16.mxu0 0
        %5864 = vmatmul.mubr.bf16.gmra.mrb[0].mxu0 %v5540
        %v5865 = vpop.f32.mrb[0].mxu0
        %v5866 = vadd.f32 %v5753, %v5865
        %v5867 = vpop.f32.mrb[0].mxu0
        %v5868 = vadd.f32 %v5755, %v5867
        %v5869 = vpop.f32.mrb[0].mxu0
        %v5870 = vadd.f32 %v5757, %v5869
        %v5871 = vpop.f32.mrb[0].mxu0
        %v5872 = vadd.f32 %v5759, %v5871
        %5873 = vmatprep.mubr.bf16.mxu0 0
        %5874 = vmatmul.mubr.bf16.gmra.mrb[0].mxu0 %v5543
        %v5875 = vpop.f32.mrb[0].mxu0
        %v5876 = vadd.f32 %v5763, %v5875
        %v5877 = vpop.f32.mrb[0].mxu0
        %v5878 = vadd.f32 %v5765, %v5877
        %v5879 = vpop.f32.mrb[0].mxu0
        %v5880 = vadd.f32 %v5767, %v5879
        %v5881 = vpop.f32.mrb[0].mxu0
        %v5882 = vadd.f32 %v5769, %v5881
        %5883 = vdwg.mxu0
        %5884 = vmatprep.subr.bf16.mxu0 %v5220
        %5885 = vmatpush1.bf16.msra.mxu0 %v5219
        %5886 = vmatprep.subr.bf16.mxu0 %v5224
        %5887 = vmatpush1.bf16.msra.mxu0 %v5223
        %5888 = vmatprep.subr.bf16.mxu0 %v5228
        %5889 = vmatpush1.bf16.msra.mxu0 %v5227
        %5890 = vmatprep.subr.bf16.mxu0 %v5232
        %5891 = vmatpush1.bf16.msra.mxu0 %v5231
        %5892 = vmatprep.subr.bf16.mxu0 %v5236
        %5893 = vmatpush1.bf16.msra.mxu0 %v5235
        %5894 = vmatprep.subr.bf16.mxu0 %v5240
        %5895 = vmatpush1.bf16.msra.mxu0 %v5239
        %5896 = vmatprep.subr.bf16.mxu0 %v5244
        %5897 = vmatpush1.bf16.msra.mxu0 %v5243
        %5898 = vmatprep.subr.bf16.mxu0 %v5248
        %5899 = vmatpush1.bf16.msra.mxu0 %v5247
        %5900 = vmatprep.subr.bf16.mxu0 %v5252
        %5901 = vmatpush1.bf16.msra.mxu0 %v5251
        %5902 = vmatprep.subr.bf16.mxu0 %v5256
        %5903 = vmatpush1.bf16.msra.mxu0 %v5255
        %5904 = vmatprep.subr.bf16.mxu0 %v5260
        %5905 = vmatpush1.bf16.msra.mxu0 %v5259
        %5906 = vmatprep.subr.bf16.mxu0 %v5264
        %5907 = vmatpush1.bf16.msra.mxu0 %v5263
        %5908 = vmatprep.subr.bf16.mxu0 %v5268
        %5909 = vmatpush1.bf16.msra.mxu0 %v5267
        %5910 = vmatprep.subr.bf16.mxu0 %v5272
        %5911 = vmatpush1.bf16.msra.mxu0 %v5271
        %5912 = vmatprep.subr.bf16.mxu0 %v5276
        %5913 = vmatpush1.bf16.msra.mxu0 %v5275
        %5914 = vmatprep.subr.bf16.mxu0 %v5280
        %5915 = vmatpush1.bf16.msra.mxu0 %v5279
        %5916 = vmatprep.mubr.bf16.mxu0 %v4690
        %5917 = vmatmul.mubr.bf16.gmra.mrb[0].mxu0 %v4689
        %v5918 = vpop.f32.mrb[0].mxu0
        %v5919 = vadd.f32 0.0, %v5918
        %v5920 = vpop.f32.mrb[0].mxu0
        %v5921 = vadd.f32 0.0, %v5920
        %v5922 = vpop.f32.mrb[0].mxu0
        %v5923 = vadd.f32 0.0, %v5922
        %v5924 = vpop.f32.mrb[0].mxu0
        %v5925 = vadd.f32 0.0, %v5924
        %5926 = vmatprep.mubr.bf16.mxu0 %v4695
        %5927 = vmatmul.mubr.bf16.gmra.mrb[0].mxu0 %v4694
        %v5928 = vpop.f32.mrb[0].mxu0
        %v5929 = vadd.f32 0.0, %v5928
        %v5930 = vpop.f32.mrb[0].mxu0
        %v5931 = vadd.f32 0.0, %v5930
        %v5932 = vpop.f32.mrb[0].mxu0
        %v5933 = vadd.f32 0.0, %v5932
        %v5934 = vpop.f32.mrb[0].mxu0
        %v5935 = vadd.f32 0.0, %v5934
        %5936 = vmatprep.mubr.bf16.mxu0 %v4700
        %5937 = vmatmul.mubr.bf16.gmra.mrb[0].mxu0 %v4699
        %v5938 = vpop.f32.mrb[0].mxu0
        %v5939 = vadd.f32 0.0, %v5938
        %v5940 = vpop.f32.mrb[0].mxu0
        %v5941 = vadd.f32 0.0, %v5940
        %v5942 = vpop.f32.mrb[0].mxu0
        %v5943 = vadd.f32 0.0, %v5942
        %v5944 = vpop.f32.mrb[0].mxu0
        %v5945 = vadd.f32 0.0, %v5944
        %5946 = vmatprep.mubr.bf16.mxu0 %v4705
        %5947 = vmatmul.mubr.bf16.gmra.mrb[0].mxu0 %v4704
        %v5948 = vpop.f32.mrb[0].mxu0
        %v5949 = vadd.f32 0.0, %v5948
        %v5950 = vpop.f32.mrb[0].mxu0
        %v5951 = vadd.f32 0.0, %v5950
        %v5952 = vpop.f32.mrb[0].mxu0
        %v5953 = vadd.f32 0.0, %v5952
        %v5954 = vpop.f32.mrb[0].mxu0
        %v5955 = vadd.f32 0.0, %v5954
        %5956 = vmatprep.mubr.bf16.mxu0 %v4710
        %5957 = vmatmul.mubr.bf16.gmra.mrb[0].mxu0 %v4709
        %v5958 = vpop.f32.mrb[0].mxu0
        %v5959 = vadd.f32 0.0, %v5958
        %v5960 = vpop.f32.mrb[0].mxu0
        %v5961 = vadd.f32 0.0, %v5960
        %v5962 = vpop.f32.mrb[0].mxu0
        %v5963 = vadd.f32 0.0, %v5962
        %v5964 = vpop.f32.mrb[0].mxu0
        %v5965 = vadd.f32 0.0, %v5964
        %5966 = vmatprep.mubr.bf16.mxu0 %v4715
        %5967 = vmatmul.mubr.bf16.gmra.mrb[0].mxu0 %v4714
        %v5968 = vpop.f32.mrb[0].mxu0
        %v5969 = vadd.f32 0.0, %v5968
        %v5970 = vpop.f32.mrb[0].mxu0
        %v5971 = vadd.f32 0.0, %v5970
        %v5972 = vpop.f32.mrb[0].mxu0
        %v5973 = vadd.f32 0.0, %v5972
        %v5974 = vpop.f32.mrb[0].mxu0
        %v5975 = vadd.f32 0.0, %v5974
        %5976 = vmatprep.mubr.bf16.mxu0 %v4720
        %5977 = vmatmul.mubr.bf16.gmra.mrb[0].mxu0 %v4719
        %v5978 = vpop.f32.mrb[0].mxu0
        %v5979 = vadd.f32 0.0, %v5978
        %v5980 = vpop.f32.mrb[0].mxu0
        %v5981 = vadd.f32 0.0, %v5980
        %v5982 = vpop.f32.mrb[0].mxu0
        %v5983 = vadd.f32 0.0, %v5982
        %v5984 = vpop.f32.mrb[0].mxu0
        %v5985 = vadd.f32 0.0, %v5984
        %5986 = vmatprep.mubr.bf16.mxu0 %v4725
        %5987 = vmatmul.mubr.bf16.gmra.mrb[0].mxu0 %v4724
        %v5988 = vpop.f32.mrb[0].mxu0
        %v5989 = vadd.f32 0.0, %v5988
        %v5990 = vpop.f32.mrb[0].mxu0
        %v5991 = vadd.f32 0.0, %v5990
        %v5992 = vpop.f32.mrb[0].mxu0
        %v5993 = vadd.f32 0.0, %v5992
        %v5994 = vpop.f32.mrb[0].mxu0
        %v5995 = vadd.f32 0.0, %v5994
        %5996 = vdwg.mxu0
        %5997 = vmatprep.subr.bf16.mxu0 %v5284
        %5998 = vmatpush1.bf16.msra.mxu0 %v5283
        %5999 = vmatprep.subr.bf16.mxu0 %v5288
        %6000 = vmatpush1.bf16.msra.mxu0 %v5287
        %6001 = vmatprep.subr.bf16.mxu0 %v5292
        %6002 = vmatpush1.bf16.msra.mxu0 %v5291
        %6003 = vmatprep.subr.bf16.mxu0 %v5296
        %6004 = vmatpush1.bf16.msra.mxu0 %v5295
        %6005 = vmatprep.subr.bf16.mxu0 %v5300
        %6006 = vmatpush1.bf16.msra.mxu0 %v5299
        %6007 = vmatprep.subr.bf16.mxu0 %v5304
        %6008 = vmatpush1.bf16.msra.mxu0 %v5303
        %6009 = vmatprep.subr.bf16.mxu0 %v5308
        %6010 = vmatpush1.bf16.msra.mxu0 %v5307
        %6011 = vmatprep.subr.bf16.mxu0 %v5312
        %6012 = vmatpush1.bf16.msra.mxu0 %v5311
        %6013 = vmatprep.subr.bf16.mxu0 %v5316
        %6014 = vmatpush1.bf16.msra.mxu0 %v5315
        %6015 = vmatprep.subr.bf16.mxu0 %v5320
        %6016 = vmatpush1.bf16.msra.mxu0 %v5319
        %6017 = vmatprep.subr.bf16.mxu0 %v5324
        %6018 = vmatpush1.bf16.msra.mxu0 %v5323
        %6019 = vmatprep.subr.bf16.mxu0 %v5328
        %6020 = vmatpush1.bf16.msra.mxu0 %v5327
        %6021 = vmatprep.subr.bf16.mxu0 %v5332
        %6022 = vmatpush1.bf16.msra.mxu0 %v5331
        %6023 = vmatprep.subr.bf16.mxu0 %v5336
        %6024 = vmatpush1.bf16.msra.mxu0 %v5335
        %6025 = vmatprep.subr.bf16.mxu0 %v5340
        %6026 = vmatpush1.bf16.msra.mxu0 %v5339
        %6027 = vmatprep.subr.bf16.mxu0 %v5344
        %6028 = vmatpush1.bf16.msra.mxu0 %v5343
        %6029 = vmatprep.mubr.bf16.mxu0 %v4692
        %6030 = vmatmul.mubr.bf16.gmra.mrb[0].mxu0 %v4691
        %v6031 = vpop.f32.mrb[0].mxu0
        %v6032 = vadd.f32 %v5919, %v6031
        %v6033 = vpop.f32.mrb[0].mxu0
        %v6034 = vadd.f32 %v5921, %v6033
        %v6035 = vpop.f32.mrb[0].mxu0
        %v6036 = vadd.f32 %v5923, %v6035
        %v6037 = vpop.f32.mrb[0].mxu0
        %v6038 = vadd.f32 %v5925, %v6037
        %6039 = vmatprep.mubr.bf16.mxu0 %v4697
        %6040 = vmatmul.mubr.bf16.gmra.mrb[0].mxu0 %v4696
        %v6041 = vpop.f32.mrb[0].mxu0
        %v6042 = vadd.f32 %v5929, %v6041
        %v6043 = vpop.f32.mrb[0].mxu0
        %v6044 = vadd.f32 %v5931, %v6043
        %v6045 = vpop.f32.mrb[0].mxu0
        %v6046 = vadd.f32 %v5933, %v6045
        %v6047 = vpop.f32.mrb[0].mxu0
        %v6048 = vadd.f32 %v5935, %v6047
        %6049 = vmatprep.mubr.bf16.mxu0 %v4702
        %6050 = vmatmul.mubr.bf16.gmra.mrb[0].mxu0 %v4701
        %v6051 = vpop.f32.mrb[0].mxu0
        %v6052 = vadd.f32 %v5939, %v6051
        %v6053 = vpop.f32.mrb[0].mxu0
        %v6054 = vadd.f32 %v5941, %v6053
        %v6055 = vpop.f32.mrb[0].mxu0
        %v6056 = vadd.f32 %v5943, %v6055
        %v6057 = vpop.f32.mrb[0].mxu0
        %v6058 = vadd.f32 %v5945, %v6057
        %6059 = vmatprep.mubr.bf16.mxu0 %v4707
        %6060 = vmatmul.mubr.bf16.gmra.mrb[0].mxu0 %v4706
        %v6061 = vpop.f32.mrb[0].mxu0
        %v6062 = vadd.f32 %v5949, %v6061
        %v6063 = vpop.f32.mrb[0].mxu0
        %v6064 = vadd.f32 %v5951, %v6063
        %v6065 = vpop.f32.mrb[0].mxu0
        %v6066 = vadd.f32 %v5953, %v6065
        %v6067 = vpop.f32.mrb[0].mxu0
        %v6068 = vadd.f32 %v5955, %v6067
        %6069 = vmatprep.mubr.bf16.mxu0 %v4712
        %6070 = vmatmul.mubr.bf16.gmra.mrb[0].mxu0 %v4711
        %v6071 = vpop.f32.mrb[0].mxu0
        %v6072 = vadd.f32 %v5959, %v6071
        %v6073 = vpop.f32.mrb[0].mxu0
        %v6074 = vadd.f32 %v5961, %v6073
        %v6075 = vpop.f32.mrb[0].mxu0
        %v6076 = vadd.f32 %v5963, %v6075
        %v6077 = vpop.f32.mrb[0].mxu0
        %v6078 = vadd.f32 %v5965, %v6077
        %6079 = vmatprep.mubr.bf16.mxu0 %v4717
        %6080 = vmatmul.mubr.bf16.gmra.mrb[0].mxu0 %v4716
        %v6081 = vpop.f32.mrb[0].mxu0
        %v6082 = vadd.f32 %v5969, %v6081
        %v6083 = vpop.f32.mrb[0].mxu0
        %v6084 = vadd.f32 %v5971, %v6083
        %v6085 = vpop.f32.mrb[0].mxu0
        %v6086 = vadd.f32 %v5973, %v6085
        %v6087 = vpop.f32.mrb[0].mxu0
        %v6088 = vadd.f32 %v5975, %v6087
        %6089 = vmatprep.mubr.bf16.mxu0 %v4722
        %6090 = vmatmul.mubr.bf16.gmra.mrb[0].mxu0 %v4721
        %v6091 = vpop.f32.mrb[0].mxu0
        %v6092 = vadd.f32 %v5979, %v6091
        %v6093 = vpop.f32.mrb[0].mxu0
        %v6094 = vadd.f32 %v5981, %v6093
        %v6095 = vpop.f32.mrb[0].mxu0
        %v6096 = vadd.f32 %v5983, %v6095
        %v6097 = vpop.f32.mrb[0].mxu0
        %v6098 = vadd.f32 %v5985, %v6097
        %6099 = vmatprep.mubr.bf16.mxu0 %v4727
        %6100 = vmatmul.mubr.bf16.gmra.mrb[0].mxu0 %v4726
        %v6101 = vpop.f32.mrb[0].mxu0
        %v6102 = vadd.f32 %v5989, %v6101
        %v6103 = vpop.f32.mrb[0].mxu0
        %v6104 = vadd.f32 %v5991, %v6103
        %v6105 = vpop.f32.mrb[0].mxu0
        %v6106 = vadd.f32 %v5993, %v6105
        %v6107 = vpop.f32.mrb[0].mxu0
        %v6108 = vadd.f32 %v5995, %v6107
        %6109 = vdwg.mxu0
        %6110 = vmatprep.subr.bf16.mxu0 %v5348
        %6111 = vmatpush1.bf16.msra.mxu0 %v5347
        %6112 = vmatprep.subr.bf16.mxu0 %v5352
        %6113 = vmatpush1.bf16.msra.mxu0 %v5351
        %6114 = vmatprep.subr.bf16.mxu0 %v5356
        %6115 = vmatpush1.bf16.msra.mxu0 %v5355
        %6116 = vmatprep.subr.bf16.mxu0 %v5360
        %6117 = vmatpush1.bf16.msra.mxu0 %v5359
        %6118 = vmatprep.subr.bf16.mxu0 %v5364
        %6119 = vmatpush1.bf16.msra.mxu0 %v5363
        %6120 = vmatprep.subr.bf16.mxu0 %v5368
        %6121 = vmatpush1.bf16.msra.mxu0 %v5367
        %6122 = vmatprep.subr.bf16.mxu0 0
        %6123 = vmatpush1.bf16.msra.mxu0 0
        %6124 = vmatprep.subr.bf16.mxu0 0
        %6125 = vmatpush1.bf16.msra.mxu0 0
        %6126 = vmatprep.subr.bf16.mxu0 0
        %6127 = vmatpush1.bf16.msra.mxu0 0
        %6128 = vmatprep.subr.bf16.mxu0 0
        %6129 = vmatpush1.bf16.msra.mxu0 0
        %6130 = vmatprep.subr.bf16.mxu0 0
        %6131 = vmatpush1.bf16.msra.mxu0 0
        %6132 = vmatprep.subr.bf16.mxu0 0
        %6133 = vmatpush1.bf16.msra.mxu0 0
        %6134 = vmatprep.subr.bf16.mxu0 0
        %6135 = vmatpush1.bf16.msra.mxu0 0
        %6136 = vmatprep.subr.bf16.mxu0 0
        %6137 = vmatpush1.bf16.msra.mxu0 0
        %6138 = vmatprep.subr.bf16.mxu0 0
        %6139 = vmatpush1.bf16.msra.mxu0 0
        %6140 = vmatprep.subr.bf16.mxu0 0
        %6141 = vmatpush1.bf16.msra.mxu0 0
        %6142 = vmatprep.mubr.bf16.mxu0 0
        %6143 = vmatmul.mubr.bf16.gmra.mrb[0].mxu0 %v5522
        %v6144 = vpop.f32.mrb[0].mxu0
        %v6145 = vadd.f32 %v6032, %v6144
        %v6146 = vpop.f32.mrb[0].mxu0
        %v6147 = vadd.f32 %v6034, %v6146
        %v6148 = vpop.f32.mrb[0].mxu0
        %v6149 = vadd.f32 %v6036, %v6148
        %v6150 = vpop.f32.mrb[0].mxu0
        %v6151 = vadd.f32 %v6038, %v6150
        %6152 = vmatprep.mubr.bf16.mxu0 0
        %6153 = vmatmul.mubr.bf16.gmra.mrb[0].mxu0 %v5525
        %v6154 = vpop.f32.mrb[0].mxu0
        %v6155 = vadd.f32 %v6042, %v6154
        %v6156 = vpop.f32.mrb[0].mxu0
        %v6157 = vadd.f32 %v6044, %v6156
        %v6158 = vpop.f32.mrb[0].mxu0
        %v6159 = vadd.f32 %v6046, %v6158
        %v6160 = vpop.f32.mrb[0].mxu0
        %v6161 = vadd.f32 %v6048, %v6160
        %6162 = vmatprep.mubr.bf16.mxu0 0
        %6163 = vmatmul.mubr.bf16.gmra.mrb[0].mxu0 %v5528
        %v6164 = vpop.f32.mrb[0].mxu0
        %v6165 = vadd.f32 %v6052, %v6164
        %v6166 = vpop.f32.mrb[0].mxu0
        %v6167 = vadd.f32 %v6054, %v6166
        %v6168 = vpop.f32.mrb[0].mxu0
        %v6169 = vadd.f32 %v6056, %v6168
        %v6170 = vpop.f32.mrb[0].mxu0
        %v6171 = vadd.f32 %v6058, %v6170
        %6172 = vmatprep.mubr.bf16.mxu0 0
        %6173 = vmatmul.mubr.bf16.gmra.mrb[0].mxu0 %v5531
        %v6174 = vpop.f32.mrb[0].mxu0
        %v6175 = vadd.f32 %v6062, %v6174
        %v6176 = vpop.f32.mrb[0].mxu0
        %v6177 = vadd.f32 %v6064, %v6176
        %v6178 = vpop.f32.mrb[0].mxu0
        %v6179 = vadd.f32 %v6066, %v6178
        %v6180 = vpop.f32.mrb[0].mxu0
        %v6181 = vadd.f32 %v6068, %v6180
        %6182 = vmatprep.mubr.bf16.mxu0 0
        %6183 = vmatmul.mubr.bf16.gmra.mrb[0].mxu0 %v5534
        %v6184 = vpop.f32.mrb[0].mxu0
        %v6185 = vadd.f32 %v6072, %v6184
        %v6186 = vpop.f32.mrb[0].mxu0
        %v6187 = vadd.f32 %v6074, %v6186
        %v6188 = vpop.f32.mrb[0].mxu0
        %v6189 = vadd.f32 %v6076, %v6188
        %v6190 = vpop.f32.mrb[0].mxu0
        %v6191 = vadd.f32 %v6078, %v6190
        %6192 = vmatprep.mubr.bf16.mxu0 0
        %6193 = vmatmul.mubr.bf16.gmra.mrb[0].mxu0 %v5537
        %v6194 = vpop.f32.mrb[0].mxu0
        %v6195 = vadd.f32 %v6082, %v6194
        %v6196 = vpop.f32.mrb[0].mxu0
        %v6197 = vadd.f32 %v6084, %v6196
        %v6198 = vpop.f32.mrb[0].mxu0
        %v6199 = vadd.f32 %v6086, %v6198
        %v6200 = vpop.f32.mrb[0].mxu0
        %v6201 = vadd.f32 %v6088, %v6200
        %6202 = vmatprep.mubr.bf16.mxu0 0
        %6203 = vmatmul.mubr.bf16.gmra.mrb[0].mxu0 %v5540
        %v6204 = vpop.f32.mrb[0].mxu0
        %v6205 = vadd.f32 %v6092, %v6204
        %v6206 = vpop.f32.mrb[0].mxu0
        %v6207 = vadd.f32 %v6094, %v6206
        %v6208 = vpop.f32.mrb[0].mxu0
        %v6209 = vadd.f32 %v6096, %v6208
        %v6210 = vpop.f32.mrb[0].mxu0
        %v6211 = vadd.f32 %v6098, %v6210
        %6212 = vmatprep.mubr.bf16.mxu0 0
        %6213 = vmatmul.mubr.bf16.gmra.mrb[0].mxu0 %v5543
        %v6214 = vpop.f32.mrb[0].mxu0
        %v6215 = vadd.f32 %v6102, %v6214
        %v6216 = vpop.f32.mrb[0].mxu0
        %v6217 = vadd.f32 %v6104, %v6216
        %v6218 = vpop.f32.mrb[0].mxu0
        %v6219 = vadd.f32 %v6106, %v6218
        %v6220 = vpop.f32.mrb[0].mxu0
        %v6221 = vadd.f32 %v6108, %v6220
        %6222 = vdwg.mxu0
        %v6223 = vpack.c.bf16 %v5810, %v5806
        %v6224 = vpack.c.bf16 %v5812, %v5808
        %v6225 = vpack.c.bf16 %v6149, %v6145
        %v6226 = vpack.c.bf16 %v6151, %v6147
        %v6227 = vpack.c.bf16 %v5820, %v5816
        %v6228 = vpack.c.bf16 %v5822, %v5818
        %v6229 = vpack.c.bf16 %v6159, %v6155
        %v6230 = vpack.c.bf16 %v6161, %v6157
        %v6231 = vpack.c.bf16 %v5830, %v5826
        %v6232 = vpack.c.bf16 %v5832, %v5828
        %v6233 = vpack.c.bf16 %v6169, %v6165
        %v6234 = vpack.c.bf16 %v6171, %v6167
        %v6235 = vpack.c.bf16 %v5840, %v5836
        %v6236 = vpack.c.bf16 %v5842, %v5838
        %v6237 = vpack.c.bf16 %v6179, %v6175
        %v6238 = vpack.c.bf16 %v6181, %v6177
        %v6239 = vpack.c.bf16 %v5850, %v5846
        %v6240 = vpack.c.bf16 %v5852, %v5848
        %v6241 = vpack.c.bf16 %v6189, %v6185
        %v6242 = vpack.c.bf16 %v6191, %v6187
        %v6243 = vpack.c.bf16 %v5860, %v5856
        %v6244 = vpack.c.bf16 %v5862, %v5858
        %v6245 = vpack.c.bf16 %v6199, %v6195
        %v6246 = vpack.c.bf16 %v6201, %v6197
        %v6247 = vpack.c.bf16 %v5870, %v5866
        %v6248 = vpack.c.bf16 %v5872, %v5868
        %v6249 = vpack.c.bf16 %v6209, %v6205
        %v6250 = vpack.c.bf16 %v6211, %v6207
        %v6251 = vpack.c.bf16 %v5880, %v5876
        %v6252 = vpack.c.bf16 %v5882, %v5878
        %v6253 = vpack.c.bf16 %v6219, %v6215
        %v6254 = vpack.c.bf16 %v6221, %v6217
        %v6255 = vld [vmem:[#allocation22] sm:$0xf]
        %v6257 = vlaneseq
        %v6258 = vshrl.u32 %v6257, 7
        %v6259 = vsub.s32 0, %v6258
        %v6260 = vrot.slane %v6255, %v6259
        %v6261 = vlaneseq
        %v6262 = vshrl.u32 %v6261, 7
        %v6263 = vsub.s32 1, %v6262
        %v6264 = vrot.slane %v6255, %v6263
        %v6265 = vlaneseq
        %v6266 = vshrl.u32 %v6265, 7
        %v6267 = vsub.s32 2, %v6266
        %v6268 = vrot.slane %v6255, %v6267
        %v6269 = vlaneseq
        %v6270 = vshrl.u32 %v6269, 7
        %v6271 = vsub.s32 3, %v6270
        %v6272 = vrot.slane %v6255, %v6271
        %v6277 = vpack.c.bf16 %v6260, %v6260
        %v6278 = vpack.c.bf16 %v6264, %v6264
        %v6279 = vpack.c.bf16 %v6268, %v6268
        %v6280 = vpack.c.bf16 %v6272, %v6272
        %v6282 = vpack.i.b16 %v6277, %v6277
        %v6284 = vlaneseq
        %v6285 = vshrl.u32 %v6284, 7
        %v6286 = vsub.s32 0, %v6285
        %v6287 = vrot.slane %v6282, %v6286
        %v6289 = vpack.i.b16 %v6278, %v6278
        %v6291 = vlaneseq
        %v6292 = vshrl.u32 %v6291, 7
        %v6293 = vsub.s32 0, %v6292
        %v6294 = vrot.slane %v6289, %v6293
        %v6296 = vpack.i.b16 %v6279, %v6279
        %v6298 = vlaneseq
        %v6299 = vshrl.u32 %v6298, 7
        %v6300 = vsub.s32 0, %v6299
        %v6301 = vrot.slane %v6296, %v6300
        %v6303 = vpack.i.b16 %v6280, %v6280
        %v6305 = vlaneseq
        %v6306 = vshrl.u32 %v6305, 7
        %v6307 = vsub.s32 0, %v6306
        %v6308 = vrot.slane %v6303, %v6307
        %v6309 = vadd.bf16 %v6223, %v6287
        %v6310 = vadd.bf16 %v6224, %v6294
        %v6311 = vadd.bf16 %v6225, %v6301
        %v6312 = vadd.bf16 %v6226, %v6308
        %v6313 = vadd.bf16 %v6227, %v6287
        %v6314 = vadd.bf16 %v6228, %v6294
        %v6315 = vadd.bf16 %v6229, %v6301
        %v6316 = vadd.bf16 %v6230, %v6308
        %v6317 = vadd.bf16 %v6231, %v6287
        %v6318 = vadd.bf16 %v6232, %v6294
        %v6319 = vadd.bf16 %v6233, %v6301
        %v6320 = vadd.bf16 %v6234, %v6308
        %v6321 = vadd.bf16 %v6235, %v6287
        %v6322 = vadd.bf16 %v6236, %v6294
        %v6323 = vadd.bf16 %v6237, %v6301
        %v6324 = vadd.bf16 %v6238, %v6308
        %v6325 = vadd.bf16 %v6239, %v6287
        %v6326 = vadd.bf16 %v6240, %v6294
        %v6327 = vadd.bf16 %v6241, %v6301
        %v6328 = vadd.bf16 %v6242, %v6308
        %v6329 = vadd.bf16 %v6243, %v6287
        %v6330 = vadd.bf16 %v6244, %v6294
        %v6331 = vadd.bf16 %v6245, %v6301
        %v6332 = vadd.bf16 %v6246, %v6308
        %v6333 = vadd.bf16 %v6247, %v6287
        %v6334 = vadd.bf16 %v6248, %v6294
        %v6335 = vadd.bf16 %v6249, %v6301
        %v6336 = vadd.bf16 %v6250, %v6308
        %v6337 = vadd.bf16 %v6251, %v6287
        %v6338 = vadd.bf16 %v6252, %v6294
        %v6339 = vadd.bf16 %v6253, %v6301
        %v6340 = vadd.bf16 %v6254, %v6308
        %v6341 = vmul.bf16 %v6309, 1009007652
        %v6342 = vmul.bf16 %v6310, 1009007652
        %v6343 = vmul.bf16 %v6311, 1009007652
        %v6344 = vmul.bf16 %v6312, 1009007652
        %v6345 = vmul.bf16 %v6313, 1009007652
        %v6346 = vmul.bf16 %v6314, 1009007652
        %v6347 = vmul.bf16 %v6315, 1009007652
        %v6348 = vmul.bf16 %v6316, 1009007652
        %v6349 = vmul.bf16 %v6317, 1009007652
        %v6350 = vmul.bf16 %v6318, 1009007652
        %v6351 = vmul.bf16 %v6319, 1009007652
        %v6352 = vmul.bf16 %v6320, 1009007652
        %v6353 = vmul.bf16 %v6321, 1009007652
        %v6354 = vmul.bf16 %v6322, 1009007652
        %v6355 = vmul.bf16 %v6323, 1009007652
        %v6356 = vmul.bf16 %v6324, 1009007652
        %v6357 = vmul.bf16 %v6325, 1009007652
        %v6358 = vmul.bf16 %v6326, 1009007652
        %v6359 = vmul.bf16 %v6327, 1009007652
        %v6360 = vmul.bf16 %v6328, 1009007652
        %v6361 = vmul.bf16 %v6329, 1009007652
        %v6362 = vmul.bf16 %v6330, 1009007652
        %v6363 = vmul.bf16 %v6331, 1009007652
        %v6364 = vmul.bf16 %v6332, 1009007652
        %v6365 = vmul.bf16 %v6333, 1009007652
        %v6366 = vmul.bf16 %v6334, 1009007652
        %v6367 = vmul.bf16 %v6335, 1009007652
        %v6368 = vmul.bf16 %v6336, 1009007652
        %v6369 = vmul.bf16 %v6337, 1009007652
        %v6370 = vmul.bf16 %v6338, 1009007652
        %v6371 = vmul.bf16 %v6339, 1009007652
        %v6372 = vmul.bf16 %v6340, 1009007652
        %v6373 = vmax.bf16 %v6309, %v6341
        %v6374 = vmax.bf16 %v6310, %v6342
        %v6375 = vmax.bf16 %v6311, %v6343
        %v6376 = vmax.bf16 %v6312, %v6344
        %v6377 = vmax.bf16 %v6313, %v6345
        %v6378 = vmax.bf16 %v6314, %v6346
        %v6379 = vmax.bf16 %v6315, %v6347
        %v6380 = vmax.bf16 %v6316, %v6348
        %v6381 = vmax.bf16 %v6317, %v6349
        %v6382 = vmax.bf16 %v6318, %v6350
        %v6383 = vmax.bf16 %v6319, %v6351
        %v6384 = vmax.bf16 %v6320, %v6352
        %v6385 = vmax.bf16 %v6321, %v6353
        %v6386 = vmax.bf16 %v6322, %v6354
        %v6387 = vmax.bf16 %v6323, %v6355
        %v6388 = vmax.bf16 %v6324, %v6356
        %v6389 = vmax.bf16 %v6325, %v6357
        %v6390 = vmax.bf16 %v6326, %v6358
        %v6391 = vmax.bf16 %v6327, %v6359
        %v6392 = vmax.bf16 %v6328, %v6360
        %v6393 = vmax.bf16 %v6329, %v6361
        %v6394 = vmax.bf16 %v6330, %v6362
        %v6395 = vmax.bf16 %v6331, %v6363
        %v6396 = vmax.bf16 %v6332, %v6364
        %v6397 = vmax.bf16 %v6333, %v6365
        %v6398 = vmax.bf16 %v6334, %v6366
        %v6399 = vmax.bf16 %v6335, %v6367
        %v6400 = vmax.bf16 %v6336, %v6368
        %v6401 = vmax.bf16 %v6337, %v6369
        %v6402 = vmax.bf16 %v6338, %v6370
        %v6403 = vmax.bf16 %v6339, %v6371
        %v6404 = vmax.bf16 %v6340, %v6372
        %v6405 = vld [vmem:[#allocation24] sm:$0xf]
        %v6406 = vld [vmem:[#allocation24 + $0x4] sm:$0xf]
        %v6407 = vld [vmem:[#allocation24 + $0x8] sm:$0xf]
        %v6408 = vld [vmem:[#allocation24 + $0xc] sm:$0xf]
        %v6409 = vld [vmem:[#allocation24 + $0x10] sm:$0xf]
        %v6410 = vld [vmem:[#allocation24 + $0x14] sm:$0xf]
        %v6411 = vld [vmem:[#allocation24 + $0x18] sm:$0xf]
        %v6412 = vld [vmem:[#allocation24 + $0x1c] sm:$0xf]
        %v6413 = vld [vmem:[#allocation24 + $0x20] sm:$0xf]
        %v6414 = vld [vmem:[#allocation24 + $0x24] sm:$0xf]
        %v6415 = vld [vmem:[#allocation24 + $0x28] sm:$0xf]
        %v6416 = vld [vmem:[#allocation24 + $0x2c] sm:$0xf]
        %v6417 = vld [vmem:[#allocation24 + $0x30] sm:$0xf]
        %v6418 = vld [vmem:[#allocation24 + $0x34] sm:$0xf]
        %v6419 = vld [vmem:[#allocation24 + $0x38] sm:$0xf]
        %v6420 = vld [vmem:[#allocation24 + $0x3c] sm:$0xf]
        %v6421 = vld [vmem:[#allocation24 + $0x40] sm:$0xf]
        %v6422 = vld [vmem:[#allocation24 + $0x44] sm:$0xf]
        %v6423 = vld [vmem:[#allocation24 + $0x48] sm:$0xf]
        %v6424 = vld [vmem:[#allocation24 + $0x4c] sm:$0xf]
        %v6425 = vld [vmem:[#allocation24 + $0x50] sm:$0xf]
        %v6426 = vld [vmem:[#allocation24 + $0x54] sm:$0xf]
        %v6427 = vld [vmem:[#allocation24 + $0x58] sm:$0xf]
        %v6428 = vld [vmem:[#allocation24 + $0x5c] sm:$0xf]
        %v6429 = vld [vmem:[#allocation24 + $0x60] sm:$0xf]
        %v6430 = vld [vmem:[#allocation24 + $0x64] sm:$0xf]
        %v6431 = vld [vmem:[#allocation24 + $0x68] sm:$0xf]
        %v6432 = vld [vmem:[#allocation24 + $0x6c] sm:$0xf]
        %v6433 = vld [vmem:[#allocation24 + $0x70] sm:$0xf]
        %v6434 = vld [vmem:[#allocation24 + $0x74] sm:$0xf]
        %v6435 = vld [vmem:[#allocation24 + $0x78] sm:$0xf]
        %v6436 = vld [vmem:[#allocation24 + $0x7c] sm:$0xf]
        %v6437 = vld [vmem:[#allocation24 + $0x80] sm:$0xf]
        %v6438 = vld [vmem:[#allocation24 + $0x84] sm:$0xf]
        %v6439 = vld [vmem:[#allocation24 + $0x88] sm:$0xf]
        %v6440 = vld [vmem:[#allocation24 + $0x8c] sm:$0xf]
        %v6441 = vld [vmem:[#allocation24 + $0x90] sm:$0xf]
        %v6442 = vld [vmem:[#allocation24 + $0x94] sm:$0xf]
        %v6443 = vld [vmem:[#allocation24 + $0x98] sm:$0xf]
        %v6444 = vld [vmem:[#allocation24 + $0x9c] sm:$0xf]
        %v6445 = vld [vmem:[#allocation24 + $0xa0] sm:$0xf]
        %v6446 = vld [vmem:[#allocation24 + $0xa4] sm:$0xf]
        %v6447 = vld [vmem:[#allocation24 + $0xa8] sm:$0xf]
        %v6448 = vld [vmem:[#allocation24 + $0xac] sm:$0xf]
        %v6449 = vld [vmem:[#allocation24 + $0xb0] sm:$0xf]
        %v6450 = vld [vmem:[#allocation24 + $0xb4] sm:$0xf]
        %v6451 = vld [vmem:[#allocation24 + $0xb8] sm:$0xf]
        %v6452 = vld [vmem:[#allocation24 + $0xbc] sm:$0xf]
        %v6453 = vld [vmem:[#allocation24 + $0xc0] sm:$0xf]
        %v6454 = vld [vmem:[#allocation24 + $0xc4] sm:$0xf]
        %v6455 = vld [vmem:[#allocation24 + $0xc8] sm:$0xf]
        %v6456 = vld [vmem:[#allocation24 + $0xcc] sm:$0xf]
        %v6457 = vld [vmem:[#allocation24 + $0xd0] sm:$0xf]
        %v6458 = vld [vmem:[#allocation24 + $0xd4] sm:$0xf]
        %v6459 = vld [vmem:[#allocation24 + $0xd8] sm:$0xf]
        %v6460 = vld [vmem:[#allocation24 + $0xdc] sm:$0xf]
        %v6461 = vld [vmem:[#allocation24 + $0xe0] sm:$0xf]
        %v6462 = vld [vmem:[#allocation24 + $0xe4] sm:$0xf]
        %v6463 = vld [vmem:[#allocation24 + $0xe8] sm:$0xf]
        %v6464 = vld [vmem:[#allocation24 + $0xec] sm:$0xf]
        %v6465 = vld [vmem:[#allocation24 + $0xf0] sm:$0xf]
        %v6466 = vld [vmem:[#allocation24 + $0xf4] sm:$0xf]
        %v6467 = vld [vmem:[#allocation24 + $0xf8] sm:$0xf]
        %v6468 = vld [vmem:[#allocation24 + $0xfc] sm:$0xf]
        %v6533 = vunpack.c.l.b16 %v6405
        %v6534 = vunpack.c.l.b16 %v6406
        %v6535 = vunpack.c.l.b16 %v6407
        %v6536 = vunpack.c.l.b16 %v6408
        %v6537 = vunpack.c.l.b16 %v6409
        %v6538 = vunpack.c.l.b16 %v6410
        %v6539 = vunpack.c.l.b16 %v6411
        %v6540 = vunpack.c.l.b16 %v6412
        %v6541 = vunpack.c.l.b16 %v6413
        %v6542 = vunpack.c.l.b16 %v6414
        %v6543 = vunpack.c.l.b16 %v6415
        %v6544 = vunpack.c.l.b16 %v6416
        %v6545 = vunpack.c.l.b16 %v6417
        %v6546 = vunpack.c.l.b16 %v6418
        %v6547 = vunpack.c.l.b16 %v6419
        %v6548 = vunpack.c.l.b16 %v6420
        %v6549 = vunpack.c.l.b16 %v6421
        %v6550 = vunpack.c.l.b16 %v6422
        %v6551 = vunpack.c.l.b16 %v6423
        %v6552 = vunpack.c.l.b16 %v6424
        %v6553 = vunpack.c.l.b16 %v6425
        %v6554 = vunpack.c.l.b16 %v6426
        %v6555 = vunpack.c.l.b16 %v6427
        %v6556 = vunpack.c.l.b16 %v6428
        %v6557 = vunpack.c.l.b16 %v6429
        %v6558 = vunpack.c.l.b16 %v6430
        %v6559 = vunpack.c.l.b16 %v6431
        %v6560 = vunpack.c.l.b16 %v6432
        %v6561 = vunpack.c.l.b16 %v6433
        %v6562 = vunpack.c.l.b16 %v6434
        %v6563 = vunpack.c.l.b16 %v6435
        %v6564 = vunpack.c.l.b16 %v6436
        %v6565 = vunpack.c.l.b16 %v6437
        %v6566 = vunpack.c.l.b16 %v6438
        %v6567 = vunpack.c.l.b16 %v6439
        %v6568 = vunpack.c.l.b16 %v6440
        %v6569 = vunpack.c.l.b16 %v6441
        %v6570 = vunpack.c.l.b16 %v6442
        %v6571 = vunpack.c.l.b16 %v6443
        %v6572 = vunpack.c.l.b16 %v6444
        %v6573 = vunpack.c.l.b16 %v6445
        %v6574 = vunpack.c.l.b16 %v6446
        %v6575 = vunpack.c.l.b16 %v6447
        %v6576 = vunpack.c.l.b16 %v6448
        %v6577 = vunpack.c.l.b16 %v6449
        %v6578 = vunpack.c.l.b16 %v6450
        %v6579 = vunpack.c.l.b16 %v6451
        %v6580 = vunpack.c.l.b16 %v6452
        %v6581 = vunpack.c.l.b16 %v6453
        %v6582 = vunpack.c.l.b16 %v6454
        %v6583 = vunpack.c.l.b16 %v6455
        %v6584 = vunpack.c.l.b16 %v6456
        %v6585 = vunpack.c.l.b16 %v6457
        %v6586 = vunpack.c.l.b16 %v6458
        %v6587 = vunpack.c.l.b16 %v6459
        %v6588 = vunpack.c.l.b16 %v6460
        %v6589 = vunpack.c.l.b16 %v6461
        %v6590 = vunpack.c.l.b16 %v6462
        %v6591 = vunpack.c.l.b16 %v6463
        %v6592 = vunpack.c.l.b16 %v6464
        %v6593 = vunpack.c.l.b16 %v6465
        %v6594 = vunpack.c.l.b16 %v6466
        %v6595 = vunpack.c.l.b16 %v6467
        %v6596 = vunpack.c.l.b16 %v6468
        %v6597 = vpack.c.b16 %v6534, %v6533
        %v6598 = vpack.c.b16 %v6536, %v6535
        %v6599 = vpack.c.b16 %v6538, %v6537
        %v6600 = vpack.c.b16 %v6540, %v6539
        %v6601 = vpack.c.b16 %v6542, %v6541
        %v6602 = vpack.c.b16 %v6544, %v6543
        %v6603 = vpack.c.b16 %v6546, %v6545
        %v6604 = vpack.c.b16 %v6548, %v6547
        %v6605 = vpack.c.b16 %v6550, %v6549
        %v6606 = vpack.c.b16 %v6552, %v6551
        %v6607 = vpack.c.b16 %v6554, %v6553
        %v6608 = vpack.c.b16 %v6556, %v6555
        %v6609 = vpack.c.b16 %v6558, %v6557
        %v6610 = vpack.c.b16 %v6560, %v6559
        %v6611 = vpack.c.b16 %v6562, %v6561
        %v6612 = vpack.c.b16 %v6564, %v6563
        %v6613 = vpack.c.b16 %v6566, %v6565
        %v6614 = vpack.c.b16 %v6568, %v6567
        %v6615 = vpack.c.b16 %v6570, %v6569
        %v6616 = vpack.c.b16 %v6572, %v6571
        %v6617 = vpack.c.b16 %v6574, %v6573
        %v6618 = vpack.c.b16 %v6576, %v6575
        %v6619 = vpack.c.b16 %v6578, %v6577
        %v6620 = vpack.c.b16 %v6580, %v6579
        %v6621 = vpack.c.b16 %v6582, %v6581
        %v6622 = vpack.c.b16 %v6584, %v6583
        %v6623 = vpack.c.b16 %v6586, %v6585
        %v6624 = vpack.c.b16 %v6588, %v6587
        %v6625 = vpack.c.b16 %v6590, %v6589
        %v6626 = vpack.c.b16 %v6592, %v6591
        %v6627 = vpack.c.b16 %v6594, %v6593
        %v6628 = vpack.c.b16 %v6596, %v6595
        %6661 = vmatprep.subr.bf16.mxu0 0
        %6662 = vmatpush1.bf16.msra.mxu0 %v6597
        %6663 = vmatprep.subr.bf16.mxu0 0
        %6664 = vmatpush1.bf16.msra.mxu0 %v6598
        %6665 = vmatprep.subr.bf16.mxu0 0
        %6666 = vmatpush1.bf16.msra.mxu0 %v6599
        %6667 = vmatprep.subr.bf16.mxu0 0
        %6668 = vmatpush1.bf16.msra.mxu0 %v6600
        %6669 = vmatprep.subr.bf16.mxu0 0
        %6670 = vmatpush1.bf16.msra.mxu0 %v6601
        %6671 = vmatprep.subr.bf16.mxu0 0
        %6672 = vmatpush1.bf16.msra.mxu0 %v6602
        %6673 = vmatprep.subr.bf16.mxu0 0
        %6674 = vmatpush1.bf16.msra.mxu0 %v6603
        %6675 = vmatprep.subr.bf16.mxu0 0
        %6676 = vmatpush1.bf16.msra.mxu0 %v6604
        %6677 = vmatprep.subr.bf16.mxu0 0
        %6678 = vmatpush1.bf16.msra.mxu0 %v6605
        %6679 = vmatprep.subr.bf16.mxu0 0
        %6680 = vmatpush1.bf16.msra.mxu0 %v6606
        %6681 = vmatprep.subr.bf16.mxu0 0
        %6682 = vmatpush1.bf16.msra.mxu0 %v6607
        %6683 = vmatprep.subr.bf16.mxu0 0
        %6684 = vmatpush1.bf16.msra.mxu0 %v6608
        %6685 = vmatprep.subr.bf16.mxu0 0
        %6686 = vmatpush1.bf16.msra.mxu0 %v6609
        %6687 = vmatprep.subr.bf16.mxu0 0
        %6688 = vmatpush1.bf16.msra.mxu0 %v6610
        %6689 = vmatprep.subr.bf16.mxu0 0
        %6690 = vmatpush1.bf16.msra.mxu0 %v6611
        %6691 = vmatprep.subr.bf16.mxu0 0
        %6692 = vmatpush1.bf16.msra.mxu0 %v6612
        %6693 = vmatprep.mubr.bf16.mxu0 %v6374
        %6694 = vmatmul.mubr.bf16.gmra.mrb[0].mxu0 %v6373
        %v6695 = vpop.f32.mrb[0].mxu0
        %v6696 = vadd.f32 0.0, %v6695
        %v6697 = vpop.f32.mrb[0].mxu0
        %v6698 = vpop.f32.mrb[0].mxu0
        %v6699 = vadd.f32 0.0, %v6698
        %v6700 = vpop.f32.mrb[0].mxu0
        %6701 = vmatprep.mubr.bf16.mxu0 %v6378
        %6702 = vmatmul.mubr.bf16.gmra.mrb[0].mxu0 %v6377
        %v6703 = vpop.f32.mrb[0].mxu0
        %v6704 = vadd.f32 0.0, %v6703
        %v6705 = vpop.f32.mrb[0].mxu0
        %v6706 = vpop.f32.mrb[0].mxu0
        %v6707 = vadd.f32 0.0, %v6706
        %v6708 = vpop.f32.mrb[0].mxu0
        %6709 = vmatprep.mubr.bf16.mxu0 %v6382
        %6710 = vmatmul.mubr.bf16.gmra.mrb[0].mxu0 %v6381
        %v6711 = vpop.f32.mrb[0].mxu0
        %v6712 = vadd.f32 0.0, %v6711
        %v6713 = vpop.f32.mrb[0].mxu0
        %v6714 = vpop.f32.mrb[0].mxu0
        %v6715 = vadd.f32 0.0, %v6714
        %v6716 = vpop.f32.mrb[0].mxu0
        %6717 = vmatprep.mubr.bf16.mxu0 %v6386
        %6718 = vmatmul.mubr.bf16.gmra.mrb[0].mxu0 %v6385
        %v6719 = vpop.f32.mrb[0].mxu0
        %v6720 = vadd.f32 0.0, %v6719
        %v6721 = vpop.f32.mrb[0].mxu0
        %v6722 = vpop.f32.mrb[0].mxu0
        %v6723 = vadd.f32 0.0, %v6722
        %v6724 = vpop.f32.mrb[0].mxu0
        %6725 = vmatprep.mubr.bf16.mxu0 %v6390
        %6726 = vmatmul.mubr.bf16.gmra.mrb[0].mxu0 %v6389
        %v6727 = vpop.f32.mrb[0].mxu0
        %v6728 = vadd.f32 0.0, %v6727
        %v6729 = vpop.f32.mrb[0].mxu0
        %v6730 = vpop.f32.mrb[0].mxu0
        %v6731 = vadd.f32 0.0, %v6730
        %v6732 = vpop.f32.mrb[0].mxu0
        %6733 = vmatprep.mubr.bf16.mxu0 %v6394
        %6734 = vmatmul.mubr.bf16.gmra.mrb[0].mxu0 %v6393
        %v6735 = vpop.f32.mrb[0].mxu0
        %v6736 = vadd.f32 0.0, %v6735
        %v6737 = vpop.f32.mrb[0].mxu0
        %v6738 = vpop.f32.mrb[0].mxu0
        %v6739 = vadd.f32 0.0, %v6738
        %v6740 = vpop.f32.mrb[0].mxu0
        %6741 = vmatprep.mubr.bf16.mxu0 %v6398
        %6742 = vmatmul.mubr.bf16.gmra.mrb[0].mxu0 %v6397
        %v6743 = vpop.f32.mrb[0].mxu0
        %v6744 = vadd.f32 0.0, %v6743
        %v6745 = vpop.f32.mrb[0].mxu0
        %v6746 = vpop.f32.mrb[0].mxu0
        %v6747 = vadd.f32 0.0, %v6746
        %v6748 = vpop.f32.mrb[0].mxu0
        %6749 = vmatprep.mubr.bf16.mxu0 %v6402
        %6750 = vmatmul.mubr.bf16.gmra.mrb[0].mxu0 %v6401
        %v6751 = vpop.f32.mrb[0].mxu0
        %v6752 = vadd.f32 0.0, %v6751
        %v6753 = vpop.f32.mrb[0].mxu0
        %v6754 = vpop.f32.mrb[0].mxu0
        %v6755 = vadd.f32 0.0, %v6754
        %v6756 = vpop.f32.mrb[0].mxu0
        %6757 = vdwg.mxu0
        %6758 = vmatprep.subr.bf16.mxu0 0
        %6759 = vmatpush1.bf16.msra.mxu0 %v6613
        %6760 = vmatprep.subr.bf16.mxu0 0
        %6761 = vmatpush1.bf16.msra.mxu0 %v6614
        %6762 = vmatprep.subr.bf16.mxu0 0
        %6763 = vmatpush1.bf16.msra.mxu0 %v6615
        %6764 = vmatprep.subr.bf16.mxu0 0
        %6765 = vmatpush1.bf16.msra.mxu0 %v6616
        %6766 = vmatprep.subr.bf16.mxu0 0
        %6767 = vmatpush1.bf16.msra.mxu0 %v6617
        %6768 = vmatprep.subr.bf16.mxu0 0
        %6769 = vmatpush1.bf16.msra.mxu0 %v6618
        %6770 = vmatprep.subr.bf16.mxu0 0
        %6771 = vmatpush1.bf16.msra.mxu0 %v6619
        %6772 = vmatprep.subr.bf16.mxu0 0
        %6773 = vmatpush1.bf16.msra.mxu0 %v6620
        %6774 = vmatprep.subr.bf16.mxu0 0
        %6775 = vmatpush1.bf16.msra.mxu0 %v6621
        %6776 = vmatprep.subr.bf16.mxu0 0
        %6777 = vmatpush1.bf16.msra.mxu0 %v6622
        %6778 = vmatprep.subr.bf16.mxu0 0
        %6779 = vmatpush1.bf16.msra.mxu0 %v6623
        %6780 = vmatprep.subr.bf16.mxu0 0
        %6781 = vmatpush1.bf16.msra.mxu0 %v6624
        %6782 = vmatprep.subr.bf16.mxu0 0
        %6783 = vmatpush1.bf16.msra.mxu0 %v6625
        %6784 = vmatprep.subr.bf16.mxu0 0
        %6785 = vmatpush1.bf16.msra.mxu0 %v6626
        %6786 = vmatprep.subr.bf16.mxu0 0
        %6787 = vmatpush1.bf16.msra.mxu0 %v6627
        %6788 = vmatprep.subr.bf16.mxu0 0
        %6789 = vmatpush1.bf16.msra.mxu0 %v6628
        %6790 = vmatprep.mubr.bf16.mxu0 %v6376
        %6791 = vmatmul.mubr.bf16.gmra.mrb[0].mxu0 %v6375
        %v6792 = vpop.f32.mrb[0].mxu0
        %v6793 = vadd.f32 %v6696, %v6792
        %v6794 = vpop.f32.mrb[0].mxu0
        %v6795 = vpop.f32.mrb[0].mxu0
        %v6796 = vadd.f32 %v6699, %v6795
        %v6797 = vpop.f32.mrb[0].mxu0
        %6798 = vmatprep.mubr.bf16.mxu0 %v6380
        %6799 = vmatmul.mubr.bf16.gmra.mrb[0].mxu0 %v6379
        %v6800 = vpop.f32.mrb[0].mxu0
        %v6801 = vadd.f32 %v6704, %v6800
        %v6802 = vpop.f32.mrb[0].mxu0
        %v6803 = vpop.f32.mrb[0].mxu0
        %v6804 = vadd.f32 %v6707, %v6803
        %v6805 = vpop.f32.mrb[0].mxu0
        %6806 = vmatprep.mubr.bf16.mxu0 %v6384
        %6807 = vmatmul.mubr.bf16.gmra.mrb[0].mxu0 %v6383
        %v6808 = vpop.f32.mrb[0].mxu0
        %v6809 = vadd.f32 %v6712, %v6808
        %v6810 = vpop.f32.mrb[0].mxu0
        %v6811 = vpop.f32.mrb[0].mxu0
        %v6812 = vadd.f32 %v6715, %v6811
        %v6813 = vpop.f32.mrb[0].mxu0
        %6814 = vmatprep.mubr.bf16.mxu0 %v6388
        %6815 = vmatmul.mubr.bf16.gmra.mrb[0].mxu0 %v6387
        %v6816 = vpop.f32.mrb[0].mxu0
        %v6817 = vadd.f32 %v6720, %v6816
        %v6818 = vpop.f32.mrb[0].mxu0
        %v6819 = vpop.f32.mrb[0].mxu0
        %v6820 = vadd.f32 %v6723, %v6819
        %v6821 = vpop.f32.mrb[0].mxu0
        %6822 = vmatprep.mubr.bf16.mxu0 %v6392
        %6823 = vmatmul.mubr.bf16.gmra.mrb[0].mxu0 %v6391
        %v6824 = vpop.f32.mrb[0].mxu0
        %v6825 = vadd.f32 %v6728, %v6824
        %v6826 = vpop.f32.mrb[0].mxu0
        %v6827 = vpop.f32.mrb[0].mxu0
        %v6828 = vadd.f32 %v6731, %v6827
        %v6829 = vpop.f32.mrb[0].mxu0
        %6830 = vmatprep.mubr.bf16.mxu0 %v6396
        %6831 = vmatmul.mubr.bf16.gmra.mrb[0].mxu0 %v6395
        %v6832 = vpop.f32.mrb[0].mxu0
        %v6833 = vadd.f32 %v6736, %v6832
        %v6834 = vpop.f32.mrb[0].mxu0
        %v6835 = vpop.f32.mrb[0].mxu0
        %v6836 = vadd.f32 %v6739, %v6835
        %v6837 = vpop.f32.mrb[0].mxu0
        %6838 = vmatprep.mubr.bf16.mxu0 %v6400
        %6839 = vmatmul.mubr.bf16.gmra.mrb[0].mxu0 %v6399
        %v6840 = vpop.f32.mrb[0].mxu0
        %v6841 = vadd.f32 %v6744, %v6840
        %v6842 = vpop.f32.mrb[0].mxu0
        %v6843 = vpop.f32.mrb[0].mxu0
        %v6844 = vadd.f32 %v6747, %v6843
        %v6845 = vpop.f32.mrb[0].mxu0
        %6846 = vmatprep.mubr.bf16.mxu0 %v6404
        %6847 = vmatmul.mubr.bf16.gmra.mrb[0].mxu0 %v6403
        %v6848 = vpop.f32.mrb[0].mxu0
        %v6849 = vadd.f32 %v6752, %v6848
        %v6850 = vpop.f32.mrb[0].mxu0
        %v6851 = vpop.f32.mrb[0].mxu0
        %v6852 = vadd.f32 %v6755, %v6851
        %v6853 = vpop.f32.mrb[0].mxu0
        %6854 = vdwg.mxu0
        %v6855 = vpack.c.bf16 %v6796, %v6793
        %v6856 = vpack.c.bf16 %v6804, %v6801
        %v6857 = vpack.c.bf16 %v6812, %v6809
        %v6858 = vpack.c.bf16 %v6820, %v6817
        %v6859 = vpack.c.bf16 %v6828, %v6825
        %v6860 = vpack.c.bf16 %v6836, %v6833
        %v6861 = vpack.c.bf16 %v6844, %v6841
        %v6862 = vpack.c.bf16 %v6852, %v6849
        %v6863 = vld [vmem:[#allocation25] sm:$0x1]
        %v6864 = vpack.c.bf16 %v6863, %v6863
        %v6866 = vpack.i.b16 %v6864, %v6864
        %v6868 = vlaneseq
        %v6869 = vshrl.u32 %v6868, 7
        %v6870 = vsub.s32 0, %v6869
        %v6871 = vrot.slane %v6866, %v6870
        %v6872 = vadd.bf16 %v6855, %v6871
        %v6873 = vadd.bf16 %v6856, %v6871
        %v6874 = vadd.bf16 %v6857, %v6871
        %v6875 = vadd.bf16 %v6858, %v6871
        %v6876 = vadd.bf16 %v6859, %v6871
        %v6877 = vadd.bf16 %v6860, %v6871
        %v6878 = vadd.bf16 %v6861, %v6871
        %v6879 = vadd.bf16 %v6862, %v6871
        %v6880 = vmul.bf16 %v6872, 1009007652
        %v6881 = vmul.bf16 %v6873, 1009007652
        %v6882 = vmul.bf16 %v6874, 1009007652
        %v6883 = vmul.bf16 %v6875, 1009007652
        %v6884 = vmul.bf16 %v6876, 1009007652
        %v6885 = vmul.bf16 %v6877, 1009007652
        %v6886 = vmul.bf16 %v6878, 1009007652
        %v6887 = vmul.bf16 %v6879, 1009007652
        %v6888 = vmax.bf16 %v6872, %v6880
        %v6889 = vmax.bf16 %v6873, %v6881
        %v6890 = vmax.bf16 %v6874, %v6882
        %v6891 = vmax.bf16 %v6875, %v6883
        %v6892 = vmax.bf16 %v6876, %v6884
        %v6893 = vmax.bf16 %v6877, %v6885
        %v6894 = vmax.bf16 %v6878, %v6886
        %v6895 = vmax.bf16 %v6879, %v6887
        %v6896 = vld [vmem:[#allocation27] sm:$0xf]
        %v6897 = vld [vmem:[#allocation27 + $0x4] sm:$0xf]
        %v6898 = vld [vmem:[#allocation27 + $0x8] sm:$0xf]
        %v6899 = vld [vmem:[#allocation27 + $0xc] sm:$0xf]
        %v6900 = vld [vmem:[#allocation27 + $0x10] sm:$0xf]
        %v6901 = vld [vmem:[#allocation27 + $0x14] sm:$0xf]
        %v6902 = vld [vmem:[#allocation27 + $0x18] sm:$0xf]
        %v6903 = vld [vmem:[#allocation27 + $0x1c] sm:$0xf]
        %v6904 = vld [vmem:[#allocation27 + $0x20] sm:$0xf]
        %v6905 = vld [vmem:[#allocation27 + $0x24] sm:$0xf]
        %v6906 = vld [vmem:[#allocation27 + $0x28] sm:$0xf]
        %v6907 = vld [vmem:[#allocation27 + $0x2c] sm:$0xf]
        %v6908 = vld [vmem:[#allocation27 + $0x30] sm:$0xf]
        %v6909 = vld [vmem:[#allocation27 + $0x34] sm:$0xf]
        %v6910 = vld [vmem:[#allocation27 + $0x38] sm:$0xf]
        %v6911 = vld [vmem:[#allocation27 + $0x3c] sm:$0xf]
        %v6928 = vunpack.c.l.b16 %v6896
        %v6929 = vunpack.c.l.b16 %v6897
        %v6930 = vunpack.c.l.b16 %v6898
        %v6931 = vunpack.c.l.b16 %v6899
        %v6932 = vunpack.c.l.b16 %v6900
        %v6933 = vunpack.c.l.b16 %v6901
        %v6934 = vunpack.c.l.b16 %v6902
        %v6935 = vunpack.c.l.b16 %v6903
        %v6936 = vunpack.c.l.b16 %v6904
        %v6937 = vunpack.c.l.b16 %v6905
        %v6938 = vunpack.c.l.b16 %v6906
        %v6939 = vunpack.c.l.b16 %v6907
        %v6940 = vunpack.c.l.b16 %v6908
        %v6941 = vunpack.c.l.b16 %v6909
        %v6942 = vunpack.c.l.b16 %v6910
        %v6943 = vunpack.c.l.b16 %v6911
        %v6944 = vpack.c.b16 %v6929, %v6928
        %v6945 = vpack.c.b16 %v6931, %v6930
        %v6946 = vpack.c.b16 %v6933, %v6932
        %v6947 = vpack.c.b16 %v6935, %v6934
        %v6948 = vpack.c.b16 %v6937, %v6936
        %v6949 = vpack.c.b16 %v6939, %v6938
        %v6950 = vpack.c.b16 %v6941, %v6940
        %v6951 = vpack.c.b16 %v6943, %v6942
        %6960 = vmatprep.subr.bf16.mxu0 0
        %6961 = vmatpush1.bf16.msra.mxu0 %v6944
        %6962 = vmatprep.subr.bf16.mxu0 0
        %6963 = vmatpush1.bf16.msra.mxu0 %v6945
        %6964 = vmatprep.subr.bf16.mxu0 0
        %6965 = vmatpush1.bf16.msra.mxu0 %v6946
        %6966 = vmatprep.subr.bf16.mxu0 0
        %6967 = vmatpush1.bf16.msra.mxu0 %v6947
        %6968 = vmatprep.subr.bf16.mxu0 0
        %6969 = vmatpush1.bf16.msra.mxu0 %v6948
        %6970 = vmatprep.subr.bf16.mxu0 0
        %6971 = vmatpush1.bf16.msra.mxu0 %v6949
        %6972 = vmatprep.subr.bf16.mxu0 0
        %6973 = vmatpush1.bf16.msra.mxu0 %v6950
        %6974 = vmatprep.subr.bf16.mxu0 0
        %6975 = vmatpush1.bf16.msra.mxu0 %v6951
        %6976 = vmatprep.subr.bf16.mxu0 0
        %6977 = vmatpush1.bf16.msra.mxu0 0
        %6978 = vmatprep.subr.bf16.mxu0 0
        %6979 = vmatpush1.bf16.msra.mxu0 0
        %6980 = vmatprep.subr.bf16.mxu0 0
        %6981 = vmatpush1.bf16.msra.mxu0 0
        %6982 = vmatprep.subr.bf16.mxu0 0
        %6983 = vmatpush1.bf16.msra.mxu0 0
        %6984 = vmatprep.subr.bf16.mxu0 0
        %6985 = vmatpush1.bf16.msra.mxu0 0
        %6986 = vmatprep.subr.bf16.mxu0 0
        %6987 = vmatpush1.bf16.msra.mxu0 0
        %6988 = vmatprep.subr.bf16.mxu0 0
        %6989 = vmatpush1.bf16.msra.mxu0 0
        %6990 = vmatprep.subr.bf16.mxu0 0
        %6991 = vmatpush1.bf16.msra.mxu0 0
        %6992 = vmatprep.mubr.bf16.mxu0 0
        %6993 = vmatmul.mubr.bf16.gmra.mrb[0].mxu0 %v6888
        %v6994 = vpop.f32.mrb[0].mxu0
        %v6995 = vadd.f32 0.0, %v6994
        %v6996 = vpop.f32.mrb[0].mxu0
        %v6997 = vpop.f32.mrb[0].mxu0
        %v6998 = vadd.f32 0.0, %v6997
        %v6999 = vpop.f32.mrb[0].mxu0
        %7000 = vmatprep.mubr.bf16.mxu0 0
        %7001 = vmatmul.mubr.bf16.gmra.mrb[0].mxu0 %v6889
        %v7002 = vpop.f32.mrb[0].mxu0
        %v7003 = vadd.f32 0.0, %v7002
        %v7004 = vpop.f32.mrb[0].mxu0
        %v7005 = vpop.f32.mrb[0].mxu0
        %v7006 = vadd.f32 0.0, %v7005
        %v7007 = vpop.f32.mrb[0].mxu0
        %7008 = vmatprep.mubr.bf16.mxu0 0
        %7009 = vmatmul.mubr.bf16.gmra.mrb[0].mxu0 %v6890
        %v7010 = vpop.f32.mrb[0].mxu0
        %v7011 = vadd.f32 0.0, %v7010
        %v7012 = vpop.f32.mrb[0].mxu0
        %v7013 = vpop.f32.mrb[0].mxu0
        %v7014 = vadd.f32 0.0, %v7013
        %v7015 = vpop.f32.mrb[0].mxu0
        %7016 = vmatprep.mubr.bf16.mxu0 0
        %7017 = vmatmul.mubr.bf16.gmra.mrb[0].mxu0 %v6891
        %v7018 = vpop.f32.mrb[0].mxu0
        %v7019 = vadd.f32 0.0, %v7018
        %v7020 = vpop.f32.mrb[0].mxu0
        %v7021 = vpop.f32.mrb[0].mxu0
        %v7022 = vadd.f32 0.0, %v7021
        %v7023 = vpop.f32.mrb[0].mxu0
        %7024 = vmatprep.mubr.bf16.mxu0 0
        %7025 = vmatmul.mubr.bf16.gmra.mrb[0].mxu0 %v6892
        %v7026 = vpop.f32.mrb[0].mxu0
        %v7027 = vadd.f32 0.0, %v7026
        %v7028 = vpop.f32.mrb[0].mxu0
        %v7029 = vpop.f32.mrb[0].mxu0
        %v7030 = vadd.f32 0.0, %v7029
        %v7031 = vpop.f32.mrb[0].mxu0
        %7032 = vmatprep.mubr.bf16.mxu0 0
        %7033 = vmatmul.mubr.bf16.gmra.mrb[0].mxu0 %v6893
        %v7034 = vpop.f32.mrb[0].mxu0
        %v7035 = vadd.f32 0.0, %v7034
        %v7036 = vpop.f32.mrb[0].mxu0
        %v7037 = vpop.f32.mrb[0].mxu0
        %v7038 = vadd.f32 0.0, %v7037
        %v7039 = vpop.f32.mrb[0].mxu0
        %7040 = vmatprep.mubr.bf16.mxu0 0
        %7041 = vmatmul.mubr.bf16.gmra.mrb[0].mxu0 %v6894
        %v7042 = vpop.f32.mrb[0].mxu0
        %v7043 = vadd.f32 0.0, %v7042
        %v7044 = vpop.f32.mrb[0].mxu0
        %v7045 = vpop.f32.mrb[0].mxu0
        %v7046 = vadd.f32 0.0, %v7045
        %v7047 = vpop.f32.mrb[0].mxu0
        %7048 = vmatprep.mubr.bf16.mxu0 0
        %7049 = vmatmul.mubr.bf16.gmra.mrb[0].mxu0 %v6895
        %v7050 = vpop.f32.mrb[0].mxu0
        %v7051 = vadd.f32 0.0, %v7050
        %v7052 = vpop.f32.mrb[0].mxu0
        %v7053 = vpop.f32.mrb[0].mxu0
        %v7054 = vadd.f32 0.0, %v7053
        %v7055 = vpop.f32.mrb[0].mxu0
        %7056 = vdwg.mxu0
        %v7057 = vpack.c.bf16 %v6998, %v6995
        %v7058 = vpack.c.bf16 %v7006, %v7003
        %v7059 = vpack.c.bf16 %v7014, %v7011
        %v7060 = vpack.c.bf16 %v7022, %v7019
        %v7061 = vpack.c.bf16 %v7030, %v7027
        %v7062 = vpack.c.bf16 %v7038, %v7035
        %v7063 = vpack.c.bf16 %v7046, %v7043
        %v7064 = vpack.c.bf16 %v7054, %v7051
        %v7065 = vld [vmem:[#allocation28] sm:$0x1]
        %v7066 = vpack.c.bf16 %v7065, %v7065
        %v7068 = vpack.i.b16 %v7066, %v7066
        %v7070 = vlaneseq
        %v7071 = vshrl.u32 %v7070, 7
        %v7072 = vsub.s32 0, %v7071
        %v7073 = vrot.slane %v7068, %v7072
        %v7074 = vadd.bf16 %v7057, %v7073
        %v7075 = vadd.bf16 %v7058, %v7073
        %v7076 = vadd.bf16 %v7059, %v7073
        %v7077 = vadd.bf16 %v7060, %v7073
        %v7078 = vadd.bf16 %v7061, %v7073
        %v7079 = vadd.bf16 %v7062, %v7073
        %v7080 = vadd.bf16 %v7063, %v7073
        %v7081 = vadd.bf16 %v7064, %v7073
        %v7082 = vmul.bf16 %v7074, 1009007652
        %v7083 = vmul.bf16 %v7075, 1009007652
        %v7084 = vmul.bf16 %v7076, 1009007652
        %v7085 = vmul.bf16 %v7077, 1009007652
        %v7086 = vmul.bf16 %v7078, 1009007652
        %v7087 = vmul.bf16 %v7079, 1009007652
        %v7088 = vmul.bf16 %v7080, 1009007652
        %v7089 = vmul.bf16 %v7081, 1009007652
        %v7090 = vmax.bf16 %v7074, %v7082
        %v7091 = vmax.bf16 %v7075, %v7083
        %v7092 = vmax.bf16 %v7076, %v7084
        %v7093 = vmax.bf16 %v7077, %v7085
        %v7094 = vmax.bf16 %v7078, %v7086
        %v7095 = vmax.bf16 %v7079, %v7087
        %v7096 = vmax.bf16 %v7080, %v7088
        %v7097 = vmax.bf16 %v7081, %v7089
        %v7098 = vld [vmem:[%s1385] sm:$0xff]
        %v7099 = vld [vmem:[%s1385 + $0x8] sm:$0xff]
        %v7100 = vld [vmem:[%s1385 + $0x10] sm:$0xff]
        %v7101 = vld [vmem:[%s1385 + $0x18] sm:$0xff]
        %v7102 = vld [vmem:[%s1385 + $0x20] sm:$0xff]
        %v7103 = vld [vmem:[%s1385 + $0x28] sm:$0xff]
        %v7104 = vld [vmem:[%s1385 + $0x30] sm:$0xff]
        %v7105 = vld [vmem:[%s1385 + $0x38] sm:$0xff]
        %v7106 = vld [vmem:[%s1385 + $0x40] sm:$0xff]
        %v7107 = vld [vmem:[%s1385 + $0x48] sm:$0xff]
        %v7108 = vld [vmem:[%s1385 + $0x50] sm:$0xff]
        %v7109 = vld [vmem:[%s1385 + $0x58] sm:$0xff]
        %v7110 = vld [vmem:[%s1385 + $0x60] sm:$0xff]
        %v7111 = vld [vmem:[%s1385 + $0x68] sm:$0xff]
        %v7112 = vld [vmem:[%s1385 + $0x70] sm:$0xff]
        %v7113 = vld [vmem:[%s1385 + $0x78] sm:$0xff]
        %v7114 = vld [vmem:[#allocation30] sm:$0xff]
        %v7115 = vld [vmem:[#allocation30 + $0x8] sm:$0xf]
        %v7116 = vld [vmem:[#allocation31] sm:$0x1]
        %v7118 = vlaneseq
        %v7119 = vshrl.u32 %v7118, 7
        %v7120 = vsub.s32 0, %v7119
        %v7121 = vrot.slane %v7116, %v7120
        %vm7123 = vcmask 97280
        %v7125 = vsel %vm7123, %v7098, 0
        %v7128 = vsel %vm7123, %v7099, 0
        %v7131 = vsel %vm7123, %v7100, 0
        %v7134 = vsel %vm7123, %v7101, 0
        %v7137 = vsel %vm7123, %v7102, 0
        %v7140 = vsel %vm7123, %v7103, 0
        %v7143 = vsel %vm7123, %v7104, 0
        %v7146 = vsel %vm7123, %v7105, 0
        %v7149 = vsel %vm7123, %v7106, 0
        %v7152 = vsel %vm7123, %v7107, 0
        %v7155 = vsel %vm7123, %v7108, 0
        %v7158 = vsel %vm7123, %v7109, 0
        %v7161 = vsel %vm7123, %v7110, 0
        %v7164 = vsel %vm7123, %v7111, 0
        %v7167 = vsel %vm7123, %v7112, 0
        %v7170 = vsel %vm7123, %v7113, 0
        %vm7172 = vcmask 1043456
        %v7174 = vsel %vm7172, %v7115, 0
        %7176 = vmatprep.subr.mxu0 0.0
        %7177 = vmatpush1.msra.mxu0 %v7114
        %7178 = vmatprep.subr.mxu0 0.0
        %7179 = vmatpush1.msra.mxu0 %v7174
        %7180 = vmatprep.subr.mxu0 0.0
        %7181 = vmatpush1.msra.mxu0 0.0
        %7182 = vmatprep.subr.mxu0 0.0
        %7183 = vmatpush1.msra.mxu0 0.0
        %7184 = vmatprep.subr.mxu0 0.0
        %7185 = vmatpush1.msra.mxu0 0.0
        %7186 = vmatprep.subr.mxu0 0.0
        %7187 = vmatpush1.msra.mxu0 0.0
        %7188 = vmatprep.subr.mxu0 0.0
        %7189 = vmatpush1.msra.mxu0 0.0
        %7190 = vmatprep.subr.mxu0 0.0
        %7191 = vmatpush1.msra.mxu0 0.0
        %7192 = vmatprep.subr.mxu0 0.0
        %7193 = vmatpush1.msra.mxu0 0.0
        %7194 = vmatprep.subr.mxu0 0.0
        %7195 = vmatpush1.msra.mxu0 0.0
        %7196 = vmatprep.subr.mxu0 0.0
        %7197 = vmatpush1.msra.mxu0 0.0
        %7198 = vmatprep.subr.mxu0 0.0
        %7199 = vmatpush1.msra.mxu0 0.0
        %7200 = vmatprep.subr.mxu0 0.0
        %7201 = vmatpush1.msra.mxu0 0.0
        %7202 = vmatprep.subr.mxu0 0.0
        %7203 = vmatpush1.msra.mxu0 0.0
        %7204 = vmatprep.subr.mxu0 0.0
        %7205 = vmatpush1.msra.mxu0 0.0
        %7206 = vmatprep.subr.mxu0 0.0
        %7207 = vmatpush1.msra.mxu0 0.0
        %7208 = vmatprep.subr.mxu0 0.0
        %7209 = vmatpush1.msra.mxu0 0.0
        %7210 = vmatprep.subr.mxu0 0.0
        %7211 = vmatpush1.msra.mxu0 0.0
        %7212 = vmatprep.subr.mxu0 0.0
        %7213 = vmatpush1.msra.mxu0 0.0
        %7214 = vmatprep.subr.mxu0 0.0
        %7215 = vmatpush1.msra.mxu0 0.0
        %7216 = vmatprep.subr.mxu0 0.0
        %7217 = vmatpush1.msra.mxu0 0.0
        %7218 = vmatprep.subr.mxu0 0.0
        %7219 = vmatpush1.msra.mxu0 0.0
        %7220 = vmatprep.subr.mxu0 0.0
        %7221 = vmatpush1.msra.mxu0 0.0
        %7222 = vmatprep.subr.mxu0 0.0
        %7223 = vmatpush1.msra.mxu0 0.0
        %7224 = vmatprep.subr.mxu0 0.0
        %7225 = vmatpush1.msra.mxu0 0.0
        %7226 = vmatprep.subr.mxu0 0.0
        %7227 = vmatpush1.msra.mxu0 0.0
        %7228 = vmatprep.subr.mxu0 0.0
        %7229 = vmatpush1.msra.mxu0 0.0
        %7230 = vmatprep.subr.mxu0 0.0
        %7231 = vmatpush1.msra.mxu0 0.0
        %7232 = vmatprep.subr.mxu0 0.0
        %7233 = vmatpush1.msra.mxu0 0.0
        %7234 = vmatprep.subr.mxu0 0.0
        %7235 = vmatpush1.msra.mxu0 0.0
        %7236 = vmatprep.subr.mxu0 0.0
        %7237 = vmatpush1.msra.mxu0 0.0
        %7238 = vmatprep.subr.mxu0 0.0
        %7239 = vmatpush1.msra.mxu0 0.0
        %7240 = vmatprep.mubr.f32.mxu0 0.0
        %7241 = vmatmul.mubr.f32.gmra.mrb[0].mxu0 %v7125
        %v7242 = vpop.f32.mrb[0].mxu0
        %v7243 = vadd.f32 %v7121, %v7242
        %v7244 = vpop.f32.mrb[0].mxu0
        %7245 = vmatprep.mubr.f32.mxu0 0.0
        %7246 = vmatmul.mubr.f32.gmra.mrb[0].mxu0 %v7128
        %v7247 = vpop.f32.mrb[0].mxu0
        %v7248 = vadd.f32 %v7121, %v7247
        %v7249 = vpop.f32.mrb[0].mxu0
        %7250 = vmatprep.mubr.f32.mxu0 0.0
        %7251 = vmatmul.mubr.f32.gmra.mrb[0].mxu0 %v7131
        %v7252 = vpop.f32.mrb[0].mxu0
        %v7253 = vadd.f32 %v7121, %v7252
        %v7254 = vpop.f32.mrb[0].mxu0
        %7255 = vmatprep.mubr.f32.mxu0 0.0
        %7256 = vmatmul.mubr.f32.gmra.mrb[0].mxu0 %v7134
        %v7257 = vpop.f32.mrb[0].mxu0
        %v7258 = vadd.f32 %v7121, %v7257
        %v7259 = vpop.f32.mrb[0].mxu0
        %7260 = vmatprep.mubr.f32.mxu0 0.0
        %7261 = vmatmul.mubr.f32.gmra.mrb[0].mxu0 %v7137
        %v7262 = vpop.f32.mrb[0].mxu0
        %v7263 = vadd.f32 %v7121, %v7262
        %v7264 = vpop.f32.mrb[0].mxu0
        %7265 = vmatprep.mubr.f32.mxu0 0.0
        %7266 = vmatmul.mubr.f32.gmra.mrb[0].mxu0 %v7140
        %v7267 = vpop.f32.mrb[0].mxu0
        %v7268 = vadd.f32 %v7121, %v7267
        %v7269 = vpop.f32.mrb[0].mxu0
        %7270 = vmatprep.mubr.f32.mxu0 0.0
        %7271 = vmatmul.mubr.f32.gmra.mrb[0].mxu0 %v7143
        %v7272 = vpop.f32.mrb[0].mxu0
        %v7273 = vadd.f32 %v7121, %v7272
        %v7274 = vpop.f32.mrb[0].mxu0
        %7275 = vmatprep.mubr.f32.mxu0 0.0
        %7276 = vmatmul.mubr.f32.gmra.mrb[0].mxu0 %v7146
        %v7277 = vpop.f32.mrb[0].mxu0
        %v7278 = vadd.f32 %v7121, %v7277
        %v7279 = vpop.f32.mrb[0].mxu0
        %7280 = vmatprep.mubr.f32.mxu0 0.0
        %7281 = vmatmul.mubr.f32.gmra.mrb[0].mxu0 %v7149
        %v7282 = vpop.f32.mrb[0].mxu0
        %v7283 = vadd.f32 %v7121, %v7282
        %v7284 = vpop.f32.mrb[0].mxu0
        %7285 = vmatprep.mubr.f32.mxu0 0.0
        %7286 = vmatmul.mubr.f32.gmra.mrb[0].mxu0 %v7152
        %v7287 = vpop.f32.mrb[0].mxu0
        %v7288 = vadd.f32 %v7121, %v7287
        %v7289 = vpop.f32.mrb[0].mxu0
        %7290 = vmatprep.mubr.f32.mxu0 0.0
        %7291 = vmatmul.mubr.f32.gmra.mrb[0].mxu0 %v7155
        %v7292 = vpop.f32.mrb[0].mxu0
        %v7293 = vadd.f32 %v7121, %v7292
        %v7294 = vpop.f32.mrb[0].mxu0
        %7295 = vmatprep.mubr.f32.mxu0 0.0
        %7296 = vmatmul.mubr.f32.gmra.mrb[0].mxu0 %v7158
        %v7297 = vpop.f32.mrb[0].mxu0
        %v7298 = vadd.f32 %v7121, %v7297
        %v7299 = vpop.f32.mrb[0].mxu0
        %7300 = vmatprep.mubr.f32.mxu0 0.0
        %7301 = vmatmul.mubr.f32.gmra.mrb[0].mxu0 %v7161
        %v7302 = vpop.f32.mrb[0].mxu0
        %v7303 = vadd.f32 %v7121, %v7302
        %v7304 = vpop.f32.mrb[0].mxu0
        %7305 = vmatprep.mubr.f32.mxu0 0.0
        %7306 = vmatmul.mubr.f32.gmra.mrb[0].mxu0 %v7164
        %v7307 = vpop.f32.mrb[0].mxu0
        %v7308 = vadd.f32 %v7121, %v7307
        %v7309 = vpop.f32.mrb[0].mxu0
        %7310 = vmatprep.mubr.f32.mxu0 0.0
        %7311 = vmatmul.mubr.f32.gmra.mrb[0].mxu0 %v7167
        %v7312 = vpop.f32.mrb[0].mxu0
        %v7313 = vadd.f32 %v7121, %v7312
        %v7314 = vpop.f32.mrb[0].mxu0
        %7315 = vmatprep.mubr.f32.mxu0 0.0
        %7316 = vmatmul.mubr.f32.gmra.mrb[0].mxu0 %v7170
        %v7317 = vpop.f32.mrb[0].mxu0
        %v7318 = vadd.f32 %v7121, %v7317
        %v7319 = vpop.f32.mrb[0].mxu0
        %7320 = vdwg.mxu0
        %v7321 = vmul.f32 %v7243, 0.01
        %v7322 = vmul.f32 %v7248, 0.01
        %v7323 = vmul.f32 %v7253, 0.01
        %v7324 = vmul.f32 %v7258, 0.01
        %v7325 = vmul.f32 %v7263, 0.01
        %v7326 = vmul.f32 %v7268, 0.01
        %v7327 = vmul.f32 %v7273, 0.01
        %v7328 = vmul.f32 %v7278, 0.01
        %v7329 = vmul.f32 %v7283, 0.01
        %v7330 = vmul.f32 %v7288, 0.01
        %v7331 = vmul.f32 %v7293, 0.01
        %v7332 = vmul.f32 %v7298, 0.01
        %v7333 = vmul.f32 %v7303, 0.01
        %v7334 = vmul.f32 %v7308, 0.01
        %v7335 = vmul.f32 %v7313, 0.01
        %v7336 = vmul.f32 %v7318, 0.01
        %v7337 = vmax.f32 %v7243, %v7321
        %v7338 = vmax.f32 %v7248, %v7322
        %v7339 = vmax.f32 %v7253, %v7323
        %v7340 = vmax.f32 %v7258, %v7324
        %v7341 = vmax.f32 %v7263, %v7325
        %v7342 = vmax.f32 %v7268, %v7326
        %v7343 = vmax.f32 %v7273, %v7327
        %v7344 = vmax.f32 %v7278, %v7328
        %v7345 = vmax.f32 %v7283, %v7329
        %v7346 = vmax.f32 %v7288, %v7330
        %v7347 = vmax.f32 %v7293, %v7331
        %v7348 = vmax.f32 %v7298, %v7332
        %v7349 = vmax.f32 %v7303, %v7333
        %v7350 = vmax.f32 %v7308, %v7334
        %v7351 = vmax.f32 %v7313, %v7335
        %v7352 = vmax.f32 %v7318, %v7336
        %v7353 = vld [vmem:[#allocation33] sm:$0x1f]
        %v7354 = vld [vmem:[#allocation34] sm:$0x1]
        %v7356 = vlaneseq
        %v7357 = vshrl.u32 %v7356, 7
        %v7358 = vsub.s32 0, %v7357
        %v7359 = vrot.slane %v7354, %v7358
        %vm7361 = vcmask 39936
        %v7363 = vsel %vm7361, %v7337, 0
        %v7366 = vsel %vm7361, %v7338, 0
        %v7369 = vsel %vm7361, %v7339, 0
        %v7372 = vsel %vm7361, %v7340, 0
        %v7375 = vsel %vm7361, %v7341, 0
        %v7378 = vsel %vm7361, %v7342, 0
        %v7381 = vsel %vm7361, %v7343, 0
        %v7384 = vsel %vm7361, %v7344, 0
        %v7387 = vsel %vm7361, %v7345, 0
        %v7390 = vsel %vm7361, %v7346, 0
        %v7393 = vsel %vm7361, %v7347, 0
        %v7396 = vsel %vm7361, %v7348, 0
        %v7399 = vsel %vm7361, %v7349, 0
        %v7402 = vsel %vm7361, %v7350, 0
        %v7405 = vsel %vm7361, %v7351, 0
        %v7408 = vsel %vm7361, %v7352, 0
        %vm7410 = vcmask 1044480
        %v7412 = vsel %vm7410, %v7353, 0
        %7414 = vmatprep.subr.mxu0 0.0
        %7415 = vmatpush1.msra.mxu0 %v7412
        %7416 = vmatprep.subr.mxu0 0.0
        %7417 = vmatpush1.msra.mxu0 0.0
        %7418 = vmatprep.subr.mxu0 0.0
        %7419 = vmatpush1.msra.mxu0 0.0
        %7420 = vmatprep.subr.mxu0 0.0
        %7421 = vmatpush1.msra.mxu0 0.0
        %7422 = vmatprep.subr.mxu0 0.0
        %7423 = vmatpush1.msra.mxu0 0.0
        %7424 = vmatprep.subr.mxu0 0.0
        %7425 = vmatpush1.msra.mxu0 0.0
        %7426 = vmatprep.subr.mxu0 0.0
        %7427 = vmatpush1.msra.mxu0 0.0
        %7428 = vmatprep.subr.mxu0 0.0
        %7429 = vmatpush1.msra.mxu0 0.0
        %7430 = vmatprep.subr.mxu0 0.0
        %7431 = vmatpush1.msra.mxu0 0.0
        %7432 = vmatprep.subr.mxu0 0.0
        %7433 = vmatpush1.msra.mxu0 0.0
        %7434 = vmatprep.subr.mxu0 0.0
        %7435 = vmatpush1.msra.mxu0 0.0
        %7436 = vmatprep.subr.mxu0 0.0
        %7437 = vmatpush1.msra.mxu0 0.0
        %7438 = vmatprep.subr.mxu0 0.0
        %7439 = vmatpush1.msra.mxu0 0.0
        %7440 = vmatprep.subr.mxu0 0.0
        %7441 = vmatpush1.msra.mxu0 0.0
        %7442 = vmatprep.subr.mxu0 0.0
        %7443 = vmatpush1.msra.mxu0 0.0
        %7444 = vmatprep.subr.mxu0 0.0
        %7445 = vmatpush1.msra.mxu0 0.0
        %7446 = vmatprep.subr.mxu0 0.0
        %7447 = vmatpush1.msra.mxu0 0.0
        %7448 = vmatprep.subr.mxu0 0.0
        %7449 = vmatpush1.msra.mxu0 0.0
        %7450 = vmatprep.subr.mxu0 0.0
        %7451 = vmatpush1.msra.mxu0 0.0
        %7452 = vmatprep.subr.mxu0 0.0
        %7453 = vmatpush1.msra.mxu0 0.0
        %7454 = vmatprep.subr.mxu0 0.0
        %7455 = vmatpush1.msra.mxu0 0.0
        %7456 = vmatprep.subr.mxu0 0.0
        %7457 = vmatpush1.msra.mxu0 0.0
        %7458 = vmatprep.subr.mxu0 0.0
        %7459 = vmatpush1.msra.mxu0 0.0
        %7460 = vmatprep.subr.mxu0 0.0
        %7461 = vmatpush1.msra.mxu0 0.0
        %7462 = vmatprep.subr.mxu0 0.0
        %7463 = vmatpush1.msra.mxu0 0.0
        %7464 = vmatprep.subr.mxu0 0.0
        %7465 = vmatpush1.msra.mxu0 0.0
        %7466 = vmatprep.subr.mxu0 0.0
        %7467 = vmatpush1.msra.mxu0 0.0
        %7468 = vmatprep.subr.mxu0 0.0
        %7469 = vmatpush1.msra.mxu0 0.0
        %7470 = vmatprep.subr.mxu0 0.0
        %7471 = vmatpush1.msra.mxu0 0.0
        %7472 = vmatprep.subr.mxu0 0.0
        %7473 = vmatpush1.msra.mxu0 0.0
        %7474 = vmatprep.subr.mxu0 0.0
        %7475 = vmatpush1.msra.mxu0 0.0
        %7476 = vmatprep.subr.mxu0 0.0
        %7477 = vmatpush1.msra.mxu0 0.0
        %7478 = vmatprep.mubr.f32.mxu0 0.0
        %7479 = vmatmul.mubr.f32.gmra.mrb[0].mxu0 %v7363
        %v7480 = vpop.f32.mrb[0].mxu0
        %v7481 = vadd.f32 %v7359, %v7480
        %v7482 = vpop.f32.mrb[0].mxu0
        %7483 = vmatprep.mubr.f32.mxu0 0.0
        %7484 = vmatmul.mubr.f32.gmra.mrb[0].mxu0 %v7366
        %v7485 = vpop.f32.mrb[0].mxu0
        %v7486 = vadd.f32 %v7359, %v7485
        %v7487 = vpop.f32.mrb[0].mxu0
        %7488 = vmatprep.mubr.f32.mxu0 0.0
        %7489 = vmatmul.mubr.f32.gmra.mrb[0].mxu0 %v7369
        %v7490 = vpop.f32.mrb[0].mxu0
        %v7491 = vadd.f32 %v7359, %v7490
        %v7492 = vpop.f32.mrb[0].mxu0
        %7493 = vmatprep.mubr.f32.mxu0 0.0
        %7494 = vmatmul.mubr.f32.gmra.mrb[0].mxu0 %v7372
        %v7495 = vpop.f32.mrb[0].mxu0
        %v7496 = vadd.f32 %v7359, %v7495
        %v7497 = vpop.f32.mrb[0].mxu0
        %7498 = vmatprep.mubr.f32.mxu0 0.0
        %7499 = vmatmul.mubr.f32.gmra.mrb[0].mxu0 %v7375
        %v7500 = vpop.f32.mrb[0].mxu0
        %v7501 = vadd.f32 %v7359, %v7500
        %v7502 = vpop.f32.mrb[0].mxu0
        %7503 = vmatprep.mubr.f32.mxu0 0.0
        %7504 = vmatmul.mubr.f32.gmra.mrb[0].mxu0 %v7378
        %v7505 = vpop.f32.mrb[0].mxu0
        %v7506 = vadd.f32 %v7359, %v7505
        %v7507 = vpop.f32.mrb[0].mxu0
        %7508 = vmatprep.mubr.f32.mxu0 0.0
        %7509 = vmatmul.mubr.f32.gmra.mrb[0].mxu0 %v7381
        %v7510 = vpop.f32.mrb[0].mxu0
        %v7511 = vadd.f32 %v7359, %v7510
        %v7512 = vpop.f32.mrb[0].mxu0
        %7513 = vmatprep.mubr.f32.mxu0 0.0
        %7514 = vmatmul.mubr.f32.gmra.mrb[0].mxu0 %v7384
        %v7515 = vpop.f32.mrb[0].mxu0
        %v7516 = vadd.f32 %v7359, %v7515
        %v7517 = vpop.f32.mrb[0].mxu0
        %7518 = vmatprep.mubr.f32.mxu0 0.0
        %7519 = vmatmul.mubr.f32.gmra.mrb[0].mxu0 %v7387
        %v7520 = vpop.f32.mrb[0].mxu0
        %v7521 = vadd.f32 %v7359, %v7520
        %v7522 = vpop.f32.mrb[0].mxu0
        %7523 = vmatprep.mubr.f32.mxu0 0.0
        %7524 = vmatmul.mubr.f32.gmra.mrb[0].mxu0 %v7390
        %v7525 = vpop.f32.mrb[0].mxu0
        %v7526 = vadd.f32 %v7359, %v7525
        %v7527 = vpop.f32.mrb[0].mxu0
        %7528 = vmatprep.mubr.f32.mxu0 0.0
        %7529 = vmatmul.mubr.f32.gmra.mrb[0].mxu0 %v7393
        %v7530 = vpop.f32.mrb[0].mxu0
        %v7531 = vadd.f32 %v7359, %v7530
        %v7532 = vpop.f32.mrb[0].mxu0
        %7533 = vmatprep.mubr.f32.mxu0 0.0
        %7534 = vmatmul.mubr.f32.gmra.mrb[0].mxu0 %v7396
        %v7535 = vpop.f32.mrb[0].mxu0
        %v7536 = vadd.f32 %v7359, %v7535
        %v7537 = vpop.f32.mrb[0].mxu0
        %7538 = vmatprep.mubr.f32.mxu0 0.0
        %7539 = vmatmul.mubr.f32.gmra.mrb[0].mxu0 %v7399
        %v7540 = vpop.f32.mrb[0].mxu0
        %v7541 = vadd.f32 %v7359, %v7540
        %v7542 = vpop.f32.mrb[0].mxu0
        %7543 = vmatprep.mubr.f32.mxu0 0.0
        %7544 = vmatmul.mubr.f32.gmra.mrb[0].mxu0 %v7402
        %v7545 = vpop.f32.mrb[0].mxu0
        %v7546 = vadd.f32 %v7359, %v7545
        %v7547 = vpop.f32.mrb[0].mxu0
        %7548 = vmatprep.mubr.f32.mxu0 0.0
        %7549 = vmatmul.mubr.f32.gmra.mrb[0].mxu0 %v7405
        %v7550 = vpop.f32.mrb[0].mxu0
        %v7551 = vadd.f32 %v7359, %v7550
        %v7552 = vpop.f32.mrb[0].mxu0
        %7553 = vmatprep.mubr.f32.mxu0 0.0
        %7554 = vmatmul.mubr.f32.gmra.mrb[0].mxu0 %v7408
        %v7555 = vpop.f32.mrb[0].mxu0
        %v7556 = vadd.f32 %v7359, %v7555
        %v7557 = vpop.f32.mrb[0].mxu0
        %7558 = vdwg.mxu0
        %v7559 = vmul.f32 %v7481, 0.01
        %v7560 = vmul.f32 %v7486, 0.01
        %v7561 = vmul.f32 %v7491, 0.01
        %v7562 = vmul.f32 %v7496, 0.01
        %v7563 = vmul.f32 %v7501, 0.01
        %v7564 = vmul.f32 %v7506, 0.01
        %v7565 = vmul.f32 %v7511, 0.01
        %v7566 = vmul.f32 %v7516, 0.01
        %v7567 = vmul.f32 %v7521, 0.01
        %v7568 = vmul.f32 %v7526, 0.01
        %v7569 = vmul.f32 %v7531, 0.01
        %v7570 = vmul.f32 %v7536, 0.01
        %v7571 = vmul.f32 %v7541, 0.01
        %v7572 = vmul.f32 %v7546, 0.01
        %v7573 = vmul.f32 %v7551, 0.01
        %v7574 = vmul.f32 %v7556, 0.01
        %v7575 = vmax.f32 %v7481, %v7559
        %v7576 = vmax.f32 %v7486, %v7560
        %v7577 = vmax.f32 %v7491, %v7561
        %v7578 = vmax.f32 %v7496, %v7562
        %v7579 = vmax.f32 %v7501, %v7563
        %v7580 = vmax.f32 %v7506, %v7564
        %v7581 = vmax.f32 %v7511, %v7565
        %v7582 = vmax.f32 %v7516, %v7566
        %v7583 = vmax.f32 %v7521, %v7567
        %v7584 = vmax.f32 %v7526, %v7568
        %v7585 = vmax.f32 %v7531, %v7569
        %v7586 = vmax.f32 %v7536, %v7570
        %v7587 = vmax.f32 %v7541, %v7571
        %v7588 = vmax.f32 %v7546, %v7572
        %v7589 = vmax.f32 %v7551, %v7573
        %v7590 = vmax.f32 %v7556, %v7574
        %v7591 = vunpack.c.l.bf16 %v4353
        %v7592 = vunpack.c.h.bf16 %v4353
        %v7593 = vunpack.c.l.bf16 %v4354
        %v7594 = vunpack.c.h.bf16 %v4354
        %v7595 = vunpack.c.l.bf16 %v4355
        %v7596 = vunpack.c.h.bf16 %v4355
        %v7597 = vunpack.c.l.bf16 %v4356
        %v7598 = vunpack.c.h.bf16 %v4356
        %v7599 = vunpack.c.l.bf16 %v4357
        %v7600 = vunpack.c.h.bf16 %v4357
        %v7601 = vunpack.c.l.bf16 %v4358
        %v7602 = vunpack.c.h.bf16 %v4358
        %v7603 = vunpack.c.l.bf16 %v4359
        %v7604 = vunpack.c.h.bf16 %v4359
        %v7605 = vunpack.c.l.bf16 %v4360
        %v7606 = vunpack.c.h.bf16 %v4360
        %v7607 = vunpack.c.l.bf16 %v7090
        %v7608 = vunpack.c.h.bf16 %v7090
        %v7609 = vunpack.c.l.bf16 %v7091
        %v7610 = vunpack.c.h.bf16 %v7091
        %v7611 = vunpack.c.l.bf16 %v7092
        %v7612 = vunpack.c.h.bf16 %v7092
        %v7613 = vunpack.c.l.bf16 %v7093
        %v7614 = vunpack.c.h.bf16 %v7093
        %v7615 = vunpack.c.l.bf16 %v7094
        %v7616 = vunpack.c.h.bf16 %v7094
        %v7617 = vunpack.c.l.bf16 %v7095
        %v7618 = vunpack.c.h.bf16 %v7095
        %v7619 = vunpack.c.l.bf16 %v7096
        %v7620 = vunpack.c.h.bf16 %v7096
        %v7621 = vunpack.c.l.bf16 %v7097
        %v7622 = vunpack.c.h.bf16 %v7097
        %7639 = vrot.lane.b32.xlu0 %v7575, 64
        %v7640 = vpop.permute.xlu0 %7639
        %7641 = vrot.lane.b32.xlu0 %v7576, 64
        %v7642 = vpop.permute.xlu0 %7641
        %7643 = vrot.lane.b32.xlu0 %v7577, 64
        %v7644 = vpop.permute.xlu0 %7643
        %7645 = vrot.lane.b32.xlu0 %v7578, 64
        %v7646 = vpop.permute.xlu0 %7645
        %7647 = vrot.lane.b32.xlu0 %v7579, 64
        %v7648 = vpop.permute.xlu0 %7647
        %7649 = vrot.lane.b32.xlu0 %v7580, 64
        %v7650 = vpop.permute.xlu0 %7649
        %7651 = vrot.lane.b32.xlu0 %v7581, 64
        %v7652 = vpop.permute.xlu0 %7651
        %7653 = vrot.lane.b32.xlu0 %v7582, 64
        %v7654 = vpop.permute.xlu0 %7653
        %7655 = vrot.lane.b32.xlu0 %v7583, 64
        %v7656 = vpop.permute.xlu0 %7655
        %7657 = vrot.lane.b32.xlu0 %v7584, 64
        %v7658 = vpop.permute.xlu0 %7657
        %7659 = vrot.lane.b32.xlu0 %v7585, 64
        %v7660 = vpop.permute.xlu0 %7659
        %7661 = vrot.lane.b32.xlu0 %v7586, 64
        %v7662 = vpop.permute.xlu0 %7661
        %7663 = vrot.lane.b32.xlu0 %v7587, 64
        %v7664 = vpop.permute.xlu0 %7663
        %7665 = vrot.lane.b32.xlu0 %v7588, 64
        %v7666 = vpop.permute.xlu0 %7665
        %7667 = vrot.lane.b32.xlu0 %v7589, 64
        %v7668 = vpop.permute.xlu0 %7667
        %7669 = vrot.lane.b32.xlu0 %v7590, 64
        %v7670 = vpop.permute.xlu0 %7669
        %7703 = vrot.lane.b32.xlu0 %v7607, 68
        %v7704 = vpop.permute.xlu0 %7703
        %7705 = vrot.lane.b32.xlu0 %v7608, 68
        %v7706 = vpop.permute.xlu0 %7705
        %7707 = vrot.lane.b32.xlu0 %v7609, 68
        %v7708 = vpop.permute.xlu0 %7707
        %7709 = vrot.lane.b32.xlu0 %v7610, 68
        %v7710 = vpop.permute.xlu0 %7709
        %7711 = vrot.lane.b32.xlu0 %v7611, 68
        %v7712 = vpop.permute.xlu0 %7711
        %7713 = vrot.lane.b32.xlu0 %v7612, 68
        %v7714 = vpop.permute.xlu0 %7713
        %7715 = vrot.lane.b32.xlu0 %v7613, 68
        %v7716 = vpop.permute.xlu0 %7715
        %7717 = vrot.lane.b32.xlu0 %v7614, 68
        %v7718 = vpop.permute.xlu0 %7717
        %7719 = vrot.lane.b32.xlu0 %v7615, 68
        %v7720 = vpop.permute.xlu0 %7719
        %7721 = vrot.lane.b32.xlu0 %v7616, 68
        %v7722 = vpop.permute.xlu0 %7721
        %7723 = vrot.lane.b32.xlu0 %v7617, 68
        %v7724 = vpop.permute.xlu0 %7723
        %7725 = vrot.lane.b32.xlu0 %v7618, 68
        %v7726 = vpop.permute.xlu0 %7725
        %7727 = vrot.lane.b32.xlu0 %v7619, 68
        %v7728 = vpop.permute.xlu0 %7727
        %7729 = vrot.lane.b32.xlu0 %v7620, 68
        %v7730 = vpop.permute.xlu0 %7729
        %7731 = vrot.lane.b32.xlu0 %v7621, 68
        %v7732 = vpop.permute.xlu0 %7731
        %7733 = vrot.lane.b32.xlu0 %v7622, 68
        %v7734 = vpop.permute.xlu0 %7733
        %7751 = vrot.lane.b32.xlu0 %v7337, 69
        %v7752 = vpop.permute.xlu0 %7751
        %7753 = vrot.lane.b32.xlu0 %v7338, 69
        %v7754 = vpop.permute.xlu0 %7753
        %7755 = vrot.lane.b32.xlu0 %v7339, 69
        %v7756 = vpop.permute.xlu0 %7755
        %7757 = vrot.lane.b32.xlu0 %v7340, 69
        %v7758 = vpop.permute.xlu0 %7757
        %7759 = vrot.lane.b32.xlu0 %v7341, 69
        %v7760 = vpop.permute.xlu0 %7759
        %7761 = vrot.lane.b32.xlu0 %v7342, 69
        %v7762 = vpop.permute.xlu0 %7761
        %7763 = vrot.lane.b32.xlu0 %v7343, 69
        %v7764 = vpop.permute.xlu0 %7763
        %7765 = vrot.lane.b32.xlu0 %v7344, 69
        %v7766 = vpop.permute.xlu0 %7765
        %7767 = vrot.lane.b32.xlu0 %v7345, 69
        %v7768 = vpop.permute.xlu0 %7767
        %7769 = vrot.lane.b32.xlu0 %v7346, 69
        %v7770 = vpop.permute.xlu0 %7769
        %7771 = vrot.lane.b32.xlu0 %v7347, 69
        %v7772 = vpop.permute.xlu0 %7771
        %7773 = vrot.lane.b32.xlu0 %v7348, 69
        %v7774 = vpop.permute.xlu0 %7773
        %7775 = vrot.lane.b32.xlu0 %v7349, 69
        %v7776 = vpop.permute.xlu0 %7775
        %7777 = vrot.lane.b32.xlu0 %v7350, 69
        %v7778 = vpop.permute.xlu0 %7777
        %7779 = vrot.lane.b32.xlu0 %v7351, 69
        %v7780 = vpop.permute.xlu0 %7779
        %7781 = vrot.lane.b32.xlu0 %v7352, 69
        %v7782 = vpop.permute.xlu0 %7781
        %vm7799 = vcmask 523264
        %v7800 = vsel %vm7799, %v7591, %v7640
        %v7801 = vsel %vm7799, %v7592, %v7642
        %v7802 = vsel %vm7799, %v7593, %v7644
        %v7803 = vsel %vm7799, %v7594, %v7646
        %v7804 = vsel %vm7799, %v7595, %v7648
        %v7805 = vsel %vm7799, %v7596, %v7650
        %v7806 = vsel %vm7799, %v7597, %v7652
        %v7807 = vsel %vm7799, %v7598, %v7654
        %v7808 = vsel %vm7799, %v7599, %v7656
        %v7809 = vsel %vm7799, %v7600, %v7658
        %v7810 = vsel %vm7799, %v7601, %v7660
        %v7811 = vsel %vm7799, %v7602, %v7662
        %v7812 = vsel %vm7799, %v7603, %v7664
        %v7813 = vsel %vm7799, %v7604, %v7666
        %v7814 = vsel %vm7799, %v7605, %v7668
        %v7815 = vsel %vm7799, %v7606, %v7670
        %vm7816 = vcmask 556032
        %v7817 = vsel %vm7816, %v7800, %v7704
        %v7818 = vsel %vm7816, %v7801, %v7706
        %v7819 = vsel %vm7816, %v7802, %v7708
        %v7820 = vsel %vm7816, %v7803, %v7710
        %v7821 = vsel %vm7816, %v7804, %v7712
        %v7822 = vsel %vm7816, %v7805, %v7714
        %v7823 = vsel %vm7816, %v7806, %v7716
        %v7824 = vsel %vm7816, %v7807, %v7718
        %v7825 = vsel %vm7816, %v7808, %v7720
        %v7826 = vsel %vm7816, %v7809, %v7722
        %v7827 = vsel %vm7816, %v7810, %v7724
        %v7828 = vsel %vm7816, %v7811, %v7726
        %v7829 = vsel %vm7816, %v7812, %v7728
        %v7830 = vsel %vm7816, %v7813, %v7730
        %v7831 = vsel %vm7816, %v7814, %v7732
        %v7832 = vsel %vm7816, %v7815, %v7734
        %vm7833 = vcmask 605184
        %v7834 = vsel %vm7833, %v7817, %v7752
        %v7835 = vsel %vm7833, %v7818, %v7754
        %v7836 = vsel %vm7833, %v7819, %v7756
        %v7837 = vsel %vm7833, %v7820, %v7758
        %v7838 = vsel %vm7833, %v7821, %v7760
        %v7839 = vsel %vm7833, %v7822, %v7762
        %v7840 = vsel %vm7833, %v7823, %v7764
        %v7841 = vsel %vm7833, %v7824, %v7766
        %v7842 = vsel %vm7833, %v7825, %v7768
        %v7843 = vsel %vm7833, %v7826, %v7770
        %v7844 = vsel %vm7833, %v7827, %v7772
        %v7845 = vsel %vm7833, %v7828, %v7774
        %v7846 = vsel %vm7833, %v7829, %v7776
        %v7847 = vsel %vm7833, %v7830, %v7778
        %v7848 = vsel %vm7833, %v7831, %v7780
        %v7849 = vsel %vm7833, %v7832, %v7782
        %vm7850 = vcmask 646144
        %7851 = vst.msk [vmem:[#allocation2] sm:$0xff] %vm7850, %v7834
        %7852 = vst.msk [vmem:[#allocation2 + $0x8] sm:$0xff] %vm7850, %v7835
        %7853 = vst.msk [vmem:[#allocation2 + $0x10] sm:$0xff] %vm7850, %v7836
        %7854 = vst.msk [vmem:[#allocation2 + $0x18] sm:$0xff] %vm7850, %v7837
        %7855 = vst.msk [vmem:[#allocation2 + $0x20] sm:$0xff] %vm7850, %v7838
        %7856 = vst.msk [vmem:[#allocation2 + $0x28] sm:$0xff] %vm7850, %v7839
        %7857 = vst.msk [vmem:[#allocation2 + $0x30] sm:$0xff] %vm7850, %v7840
        %7858 = vst.msk [vmem:[#allocation2 + $0x38] sm:$0xff] %vm7850, %v7841
        %7859 = vst.msk [vmem:[#allocation2 + $0x40] sm:$0xff] %vm7850, %v7842
        %7860 = vst.msk [vmem:[#allocation2 + $0x48] sm:$0xff] %vm7850, %v7843
        %7861 = vst.msk [vmem:[#allocation2 + $0x50] sm:$0xff] %vm7850, %v7844
        %7862 = vst.msk [vmem:[#allocation2 + $0x58] sm:$0xff] %vm7850, %v7845
        %7863 = vst.msk [vmem:[#allocation2 + $0x60] sm:$0xff] %vm7850, %v7846
        %7864 = vst.msk [vmem:[#allocation2 + $0x68] sm:$0xff] %vm7850, %v7847
        %7865 = vst.msk [vmem:[#allocation2 + $0x70] sm:$0xff] %vm7850, %v7848
        %7866 = vst.msk [vmem:[#allocation2 + $0x78] sm:$0xff] %vm7850, %v7849
        %v7867 = vld [vmem:[#allocation2] ss:$8 sm:$0xf]
        %v7868 = vld [vmem:[#allocation2] ss:$8 sm:$0xf0]
        %v7869 = vor.u32 %v7867, %v7868
        %s7870 = scalar_lea.vmem [#allocation2], 64
        %v7871 = vld [vmem:[%s7870] ss:$8 sm:$0xf]
        %v7872 = vld [vmem:[%s7870] ss:$8 sm:$0xf0]
        %v7873 = vor.u32 %v7871, %v7872
        %v7874 = vpack.c.bf16 %v7873, %v7869
        %v7875 = vld [vmem:[#allocation36] sm:$0xf]
        %v7876 = vld [vmem:[#allocation36 + $0x4] sm:$0xf]
        %v7877 = vld [vmem:[#allocation36 + $0x8] sm:$0xf]
        %v7878 = vld [vmem:[#allocation36 + $0xc] sm:$0xf]
        %v7879 = vld [vmem:[#allocation36 + $0x10] sm:$0xf]
        %v7880 = vld [vmem:[#allocation36 + $0x14] sm:$0xf]
        %v7881 = vld [vmem:[#allocation36 + $0x18] sm:$0xf]
        %v7882 = vld [vmem:[#allocation36 + $0x1c] sm:$0xf]
        %v7883 = vld [vmem:[#allocation36 + $0x20] sm:$0xf]
        %v7884 = vld [vmem:[#allocation36 + $0x24] sm:$0xf]
        %s7885 = scalar_lea.vmem [#allocation2], 1
        %v7886 = vld [vmem:[%s7885] ss:$8 sm:$0xf]
        %v7887 = vld [vmem:[%s7885] ss:$8 sm:$0xf0]
        %v7888 = vor.u32 %v7886, %v7887
        %s7889 = scalar_lea.vmem [#allocation2], 65
        %v7890 = vld [vmem:[%s7889] ss:$8 sm:$0xf]
        %v7891 = vld [vmem:[%s7889] ss:$8 sm:$0xf0]
        %v7892 = vor.u32 %v7890, %v7891
        %v7893 = vpack.c.bf16 %v7892, %v7888
        %s7894 = scalar_lea.vmem [#allocation36], 40
        %v7895 = vld [vmem:[%s7894] sm:$0xf]
        %v7896 = vld [vmem:[%s7894 + $0x4] sm:$0xf]
        %v7897 = vld [vmem:[%s7894 + $0x8] sm:$0xf]
        %v7898 = vld [vmem:[%s7894 + $0xc] sm:$0xf]
        %v7899 = vld [vmem:[%s7894 + $0x10] sm:$0xf]
        %v7900 = vld [vmem:[%s7894 + $0x14] sm:$0xf]
        %v7901 = vld [vmem:[%s7894 + $0x18] sm:$0xf]
        %v7902 = vld [vmem:[%s7894 + $0x1c] sm:$0xf]
        %v7903 = vld [vmem:[%s7894 + $0x20] sm:$0xf]
        %v7904 = vld [vmem:[%s7894 + $0x24] sm:$0xf]
        %v7915 = vunpack.c.l.b16 %v7895
        %v7916 = vunpack.c.l.b16 %v7896
        %v7917 = vunpack.c.l.b16 %v7897
        %v7918 = vunpack.c.l.b16 %v7898
        %v7919 = vunpack.c.l.b16 %v7899
        %v7920 = vunpack.c.l.b16 %v7900
        %v7921 = vunpack.c.l.b16 %v7901
        %v7922 = vunpack.c.l.b16 %v7902
        %v7923 = vunpack.c.l.b16 %v7903
        %v7924 = vunpack.c.l.b16 %v7904
        %v7925 = vpack.c.b16 %v7916, %v7915
        %v7926 = vpack.c.b16 %v7918, %v7917
        %v7927 = vpack.c.b16 %v7920, %v7919
        %v7928 = vpack.c.b16 %v7922, %v7921
        %v7929 = vpack.c.b16 %v7924, %v7923
        %v7935 = vsel %vm7850, %v7893, 0
        %vm7937 = vcmask 1046528
        %vm7938 = vcmask 1047552
        %v7939 = vsel %vm7937, 4294967295, 65535
        %v7940 = vsel %vm7938, %v7939, 0
        %v7942 = vand.u32 %v7929, %v7940
        %7944 = vmatprep.subr.bf16.mxu0 0
        %7945 = vmatpush1.bf16.msra.mxu0 %v7925
        %7946 = vmatprep.subr.bf16.mxu0 0
        %7947 = vmatpush1.bf16.msra.mxu0 %v7926
        %7948 = vmatprep.subr.bf16.mxu0 0
        %7949 = vmatpush1.bf16.msra.mxu0 %v7927
        %7950 = vmatprep.subr.bf16.mxu0 0
        %7951 = vmatpush1.bf16.msra.mxu0 %v7928
        %7952 = vmatprep.subr.bf16.mxu0 0
        %7953 = vmatpush1.bf16.msra.mxu0 %v7942
        %7954 = vmatprep.subr.bf16.mxu0 0
        %7955 = vmatpush1.bf16.msra.mxu0 0
        %7956 = vmatprep.subr.bf16.mxu0 0
        %7957 = vmatpush1.bf16.msra.mxu0 0
        %7958 = vmatprep.subr.bf16.mxu0 0
        %7959 = vmatpush1.bf16.msra.mxu0 0
        %7960 = vmatprep.subr.bf16.mxu0 0
        %7961 = vmatpush1.bf16.msra.mxu0 0
        %7962 = vmatprep.subr.bf16.mxu0 0
        %7963 = vmatpush1.bf16.msra.mxu0 0
        %7964 = vmatprep.subr.bf16.mxu0 0
        %7965 = vmatpush1.bf16.msra.mxu0 0
        %7966 = vmatprep.subr.bf16.mxu0 0
        %7967 = vmatpush1.bf16.msra.mxu0 0
        %7968 = vmatprep.subr.bf16.mxu0 0
        %7969 = vmatpush1.bf16.msra.mxu0 0
        %7970 = vmatprep.subr.bf16.mxu0 0
        %7971 = vmatpush1.bf16.msra.mxu0 0
        %7972 = vmatprep.subr.bf16.mxu0 0
        %7973 = vmatpush1.bf16.msra.mxu0 0
        %7974 = vmatprep.subr.bf16.mxu0 0
        %7975 = vmatpush1.bf16.msra.mxu0 0
        %7976 = vmatprep.mubr.bf16.mxu0 0
        %7977 = vmatmul.mubr.bf16.gmra.mrb[0].mxu0 %v7935
        %v7978 = vpop.f32.mrb[0].mxu0
        %v7979 = vadd.f32 0.0, %v7978
        %v7980 = vpop.f32.mrb[0].mxu0
        %v7981 = vpop.f32.mrb[0].mxu0
        %v7982 = vadd.f32 0.0, %v7981
        %v7983 = vpop.f32.mrb[0].mxu0
        %7984 = vdwg.mxu0
        %v7995 = vunpack.c.l.b16 %v7875
        %v7996 = vunpack.c.l.b16 %v7876
        %v7997 = vunpack.c.l.b16 %v7877
        %v7998 = vunpack.c.l.b16 %v7878
        %v7999 = vunpack.c.l.b16 %v7879
        %v8000 = vunpack.c.l.b16 %v7880
        %v8001 = vunpack.c.l.b16 %v7881
        %v8002 = vunpack.c.l.b16 %v7882
        %v8003 = vunpack.c.l.b16 %v7883
        %v8004 = vunpack.c.l.b16 %v7884
        %v8005 = vpack.c.b16 %v7996, %v7995
        %v8006 = vpack.c.b16 %v7998, %v7997
        %v8007 = vpack.c.b16 %v8000, %v7999
        %v8008 = vpack.c.b16 %v8002, %v8001
        %v8009 = vpack.c.b16 %v8004, %v8003
        %v8015 = vsel %vm7850, %v7874, 0
        %v8018 = vand.u32 %v8009, %v7940
        %8020 = vmatprep.subr.bf16.mxu0 0
        %8021 = vmatpush1.bf16.msra.mxu0 %v8005
        %8022 = vmatprep.subr.bf16.mxu0 0
        %8023 = vmatpush1.bf16.msra.mxu0 %v8006
        %8024 = vmatprep.subr.bf16.mxu0 0
        %8025 = vmatpush1.bf16.msra.mxu0 %v8007
        %8026 = vmatprep.subr.bf16.mxu0 0
        %8027 = vmatpush1.bf16.msra.mxu0 %v8008
        %8028 = vmatprep.subr.bf16.mxu0 0
        %8029 = vmatpush1.bf16.msra.mxu0 %v8018
        %8030 = vmatprep.subr.bf16.mxu0 0
        %8031 = vmatpush1.bf16.msra.mxu0 0
        %8032 = vmatprep.subr.bf16.mxu0 0
        %8033 = vmatpush1.bf16.msra.mxu0 0
        %8034 = vmatprep.subr.bf16.mxu0 0
        %8035 = vmatpush1.bf16.msra.mxu0 0
        %8036 = vmatprep.subr.bf16.mxu0 0
        %8037 = vmatpush1.bf16.msra.mxu0 0
        %8038 = vmatprep.subr.bf16.mxu0 0
        %8039 = vmatpush1.bf16.msra.mxu0 0
        %8040 = vmatprep.subr.bf16.mxu0 0
        %8041 = vmatpush1.bf16.msra.mxu0 0
        %8042 = vmatprep.subr.bf16.mxu0 0
        %8043 = vmatpush1.bf16.msra.mxu0 0
        %8044 = vmatprep.subr.bf16.mxu0 0
        %8045 = vmatpush1.bf16.msra.mxu0 0
        %8046 = vmatprep.subr.bf16.mxu0 0
        %8047 = vmatpush1.bf16.msra.mxu0 0
        %8048 = vmatprep.subr.bf16.mxu0 0
        %8049 = vmatpush1.bf16.msra.mxu0 0
        %8050 = vmatprep.subr.bf16.mxu0 0
        %8051 = vmatpush1.bf16.msra.mxu0 0
        %8052 = vmatprep.mubr.bf16.mxu0 0
        %8053 = vmatmul.mubr.bf16.gmra.mrb[0].mxu0 %v8015
        %v8054 = vpop.f32.mrb[0].mxu0
        %v8055 = vadd.f32 %v7979, %v8054
        %v8056 = vpop.f32.mrb[0].mxu0
        %v8057 = vpop.f32.mrb[0].mxu0
        %v8058 = vadd.f32 %v7982, %v8057
        %v8059 = vpop.f32.mrb[0].mxu0
        %8060 = vdwg.mxu0
        %s8061 = scalar_lea.vmem [#allocation2], 2
        %v8062 = vld [vmem:[%s8061] ss:$8 sm:$0xf]
        %v8063 = vld [vmem:[%s8061] ss:$8 sm:$0xf0]
        %v8064 = vor.u32 %v8062, %v8063
        %s8065 = scalar_lea.vmem [#allocation2], 66
        %v8066 = vld [vmem:[%s8065] ss:$8 sm:$0xf]
        %v8067 = vld [vmem:[%s8065] ss:$8 sm:$0xf0]
        %v8068 = vor.u32 %v8066, %v8067
        %v8069 = vpack.c.bf16 %v8068, %v8064
        %s8070 = scalar_lea.vmem [#allocation36], 80
        %v8071 = vld [vmem:[%s8070] sm:$0xf]
        %v8072 = vld [vmem:[%s8070 + $0x4] sm:$0xf]
        %v8073 = vld [vmem:[%s8070 + $0x8] sm:$0xf]
        %v8074 = vld [vmem:[%s8070 + $0xc] sm:$0xf]
        %v8075 = vld [vmem:[%s8070 + $0x10] sm:$0xf]
        %v8076 = vld [vmem:[%s8070 + $0x14] sm:$0xf]
        %v8077 = vld [vmem:[%s8070 + $0x18] sm:$0xf]
        %v8078 = vld [vmem:[%s8070 + $0x1c] sm:$0xf]
        %v8079 = vld [vmem:[%s8070 + $0x20] sm:$0xf]
        %v8080 = vld [vmem:[%s8070 + $0x24] sm:$0xf]
        %v8091 = vunpack.c.l.b16 %v8071
        %v8092 = vunpack.c.l.b16 %v8072
        %v8093 = vunpack.c.l.b16 %v8073
        %v8094 = vunpack.c.l.b16 %v8074
        %v8095 = vunpack.c.l.b16 %v8075
        %v8096 = vunpack.c.l.b16 %v8076
        %v8097 = vunpack.c.l.b16 %v8077
        %v8098 = vunpack.c.l.b16 %v8078
        %v8099 = vunpack.c.l.b16 %v8079
        %v8100 = vunpack.c.l.b16 %v8080
        %v8101 = vpack.c.b16 %v8092, %v8091
        %v8102 = vpack.c.b16 %v8094, %v8093
        %v8103 = vpack.c.b16 %v8096, %v8095
        %v8104 = vpack.c.b16 %v8098, %v8097
        %v8105 = vpack.c.b16 %v8100, %v8099
        %v8111 = vsel %vm7850, %v8069, 0
        %v8114 = vand.u32 %v8105, %v7940
        %8116 = vmatprep.subr.bf16.mxu0 0
        %8117 = vmatpush1.bf16.msra.mxu0 %v8101
        %8118 = vmatprep.subr.bf16.mxu0 0
        %8119 = vmatpush1.bf16.msra.mxu0 %v8102
        %8120 = vmatprep.subr.bf16.mxu0 0
        %8121 = vmatpush1.bf16.msra.mxu0 %v8103
        %8122 = vmatprep.subr.bf16.mxu0 0
        %8123 = vmatpush1.bf16.msra.mxu0 %v8104
        %8124 = vmatprep.subr.bf16.mxu0 0
        %8125 = vmatpush1.bf16.msra.mxu0 %v8114
        %8126 = vmatprep.subr.bf16.mxu0 0
        %8127 = vmatpush1.bf16.msra.mxu0 0
        %8128 = vmatprep.subr.bf16.mxu0 0
        %8129 = vmatpush1.bf16.msra.mxu0 0
        %8130 = vmatprep.subr.bf16.mxu0 0
        %8131 = vmatpush1.bf16.msra.mxu0 0
        %8132 = vmatprep.subr.bf16.mxu0 0
        %8133 = vmatpush1.bf16.msra.mxu0 0
        %8134 = vmatprep.subr.bf16.mxu0 0
        %8135 = vmatpush1.bf16.msra.mxu0 0
        %8136 = vmatprep.subr.bf16.mxu0 0
        %8137 = vmatpush1.bf16.msra.mxu0 0
        %8138 = vmatprep.subr.bf16.mxu0 0
        %8139 = vmatpush1.bf16.msra.mxu0 0
        %8140 = vmatprep.subr.bf16.mxu0 0
        %8141 = vmatpush1.bf16.msra.mxu0 0
        %8142 = vmatprep.subr.bf16.mxu0 0
        %8143 = vmatpush1.bf16.msra.mxu0 0
        %8144 = vmatprep.subr.bf16.mxu0 0
        %8145 = vmatpush1.bf16.msra.mxu0 0
        %8146 = vmatprep.subr.bf16.mxu0 0
        %8147 = vmatpush1.bf16.msra.mxu0 0
        %8148 = vmatprep.mubr.bf16.mxu0 0
        %8149 = vmatmul.mubr.bf16.gmra.mrb[0].mxu0 %v8111
        %v8150 = vpop.f32.mrb[0].mxu0
        %v8151 = vadd.f32 0.0, %v8150
        %v8152 = vpop.f32.mrb[0].mxu0
        %v8153 = vpop.f32.mrb[0].mxu0
        %v8154 = vadd.f32 0.0, %v8153
        %v8155 = vpop.f32.mrb[0].mxu0
        %8156 = vdwg.mxu0
        %v8157 = vadd.f32 %v8055, %v8151
        %v8158 = vadd.f32 %v8058, %v8154
        %s8159 = scalar_lea.vmem [#allocation2], 3
        %v8160 = vld [vmem:[%s8159] ss:$8 sm:$0xf]
        %v8161 = vld [vmem:[%s8159] ss:$8 sm:$0xf0]
        %v8162 = vor.u32 %v8160, %v8161
        %s8163 = scalar_lea.vmem [#allocation2], 67
        %v8164 = vld [vmem:[%s8163] ss:$8 sm:$0xf]
        %v8165 = vld [vmem:[%s8163] ss:$8 sm:$0xf0]
        %v8166 = vor.u32 %v8164, %v8165
        %v8167 = vpack.c.bf16 %v8166, %v8162
        %s8168 = scalar_lea.vmem [#allocation36], 120
        %v8169 = vld [vmem:[%s8168] sm:$0xf]
        %v8170 = vld [vmem:[%s8168 + $0x4] sm:$0xf]
        %v8171 = vld [vmem:[%s8168 + $0x8] sm:$0xf]
        %v8172 = vld [vmem:[%s8168 + $0xc] sm:$0xf]
        %v8173 = vld [vmem:[%s8168 + $0x10] sm:$0xf]
        %v8174 = vld [vmem:[%s8168 + $0x14] sm:$0xf]
        %v8175 = vld [vmem:[%s8168 + $0x18] sm:$0xf]
        %v8176 = vld [vmem:[%s8168 + $0x1c] sm:$0xf]
        %v8177 = vld [vmem:[%s8168 + $0x20] sm:$0xf]
        %v8178 = vld [vmem:[%s8168 + $0x24] sm:$0xf]
        %v8189 = vunpack.c.l.b16 %v8169
        %v8190 = vunpack.c.l.b16 %v8170
        %v8191 = vunpack.c.l.b16 %v8171
        %v8192 = vunpack.c.l.b16 %v8172
        %v8193 = vunpack.c.l.b16 %v8173
        %v8194 = vunpack.c.l.b16 %v8174
        %v8195 = vunpack.c.l.b16 %v8175
        %v8196 = vunpack.c.l.b16 %v8176
        %v8197 = vunpack.c.l.b16 %v8177
        %v8198 = vunpack.c.l.b16 %v8178
        %v8199 = vpack.c.b16 %v8190, %v8189
        %v8200 = vpack.c.b16 %v8192, %v8191
        %v8201 = vpack.c.b16 %v8194, %v8193
        %v8202 = vpack.c.b16 %v8196, %v8195
        %v8203 = vpack.c.b16 %v8198, %v8197
        %v8209 = vsel %vm7850, %v8167, 0
        %v8212 = vand.u32 %v8203, %v7940
        %8214 = vmatprep.subr.bf16.mxu0 0
        %8215 = vmatpush1.bf16.msra.mxu0 %v8199
        %8216 = vmatprep.subr.bf16.mxu0 0
        %8217 = vmatpush1.bf16.msra.mxu0 %v8200
        %8218 = vmatprep.subr.bf16.mxu0 0
        %8219 = vmatpush1.bf16.msra.mxu0 %v8201
        %8220 = vmatprep.subr.bf16.mxu0 0
        %8221 = vmatpush1.bf16.msra.mxu0 %v8202
        %8222 = vmatprep.subr.bf16.mxu0 0
        %8223 = vmatpush1.bf16.msra.mxu0 %v8212
        %8224 = vmatprep.subr.bf16.mxu0 0
        %8225 = vmatpush1.bf16.msra.mxu0 0
        %8226 = vmatprep.subr.bf16.mxu0 0
        %8227 = vmatpush1.bf16.msra.mxu0 0
        %8228 = vmatprep.subr.bf16.mxu0 0
        %8229 = vmatpush1.bf16.msra.mxu0 0
        %8230 = vmatprep.subr.bf16.mxu0 0
        %8231 = vmatpush1.bf16.msra.mxu0 0
        %8232 = vmatprep.subr.bf16.mxu0 0
        %8233 = vmatpush1.bf16.msra.mxu0 0
        %8234 = vmatprep.subr.bf16.mxu0 0
        %8235 = vmatpush1.bf16.msra.mxu0 0
        %8236 = vmatprep.subr.bf16.mxu0 0
        %8237 = vmatpush1.bf16.msra.mxu0 0
        %8238 = vmatprep.subr.bf16.mxu0 0
        %8239 = vmatpush1.bf16.msra.mxu0 0
        %8240 = vmatprep.subr.bf16.mxu0 0
        %8241 = vmatpush1.bf16.msra.mxu0 0
        %8242 = vmatprep.subr.bf16.mxu0 0
        %8243 = vmatpush1.bf16.msra.mxu0 0
        %8244 = vmatprep.subr.bf16.mxu0 0
        %8245 = vmatpush1.bf16.msra.mxu0 0
        %8246 = vmatprep.mubr.bf16.mxu0 0
        %8247 = vmatmul.mubr.bf16.gmra.mrb[0].mxu0 %v8209
        %v8248 = vpop.f32.mrb[0].mxu0
        %v8249 = vadd.f32 0.0, %v8248
        %v8250 = vpop.f32.mrb[0].mxu0
        %v8251 = vpop.f32.mrb[0].mxu0
        %v8252 = vadd.f32 0.0, %v8251
        %v8253 = vpop.f32.mrb[0].mxu0
        %8254 = vdwg.mxu0
        %v8255 = vadd.f32 %v8157, %v8249
        %v8256 = vadd.f32 %v8158, %v8252
        %s8257 = scalar_lea.vmem [#allocation2], 4
        %v8258 = vld [vmem:[%s8257] ss:$8 sm:$0xf]
        %v8259 = vld [vmem:[%s8257] ss:$8 sm:$0xf0]
        %v8260 = vor.u32 %v8258, %v8259
        %s8261 = scalar_lea.vmem [#allocation2], 68
        %v8262 = vld [vmem:[%s8261] ss:$8 sm:$0xf]
        %v8263 = vld [vmem:[%s8261] ss:$8 sm:$0xf0]
        %v8264 = vor.u32 %v8262, %v8263
        %v8265 = vpack.c.bf16 %v8264, %v8260
        %s8266 = scalar_lea.vmem [#allocation36], 160
        %v8267 = vld [vmem:[%s8266] sm:$0xf]
        %v8268 = vld [vmem:[%s8266 + $0x4] sm:$0xf]
        %v8269 = vld [vmem:[%s8266 + $0x8] sm:$0xf]
        %v8270 = vld [vmem:[%s8266 + $0xc] sm:$0xf]
        %v8271 = vld [vmem:[%s8266 + $0x10] sm:$0xf]
        %v8272 = vld [vmem:[%s8266 + $0x14] sm:$0xf]
        %v8273 = vld [vmem:[%s8266 + $0x18] sm:$0xf]
        %v8274 = vld [vmem:[%s8266 + $0x1c] sm:$0xf]
        %v8275 = vld [vmem:[%s8266 + $0x20] sm:$0xf]
        %v8276 = vld [vmem:[%s8266 + $0x24] sm:$0xf]
        %v8287 = vunpack.c.l.b16 %v8267
        %v8288 = vunpack.c.l.b16 %v8268
        %v8289 = vunpack.c.l.b16 %v8269
        %v8290 = vunpack.c.l.b16 %v8270
        %v8291 = vunpack.c.l.b16 %v8271
        %v8292 = vunpack.c.l.b16 %v8272
        %v8293 = vunpack.c.l.b16 %v8273
        %v8294 = vunpack.c.l.b16 %v8274
        %v8295 = vunpack.c.l.b16 %v8275
        %v8296 = vunpack.c.l.b16 %v8276
        %v8297 = vpack.c.b16 %v8288, %v8287
        %v8298 = vpack.c.b16 %v8290, %v8289
        %v8299 = vpack.c.b16 %v8292, %v8291
        %v8300 = vpack.c.b16 %v8294, %v8293
        %v8301 = vpack.c.b16 %v8296, %v8295
        %v8307 = vsel %vm7850, %v8265, 0
        %v8310 = vand.u32 %v8301, %v7940
        %8312 = vmatprep.subr.bf16.mxu0 0
        %8313 = vmatpush1.bf16.msra.mxu0 %v8297
        %8314 = vmatprep.subr.bf16.mxu0 0
        %8315 = vmatpush1.bf16.msra.mxu0 %v8298
        %8316 = vmatprep.subr.bf16.mxu0 0
        %8317 = vmatpush1.bf16.msra.mxu0 %v8299
        %8318 = vmatprep.subr.bf16.mxu0 0
        %8319 = vmatpush1.bf16.msra.mxu0 %v8300
        %8320 = vmatprep.subr.bf16.mxu0 0
        %8321 = vmatpush1.bf16.msra.mxu0 %v8310
        %8322 = vmatprep.subr.bf16.mxu0 0
        %8323 = vmatpush1.bf16.msra.mxu0 0
        %8324 = vmatprep.subr.bf16.mxu0 0
        %8325 = vmatpush1.bf16.msra.mxu0 0
        %8326 = vmatprep.subr.bf16.mxu0 0
        %8327 = vmatpush1.bf16.msra.mxu0 0
        %8328 = vmatprep.subr.bf16.mxu0 0
        %8329 = vmatpush1.bf16.msra.mxu0 0
        %8330 = vmatprep.subr.bf16.mxu0 0
        %8331 = vmatpush1.bf16.msra.mxu0 0
        %8332 = vmatprep.subr.bf16.mxu0 0
        %8333 = vmatpush1.bf16.msra.mxu0 0
        %8334 = vmatprep.subr.bf16.mxu0 0
        %8335 = vmatpush1.bf16.msra.mxu0 0
        %8336 = vmatprep.subr.bf16.mxu0 0
        %8337 = vmatpush1.bf16.msra.mxu0 0
        %8338 = vmatprep.subr.bf16.mxu0 0
        %8339 = vmatpush1.bf16.msra.mxu0 0
        %8340 = vmatprep.subr.bf16.mxu0 0
        %8341 = vmatpush1.bf16.msra.mxu0 0
        %8342 = vmatprep.subr.bf16.mxu0 0
        %8343 = vmatpush1.bf16.msra.mxu0 0
        %8344 = vmatprep.mubr.bf16.mxu0 0
        %8345 = vmatmul.mubr.bf16.gmra.mrb[0].mxu0 %v8307
        %v8346 = vpop.f32.mrb[0].mxu0
        %v8347 = vadd.f32 0.0, %v8346
        %v8348 = vpop.f32.mrb[0].mxu0
        %v8349 = vpop.f32.mrb[0].mxu0
        %v8350 = vadd.f32 0.0, %v8349
        %v8351 = vpop.f32.mrb[0].mxu0
        %8352 = vdwg.mxu0
        %v8353 = vadd.f32 %v8255, %v8347
        %v8354 = vadd.f32 %v8256, %v8350
        %s8355 = scalar_lea.vmem [#allocation2], 5
        %v8356 = vld [vmem:[%s8355] ss:$8 sm:$0xf]
        %v8357 = vld [vmem:[%s8355] ss:$8 sm:$0xf0]
        %v8358 = vor.u32 %v8356, %v8357
        %s8359 = scalar_lea.vmem [#allocation2], 69
        %v8360 = vld [vmem:[%s8359] ss:$8 sm:$0xf]
        %v8361 = vld [vmem:[%s8359] ss:$8 sm:$0xf0]
        %v8362 = vor.u32 %v8360, %v8361
        %v8363 = vpack.c.bf16 %v8362, %v8358
        %s8364 = scalar_lea.vmem [#allocation36], 200
        %v8365 = vld [vmem:[%s8364] sm:$0xf]
        %v8366 = vld [vmem:[%s8364 + $0x4] sm:$0xf]
        %v8367 = vld [vmem:[%s8364 + $0x8] sm:$0xf]
        %v8368 = vld [vmem:[%s8364 + $0xc] sm:$0xf]
        %v8369 = vld [vmem:[%s8364 + $0x10] sm:$0xf]
        %v8370 = vld [vmem:[%s8364 + $0x14] sm:$0xf]
        %v8371 = vld [vmem:[%s8364 + $0x18] sm:$0xf]
        %v8372 = vld [vmem:[%s8364 + $0x1c] sm:$0xf]
        %v8373 = vld [vmem:[%s8364 + $0x20] sm:$0xf]
        %v8374 = vld [vmem:[%s8364 + $0x24] sm:$0xf]
        %v8385 = vunpack.c.l.b16 %v8365
        %v8386 = vunpack.c.l.b16 %v8366
        %v8387 = vunpack.c.l.b16 %v8367
        %v8388 = vunpack.c.l.b16 %v8368
        %v8389 = vunpack.c.l.b16 %v8369
        %v8390 = vunpack.c.l.b16 %v8370
        %v8391 = vunpack.c.l.b16 %v8371
        %v8392 = vunpack.c.l.b16 %v8372
        %v8393 = vunpack.c.l.b16 %v8373
        %v8394 = vunpack.c.l.b16 %v8374
        %v8395 = vpack.c.b16 %v8386, %v8385
        %v8396 = vpack.c.b16 %v8388, %v8387
        %v8397 = vpack.c.b16 %v8390, %v8389
        %v8398 = vpack.c.b16 %v8392, %v8391
        %v8399 = vpack.c.b16 %v8394, %v8393
        %v8405 = vsel %vm7850, %v8363, 0
        %v8408 = vand.u32 %v8399, %v7940
        %8410 = vmatprep.subr.bf16.mxu0 0
        %8411 = vmatpush1.bf16.msra.mxu0 %v8395
        %8412 = vmatprep.subr.bf16.mxu0 0
        %8413 = vmatpush1.bf16.msra.mxu0 %v8396
        %8414 = vmatprep.subr.bf16.mxu0 0
        %8415 = vmatpush1.bf16.msra.mxu0 %v8397
        %8416 = vmatprep.subr.bf16.mxu0 0
        %8417 = vmatpush1.bf16.msra.mxu0 %v8398
        %8418 = vmatprep.subr.bf16.mxu0 0
        %8419 = vmatpush1.bf16.msra.mxu0 %v8408
        %8420 = vmatprep.subr.bf16.mxu0 0
        %8421 = vmatpush1.bf16.msra.mxu0 0
        %8422 = vmatprep.subr.bf16.mxu0 0
        %8423 = vmatpush1.bf16.msra.mxu0 0
        %8424 = vmatprep.subr.bf16.mxu0 0
        %8425 = vmatpush1.bf16.msra.mxu0 0
        %8426 = vmatprep.subr.bf16.mxu0 0
        %8427 = vmatpush1.bf16.msra.mxu0 0
        %8428 = vmatprep.subr.bf16.mxu0 0
        %8429 = vmatpush1.bf16.msra.mxu0 0
        %8430 = vmatprep.subr.bf16.mxu0 0
        %8431 = vmatpush1.bf16.msra.mxu0 0
        %8432 = vmatprep.subr.bf16.mxu0 0
        %8433 = vmatpush1.bf16.msra.mxu0 0
        %8434 = vmatprep.subr.bf16.mxu0 0
        %8435 = vmatpush1.bf16.msra.mxu0 0
        %8436 = vmatprep.subr.bf16.mxu0 0
        %8437 = vmatpush1.bf16.msra.mxu0 0
        %8438 = vmatprep.subr.bf16.mxu0 0
        %8439 = vmatpush1.bf16.msra.mxu0 0
        %8440 = vmatprep.subr.bf16.mxu0 0
        %8441 = vmatpush1.bf16.msra.mxu0 0
        %8442 = vmatprep.mubr.bf16.mxu0 0
        %8443 = vmatmul.mubr.bf16.gmra.mrb[0].mxu0 %v8405
        %v8444 = vpop.f32.mrb[0].mxu0
        %v8445 = vadd.f32 0.0, %v8444
        %v8446 = vpop.f32.mrb[0].mxu0
        %v8447 = vpop.f32.mrb[0].mxu0
        %v8448 = vadd.f32 0.0, %v8447
        %v8449 = vpop.f32.mrb[0].mxu0
        %8450 = vdwg.mxu0
        %v8451 = vadd.f32 %v8353, %v8445
        %v8452 = vadd.f32 %v8354, %v8448
        %s8453 = scalar_lea.vmem [#allocation2], 6
        %v8454 = vld [vmem:[%s8453] ss:$8 sm:$0xf]
        %v8455 = vld [vmem:[%s8453] ss:$8 sm:$0xf0]
        %v8456 = vor.u32 %v8454, %v8455
        %s8457 = scalar_lea.vmem [#allocation2], 70
        %v8458 = vld [vmem:[%s8457] ss:$8 sm:$0xf]
        %v8459 = vld [vmem:[%s8457] ss:$8 sm:$0xf0]
        %v8460 = vor.u32 %v8458, %v8459
        %v8461 = vpack.c.bf16 %v8460, %v8456
        %s8462 = scalar_lea.vmem [#allocation36], 240
        %v8463 = vld [vmem:[%s8462] sm:$0xf]
        %v8464 = vld [vmem:[%s8462 + $0x4] sm:$0xf]
        %v8465 = vld [vmem:[%s8462 + $0x8] sm:$0xf]
        %v8466 = vld [vmem:[%s8462 + $0xc] sm:$0xf]
        %v8467 = vld [vmem:[%s8462 + $0x10] sm:$0xf]
        %v8468 = vld [vmem:[%s8462 + $0x14] sm:$0xf]
        %v8469 = vld [vmem:[%s8462 + $0x18] sm:$0xf]
        %v8470 = vld [vmem:[%s8462 + $0x1c] sm:$0xf]
        %v8471 = vld [vmem:[%s8462 + $0x20] sm:$0xf]
        %v8472 = vld [vmem:[%s8462 + $0x24] sm:$0xf]
        %v8483 = vunpack.c.l.b16 %v8463
        %v8484 = vunpack.c.l.b16 %v8464
        %v8485 = vunpack.c.l.b16 %v8465
        %v8486 = vunpack.c.l.b16 %v8466
        %v8487 = vunpack.c.l.b16 %v8467
        %v8488 = vunpack.c.l.b16 %v8468
        %v8489 = vunpack.c.l.b16 %v8469
        %v8490 = vunpack.c.l.b16 %v8470
        %v8491 = vunpack.c.l.b16 %v8471
        %v8492 = vunpack.c.l.b16 %v8472
        %v8493 = vpack.c.b16 %v8484, %v8483
        %v8494 = vpack.c.b16 %v8486, %v8485
        %v8495 = vpack.c.b16 %v8488, %v8487
        %v8496 = vpack.c.b16 %v8490, %v8489
        %v8497 = vpack.c.b16 %v8492, %v8491
        %v8503 = vsel %vm7850, %v8461, 0
        %v8506 = vand.u32 %v8497, %v7940
        %8508 = vmatprep.subr.bf16.mxu0 0
        %8509 = vmatpush1.bf16.msra.mxu0 %v8493
        %8510 = vmatprep.subr.bf16.mxu0 0
        %8511 = vmatpush1.bf16.msra.mxu0 %v8494
        %8512 = vmatprep.subr.bf16.mxu0 0
        %8513 = vmatpush1.bf16.msra.mxu0 %v8495
        %8514 = vmatprep.subr.bf16.mxu0 0
        %8515 = vmatpush1.bf16.msra.mxu0 %v8496
        %8516 = vmatprep.subr.bf16.mxu0 0
        %8517 = vmatpush1.bf16.msra.mxu0 %v8506
        %8518 = vmatprep.subr.bf16.mxu0 0
        %8519 = vmatpush1.bf16.msra.mxu0 0
        %8520 = vmatprep.subr.bf16.mxu0 0
        %8521 = vmatpush1.bf16.msra.mxu0 0
        %8522 = vmatprep.subr.bf16.mxu0 0
        %8523 = vmatpush1.bf16.msra.mxu0 0
        %8524 = vmatprep.subr.bf16.mxu0 0
        %8525 = vmatpush1.bf16.msra.mxu0 0
        %8526 = vmatprep.subr.bf16.mxu0 0
        %8527 = vmatpush1.bf16.msra.mxu0 0
        %8528 = vmatprep.subr.bf16.mxu0 0
        %8529 = vmatpush1.bf16.msra.mxu0 0
        %8530 = vmatprep.subr.bf16.mxu0 0
        %8531 = vmatpush1.bf16.msra.mxu0 0
        %8532 = vmatprep.subr.bf16.mxu0 0
        %8533 = vmatpush1.bf16.msra.mxu0 0
        %8534 = vmatprep.subr.bf16.mxu0 0
        %8535 = vmatpush1.bf16.msra.mxu0 0
        %8536 = vmatprep.subr.bf16.mxu0 0
        %8537 = vmatpush1.bf16.msra.mxu0 0
        %8538 = vmatprep.subr.bf16.mxu0 0
        %8539 = vmatpush1.bf16.msra.mxu0 0
        %8540 = vmatprep.mubr.bf16.mxu0 0
        %8541 = vmatmul.mubr.bf16.gmra.mrb[0].mxu0 %v8503
        %v8542 = vpop.f32.mrb[0].mxu0
        %v8543 = vadd.f32 0.0, %v8542
        %v8544 = vpop.f32.mrb[0].mxu0
        %v8545 = vpop.f32.mrb[0].mxu0
        %v8546 = vadd.f32 0.0, %v8545
        %v8547 = vpop.f32.mrb[0].mxu0
        %8548 = vdwg.mxu0
        %v8549 = vadd.f32 %v8451, %v8543
        %v8550 = vadd.f32 %v8452, %v8546
        %s8551 = scalar_lea.vmem [#allocation2], 7
        %v8552 = vld [vmem:[%s8551] ss:$8 sm:$0xf]
        %v8553 = vld [vmem:[%s8551] ss:$8 sm:$0xf0]
        %v8554 = vor.u32 %v8552, %v8553
        %s8555 = scalar_lea.vmem [#allocation2], 71
        %v8556 = vld [vmem:[%s8555] ss:$8 sm:$0xf]
        %v8557 = vld [vmem:[%s8555] ss:$8 sm:$0xf0]
        %v8558 = vor.u32 %v8556, %v8557
        %v8559 = vpack.c.bf16 %v8558, %v8554
        %s8560 = scalar_lea.vmem [#allocation36], 280
        %v8561 = vld [vmem:[%s8560] sm:$0xf]
        %v8562 = vld [vmem:[%s8560 + $0x4] sm:$0xf]
        %v8563 = vld [vmem:[%s8560 + $0x8] sm:$0xf]
        %v8564 = vld [vmem:[%s8560 + $0xc] sm:$0xf]
        %v8565 = vld [vmem:[%s8560 + $0x10] sm:$0xf]
        %v8566 = vld [vmem:[%s8560 + $0x14] sm:$0xf]
        %v8567 = vld [vmem:[%s8560 + $0x18] sm:$0xf]
        %v8568 = vld [vmem:[%s8560 + $0x1c] sm:$0xf]
        %v8569 = vld [vmem:[%s8560 + $0x20] sm:$0xf]
        %v8570 = vld [vmem:[%s8560 + $0x24] sm:$0xf]
        %v8581 = vunpack.c.l.b16 %v8561
        %v8582 = vunpack.c.l.b16 %v8562
        %v8583 = vunpack.c.l.b16 %v8563
        %v8584 = vunpack.c.l.b16 %v8564
        %v8585 = vunpack.c.l.b16 %v8565
        %v8586 = vunpack.c.l.b16 %v8566
        %v8587 = vunpack.c.l.b16 %v8567
        %v8588 = vunpack.c.l.b16 %v8568
        %v8589 = vunpack.c.l.b16 %v8569
        %v8590 = vunpack.c.l.b16 %v8570
        %v8591 = vpack.c.b16 %v8582, %v8581
        %v8592 = vpack.c.b16 %v8584, %v8583
        %v8593 = vpack.c.b16 %v8586, %v8585
        %v8594 = vpack.c.b16 %v8588, %v8587
        %v8595 = vpack.c.b16 %v8590, %v8589
        %v8601 = vsel %vm7850, %v8559, 0
        %v8604 = vand.u32 %v8595, %v7940
        %8606 = vmatprep.subr.bf16.mxu0 0
        %8607 = vmatpush1.bf16.msra.mxu0 %v8591
        %8608 = vmatprep.subr.bf16.mxu0 0
        %8609 = vmatpush1.bf16.msra.mxu0 %v8592
        %8610 = vmatprep.subr.bf16.mxu0 0
        %8611 = vmatpush1.bf16.msra.mxu0 %v8593
        %8612 = vmatprep.subr.bf16.mxu0 0
        %8613 = vmatpush1.bf16.msra.mxu0 %v8594
        %8614 = vmatprep.subr.bf16.mxu0 0
        %8615 = vmatpush1.bf16.msra.mxu0 %v8604
        %8616 = vmatprep.subr.bf16.mxu0 0
        %8617 = vmatpush1.bf16.msra.mxu0 0
        %8618 = vmatprep.subr.bf16.mxu0 0
        %8619 = vmatpush1.bf16.msra.mxu0 0
        %8620 = vmatprep.subr.bf16.mxu0 0
        %8621 = vmatpush1.bf16.msra.mxu0 0
        %8622 = vmatprep.subr.bf16.mxu0 0
        %8623 = vmatpush1.bf16.msra.mxu0 0
        %8624 = vmatprep.subr.bf16.mxu0 0
        %8625 = vmatpush1.bf16.msra.mxu0 0
        %8626 = vmatprep.subr.bf16.mxu0 0
        %8627 = vmatpush1.bf16.msra.mxu0 0
        %8628 = vmatprep.subr.bf16.mxu0 0
        %8629 = vmatpush1.bf16.msra.mxu0 0
        %8630 = vmatprep.subr.bf16.mxu0 0
        %8631 = vmatpush1.bf16.msra.mxu0 0
        %8632 = vmatprep.subr.bf16.mxu0 0
        %8633 = vmatpush1.bf16.msra.mxu0 0
        %8634 = vmatprep.subr.bf16.mxu0 0
        %8635 = vmatpush1.bf16.msra.mxu0 0
        %8636 = vmatprep.subr.bf16.mxu0 0
        %8637 = vmatpush1.bf16.msra.mxu0 0
        %8638 = vmatprep.mubr.bf16.mxu0 0
        %8639 = vmatmul.mubr.bf16.gmra.mrb[0].mxu0 %v8601
        %v8640 = vpop.f32.mrb[0].mxu0
        %v8641 = vadd.f32 0.0, %v8640
        %v8642 = vpop.f32.mrb[0].mxu0
        %v8643 = vpop.f32.mrb[0].mxu0
        %v8644 = vadd.f32 0.0, %v8643
        %v8645 = vpop.f32.mrb[0].mxu0
        %8646 = vdwg.mxu0
        %v8647 = vadd.f32 %v8549, %v8641
        %v8648 = vadd.f32 %v8550, %v8644
        %v8649 = vld [vmem:[#allocation37] sm:$0x1]
        %v8651 = vlaneseq
        %v8652 = vshrl.u32 %v8651, 7
        %v8653 = vsub.s32 0, %v8652
        %v8654 = vrot.slane %v8649, %v8653
        %v8656 = vadd.f32 %v8647, %v8654
        %v8657 = vadd.f32 %v8648, %v8654
        %v8658 = vpack.c.bf16 %v8657, %v8656
        %v8659 = vmul.bf16 %v8658, 1009007652
        %v8660 = vmax.bf16 %v8658, %v8659
        %v8661 = vld [vmem:[%s1394] sm:$0xff]
        %v8662 = vld [vmem:[%s1394 + $0x8] sm:$0xff]
        %v8663 = vld [vmem:[%s1394 + $0x10] sm:$0xff]
        %v8664 = vld [vmem:[%s1394 + $0x18] sm:$0xff]
        %v8665 = vld [vmem:[#allocation39] sm:$0xff]
        %v8666 = vld [vmem:[#allocation39 + $0x8] sm:$0xff]
        %v8667 = vld [vmem:[#allocation39 + $0x10] sm:$0xff]
        %v8668 = vld [vmem:[#allocation39 + $0x18] sm:$0xff]
        %v8669 = vld [vmem:[#allocation39 + $0x20] sm:$0xff]
        %v8670 = vld [vmem:[#allocation39 + $0x28] sm:$0xff]
        %v8671 = vld [vmem:[#allocation39 + $0x30] sm:$0xff]
        %v8672 = vld [vmem:[#allocation39 + $0x38] sm:$0xff]
        %v8673 = vld [vmem:[#allocation39 + $0x40] sm:$0xff]
        %v8674 = vld [vmem:[#allocation39 + $0x48] sm:$0xff]
        %v8675 = vld [vmem:[#allocation39 + $0x50] sm:$0xff]
        %v8676 = vld [vmem:[#allocation39 + $0x58] sm:$0xff]
        %v8677 = vld [vmem:[#allocation39 + $0x60] sm:$0xff]
        %v8678 = vld [vmem:[#allocation39 + $0x68] sm:$0xff]
        %v8679 = vld [vmem:[#allocation39 + $0x70] sm:$0xff]
        %v8680 = vld [vmem:[#allocation39 + $0x78] sm:$0xff]
        %v8681 = vld [vmem:[#allocation39 + $0x80] sm:$0xff]
        %v8682 = vld [vmem:[#allocation39 + $0x88] sm:$0xff]
        %v8683 = vld [vmem:[#allocation39 + $0x90] sm:$0xff]
        %v8684 = vld [vmem:[#allocation39 + $0x98] sm:$0xff]
        %v8685 = vld [vmem:[#allocation39 + $0xa0] sm:$0xff]
        %v8686 = vld [vmem:[#allocation39 + $0xa8] sm:$0xff]
        %v8687 = vld [vmem:[#allocation39 + $0xb0] sm:$0xff]
        %v8688 = vld [vmem:[#allocation39 + $0xb8] sm:$0xff]
        %v8689 = vld [vmem:[#allocation39 + $0xc0] sm:$0xff]
        %v8690 = vld [vmem:[#allocation39 + $0xc8] sm:$0xff]
        %v8691 = vld [vmem:[#allocation39 + $0xd0] sm:$0xff]
        %v8692 = vld [vmem:[#allocation39 + $0xd8] sm:$0xff]
        %v8693 = vld [vmem:[#allocation39 + $0xe0] sm:$0xff]
        %v8694 = vld [vmem:[#allocation39 + $0xe8] sm:$0xff]
        %v8695 = vld [vmem:[#allocation39 + $0xf0] sm:$0xff]
        %v8696 = vld [vmem:[#allocation39 + $0xf8] sm:$0xff]
        %v8697 = vld [vmem:[#allocation39 + $0x100] sm:$0xff]
        %v8698 = vld [vmem:[#allocation39 + $0x108] sm:$0xff]
        %v8699 = vld [vmem:[#allocation39 + $0x110] sm:$0xff]
        %v8700 = vld [vmem:[#allocation39 + $0x118] sm:$0xff]
        %v8701 = vld [vmem:[#allocation39 + $0x120] sm:$0xff]
        %v8702 = vld [vmem:[#allocation39 + $0x128] sm:$0xff]
        %v8703 = vld [vmem:[#allocation39 + $0x130] sm:$0xff]
        %v8704 = vld [vmem:[#allocation39 + $0x138] sm:$0xff]
        %v8705 = vld [vmem:[#allocation39 + $0x140] sm:$0xff]
        %v8706 = vld [vmem:[#allocation39 + $0x148] sm:$0xff]
        %v8707 = vld [vmem:[#allocation39 + $0x150] sm:$0xff]
        %v8708 = vld [vmem:[#allocation39 + $0x158] sm:$0xff]
        %v8709 = vld [vmem:[#allocation39 + $0x160] sm:$0xff]
        %v8710 = vld [vmem:[#allocation39 + $0x168] sm:$0xff]
        %v8711 = vld [vmem:[#allocation39 + $0x170] sm:$0xff]
        %v8712 = vld [vmem:[#allocation39 + $0x178] sm:$0xff]
        %v8713 = vld [vmem:[#allocation39 + $0x180] sm:$0xff]
        %v8714 = vld [vmem:[#allocation39 + $0x188] sm:$0xff]
        %v8715 = vld [vmem:[#allocation39 + $0x190] sm:$0xff]
        %v8716 = vld [vmem:[#allocation39 + $0x198] sm:$0xff]
        %v8717 = vld [vmem:[#allocation39 + $0x1a0] sm:$0xff]
        %v8718 = vld [vmem:[#allocation39 + $0x1a8] sm:$0xff]
        %v8719 = vld [vmem:[#allocation39 + $0x1b0] sm:$0xff]
        %v8720 = vld [vmem:[#allocation39 + $0x1b8] sm:$0xff]
        %v8721 = vld [vmem:[#allocation39 + $0x1c0] sm:$0xff]
        %v8722 = vld [vmem:[#allocation39 + $0x1c8] sm:$0xff]
        %v8723 = vld [vmem:[#allocation39 + $0x1d0] sm:$0xff]
        %v8724 = vld [vmem:[#allocation39 + $0x1d8] sm:$0xff]
        %v8725 = vld [vmem:[#allocation39 + $0x1e0] sm:$0xff]
        %v8726 = vld [vmem:[#allocation39 + $0x1e8] sm:$0xff]
        %v8727 = vld [vmem:[#allocation39 + $0x1f0] sm:$0xff]
        %v8728 = vld [vmem:[#allocation39 + $0x1f8] sm:$0xff]
        %v8729 = vld [vmem:[#allocation39 + $0x200] sm:$0xff]
        %v8730 = vld [vmem:[#allocation39 + $0x208] sm:$0xff]
        %v8731 = vld [vmem:[#allocation39 + $0x210] sm:$0xff]
        %v8732 = vld [vmem:[#allocation39 + $0x218] sm:$0xff]
        %v8733 = vld [vmem:[#allocation39 + $0x220] sm:$0xff]
        %v8734 = vld [vmem:[#allocation39 + $0x228] sm:$0xff]
        %v8735 = vld [vmem:[#allocation39 + $0x230] sm:$0xff]
        %v8736 = vld [vmem:[#allocation39 + $0x238] sm:$0xff]
        %v8737 = vld [vmem:[#allocation39 + $0x240] sm:$0xff]
        %v8738 = vld [vmem:[#allocation39 + $0x248] sm:$0xff]
        %v8739 = vld [vmem:[#allocation39 + $0x250] sm:$0xff]
        %v8740 = vld [vmem:[#allocation39 + $0x258] sm:$0xff]
        %v8741 = vld [vmem:[#allocation39 + $0x260] sm:$0xff]
        %v8742 = vld [vmem:[#allocation39 + $0x268] sm:$0xff]
        %v8743 = vld [vmem:[#allocation39 + $0x270] sm:$0xff]
        %v8744 = vld [vmem:[#allocation39 + $0x278] sm:$0xff]
        %v8745 = vld [vmem:[#allocation39 + $0x280] sm:$0xff]
        %v8746 = vld [vmem:[#allocation39 + $0x288] sm:$0xff]
        %v8747 = vld [vmem:[#allocation39 + $0x290] sm:$0xff]
        %v8748 = vld [vmem:[#allocation39 + $0x298] sm:$0xff]
        %v8749 = vld [vmem:[#allocation39 + $0x2a0] sm:$0xff]
        %v8750 = vld [vmem:[#allocation39 + $0x2a8] sm:$0xff]
        %v8751 = vld [vmem:[#allocation39 + $0x2b0] sm:$0xff]
        %v8752 = vld [vmem:[#allocation39 + $0x2b8] sm:$0xff]
        %v8753 = vld [vmem:[#allocation39 + $0x2c0] sm:$0xff]
        %v8754 = vld [vmem:[#allocation39 + $0x2c8] sm:$0xff]
        %v8755 = vld [vmem:[#allocation39 + $0x2d0] sm:$0xff]
        %v8756 = vld [vmem:[#allocation39 + $0x2d8] sm:$0xff]
        %v8757 = vld [vmem:[#allocation39 + $0x2e0] sm:$0xff]
        %v8758 = vld [vmem:[#allocation39 + $0x2e8] sm:$0xff]
        %v8759 = vld [vmem:[#allocation39 + $0x2f0] sm:$0xff]
        %v8760 = vld [vmem:[#allocation39 + $0x2f8] sm:$0xff]
        %v8761 = vld [vmem:[#allocation39 + $0x300] sm:$0xff]
        %v8762 = vld [vmem:[#allocation39 + $0x308] sm:$0xff]
        %v8763 = vld [vmem:[#allocation39 + $0x310] sm:$0xff]
        %v8764 = vld [vmem:[#allocation39 + $0x318] sm:$0xff]
        %v8765 = vld [vmem:[#allocation39 + $0x320] sm:$0xff]
        %v8766 = vld [vmem:[#allocation39 + $0x328] sm:$0xff]
        %v8767 = vld [vmem:[#allocation39 + $0x330] sm:$0xff]
        %v8768 = vld [vmem:[#allocation39 + $0x338] sm:$0xff]
        %v8769 = vld [vmem:[#allocation39 + $0x340] sm:$0xff]
        %v8770 = vld [vmem:[#allocation39 + $0x348] sm:$0xff]
        %v8771 = vld [vmem:[#allocation39 + $0x350] sm:$0xff]
        %v8772 = vld [vmem:[#allocation39 + $0x358] sm:$0xff]
        %v8773 = vld [vmem:[#allocation39 + $0x360] sm:$0xff]
        %v8774 = vld [vmem:[#allocation39 + $0x368] sm:$0xff]
        %v8775 = vld [vmem:[#allocation39 + $0x370] sm:$0xff]
        %v8776 = vld [vmem:[#allocation39 + $0x378] sm:$0xff]
        %v8777 = vld [vmem:[#allocation39 + $0x380] sm:$0xff]
        %v8778 = vld [vmem:[#allocation39 + $0x388] sm:$0xff]
        %v8779 = vld [vmem:[#allocation39 + $0x390] sm:$0xff]
        %v8780 = vld [vmem:[#allocation39 + $0x398] sm:$0xff]
        %v8781 = vld [vmem:[#allocation39 + $0x3a0] sm:$0xff]
        %v8782 = vld [vmem:[#allocation39 + $0x3a8] sm:$0xff]
        %v8783 = vld [vmem:[#allocation39 + $0x3b0] sm:$0xff]
        %v8784 = vld [vmem:[#allocation39 + $0x3b8] sm:$0xff]
        %v8785 = vld [vmem:[#allocation39 + $0x3c0] sm:$0xff]
        %v8786 = vld [vmem:[#allocation39 + $0x3c8] sm:$0xff]
        %v8787 = vld [vmem:[#allocation39 + $0x3d0] sm:$0xff]
        %v8788 = vld [vmem:[#allocation39 + $0x3d8] sm:$0xff]
        %v8789 = vld [vmem:[#allocation39 + $0x3e0] sm:$0xff]
        %v8790 = vld [vmem:[#allocation39 + $0x3e8] sm:$0xff]
        %v8791 = vld [vmem:[#allocation39 + $0x3f0] sm:$0xff]
        %v8792 = vld [vmem:[#allocation39 + $0x3f8] sm:$0xff]
        %v8797 = vunpack.c.l.b16 %v8661
        %v8798 = vunpack.c.h.b16 %v8661
        %v8799 = vunpack.c.l.b16 %v8662
        %v8800 = vunpack.c.h.b16 %v8662
        %v8801 = vunpack.c.l.b16 %v8663
        %v8802 = vunpack.c.h.b16 %v8663
        %v8803 = vunpack.c.l.b16 %v8664
        %v8804 = vunpack.c.h.b16 %v8664
        %v8805 = vpack.c.b16 %v8801, %v8797
        %v8806 = vpack.c.b16 %v8802, %v8798
        %v8807 = vpack.c.b16 %v8803, %v8799
        %v8808 = vpack.c.b16 %v8804, %v8800
        %v8941 = vunpack.c.l.b16 %v8665
        %v8942 = vunpack.c.h.b16 %v8665
        %v8943 = vunpack.c.l.b16 %v8666
        %v8944 = vunpack.c.h.b16 %v8666
        %v8945 = vunpack.c.l.b16 %v8667
        %v8946 = vunpack.c.h.b16 %v8667
        %v8947 = vunpack.c.l.b16 %v8668
        %v8948 = vunpack.c.h.b16 %v8668
        %v8949 = vunpack.c.l.b16 %v8669
        %v8950 = vunpack.c.h.b16 %v8669
        %v8951 = vunpack.c.l.b16 %v8670
        %v8952 = vunpack.c.h.b16 %v8670
        %v8953 = vunpack.c.l.b16 %v8671
        %v8954 = vunpack.c.h.b16 %v8671
        %v8955 = vunpack.c.l.b16 %v8672
        %v8956 = vunpack.c.h.b16 %v8672
        %v8957 = vunpack.c.l.b16 %v8673
        %v8958 = vunpack.c.h.b16 %v8673
        %v8959 = vunpack.c.l.b16 %v8674
        %v8960 = vunpack.c.h.b16 %v8674
        %v8961 = vunpack.c.l.b16 %v8675
        %v8962 = vunpack.c.h.b16 %v8675
        %v8963 = vunpack.c.l.b16 %v8676
        %v8964 = vunpack.c.h.b16 %v8676
        %v8965 = vunpack.c.l.b16 %v8677
        %v8966 = vunpack.c.h.b16 %v8677
        %v8967 = vunpack.c.l.b16 %v8678
        %v8968 = vunpack.c.h.b16 %v8678
        %v8969 = vunpack.c.l.b16 %v8679
        %v8970 = vunpack.c.h.b16 %v8679
        %v8971 = vunpack.c.l.b16 %v8680
        %v8972 = vunpack.c.h.b16 %v8680
        %v8973 = vunpack.c.l.b16 %v8681
        %v8974 = vunpack.c.h.b16 %v8681
        %v8975 = vunpack.c.l.b16 %v8682
        %v8976 = vunpack.c.h.b16 %v8682
        %v8977 = vunpack.c.l.b16 %v8683
        %v8978 = vunpack.c.h.b16 %v8683
        %v8979 = vunpack.c.l.b16 %v8684
        %v8980 = vunpack.c.h.b16 %v8684
        %v8981 = vunpack.c.l.b16 %v8685
        %v8982 = vunpack.c.h.b16 %v8685
        %v8983 = vunpack.c.l.b16 %v8686
        %v8984 = vunpack.c.h.b16 %v8686
        %v8985 = vunpack.c.l.b16 %v8687
        %v8986 = vunpack.c.h.b16 %v8687
        %v8987 = vunpack.c.l.b16 %v8688
        %v8988 = vunpack.c.h.b16 %v8688
        %v8989 = vunpack.c.l.b16 %v8689
        %v8990 = vunpack.c.h.b16 %v8689
        %v8991 = vunpack.c.l.b16 %v8690
        %v8992 = vunpack.c.h.b16 %v8690
        %v8993 = vunpack.c.l.b16 %v8691
        %v8994 = vunpack.c.h.b16 %v8691
        %v8995 = vunpack.c.l.b16 %v8692
        %v8996 = vunpack.c.h.b16 %v8692
        %v8997 = vunpack.c.l.b16 %v8693
        %v8998 = vunpack.c.h.b16 %v8693
        %v8999 = vunpack.c.l.b16 %v8694
        %v9000 = vunpack.c.h.b16 %v8694
        %v9001 = vunpack.c.l.b16 %v8695
        %v9002 = vunpack.c.h.b16 %v8695
        %v9003 = vunpack.c.l.b16 %v8696
        %v9004 = vunpack.c.h.b16 %v8696
        %v9005 = vunpack.c.l.b16 %v8697
        %v9006 = vunpack.c.h.b16 %v8697
        %v9007 = vunpack.c.l.b16 %v8698
        %v9008 = vunpack.c.h.b16 %v8698
        %v9009 = vunpack.c.l.b16 %v8699
        %v9010 = vunpack.c.h.b16 %v8699
        %v9011 = vunpack.c.l.b16 %v8700
        %v9012 = vunpack.c.h.b16 %v8700
        %v9013 = vunpack.c.l.b16 %v8701
        %v9014 = vunpack.c.h.b16 %v8701
        %v9015 = vunpack.c.l.b16 %v8702
        %v9016 = vunpack.c.h.b16 %v8702
        %v9017 = vunpack.c.l.b16 %v8703
        %v9018 = vunpack.c.h.b16 %v8703
        %v9019 = vunpack.c.l.b16 %v8704
        %v9020 = vunpack.c.h.b16 %v8704
        %v9021 = vunpack.c.l.b16 %v8705
        %v9022 = vunpack.c.h.b16 %v8705
        %v9023 = vunpack.c.l.b16 %v8706
        %v9024 = vunpack.c.h.b16 %v8706
        %v9025 = vunpack.c.l.b16 %v8707
        %v9026 = vunpack.c.h.b16 %v8707
        %v9027 = vunpack.c.l.b16 %v8708
        %v9028 = vunpack.c.h.b16 %v8708
        %v9029 = vunpack.c.l.b16 %v8709
        %v9030 = vunpack.c.h.b16 %v8709
        %v9031 = vunpack.c.l.b16 %v8710
        %v9032 = vunpack.c.h.b16 %v8710
        %v9033 = vunpack.c.l.b16 %v8711
        %v9034 = vunpack.c.h.b16 %v8711
        %v9035 = vunpack.c.l.b16 %v8712
        %v9036 = vunpack.c.h.b16 %v8712
        %v9037 = vunpack.c.l.b16 %v8713
        %v9038 = vunpack.c.h.b16 %v8713
        %v9039 = vunpack.c.l.b16 %v8714
        %v9040 = vunpack.c.h.b16 %v8714
        %v9041 = vunpack.c.l.b16 %v8715
        %v9042 = vunpack.c.h.b16 %v8715
        %v9043 = vunpack.c.l.b16 %v8716
        %v9044 = vunpack.c.h.b16 %v8716
        %v9045 = vunpack.c.l.b16 %v8717
        %v9046 = vunpack.c.h.b16 %v8717
        %v9047 = vunpack.c.l.b16 %v8718
        %v9048 = vunpack.c.h.b16 %v8718
        %v9049 = vunpack.c.l.b16 %v8719
        %v9050 = vunpack.c.h.b16 %v8719
        %v9051 = vunpack.c.l.b16 %v8720
        %v9052 = vunpack.c.h.b16 %v8720
        %v9053 = vunpack.c.l.b16 %v8721
        %v9054 = vunpack.c.h.b16 %v8721
        %v9055 = vunpack.c.l.b16 %v8722
        %v9056 = vunpack.c.h.b16 %v8722
        %v9057 = vunpack.c.l.b16 %v8723
        %v9058 = vunpack.c.h.b16 %v8723
        %v9059 = vunpack.c.l.b16 %v8724
        %v9060 = vunpack.c.h.b16 %v8724
        %v9061 = vunpack.c.l.b16 %v8725
        %v9062 = vunpack.c.h.b16 %v8725
        %v9063 = vunpack.c.l.b16 %v8726
        %v9064 = vunpack.c.h.b16 %v8726
        %v9065 = vunpack.c.l.b16 %v8727
        %v9066 = vunpack.c.h.b16 %v8727
        %v9067 = vunpack.c.l.b16 %v8728
        %v9068 = vunpack.c.h.b16 %v8728
        %v9069 = vunpack.c.l.b16 %v8729
        %v9070 = vunpack.c.h.b16 %v8729
        %v9071 = vunpack.c.l.b16 %v8730
        %v9072 = vunpack.c.h.b16 %v8730
        %v9073 = vunpack.c.l.b16 %v8731
        %v9074 = vunpack.c.h.b16 %v8731
        %v9075 = vunpack.c.l.b16 %v8732
        %v9076 = vunpack.c.h.b16 %v8732
        %v9077 = vunpack.c.l.b16 %v8733
        %v9078 = vunpack.c.h.b16 %v8733
        %v9079 = vunpack.c.l.b16 %v8734
        %v9080 = vunpack.c.h.b16 %v8734
        %v9081 = vunpack.c.l.b16 %v8735
        %v9082 = vunpack.c.h.b16 %v8735
        %v9083 = vunpack.c.l.b16 %v8736
        %v9084 = vunpack.c.h.b16 %v8736
        %v9085 = vunpack.c.l.b16 %v8737
        %v9086 = vunpack.c.h.b16 %v8737
        %v9087 = vunpack.c.l.b16 %v8738
        %v9088 = vunpack.c.h.b16 %v8738
        %v9089 = vunpack.c.l.b16 %v8739
        %v9090 = vunpack.c.h.b16 %v8739
        %v9091 = vunpack.c.l.b16 %v8740
        %v9092 = vunpack.c.h.b16 %v8740
        %v9093 = vunpack.c.l.b16 %v8741
        %v9094 = vunpack.c.h.b16 %v8741
        %v9095 = vunpack.c.l.b16 %v8742
        %v9096 = vunpack.c.h.b16 %v8742
        %v9097 = vunpack.c.l.b16 %v8743
        %v9098 = vunpack.c.h.b16 %v8743
        %v9099 = vunpack.c.l.b16 %v8744
        %v9100 = vunpack.c.h.b16 %v8744
        %v9101 = vunpack.c.l.b16 %v8745
        %v9102 = vunpack.c.h.b16 %v8745
        %v9103 = vunpack.c.l.b16 %v8746
        %v9104 = vunpack.c.h.b16 %v8746
        %v9105 = vunpack.c.l.b16 %v8747
        %v9106 = vunpack.c.h.b16 %v8747
        %v9107 = vunpack.c.l.b16 %v8748
        %v9108 = vunpack.c.h.b16 %v8748
        %v9109 = vunpack.c.l.b16 %v8749
        %v9110 = vunpack.c.h.b16 %v8749
        %v9111 = vunpack.c.l.b16 %v8750
        %v9112 = vunpack.c.h.b16 %v8750
        %v9113 = vunpack.c.l.b16 %v8751
        %v9114 = vunpack.c.h.b16 %v8751
        %v9115 = vunpack.c.l.b16 %v8752
        %v9116 = vunpack.c.h.b16 %v8752
        %v9117 = vunpack.c.l.b16 %v8753
        %v9118 = vunpack.c.h.b16 %v8753
        %v9119 = vunpack.c.l.b16 %v8754
        %v9120 = vunpack.c.h.b16 %v8754
        %v9121 = vunpack.c.l.b16 %v8755
        %v9122 = vunpack.c.h.b16 %v8755
        %v9123 = vunpack.c.l.b16 %v8756
        %v9124 = vunpack.c.h.b16 %v8756
        %v9125 = vunpack.c.l.b16 %v8757
        %v9126 = vunpack.c.h.b16 %v8757
        %v9127 = vunpack.c.l.b16 %v8758
        %v9128 = vunpack.c.h.b16 %v8758
        %v9129 = vunpack.c.l.b16 %v8759
        %v9130 = vunpack.c.h.b16 %v8759
        %v9131 = vunpack.c.l.b16 %v8760
        %v9132 = vunpack.c.h.b16 %v8760
        %v9133 = vunpack.c.l.b16 %v8761
        %v9134 = vunpack.c.h.b16 %v8761
        %v9135 = vunpack.c.l.b16 %v8762
        %v9136 = vunpack.c.h.b16 %v8762
        %v9137 = vunpack.c.l.b16 %v8763
        %v9138 = vunpack.c.h.b16 %v8763
        %v9139 = vunpack.c.l.b16 %v8764
        %v9140 = vunpack.c.h.b16 %v8764
        %v9141 = vunpack.c.l.b16 %v8765
        %v9142 = vunpack.c.h.b16 %v8765
        %v9143 = vunpack.c.l.b16 %v8766
        %v9144 = vunpack.c.h.b16 %v8766
        %v9145 = vunpack.c.l.b16 %v8767
        %v9146 = vunpack.c.h.b16 %v8767
        %v9147 = vunpack.c.l.b16 %v8768
        %v9148 = vunpack.c.h.b16 %v8768
        %v9149 = vunpack.c.l.b16 %v8769
        %v9150 = vunpack.c.h.b16 %v8769
        %v9151 = vunpack.c.l.b16 %v8770
        %v9152 = vunpack.c.h.b16 %v8770
        %v9153 = vunpack.c.l.b16 %v8771
        %v9154 = vunpack.c.h.b16 %v8771
        %v9155 = vunpack.c.l.b16 %v8772
        %v9156 = vunpack.c.h.b16 %v8772
        %v9157 = vunpack.c.l.b16 %v8773
        %v9158 = vunpack.c.h.b16 %v8773
        %v9159 = vunpack.c.l.b16 %v8774
        %v9160 = vunpack.c.h.b16 %v8774
        %v9161 = vunpack.c.l.b16 %v8775
        %v9162 = vunpack.c.h.b16 %v8775
        %v9163 = vunpack.c.l.b16 %v8776
        %v9164 = vunpack.c.h.b16 %v8776
        %v9165 = vunpack.c.l.b16 %v8777
        %v9166 = vunpack.c.h.b16 %v8777
        %v9167 = vunpack.c.l.b16 %v8778
        %v9168 = vunpack.c.h.b16 %v8778
        %v9169 = vunpack.c.l.b16 %v8779
        %v9170 = vunpack.c.h.b16 %v8779
        %v9171 = vunpack.c.l.b16 %v8780
        %v9172 = vunpack.c.h.b16 %v8780
        %v9173 = vunpack.c.l.b16 %v8781
        %v9174 = vunpack.c.h.b16 %v8781
        %v9175 = vunpack.c.l.b16 %v8782
        %v9176 = vunpack.c.h.b16 %v8782
        %v9177 = vunpack.c.l.b16 %v8783
        %v9178 = vunpack.c.h.b16 %v8783
        %v9179 = vunpack.c.l.b16 %v8784
        %v9180 = vunpack.c.h.b16 %v8784
        %v9181 = vunpack.c.l.b16 %v8785
        %v9182 = vunpack.c.h.b16 %v8785
        %v9183 = vunpack.c.l.b16 %v8786
        %v9184 = vunpack.c.h.b16 %v8786
        %v9185 = vunpack.c.l.b16 %v8787
        %v9186 = vunpack.c.h.b16 %v8787
        %v9187 = vunpack.c.l.b16 %v8788
        %v9188 = vunpack.c.h.b16 %v8788
        %v9189 = vunpack.c.l.b16 %v8789
        %v9190 = vunpack.c.h.b16 %v8789
        %v9191 = vunpack.c.l.b16 %v8790
        %v9192 = vunpack.c.h.b16 %v8790
        %v9193 = vunpack.c.l.b16 %v8791
        %v9194 = vunpack.c.h.b16 %v8791
        %v9195 = vunpack.c.l.b16 %v8792
        %v9196 = vunpack.c.h.b16 %v8792
        %v9197 = vpack.c.b16 %v8945, %v8941
        %v9198 = vpack.c.b16 %v8946, %v8942
        %v9199 = vpack.c.b16 %v8947, %v8943
        %v9200 = vpack.c.b16 %v8948, %v8944
        %v9201 = vpack.c.b16 %v8953, %v8949
        %v9202 = vpack.c.b16 %v8954, %v8950
        %v9203 = vpack.c.b16 %v8955, %v8951
        %v9204 = vpack.c.b16 %v8956, %v8952
        %v9205 = vpack.c.b16 %v8961, %v8957
        %v9206 = vpack.c.b16 %v8962, %v8958
        %v9207 = vpack.c.b16 %v8963, %v8959
        %v9208 = vpack.c.b16 %v8964, %v8960
        %v9209 = vpack.c.b16 %v8969, %v8965
        %v9210 = vpack.c.b16 %v8970, %v8966
        %v9211 = vpack.c.b16 %v8971, %v8967
        %v9212 = vpack.c.b16 %v8972, %v8968
        %v9213 = vpack.c.b16 %v8977, %v8973
        %v9214 = vpack.c.b16 %v8978, %v8974
        %v9215 = vpack.c.b16 %v8979, %v8975
        %v9216 = vpack.c.b16 %v8980, %v8976
        %v9217 = vpack.c.b16 %v8985, %v8981
        %v9218 = vpack.c.b16 %v8986, %v8982
        %v9219 = vpack.c.b16 %v8987, %v8983
        %v9220 = vpack.c.b16 %v8988, %v8984
        %v9221 = vpack.c.b16 %v8993, %v8989
        %v9222 = vpack.c.b16 %v8994, %v8990
        %v9223 = vpack.c.b16 %v8995, %v8991
        %v9224 = vpack.c.b16 %v8996, %v8992
        %v9225 = vpack.c.b16 %v9001, %v8997
        %v9226 = vpack.c.b16 %v9002, %v8998
        %v9227 = vpack.c.b16 %v9003, %v8999
        %v9228 = vpack.c.b16 %v9004, %v9000
        %v9229 = vpack.c.b16 %v9009, %v9005
        %v9230 = vpack.c.b16 %v9010, %v9006
        %v9231 = vpack.c.b16 %v9011, %v9007
        %v9232 = vpack.c.b16 %v9012, %v9008
        %v9233 = vpack.c.b16 %v9017, %v9013
        %v9234 = vpack.c.b16 %v9018, %v9014
        %v9235 = vpack.c.b16 %v9019, %v9015
        %v9236 = vpack.c.b16 %v9020, %v9016
        %v9237 = vpack.c.b16 %v9025, %v9021
        %v9238 = vpack.c.b16 %v9026, %v9022
        %v9239 = vpack.c.b16 %v9027, %v9023
        %v9240 = vpack.c.b16 %v9028, %v9024
        %v9241 = vpack.c.b16 %v9033, %v9029
        %v9242 = vpack.c.b16 %v9034, %v9030
        %v9243 = vpack.c.b16 %v9035, %v9031
        %v9244 = vpack.c.b16 %v9036, %v9032
        %v9245 = vpack.c.b16 %v9041, %v9037
        %v9246 = vpack.c.b16 %v9042, %v9038
        %v9247 = vpack.c.b16 %v9043, %v9039
        %v9248 = vpack.c.b16 %v9044, %v9040
        %v9249 = vpack.c.b16 %v9049, %v9045
        %v9250 = vpack.c.b16 %v9050, %v9046
        %v9251 = vpack.c.b16 %v9051, %v9047
        %v9252 = vpack.c.b16 %v9052, %v9048
        %v9253 = vpack.c.b16 %v9057, %v9053
        %v9254 = vpack.c.b16 %v9058, %v9054
        %v9255 = vpack.c.b16 %v9059, %v9055
        %v9256 = vpack.c.b16 %v9060, %v9056
        %v9257 = vpack.c.b16 %v9065, %v9061
        %v9258 = vpack.c.b16 %v9066, %v9062
        %v9259 = vpack.c.b16 %v9067, %v9063
        %v9260 = vpack.c.b16 %v9068, %v9064
        %v9261 = vpack.c.b16 %v9073, %v9069
        %v9262 = vpack.c.b16 %v9074, %v9070
        %v9263 = vpack.c.b16 %v9075, %v9071
        %v9264 = vpack.c.b16 %v9076, %v9072
        %v9265 = vpack.c.b16 %v9081, %v9077
        %v9266 = vpack.c.b16 %v9082, %v9078
        %v9267 = vpack.c.b16 %v9083, %v9079
        %v9268 = vpack.c.b16 %v9084, %v9080
        %v9269 = vpack.c.b16 %v9089, %v9085
        %v9270 = vpack.c.b16 %v9090, %v9086
        %v9271 = vpack.c.b16 %v9091, %v9087
        %v9272 = vpack.c.b16 %v9092, %v9088
        %v9273 = vpack.c.b16 %v9097, %v9093
        %v9274 = vpack.c.b16 %v9098, %v9094
        %v9275 = vpack.c.b16 %v9099, %v9095
        %v9276 = vpack.c.b16 %v9100, %v9096
        %v9277 = vpack.c.b16 %v9105, %v9101
        %v9278 = vpack.c.b16 %v9106, %v9102
        %v9279 = vpack.c.b16 %v9107, %v9103
        %v9280 = vpack.c.b16 %v9108, %v9104
        %v9281 = vpack.c.b16 %v9113, %v9109
        %v9282 = vpack.c.b16 %v9114, %v9110
        %v9283 = vpack.c.b16 %v9115, %v9111
        %v9284 = vpack.c.b16 %v9116, %v9112
        %v9285 = vpack.c.b16 %v9121, %v9117
        %v9286 = vpack.c.b16 %v9122, %v9118
        %v9287 = vpack.c.b16 %v9123, %v9119
        %v9288 = vpack.c.b16 %v9124, %v9120
        %v9289 = vpack.c.b16 %v9129, %v9125
        %v9290 = vpack.c.b16 %v9130, %v9126
        %v9291 = vpack.c.b16 %v9131, %v9127
        %v9292 = vpack.c.b16 %v9132, %v9128
        %v9293 = vpack.c.b16 %v9137, %v9133
        %v9294 = vpack.c.b16 %v9138, %v9134
        %v9295 = vpack.c.b16 %v9139, %v9135
        %v9296 = vpack.c.b16 %v9140, %v9136
        %v9297 = vpack.c.b16 %v9145, %v9141
        %v9298 = vpack.c.b16 %v9146, %v9142
        %v9299 = vpack.c.b16 %v9147, %v9143
        %v9300 = vpack.c.b16 %v9148, %v9144
        %v9301 = vpack.c.b16 %v9153, %v9149
        %v9302 = vpack.c.b16 %v9154, %v9150
        %v9303 = vpack.c.b16 %v9155, %v9151
        %v9304 = vpack.c.b16 %v9156, %v9152
        %v9305 = vpack.c.b16 %v9161, %v9157
        %v9306 = vpack.c.b16 %v9162, %v9158
        %v9307 = vpack.c.b16 %v9163, %v9159
        %v9308 = vpack.c.b16 %v9164, %v9160
        %v9309 = vpack.c.b16 %v9169, %v9165
        %v9310 = vpack.c.b16 %v9170, %v9166
        %v9311 = vpack.c.b16 %v9171, %v9167
        %v9312 = vpack.c.b16 %v9172, %v9168
        %v9313 = vpack.c.b16 %v9177, %v9173
        %v9314 = vpack.c.b16 %v9178, %v9174
        %v9315 = vpack.c.b16 %v9179, %v9175
        %v9316 = vpack.c.b16 %v9180, %v9176
        %v9317 = vpack.c.b16 %v9185, %v9181
        %v9318 = vpack.c.b16 %v9186, %v9182
        %v9319 = vpack.c.b16 %v9187, %v9183
        %v9320 = vpack.c.b16 %v9188, %v9184
        %v9321 = vpack.c.b16 %v9193, %v9189
        %v9322 = vpack.c.b16 %v9194, %v9190
        %v9323 = vpack.c.b16 %v9195, %v9191
        %v9324 = vpack.c.b16 %v9196, %v9192
        %9453 = vmatprep.subr.bf16.mxu0 %v9198
        %9454 = vmatpush1.bf16.msra.mxu0 %v9197
        %9455 = vmatprep.subr.bf16.mxu0 %v9202
        %9456 = vmatpush1.bf16.msra.mxu0 %v9201
        %9457 = vmatprep.subr.bf16.mxu0 %v9206
        %9458 = vmatpush1.bf16.msra.mxu0 %v9205
        %9459 = vmatprep.subr.bf16.mxu0 %v9210
        %9460 = vmatpush1.bf16.msra.mxu0 %v9209
        %9461 = vmatprep.subr.bf16.mxu0 %v9214
        %9462 = vmatpush1.bf16.msra.mxu0 %v9213
        %9463 = vmatprep.subr.bf16.mxu0 %v9218
        %9464 = vmatpush1.bf16.msra.mxu0 %v9217
        %9465 = vmatprep.subr.bf16.mxu0 %v9222
        %9466 = vmatpush1.bf16.msra.mxu0 %v9221
        %9467 = vmatprep.subr.bf16.mxu0 %v9226
        %9468 = vmatpush1.bf16.msra.mxu0 %v9225
        %9469 = vmatprep.subr.bf16.mxu0 %v9230
        %9470 = vmatpush1.bf16.msra.mxu0 %v9229
        %9471 = vmatprep.subr.bf16.mxu0 %v9234
        %9472 = vmatpush1.bf16.msra.mxu0 %v9233
        %9473 = vmatprep.subr.bf16.mxu0 %v9238
        %9474 = vmatpush1.bf16.msra.mxu0 %v9237
        %9475 = vmatprep.subr.bf16.mxu0 %v9242
        %9476 = vmatpush1.bf16.msra.mxu0 %v9241
        %9477 = vmatprep.subr.bf16.mxu0 %v9246
        %9478 = vmatpush1.bf16.msra.mxu0 %v9245
        %9479 = vmatprep.subr.bf16.mxu0 %v9250
        %9480 = vmatpush1.bf16.msra.mxu0 %v9249
        %9481 = vmatprep.subr.bf16.mxu0 %v9254
        %9482 = vmatpush1.bf16.msra.mxu0 %v9253
        %9483 = vmatprep.subr.bf16.mxu0 %v9258
        %9484 = vmatpush1.bf16.msra.mxu0 %v9257
        %9485 = vmatprep.mubr.bf16.mxu0 %v8806
        %9486 = vmatmul.mubr.bf16.gmra.mrb[0].mxu0 %v8805
        %v9487 = vpop.f32.mrb[0].mxu0
        %v9488 = vadd.f32 0.0, %v9487
        %v9489 = vpop.f32.mrb[0].mxu0
        %v9490 = vadd.f32 0.0, %v9489
        %v9491 = vpop.f32.mrb[0].mxu0
        %v9492 = vadd.f32 0.0, %v9491
        %v9493 = vpop.f32.mrb[0].mxu0
        %v9494 = vadd.f32 0.0, %v9493
        %9495 = vdwg.mxu0
        %9496 = vmatprep.subr.bf16.mxu0 %v9262
        %9497 = vmatpush1.bf16.msra.mxu0 %v9261
        %9498 = vmatprep.subr.bf16.mxu0 %v9266
        %9499 = vmatpush1.bf16.msra.mxu0 %v9265
        %9500 = vmatprep.subr.bf16.mxu0 %v9270
        %9501 = vmatpush1.bf16.msra.mxu0 %v9269
        %9502 = vmatprep.subr.bf16.mxu0 %v9274
        %9503 = vmatpush1.bf16.msra.mxu0 %v9273
        %9504 = vmatprep.subr.bf16.mxu0 %v9278
        %9505 = vmatpush1.bf16.msra.mxu0 %v9277
        %9506 = vmatprep.subr.bf16.mxu0 %v9282
        %9507 = vmatpush1.bf16.msra.mxu0 %v9281
        %9508 = vmatprep.subr.bf16.mxu0 %v9286
        %9509 = vmatpush1.bf16.msra.mxu0 %v9285
        %9510 = vmatprep.subr.bf16.mxu0 %v9290
        %9511 = vmatpush1.bf16.msra.mxu0 %v9289
        %9512 = vmatprep.subr.bf16.mxu0 %v9294
        %9513 = vmatpush1.bf16.msra.mxu0 %v9293
        %9514 = vmatprep.subr.bf16.mxu0 %v9298
        %9515 = vmatpush1.bf16.msra.mxu0 %v9297
        %9516 = vmatprep.subr.bf16.mxu0 %v9302
        %9517 = vmatpush1.bf16.msra.mxu0 %v9301
        %9518 = vmatprep.subr.bf16.mxu0 %v9306
        %9519 = vmatpush1.bf16.msra.mxu0 %v9305
        %9520 = vmatprep.subr.bf16.mxu0 %v9310
        %9521 = vmatpush1.bf16.msra.mxu0 %v9309
        %9522 = vmatprep.subr.bf16.mxu0 %v9314
        %9523 = vmatpush1.bf16.msra.mxu0 %v9313
        %9524 = vmatprep.subr.bf16.mxu0 %v9318
        %9525 = vmatpush1.bf16.msra.mxu0 %v9317
        %9526 = vmatprep.subr.bf16.mxu0 %v9322
        %9527 = vmatpush1.bf16.msra.mxu0 %v9321
        %9528 = vmatprep.mubr.bf16.mxu0 %v8808
        %9529 = vmatmul.mubr.bf16.gmra.mrb[0].mxu0 %v8807
        %v9530 = vpop.f32.mrb[0].mxu0
        %v9531 = vadd.f32 %v9488, %v9530
        %v9532 = vpop.f32.mrb[0].mxu0
        %v9533 = vadd.f32 %v9490, %v9532
        %v9534 = vpop.f32.mrb[0].mxu0
        %v9535 = vadd.f32 %v9492, %v9534
        %v9536 = vpop.f32.mrb[0].mxu0
        %v9537 = vadd.f32 %v9494, %v9536
        %9538 = vdwg.mxu0
        %9539 = vmatprep.subr.bf16.mxu0 %v9200
        %9540 = vmatpush1.bf16.msra.mxu0 %v9199
        %9541 = vmatprep.subr.bf16.mxu0 %v9204
        %9542 = vmatpush1.bf16.msra.mxu0 %v9203
        %9543 = vmatprep.subr.bf16.mxu0 %v9208
        %9544 = vmatpush1.bf16.msra.mxu0 %v9207
        %9545 = vmatprep.subr.bf16.mxu0 %v9212
        %9546 = vmatpush1.bf16.msra.mxu0 %v9211
        %9547 = vmatprep.subr.bf16.mxu0 %v9216
        %9548 = vmatpush1.bf16.msra.mxu0 %v9215
        %9549 = vmatprep.subr.bf16.mxu0 %v9220
        %9550 = vmatpush1.bf16.msra.mxu0 %v9219
        %9551 = vmatprep.subr.bf16.mxu0 %v9224
        %9552 = vmatpush1.bf16.msra.mxu0 %v9223
        %9553 = vmatprep.subr.bf16.mxu0 %v9228
        %9554 = vmatpush1.bf16.msra.mxu0 %v9227
        %9555 = vmatprep.subr.bf16.mxu0 %v9232
        %9556 = vmatpush1.bf16.msra.mxu0 %v9231
        %9557 = vmatprep.subr.bf16.mxu0 %v9236
        %9558 = vmatpush1.bf16.msra.mxu0 %v9235
        %9559 = vmatprep.subr.bf16.mxu0 %v9240
        %9560 = vmatpush1.bf16.msra.mxu0 %v9239
        %9561 = vmatprep.subr.bf16.mxu0 %v9244
        %9562 = vmatpush1.bf16.msra.mxu0 %v9243
        %9563 = vmatprep.subr.bf16.mxu0 %v9248
        %9564 = vmatpush1.bf16.msra.mxu0 %v9247
        %9565 = vmatprep.subr.bf16.mxu0 %v9252
        %9566 = vmatpush1.bf16.msra.mxu0 %v9251
        %9567 = vmatprep.subr.bf16.mxu0 %v9256
        %9568 = vmatpush1.bf16.msra.mxu0 %v9255
        %9569 = vmatprep.subr.bf16.mxu0 %v9260
        %9570 = vmatpush1.bf16.msra.mxu0 %v9259
        %9571 = vmatprep.mubr.bf16.mxu0 %v8806
        %9572 = vmatmul.mubr.bf16.gmra.mrb[0].mxu0 %v8805
        %v9573 = vpop.f32.mrb[0].mxu0
        %v9574 = vadd.f32 0.0, %v9573
        %v9575 = vpop.f32.mrb[0].mxu0
        %v9576 = vadd.f32 0.0, %v9575
        %v9577 = vpop.f32.mrb[0].mxu0
        %v9578 = vadd.f32 0.0, %v9577
        %v9579 = vpop.f32.mrb[0].mxu0
        %v9580 = vadd.f32 0.0, %v9579
        %9581 = vdwg.mxu0
        %9582 = vmatprep.subr.bf16.mxu0 %v9264
        %9583 = vmatpush1.bf16.msra.mxu0 %v9263
        %9584 = vmatprep.subr.bf16.mxu0 %v9268
        %9585 = vmatpush1.bf16.msra.mxu0 %v9267
        %9586 = vmatprep.subr.bf16.mxu0 %v9272
        %9587 = vmatpush1.bf16.msra.mxu0 %v9271
        %9588 = vmatprep.subr.bf16.mxu0 %v9276
        %9589 = vmatpush1.bf16.msra.mxu0 %v9275
        %9590 = vmatprep.subr.bf16.mxu0 %v9280
        %9591 = vmatpush1.bf16.msra.mxu0 %v9279
        %9592 = vmatprep.subr.bf16.mxu0 %v9284
        %9593 = vmatpush1.bf16.msra.mxu0 %v9283
        %9594 = vmatprep.subr.bf16.mxu0 %v9288
        %9595 = vmatpush1.bf16.msra.mxu0 %v9287
        %9596 = vmatprep.subr.bf16.mxu0 %v9292
        %9597 = vmatpush1.bf16.msra.mxu0 %v9291
        %9598 = vmatprep.subr.bf16.mxu0 %v9296
        %9599 = vmatpush1.bf16.msra.mxu0 %v9295
        %9600 = vmatprep.subr.bf16.mxu0 %v9300
        %9601 = vmatpush1.bf16.msra.mxu0 %v9299
        %9602 = vmatprep.subr.bf16.mxu0 %v9304
        %9603 = vmatpush1.bf16.msra.mxu0 %v9303
        %9604 = vmatprep.subr.bf16.mxu0 %v9308
        %9605 = vmatpush1.bf16.msra.mxu0 %v9307
        %9606 = vmatprep.subr.bf16.mxu0 %v9312
        %9607 = vmatpush1.bf16.msra.mxu0 %v9311
        %9608 = vmatprep.subr.bf16.mxu0 %v9316
        %9609 = vmatpush1.bf16.msra.mxu0 %v9315
        %9610 = vmatprep.subr.bf16.mxu0 %v9320
        %9611 = vmatpush1.bf16.msra.mxu0 %v9319
        %9612 = vmatprep.subr.bf16.mxu0 %v9324
        %9613 = vmatpush1.bf16.msra.mxu0 %v9323
        %9614 = vmatprep.mubr.bf16.mxu0 %v8808
        %9615 = vmatmul.mubr.bf16.gmra.mrb[0].mxu0 %v8807
        %v9616 = vpop.f32.mrb[0].mxu0
        %v9617 = vadd.f32 %v9574, %v9616
        %v9618 = vpop.f32.mrb[0].mxu0
        %v9619 = vadd.f32 %v9576, %v9618
        %v9620 = vpop.f32.mrb[0].mxu0
        %v9621 = vadd.f32 %v9578, %v9620
        %v9622 = vpop.f32.mrb[0].mxu0
        %v9623 = vadd.f32 %v9580, %v9622
        %9624 = vdwg.mxu0
        %v9625 = vpack.c.bf16 %v9535, %v9531
        %v9626 = vpack.c.bf16 %v9537, %v9533
        %v9627 = vpack.c.bf16 %v9621, %v9617
        %v9628 = vpack.c.bf16 %v9623, %v9619
        %v9629 = vld [vmem:[#allocation40] sm:$0xf]
        %v9631 = vlaneseq
        %v9632 = vshrl.u32 %v9631, 7
        %v9633 = vsub.s32 0, %v9632
        %v9634 = vrot.slane %v9629, %v9633
        %v9635 = vlaneseq
        %v9636 = vshrl.u32 %v9635, 7
        %v9637 = vsub.s32 1, %v9636
        %v9638 = vrot.slane %v9629, %v9637
        %v9639 = vlaneseq
        %v9640 = vshrl.u32 %v9639, 7
        %v9641 = vsub.s32 2, %v9640
        %v9642 = vrot.slane %v9629, %v9641
        %v9643 = vlaneseq
        %v9644 = vshrl.u32 %v9643, 7
        %v9645 = vsub.s32 3, %v9644
        %v9646 = vrot.slane %v9629, %v9645
        %v9651 = vpack.c.bf16 %v9634, %v9634
        %v9652 = vpack.c.bf16 %v9638, %v9638
        %v9653 = vpack.c.bf16 %v9642, %v9642
        %v9654 = vpack.c.bf16 %v9646, %v9646
        %v9656 = vpack.i.b16 %v9651, %v9651
        %v9658 = vlaneseq
        %v9659 = vshrl.u32 %v9658, 7
        %v9660 = vsub.s32 0, %v9659
        %v9661 = vrot.slane %v9656, %v9660
        %v9663 = vpack.i.b16 %v9652, %v9652
        %v9665 = vlaneseq
        %v9666 = vshrl.u32 %v9665, 7
        %v9667 = vsub.s32 0, %v9666
        %v9668 = vrot.slane %v9663, %v9667
        %v9670 = vpack.i.b16 %v9653, %v9653
        %v9672 = vlaneseq
        %v9673 = vshrl.u32 %v9672, 7
        %v9674 = vsub.s32 0, %v9673
        %v9675 = vrot.slane %v9670, %v9674
        %v9677 = vpack.i.b16 %v9654, %v9654
        %v9679 = vlaneseq
        %v9680 = vshrl.u32 %v9679, 7
        %v9681 = vsub.s32 0, %v9680
        %v9682 = vrot.slane %v9677, %v9681
        %v9683 = vadd.bf16 %v9625, %v9661
        %v9684 = vadd.bf16 %v9626, %v9668
        %v9685 = vadd.bf16 %v9627, %v9675
        %v9686 = vadd.bf16 %v9628, %v9682
        %v9687 = vmul.bf16 %v9683, 1009007652
        %v9688 = vmul.bf16 %v9684, 1009007652
        %v9689 = vmul.bf16 %v9685, 1009007652
        %v9690 = vmul.bf16 %v9686, 1009007652
        %v9691 = vmax.bf16 %v9683, %v9687
        %v9692 = vmax.bf16 %v9684, %v9688
        %v9693 = vmax.bf16 %v9685, %v9689
        %v9694 = vmax.bf16 %v9686, %v9690
        %v9695 = vld [vmem:[#allocation42] sm:$0xf]
        %v9696 = vld [vmem:[#allocation42 + $0x4] sm:$0xf]
        %v9697 = vld [vmem:[#allocation42 + $0x8] sm:$0xf]
        %v9698 = vld [vmem:[#allocation42 + $0xc] sm:$0xf]
        %v9699 = vld [vmem:[#allocation42 + $0x10] sm:$0xf]
        %v9700 = vld [vmem:[#allocation42 + $0x14] sm:$0xf]
        %v9701 = vld [vmem:[#allocation42 + $0x18] sm:$0xf]
        %v9702 = vld [vmem:[#allocation42 + $0x1c] sm:$0xf]
        %v9703 = vld [vmem:[#allocation42 + $0x20] sm:$0xf]
        %v9704 = vld [vmem:[#allocation42 + $0x24] sm:$0xf]
        %v9705 = vld [vmem:[#allocation42 + $0x28] sm:$0xf]
        %v9706 = vld [vmem:[#allocation42 + $0x2c] sm:$0xf]
        %v9707 = vld [vmem:[#allocation42 + $0x30] sm:$0xf]
        %v9708 = vld [vmem:[#allocation42 + $0x34] sm:$0xf]
        %v9709 = vld [vmem:[#allocation42 + $0x38] sm:$0xf]
        %v9710 = vld [vmem:[#allocation42 + $0x3c] sm:$0xf]
        %v9711 = vld [vmem:[#allocation42 + $0x40] sm:$0xf]
        %v9712 = vld [vmem:[#allocation42 + $0x44] sm:$0xf]
        %v9713 = vld [vmem:[#allocation42 + $0x48] sm:$0xf]
        %v9714 = vld [vmem:[#allocation42 + $0x4c] sm:$0xf]
        %v9715 = vld [vmem:[#allocation42 + $0x50] sm:$0xf]
        %v9716 = vld [vmem:[#allocation42 + $0x54] sm:$0xf]
        %v9717 = vld [vmem:[#allocation42 + $0x58] sm:$0xf]
        %v9718 = vld [vmem:[#allocation42 + $0x5c] sm:$0xf]
        %v9719 = vld [vmem:[#allocation42 + $0x60] sm:$0xf]
        %v9720 = vld [vmem:[#allocation42 + $0x64] sm:$0xf]
        %v9721 = vld [vmem:[#allocation42 + $0x68] sm:$0xf]
        %v9722 = vld [vmem:[#allocation42 + $0x6c] sm:$0xf]
        %v9723 = vld [vmem:[#allocation42 + $0x70] sm:$0xf]
        %v9724 = vld [vmem:[#allocation42 + $0x74] sm:$0xf]
        %v9725 = vld [vmem:[#allocation42 + $0x78] sm:$0xf]
        %v9726 = vld [vmem:[#allocation42 + $0x7c] sm:$0xf]
        %v9727 = vld [vmem:[#allocation42 + $0x80] sm:$0xf]
        %v9728 = vld [vmem:[#allocation42 + $0x84] sm:$0xf]
        %v9729 = vld [vmem:[#allocation42 + $0x88] sm:$0xf]
        %v9730 = vld [vmem:[#allocation42 + $0x8c] sm:$0xf]
        %v9731 = vld [vmem:[#allocation42 + $0x90] sm:$0xf]
        %v9732 = vld [vmem:[#allocation42 + $0x94] sm:$0xf]
        %v9733 = vld [vmem:[#allocation42 + $0x98] sm:$0xf]
        %v9734 = vld [vmem:[#allocation42 + $0x9c] sm:$0xf]
        %v9735 = vld [vmem:[#allocation42 + $0xa0] sm:$0xf]
        %v9736 = vld [vmem:[#allocation42 + $0xa4] sm:$0xf]
        %v9737 = vld [vmem:[#allocation42 + $0xa8] sm:$0xf]
        %v9738 = vld [vmem:[#allocation42 + $0xac] sm:$0xf]
        %v9739 = vld [vmem:[#allocation42 + $0xb0] sm:$0xf]
        %v9740 = vld [vmem:[#allocation42 + $0xb4] sm:$0xf]
        %v9741 = vld [vmem:[#allocation42 + $0xb8] sm:$0xf]
        %v9742 = vld [vmem:[#allocation42 + $0xbc] sm:$0xf]
        %v9743 = vld [vmem:[#allocation42 + $0xc0] sm:$0xf]
        %v9744 = vld [vmem:[#allocation42 + $0xc4] sm:$0xf]
        %v9745 = vld [vmem:[#allocation42 + $0xc8] sm:$0xf]
        %v9746 = vld [vmem:[#allocation42 + $0xcc] sm:$0xf]
        %v9747 = vld [vmem:[#allocation42 + $0xd0] sm:$0xf]
        %v9748 = vld [vmem:[#allocation42 + $0xd4] sm:$0xf]
        %v9749 = vld [vmem:[#allocation42 + $0xd8] sm:$0xf]
        %v9750 = vld [vmem:[#allocation42 + $0xdc] sm:$0xf]
        %v9751 = vld [vmem:[#allocation42 + $0xe0] sm:$0xf]
        %v9752 = vld [vmem:[#allocation42 + $0xe4] sm:$0xf]
        %v9753 = vld [vmem:[#allocation42 + $0xe8] sm:$0xf]
        %v9754 = vld [vmem:[#allocation42 + $0xec] sm:$0xf]
        %v9755 = vld [vmem:[#allocation42 + $0xf0] sm:$0xf]
        %v9756 = vld [vmem:[#allocation42 + $0xf4] sm:$0xf]
        %v9757 = vld [vmem:[#allocation42 + $0xf8] sm:$0xf]
        %v9758 = vld [vmem:[#allocation42 + $0xfc] sm:$0xf]
        %v9823 = vunpack.c.l.b16 %v9695
        %v9824 = vunpack.c.l.b16 %v9696
        %v9825 = vunpack.c.l.b16 %v9697
        %v9826 = vunpack.c.l.b16 %v9698
        %v9827 = vunpack.c.l.b16 %v9699
        %v9828 = vunpack.c.l.b16 %v9700
        %v9829 = vunpack.c.l.b16 %v9701
        %v9830 = vunpack.c.l.b16 %v9702
        %v9831 = vunpack.c.l.b16 %v9703
        %v9832 = vunpack.c.l.b16 %v9704
        %v9833 = vunpack.c.l.b16 %v9705
        %v9834 = vunpack.c.l.b16 %v9706
        %v9835 = vunpack.c.l.b16 %v9707
        %v9836 = vunpack.c.l.b16 %v9708
        %v9837 = vunpack.c.l.b16 %v9709
        %v9838 = vunpack.c.l.b16 %v9710
        %v9839 = vunpack.c.l.b16 %v9711
        %v9840 = vunpack.c.l.b16 %v9712
        %v9841 = vunpack.c.l.b16 %v9713
        %v9842 = vunpack.c.l.b16 %v9714
        %v9843 = vunpack.c.l.b16 %v9715
        %v9844 = vunpack.c.l.b16 %v9716
        %v9845 = vunpack.c.l.b16 %v9717
        %v9846 = vunpack.c.l.b16 %v9718
        %v9847 = vunpack.c.l.b16 %v9719
        %v9848 = vunpack.c.l.b16 %v9720
        %v9849 = vunpack.c.l.b16 %v9721
        %v9850 = vunpack.c.l.b16 %v9722
        %v9851 = vunpack.c.l.b16 %v9723
        %v9852 = vunpack.c.l.b16 %v9724
        %v9853 = vunpack.c.l.b16 %v9725
        %v9854 = vunpack.c.l.b16 %v9726
        %v9855 = vunpack.c.l.b16 %v9727
        %v9856 = vunpack.c.l.b16 %v9728
        %v9857 = vunpack.c.l.b16 %v9729
        %v9858 = vunpack.c.l.b16 %v9730
        %v9859 = vunpack.c.l.b16 %v9731
        %v9860 = vunpack.c.l.b16 %v9732
        %v9861 = vunpack.c.l.b16 %v9733
        %v9862 = vunpack.c.l.b16 %v9734
        %v9863 = vunpack.c.l.b16 %v9735
        %v9864 = vunpack.c.l.b16 %v9736
        %v9865 = vunpack.c.l.b16 %v9737
        %v9866 = vunpack.c.l.b16 %v9738
        %v9867 = vunpack.c.l.b16 %v9739
        %v9868 = vunpack.c.l.b16 %v9740
        %v9869 = vunpack.c.l.b16 %v9741
        %v9870 = vunpack.c.l.b16 %v9742
        %v9871 = vunpack.c.l.b16 %v9743
        %v9872 = vunpack.c.l.b16 %v9744
        %v9873 = vunpack.c.l.b16 %v9745
        %v9874 = vunpack.c.l.b16 %v9746
        %v9875 = vunpack.c.l.b16 %v9747
        %v9876 = vunpack.c.l.b16 %v9748
        %v9877 = vunpack.c.l.b16 %v9749
        %v9878 = vunpack.c.l.b16 %v9750
        %v9879 = vunpack.c.l.b16 %v9751
        %v9880 = vunpack.c.l.b16 %v9752
        %v9881 = vunpack.c.l.b16 %v9753
        %v9882 = vunpack.c.l.b16 %v9754
        %v9883 = vunpack.c.l.b16 %v9755
        %v9884 = vunpack.c.l.b16 %v9756
        %v9885 = vunpack.c.l.b16 %v9757
        %v9886 = vunpack.c.l.b16 %v9758
        %v9887 = vpack.c.b16 %v9824, %v9823
        %v9888 = vpack.c.b16 %v9826, %v9825
        %v9889 = vpack.c.b16 %v9828, %v9827
        %v9890 = vpack.c.b16 %v9830, %v9829
        %v9891 = vpack.c.b16 %v9832, %v9831
        %v9892 = vpack.c.b16 %v9834, %v9833
        %v9893 = vpack.c.b16 %v9836, %v9835
        %v9894 = vpack.c.b16 %v9838, %v9837
        %v9895 = vpack.c.b16 %v9840, %v9839
        %v9896 = vpack.c.b16 %v9842, %v9841
        %v9897 = vpack.c.b16 %v9844, %v9843
        %v9898 = vpack.c.b16 %v9846, %v9845
        %v9899 = vpack.c.b16 %v9848, %v9847
        %v9900 = vpack.c.b16 %v9850, %v9849
        %v9901 = vpack.c.b16 %v9852, %v9851
        %v9902 = vpack.c.b16 %v9854, %v9853
        %v9903 = vpack.c.b16 %v9856, %v9855
        %v9904 = vpack.c.b16 %v9858, %v9857
        %v9905 = vpack.c.b16 %v9860, %v9859
        %v9906 = vpack.c.b16 %v9862, %v9861
        %v9907 = vpack.c.b16 %v9864, %v9863
        %v9908 = vpack.c.b16 %v9866, %v9865
        %v9909 = vpack.c.b16 %v9868, %v9867
        %v9910 = vpack.c.b16 %v9870, %v9869
        %v9911 = vpack.c.b16 %v9872, %v9871
        %v9912 = vpack.c.b16 %v9874, %v9873
        %v9913 = vpack.c.b16 %v9876, %v9875
        %v9914 = vpack.c.b16 %v9878, %v9877
        %v9915 = vpack.c.b16 %v9880, %v9879
        %v9916 = vpack.c.b16 %v9882, %v9881
        %v9917 = vpack.c.b16 %v9884, %v9883
        %v9918 = vpack.c.b16 %v9886, %v9885
        %9951 = vmatprep.subr.bf16.mxu0 0
        %9952 = vmatpush1.bf16.msra.mxu0 %v9887
        %9953 = vmatprep.subr.bf16.mxu0 0
        %9954 = vmatpush1.bf16.msra.mxu0 %v9888
        %9955 = vmatprep.subr.bf16.mxu0 0
        %9956 = vmatpush1.bf16.msra.mxu0 %v9889
        %9957 = vmatprep.subr.bf16.mxu0 0
        %9958 = vmatpush1.bf16.msra.mxu0 %v9890
        %9959 = vmatprep.subr.bf16.mxu0 0
        %9960 = vmatpush1.bf16.msra.mxu0 %v9891
        %9961 = vmatprep.subr.bf16.mxu0 0
        %9962 = vmatpush1.bf16.msra.mxu0 %v9892
        %9963 = vmatprep.subr.bf16.mxu0 0
        %9964 = vmatpush1.bf16.msra.mxu0 %v9893
        %9965 = vmatprep.subr.bf16.mxu0 0
        %9966 = vmatpush1.bf16.msra.mxu0 %v9894
        %9967 = vmatprep.subr.bf16.mxu0 0
        %9968 = vmatpush1.bf16.msra.mxu0 %v9895
        %9969 = vmatprep.subr.bf16.mxu0 0
        %9970 = vmatpush1.bf16.msra.mxu0 %v9896
        %9971 = vmatprep.subr.bf16.mxu0 0
        %9972 = vmatpush1.bf16.msra.mxu0 %v9897
        %9973 = vmatprep.subr.bf16.mxu0 0
        %9974 = vmatpush1.bf16.msra.mxu0 %v9898
        %9975 = vmatprep.subr.bf16.mxu0 0
        %9976 = vmatpush1.bf16.msra.mxu0 %v9899
        %9977 = vmatprep.subr.bf16.mxu0 0
        %9978 = vmatpush1.bf16.msra.mxu0 %v9900
        %9979 = vmatprep.subr.bf16.mxu0 0
        %9980 = vmatpush1.bf16.msra.mxu0 %v9901
        %9981 = vmatprep.subr.bf16.mxu0 0
        %9982 = vmatpush1.bf16.msra.mxu0 %v9902
        %9983 = vmatprep.mubr.bf16.mxu0 %v9692
        %9984 = vmatmul.mubr.bf16.gmra.mrb[0].mxu0 %v9691
        %v9985 = vpop.f32.mrb[0].mxu0
        %v9986 = vadd.f32 0.0, %v9985
        %v9987 = vpop.f32.mrb[0].mxu0
        %v9988 = vpop.f32.mrb[0].mxu0
        %v9989 = vadd.f32 0.0, %v9988
        %v9990 = vpop.f32.mrb[0].mxu0
        %9991 = vdwg.mxu0
        %9992 = vmatprep.subr.bf16.mxu0 0
        %9993 = vmatpush1.bf16.msra.mxu0 %v9903
        %9994 = vmatprep.subr.bf16.mxu0 0
        %9995 = vmatpush1.bf16.msra.mxu0 %v9904
        %9996 = vmatprep.subr.bf16.mxu0 0
        %9997 = vmatpush1.bf16.msra.mxu0 %v9905
        %9998 = vmatprep.subr.bf16.mxu0 0
        %9999 = vmatpush1.bf16.msra.mxu0 %v9906
        %10000 = vmatprep.subr.bf16.mxu0 0
        %10001 = vmatpush1.bf16.msra.mxu0 %v9907
        %10002 = vmatprep.subr.bf16.mxu0 0
        %10003 = vmatpush1.bf16.msra.mxu0 %v9908
        %10004 = vmatprep.subr.bf16.mxu0 0
        %10005 = vmatpush1.bf16.msra.mxu0 %v9909
        %10006 = vmatprep.subr.bf16.mxu0 0
        %10007 = vmatpush1.bf16.msra.mxu0 %v9910
        %10008 = vmatprep.subr.bf16.mxu0 0
        %10009 = vmatpush1.bf16.msra.mxu0 %v9911
        %10010 = vmatprep.subr.bf16.mxu0 0
        %10011 = vmatpush1.bf16.msra.mxu0 %v9912
        %10012 = vmatprep.subr.bf16.mxu0 0
        %10013 = vmatpush1.bf16.msra.mxu0 %v9913
        %10014 = vmatprep.subr.bf16.mxu0 0
        %10015 = vmatpush1.bf16.msra.mxu0 %v9914
        %10016 = vmatprep.subr.bf16.mxu0 0
        %10017 = vmatpush1.bf16.msra.mxu0 %v9915
        %10018 = vmatprep.subr.bf16.mxu0 0
        %10019 = vmatpush1.bf16.msra.mxu0 %v9916
        %10020 = vmatprep.subr.bf16.mxu0 0
        %10021 = vmatpush1.bf16.msra.mxu0 %v9917
        %10022 = vmatprep.subr.bf16.mxu0 0
        %10023 = vmatpush1.bf16.msra.mxu0 %v9918
        %10024 = vmatprep.mubr.bf16.mxu0 %v9694
        %10025 = vmatmul.mubr.bf16.gmra.mrb[0].mxu0 %v9693
        %v10026 = vpop.f32.mrb[0].mxu0
        %v10027 = vadd.f32 %v9986, %v10026
        %v10028 = vpop.f32.mrb[0].mxu0
        %v10029 = vpop.f32.mrb[0].mxu0
        %v10030 = vadd.f32 %v9989, %v10029
        %v10031 = vpop.f32.mrb[0].mxu0
        %10032 = vdwg.mxu0
        %v10033 = vpack.c.bf16 %v10030, %v10027
        %v10034 = vld [vmem:[#allocation43] sm:$0x1]
        %v10035 = vpack.c.bf16 %v10034, %v10034
        %v10037 = vpack.i.b16 %v10035, %v10035
        %v10039 = vlaneseq
        %v10040 = vshrl.u32 %v10039, 7
        %v10041 = vsub.s32 0, %v10040
        %v10042 = vrot.slane %v10037, %v10041
        %v10043 = vadd.bf16 %v10033, %v10042
        %v10044 = vmul.bf16 %v10043, 1009007652
        %v10045 = vmax.bf16 %v10043, %v10044
        %v10046 = vld [vmem:[#allocation45] sm:$0xf]
        %v10047 = vld [vmem:[#allocation45 + $0x4] sm:$0xf]
        %v10048 = vld [vmem:[#allocation45 + $0x8] sm:$0xf]
        %v10049 = vld [vmem:[#allocation45 + $0xc] sm:$0xf]
        %v10050 = vld [vmem:[#allocation45 + $0x10] sm:$0xf]
        %v10051 = vld [vmem:[#allocation45 + $0x14] sm:$0xf]
        %v10052 = vld [vmem:[#allocation45 + $0x18] sm:$0xf]
        %v10053 = vld [vmem:[#allocation45 + $0x1c] sm:$0xf]
        %v10054 = vld [vmem:[#allocation45 + $0x20] sm:$0xf]
        %v10055 = vld [vmem:[#allocation45 + $0x24] sm:$0xf]
        %v10056 = vld [vmem:[#allocation45 + $0x28] sm:$0xf]
        %v10057 = vld [vmem:[#allocation45 + $0x2c] sm:$0xf]
        %v10058 = vld [vmem:[#allocation45 + $0x30] sm:$0xf]
        %v10059 = vld [vmem:[#allocation45 + $0x34] sm:$0xf]
        %v10060 = vld [vmem:[#allocation45 + $0x38] sm:$0xf]
        %v10061 = vld [vmem:[#allocation45 + $0x3c] sm:$0xf]
        %v10078 = vunpack.c.l.b16 %v10046
        %v10079 = vunpack.c.l.b16 %v10047
        %v10080 = vunpack.c.l.b16 %v10048
        %v10081 = vunpack.c.l.b16 %v10049
        %v10082 = vunpack.c.l.b16 %v10050
        %v10083 = vunpack.c.l.b16 %v10051
        %v10084 = vunpack.c.l.b16 %v10052
        %v10085 = vunpack.c.l.b16 %v10053
        %v10086 = vunpack.c.l.b16 %v10054
        %v10087 = vunpack.c.l.b16 %v10055
        %v10088 = vunpack.c.l.b16 %v10056
        %v10089 = vunpack.c.l.b16 %v10057
        %v10090 = vunpack.c.l.b16 %v10058
        %v10091 = vunpack.c.l.b16 %v10059
        %v10092 = vunpack.c.l.b16 %v10060
        %v10093 = vunpack.c.l.b16 %v10061
        %v10094 = vpack.c.b16 %v10079, %v10078
        %v10095 = vpack.c.b16 %v10081, %v10080
        %v10096 = vpack.c.b16 %v10083, %v10082
        %v10097 = vpack.c.b16 %v10085, %v10084
        %v10098 = vpack.c.b16 %v10087, %v10086
        %v10099 = vpack.c.b16 %v10089, %v10088
        %v10100 = vpack.c.b16 %v10091, %v10090
        %v10101 = vpack.c.b16 %v10093, %v10092
        %10110 = vmatprep.subr.bf16.mxu0 0
        %10111 = vmatpush1.bf16.msra.mxu0 %v10094
        %10112 = vmatprep.subr.bf16.mxu0 0
        %10113 = vmatpush1.bf16.msra.mxu0 %v10095
        %10114 = vmatprep.subr.bf16.mxu0 0
        %10115 = vmatpush1.bf16.msra.mxu0 %v10096
        %10116 = vmatprep.subr.bf16.mxu0 0
        %10117 = vmatpush1.bf16.msra.mxu0 %v10097
        %10118 = vmatprep.subr.bf16.mxu0 0
        %10119 = vmatpush1.bf16.msra.mxu0 %v10098
        %10120 = vmatprep.subr.bf16.mxu0 0
        %10121 = vmatpush1.bf16.msra.mxu0 %v10099
        %10122 = vmatprep.subr.bf16.mxu0 0
        %10123 = vmatpush1.bf16.msra.mxu0 %v10100
        %10124 = vmatprep.subr.bf16.mxu0 0
        %10125 = vmatpush1.bf16.msra.mxu0 %v10101
        %10126 = vmatprep.subr.bf16.mxu0 0
        %10127 = vmatpush1.bf16.msra.mxu0 0
        %10128 = vmatprep.subr.bf16.mxu0 0
        %10129 = vmatpush1.bf16.msra.mxu0 0
        %10130 = vmatprep.subr.bf16.mxu0 0
        %10131 = vmatpush1.bf16.msra.mxu0 0
        %10132 = vmatprep.subr.bf16.mxu0 0
        %10133 = vmatpush1.bf16.msra.mxu0 0
        %10134 = vmatprep.subr.bf16.mxu0 0
        %10135 = vmatpush1.bf16.msra.mxu0 0
        %10136 = vmatprep.subr.bf16.mxu0 0
        %10137 = vmatpush1.bf16.msra.mxu0 0
        %10138 = vmatprep.subr.bf16.mxu0 0
        %10139 = vmatpush1.bf16.msra.mxu0 0
        %10140 = vmatprep.subr.bf16.mxu0 0
        %10141 = vmatpush1.bf16.msra.mxu0 0
        %10142 = vmatprep.mubr.bf16.mxu0 0
        %10143 = vmatmul.mubr.bf16.gmra.mrb[0].mxu0 %v10045
        %v10144 = vpop.f32.mrb[0].mxu0
        %v10145 = vadd.f32 0.0, %v10144
        %v10146 = vpop.f32.mrb[0].mxu0
        %v10147 = vpop.f32.mrb[0].mxu0
        %v10148 = vadd.f32 0.0, %v10147
        %v10149 = vpop.f32.mrb[0].mxu0
        %10150 = vdwg.mxu0
        %v10151 = vpack.c.bf16 %v10148, %v10145
        %v10152 = vld [vmem:[#allocation46] sm:$0x1]
        %v10153 = vpack.c.bf16 %v10152, %v10152
        %v10155 = vpack.i.b16 %v10153, %v10153
        %v10157 = vlaneseq
        %v10158 = vshrl.u32 %v10157, 7
        %v10159 = vsub.s32 0, %v10158
        %v10160 = vrot.slane %v10155, %v10159
        %v10161 = vadd.bf16 %v10151, %v10160
        %v10162 = vmul.bf16 %v10161, 1009007652
        %v10163 = vmax.bf16 %v10161, %v10162
        %v10164 = vld [vmem:[#allocation48] sm:$0xf]
        %v10165 = vld [vmem:[#allocation48 + $0x4] sm:$0xf]
        %v10166 = vld [vmem:[#allocation48 + $0x8] sm:$0xf]
        %v10167 = vld [vmem:[#allocation48 + $0xc] sm:$0xf]
        %v10168 = vld [vmem:[#allocation48 + $0x10] sm:$0xf]
        %v10169 = vld [vmem:[#allocation48 + $0x14] sm:$0xf]
        %v10170 = vld [vmem:[#allocation48 + $0x18] sm:$0xf]
        %v10171 = vld [vmem:[#allocation48 + $0x1c] sm:$0xf]
        %v10172 = vld [vmem:[#allocation48 + $0x20] sm:$0xf]
        %v10173 = vld [vmem:[#allocation48 + $0x24] sm:$0xf]
        %v10174 = vld [vmem:[#allocation49] sm:$0xf]
        %v10175 = vld [vmem:[#allocation49 + $0x4] sm:$0xf]
        %v10176 = vld [vmem:[#allocation49 + $0x8] sm:$0xf]
        %v10177 = vld [vmem:[#allocation49 + $0xc] sm:$0xf]
        %v10178 = vld [vmem:[#allocation49 + $0x10] sm:$0xf]
        %v10179 = vld [vmem:[#allocation49 + $0x14] sm:$0xf]
        %v10180 = vld [vmem:[#allocation49 + $0x18] sm:$0xf]
        %v10181 = vld [vmem:[#allocation49 + $0x1c] sm:$0xf]
        %v10190 = vunpack.c.l.b16 %v10174
        %v10191 = vunpack.c.l.b16 %v10175
        %v10192 = vunpack.c.l.b16 %v10176
        %v10193 = vunpack.c.l.b16 %v10177
        %v10194 = vunpack.c.l.b16 %v10178
        %v10195 = vunpack.c.l.b16 %v10179
        %v10196 = vunpack.c.l.b16 %v10180
        %v10197 = vunpack.c.l.b16 %v10181
        %v10198 = vpack.c.b16 %v10191, %v10190
        %v10199 = vpack.c.b16 %v10193, %v10192
        %v10200 = vpack.c.b16 %v10195, %v10194
        %v10201 = vpack.c.b16 %v10197, %v10196
        %v10207 = vsel %vm7799, %v10163, 0
        %10209 = vmatprep.subr.bf16.mxu0 0
        %10210 = vmatpush1.bf16.msra.mxu0 %v10198
        %10211 = vmatprep.subr.bf16.mxu0 0
        %10212 = vmatpush1.bf16.msra.mxu0 %v10199
        %10213 = vmatprep.subr.bf16.mxu0 0
        %10214 = vmatpush1.bf16.msra.mxu0 %v10200
        %10215 = vmatprep.subr.bf16.mxu0 0
        %10216 = vmatpush1.bf16.msra.mxu0 %v10201
        %10217 = vmatprep.subr.bf16.mxu0 0
        %10218 = vmatpush1.bf16.msra.mxu0 0
        %10219 = vmatprep.subr.bf16.mxu0 0
        %10220 = vmatpush1.bf16.msra.mxu0 0
        %10221 = vmatprep.subr.bf16.mxu0 0
        %10222 = vmatpush1.bf16.msra.mxu0 0
        %10223 = vmatprep.subr.bf16.mxu0 0
        %10224 = vmatpush1.bf16.msra.mxu0 0
        %10225 = vmatprep.subr.bf16.mxu0 0
        %10226 = vmatpush1.bf16.msra.mxu0 0
        %10227 = vmatprep.subr.bf16.mxu0 0
        %10228 = vmatpush1.bf16.msra.mxu0 0
        %10229 = vmatprep.subr.bf16.mxu0 0
        %10230 = vmatpush1.bf16.msra.mxu0 0
        %10231 = vmatprep.subr.bf16.mxu0 0
        %10232 = vmatpush1.bf16.msra.mxu0 0
        %10233 = vmatprep.subr.bf16.mxu0 0
        %10234 = vmatpush1.bf16.msra.mxu0 0
        %10235 = vmatprep.subr.bf16.mxu0 0
        %10236 = vmatpush1.bf16.msra.mxu0 0
        %10237 = vmatprep.subr.bf16.mxu0 0
        %10238 = vmatpush1.bf16.msra.mxu0 0
        %10239 = vmatprep.subr.bf16.mxu0 0
        %10240 = vmatpush1.bf16.msra.mxu0 0
        %10241 = vmatprep.mubr.bf16.mxu0 0
        %10242 = vmatmul.mubr.bf16.gmra.mrb[0].mxu0 %v10207
        %v10243 = vpop.f32.mrb[0].mxu0
        %v10244 = vadd.f32 0.0, %v10243
        %v10245 = vpop.f32.mrb[0].mxu0
        %v10246 = vpop.f32.mrb[0].mxu0
        %v10247 = vadd.f32 0.0, %v10246
        %v10248 = vpop.f32.mrb[0].mxu0
        %10249 = vdwg.mxu0
        %v10260 = vunpack.c.l.b16 %v10164
        %v10261 = vunpack.c.l.b16 %v10165
        %v10262 = vunpack.c.l.b16 %v10166
        %v10263 = vunpack.c.l.b16 %v10167
        %v10264 = vunpack.c.l.b16 %v10168
        %v10265 = vunpack.c.l.b16 %v10169
        %v10266 = vunpack.c.l.b16 %v10170
        %v10267 = vunpack.c.l.b16 %v10171
        %v10268 = vunpack.c.l.b16 %v10172
        %v10269 = vunpack.c.l.b16 %v10173
        %v10270 = vpack.c.b16 %v10261, %v10260
        %v10271 = vpack.c.b16 %v10263, %v10262
        %v10272 = vpack.c.b16 %v10265, %v10264
        %v10273 = vpack.c.b16 %v10267, %v10266
        %v10274 = vpack.c.b16 %v10269, %v10268
        %v10280 = vsel %vm7850, %v8660, 0
        %v10283 = vand.u32 %v10274, %v7940
        %10285 = vmatprep.subr.bf16.mxu0 0
        %10286 = vmatpush1.bf16.msra.mxu0 %v10270
        %10287 = vmatprep.subr.bf16.mxu0 0
        %10288 = vmatpush1.bf16.msra.mxu0 %v10271
        %10289 = vmatprep.subr.bf16.mxu0 0
        %10290 = vmatpush1.bf16.msra.mxu0 %v10272
        %10291 = vmatprep.subr.bf16.mxu0 0
        %10292 = vmatpush1.bf16.msra.mxu0 %v10273
        %10293 = vmatprep.subr.bf16.mxu0 0
        %10294 = vmatpush1.bf16.msra.mxu0 %v10283
        %10295 = vmatprep.subr.bf16.mxu0 0
        %10296 = vmatpush1.bf16.msra.mxu0 0
        %10297 = vmatprep.subr.bf16.mxu0 0
        %10298 = vmatpush1.bf16.msra.mxu0 0
        %10299 = vmatprep.subr.bf16.mxu0 0
        %10300 = vmatpush1.bf16.msra.mxu0 0
        %10301 = vmatprep.subr.bf16.mxu0 0
        %10302 = vmatpush1.bf16.msra.mxu0 0
        %10303 = vmatprep.subr.bf16.mxu0 0
        %10304 = vmatpush1.bf16.msra.mxu0 0
        %10305 = vmatprep.subr.bf16.mxu0 0
        %10306 = vmatpush1.bf16.msra.mxu0 0
        %10307 = vmatprep.subr.bf16.mxu0 0
        %10308 = vmatpush1.bf16.msra.mxu0 0
        %10309 = vmatprep.subr.bf16.mxu0 0
        %10310 = vmatpush1.bf16.msra.mxu0 0
        %10311 = vmatprep.subr.bf16.mxu0 0
        %10312 = vmatpush1.bf16.msra.mxu0 0
        %10313 = vmatprep.subr.bf16.mxu0 0
        %10314 = vmatpush1.bf16.msra.mxu0 0
        %10315 = vmatprep.subr.bf16.mxu0 0
        %10316 = vmatpush1.bf16.msra.mxu0 0
        %10317 = vmatprep.mubr.bf16.mxu0 0
        %10318 = vmatmul.mubr.bf16.gmra.mrb[0].mxu0 %v10280
        %v10319 = vpop.f32.mrb[0].mxu0
        %v10320 = vadd.f32 %v10244, %v10319
        %v10321 = vpop.f32.mrb[0].mxu0
        %v10322 = vpop.f32.mrb[0].mxu0
        %v10323 = vadd.f32 %v10247, %v10322
        %v10324 = vpop.f32.mrb[0].mxu0
        %10325 = vdwg.mxu0
        %v10326 = vld [vmem:[#allocation51] sm:$0x1]
        %v10328 = vlaneseq
        %v10329 = vshrl.u32 %v10328, 7
        %v10330 = vsub.s32 0, %v10329
        %v10331 = vrot.slane %v10326, %v10330
        %v10333 = vadd.f32 %v10320, %v10331
        %v10334 = vadd.f32 %v10323, %v10331
        %v10335 = vmul.f32 %v10333, 0.01
        %v10336 = vmul.f32 %v10334, 0.01
        %v10337 = vmax.f32 %v10333, %v10335
        %v10338 = vmax.f32 %v10334, %v10336
        %v10339 = vpack.c.bf16 %v10338, %v10337
        %v10340 = vld [vmem:[#allocation52] sm:$0xf]
        %v10341 = vld [vmem:[#allocation52 + $0x4] sm:$0xf]
        %v10342 = vld [vmem:[#allocation52 + $0x8] sm:$0xf]
        %v10343 = vld [vmem:[#allocation52 + $0xc] sm:$0xf]
        %v10344 = vld [vmem:[#allocation52 + $0x10] sm:$0xf]
        %v10345 = vld [vmem:[#allocation52 + $0x14] sm:$0xf]
        %v10346 = vld [vmem:[#allocation52 + $0x18] sm:$0xf]
        %v10347 = vld [vmem:[#allocation52 + $0x1c] sm:$0xf]
        %v10348 = vld [vmem:[#allocation54] sm:$0x1]
        %v10350 = vlaneseq
        %v10351 = vshrl.u32 %v10350, 7
        %v10352 = vsub.s32 0, %v10351
        %v10353 = vrot.slane %v10348, %v10352
        %v10363 = vunpack.c.l.b16 %v10340
        %v10364 = vunpack.c.l.b16 %v10341
        %v10365 = vunpack.c.l.b16 %v10342
        %v10366 = vunpack.c.l.b16 %v10343
        %v10367 = vunpack.c.l.b16 %v10344
        %v10368 = vunpack.c.l.b16 %v10345
        %v10369 = vunpack.c.l.b16 %v10346
        %v10370 = vunpack.c.l.b16 %v10347
        %v10371 = vpack.c.b16 %v10364, %v10363
        %v10372 = vpack.c.b16 %v10366, %v10365
        %v10373 = vpack.c.b16 %v10368, %v10367
        %v10374 = vpack.c.b16 %v10370, %v10369
        %v10380 = vsel %vm7799, %v10339, 0
        %10382 = vmatprep.subr.bf16.mxu0 0
        %10383 = vmatpush1.bf16.msra.mxu0 %v10371
        %10384 = vmatprep.subr.bf16.mxu0 0
        %10385 = vmatpush1.bf16.msra.mxu0 %v10372
        %10386 = vmatprep.subr.bf16.mxu0 0
        %10387 = vmatpush1.bf16.msra.mxu0 %v10373
        %10388 = vmatprep.subr.bf16.mxu0 0
        %10389 = vmatpush1.bf16.msra.mxu0 %v10374
        %10390 = vmatprep.subr.bf16.mxu0 0
        %10391 = vmatpush1.bf16.msra.mxu0 0
        %10392 = vmatprep.subr.bf16.mxu0 0
        %10393 = vmatpush1.bf16.msra.mxu0 0
        %10394 = vmatprep.subr.bf16.mxu0 0
        %10395 = vmatpush1.bf16.msra.mxu0 0
        %10396 = vmatprep.subr.bf16.mxu0 0
        %10397 = vmatpush1.bf16.msra.mxu0 0
        %10398 = vmatprep.subr.bf16.mxu0 0
        %10399 = vmatpush1.bf16.msra.mxu0 0
        %10400 = vmatprep.subr.bf16.mxu0 0
        %10401 = vmatpush1.bf16.msra.mxu0 0
        %10402 = vmatprep.subr.bf16.mxu0 0
        %10403 = vmatpush1.bf16.msra.mxu0 0
        %10404 = vmatprep.subr.bf16.mxu0 0
        %10405 = vmatpush1.bf16.msra.mxu0 0
        %10406 = vmatprep.subr.bf16.mxu0 0
        %10407 = vmatpush1.bf16.msra.mxu0 0
        %10408 = vmatprep.subr.bf16.mxu0 0
        %10409 = vmatpush1.bf16.msra.mxu0 0
        %10410 = vmatprep.subr.bf16.mxu0 0
        %10411 = vmatpush1.bf16.msra.mxu0 0
        %10412 = vmatprep.subr.bf16.mxu0 0
        %10413 = vmatpush1.bf16.msra.mxu0 0
        %10414 = vmatprep.mubr.bf16.mxu0 0
        %10415 = vmatmul.mubr.bf16.gmra.mrb[0].mxu0 %v10380
        %v10416 = vpop.f32.mrb[0].mxu0
        %v10417 = vadd.f32 %v10353, %v10416
        %v10418 = vpop.f32.mrb[0].mxu0
        %v10419 = vpop.f32.mrb[0].mxu0
        %v10420 = vadd.f32 %v10353, %v10419
        %v10421 = vpop.f32.mrb[0].mxu0
        %10422 = vdwg.mxu0
        %v10423 = vmul.f32 %v10417, 0.01
        %v10424 = vmul.f32 %v10420, 0.01
        %v10425 = vmax.f32 %v10417, %v10423
        %v10426 = vmax.f32 %v10420, %v10424
        %v10427 = vld [vmem:[#allocation55] sm:$0xff]
        %v10428 = vld [vmem:[#allocation55 + $0x8] sm:$0xff]
        %v10429 = vld [vmem:[#allocation3] sm:$0x1]
        %v10431 = vlaneseq
        %v10432 = vshrl.u32 %v10431, 7
        %v10433 = vsub.s32 0, %v10432
        %v10434 = vrot.slane %v10429, %v10433
        %vm10436 = vcmask 130048
        %v10438 = vsel %vm10436, %v10425, 0
        %v10441 = vsel %vm10436, %v10426, 0
        %10443 = vmatprep.subr.mxu0 0.0
        %10444 = vmatpush1.msra.mxu0 %v10427
        %10445 = vmatprep.subr.mxu0 0.0
        %10446 = vmatpush1.msra.mxu0 %v10428
        %10447 = vmatprep.subr.mxu0 0.0
        %10448 = vmatpush1.msra.mxu0 0.0
        %10449 = vmatprep.subr.mxu0 0.0
        %10450 = vmatpush1.msra.mxu0 0.0
        %10451 = vmatprep.subr.mxu0 0.0
        %10452 = vmatpush1.msra.mxu0 0.0
        %10453 = vmatprep.subr.mxu0 0.0
        %10454 = vmatpush1.msra.mxu0 0.0
        %10455 = vmatprep.subr.mxu0 0.0
        %10456 = vmatpush1.msra.mxu0 0.0
        %10457 = vmatprep.subr.mxu0 0.0
        %10458 = vmatpush1.msra.mxu0 0.0
        %10459 = vmatprep.subr.mxu0 0.0
        %10460 = vmatpush1.msra.mxu0 0.0
        %10461 = vmatprep.subr.mxu0 0.0
        %10462 = vmatpush1.msra.mxu0 0.0
        %10463 = vmatprep.subr.mxu0 0.0
        %10464 = vmatpush1.msra.mxu0 0.0
        %10465 = vmatprep.subr.mxu0 0.0
        %10466 = vmatpush1.msra.mxu0 0.0
        %10467 = vmatprep.subr.mxu0 0.0
        %10468 = vmatpush1.msra.mxu0 0.0
        %10469 = vmatprep.subr.mxu0 0.0
        %10470 = vmatpush1.msra.mxu0 0.0
        %10471 = vmatprep.subr.mxu0 0.0
        %10472 = vmatpush1.msra.mxu0 0.0
        %10473 = vmatprep.subr.mxu0 0.0
        %10474 = vmatpush1.msra.mxu0 0.0
        %10475 = vmatprep.subr.mxu0 0.0
        %10476 = vmatpush1.msra.mxu0 0.0
        %10477 = vmatprep.subr.mxu0 0.0
        %10478 = vmatpush1.msra.mxu0 0.0
        %10479 = vmatprep.subr.mxu0 0.0
        %10480 = vmatpush1.msra.mxu0 0.0
        %10481 = vmatprep.subr.mxu0 0.0
        %10482 = vmatpush1.msra.mxu0 0.0
        %10483 = vmatprep.subr.mxu0 0.0
        %10484 = vmatpush1.msra.mxu0 0.0
        %10485 = vmatprep.subr.mxu0 0.0
        %10486 = vmatpush1.msra.mxu0 0.0
        %10487 = vmatprep.subr.mxu0 0.0
        %10488 = vmatpush1.msra.mxu0 0.0
        %10489 = vmatprep.subr.mxu0 0.0
        %10490 = vmatpush1.msra.mxu0 0.0
        %10491 = vmatprep.subr.mxu0 0.0
        %10492 = vmatpush1.msra.mxu0 0.0
        %10493 = vmatprep.subr.mxu0 0.0
        %10494 = vmatpush1.msra.mxu0 0.0
        %10495 = vmatprep.subr.mxu0 0.0
        %10496 = vmatpush1.msra.mxu0 0.0
        %10497 = vmatprep.subr.mxu0 0.0
        %10498 = vmatpush1.msra.mxu0 0.0
        %10499 = vmatprep.subr.mxu0 0.0
        %10500 = vmatpush1.msra.mxu0 0.0
        %10501 = vmatprep.subr.mxu0 0.0
        %10502 = vmatpush1.msra.mxu0 0.0
        %10503 = vmatprep.subr.mxu0 0.0
        %10504 = vmatpush1.msra.mxu0 0.0
        %10505 = vmatprep.subr.mxu0 0.0
        %10506 = vmatpush1.msra.mxu0 0.0
        %10507 = vmatprep.mubr.f32.mxu0 0.0
        %10508 = vmatmul.mubr.f32.gmra.mrb[0].mxu0 %v10438
        %v10509 = vpop.f32.mrb[0].mxu0
        %v10510 = vadd.f32 %v10434, %v10509
        %v10511 = vpop.f32.mrb[0].mxu0
        %10512 = vmatprep.mubr.f32.mxu0 0.0
        %10513 = vmatmul.mubr.f32.gmra.mrb[0].mxu0 %v10441
        %v10514 = vpop.f32.mrb[0].mxu0
        %v10515 = vadd.f32 %v10434, %v10514
        %v10516 = vpop.f32.mrb[0].mxu0
        %10517 = vdwg.mxu0
        %v10518 = vmul.f32 %v10510, 0.01
        %v10519 = vmul.f32 %v10515, 0.01
        %v10520 = vmax.f32 %v10510, %v10518
        %v10521 = vmax.f32 %v10515, %v10519
        %vm10522 = vcmask 7168
        %10523 = vst.msk [vmem:[%s1615] sm:$0xff] %vm10522, %v10520
        %10524 = vst.msk [vmem:[%s1615 + $0x8] sm:$0xff] %vm10522, %v10521
        %s10525 = sand.u32 %s874, 1
        %s10526 = scalar_lea.sflag [#allocation6], %s10525
        %s10527 = sand.u32 %s874, 1
        %s10528 = smul.addr %s10527, 16
        %s10529 = scalar_lea.vmem [#allocation57], %s10528
        // Predicated region
        $region297: #{tpu_custom_call.1} parent=159 // pred_check
          %p10530 = pneg %p884
        $region298: #{tpu_custom_call.1} parent=159 // pred_check_branch
          %10532 = sbr.rel (%p10530) target = $region300
        $region299: #{tpu_custom_call.1} parent=159 // pred_region
          %s10533 = smul.u32 2, %s111
          %s10535 = ssub.s32 256, 256
          %10536 = vsyncadd %s10526, %s10535
          %s10537 = smul.addr %s10533, 128
          %s10538 = scalar_lea.hbm %s71, %s10537
          %s10539 = sshll.u32 %s10529, 4
          %s10540 = int_to_ptr.vmem [resolvable:$true] %s10539
          %10545 = dma.vmem_to_hbm [thread:$0]  %s10540, 256, %s10538, %s10526, 128, 128, 8
        $region300: #{tpu_custom_call.1} parent=159 // pred_fallthru
          _
      $region160: #{tpu_custom_call.1} parent=5 // pred_fallthru
        _
      %p10546 = scmp.le.s32.totalorder 2, %s106
      // Predicated region
      $region301: #{tpu_custom_call.1} parent=5 // pred_check
        %p10547 = pneg %p10546
      $region302: #{tpu_custom_call.1} parent=5 // pred_check_branch
        %10549 = sbr.rel (%p10547) target = $region304
      $region303: #{tpu_custom_call.1} parent=5 // pred_region
        %s10550 = ssub.s32 %s106, 2
        // Predicated region
        $region305: #{tpu_custom_call.1} parent=303 // pred_check
          %p10551 = pneg %p890
        $region306: #{tpu_custom_call.1} parent=303 // pred_check_branch
          %10553 = sbr.rel (%p10551) target = $region308
        $region307: #{tpu_custom_call.1} parent=303 // pred_region
          %s10554 = sand.u32 %s875, 1
          %s10555 = scalar_lea.sflag [#allocation6], %s10554
          %s10556 = sand.u32 %s875, 1
          %s10557 = smul.addr %s10556, 16
          %s10558 = scalar_lea.vmem [#allocation57], %s10557
          %10559 = dma.done %s10555, 256
        $region308: #{tpu_custom_call.1} parent=303 // pred_fallthru
          _
      $region304: #{tpu_custom_call.1} parent=5 // pred_fallthru
        _
    $region6: #{tpu_custom_call.1} parent=1 // loop_footer
      %s110 = sadd.s32 1, %s106
    $region7: #{tpu_custom_call.1} parent=1 // loop_footer_branch
      %105 = sbr.rel target = $region3
    $region8: #{tpu_custom_call.1} parent=1 // loop_exit
      _
    %10560 = vsyncpa [#allocation5], 1
    %s10561 = scalar_lea.sflag [#allocation5], 1
    %10562 = vsyncpa %s10561, 1
    %10563 = vsyncpa [#allocation8], 1
    %s10564 = scalar_lea.sflag [#allocation8], 1
    %10565 = vsyncpa %s10564, 1
    %10566 = vsyncpa [#allocation11], 1
    %s10567 = scalar_lea.sflag [#allocation11], 1
    %10568 = vsyncpa %s10567, 1
    %10569 = vsyncpa [#allocation14], 1
    %10570 = vsyncpa [#allocation17], 1
    %10571 = vsyncpa [#allocation20], 1
    %10572 = vsyncpa [#allocation23], 1
    %10573 = vsyncpa [#allocation26], 1
    %10574 = vsyncpa [#allocation29], 1
    %10575 = vsyncpa [#allocation32], 1
    %10576 = vsyncpa [#allocation35], 1
    %10577 = vsyncpa [#allocation38], 1
    %10578 = vsyncpa [#allocation41], 1
    %10579 = vsyncpa [#allocation44], 1
    %10580 = vsyncpa [#allocation47], 1
    %10581 = vsyncpa [#allocation50], 1
    %10582 = vsyncpa [#allocation53], 1
    %10583 = vsyncpa [#allocation56], 1
    %10584 = vsyncpa [#allocation6], 1
    %s10585 = scalar_lea.sflag [#allocation6], 1
    %10586 = vsyncpa %s10585, 1

</llo_original>
